<compile_context>
chip_gen: v7x
topology: tpu7x:2x2x1
jax: 0.10.0
libtpu: 0.0.40
codegen_flags: <defaults>
</compile_context>

<pallas_src>
import numpy as np
import jax
import jax.numpy as jnp
from jax.experimental import pallas as pl
from jax.experimental.pallas import tpu as pltpu


# ---------------------------------------------------------------------------
# Trace-time constants: bilinear matrices and composite per-tap operators
# ---------------------------------------------------------------------------
def _interp_matrix(out_len, in_len, align_corners=True):
    """1-D bilinear interpolation matrix (out_len, in_len)."""
    if in_len == 1:
        return np.ones((out_len, 1), np.float32)
    if align_corners:
        src = np.arange(out_len, dtype=np.float64) * (in_len - 1) / max(out_len - 1, 1)
    else:
        src = (np.arange(out_len, dtype=np.float64) + 0.5) * in_len / out_len - 0.5
        src = np.clip(src, 0.0, in_len - 1)
    lo = np.minimum(np.floor(src).astype(np.int64), in_len - 2)
    hi = lo + 1
    frac = (src - lo).astype(np.float32)
    A = np.zeros((out_len, in_len), np.float32)
    A[np.arange(out_len), lo] += 1.0 - frac
    A[np.arange(out_len), hi] += frac
    return A


def _tap_operators(H, W):
    """(9, H*W, 2H*2W): transposed composite (3x3 shift w/ zero-pad) o (2x bilinear up)."""
    H2, W2 = 2 * H, 2 * W
    Ah = np.zeros((H2 + 2, H), np.float32)
    Aw = np.zeros((W2 + 2, W), np.float32)
    Ah[1:H2 + 1] = _interp_matrix(H2, H, align_corners=True)
    Aw[1:W2 + 1] = _interp_matrix(W2, W, align_corners=True)
    taps = []
    for kh in range(3):
        for kw in range(3):
            T = np.kron(Ah[kh:kh + H2], Aw[kw:kw + W2])   # (H2*W2, H*W)
            taps.append(T.T)                              # (H*W, H2*W2)
    return np.stack(taps, axis=0)                         # (9, H*W, H2*W2)


def _pick_batch_tile(B, Cout, m_target=128):
    """Largest divisor of B with Bt*Cout <= ~m_target (and a legal output block)."""
    cap = max(1, m_target // max(Cout, 1))
    best = B                                   # full batch is always legal
    for d in range(1, B + 1):
        if B % d == 0 and d <= cap and (d == B or (d * Cout) % 8 == 0):
            best = d
    return best


# ---------------------------------------------------------------------------
# Pallas kernel: fused upsample + conv3x3 + BN + PReLU, grid = (batch tiles,)
# ---------------------------------------------------------------------------
def _psp_upsample_kernel(x_ref, w_ref, t_ref, shift_ref, alpha_ref, o_ref, z_ref):
    # x_ref:     (Bt, Cin, HW)      bf16
    # w_ref:     (9, Cout, Cin)     bf16  (BN scale folded in)
    # t_ref:     (9*HW, HW2)        bf16  (batch-invariant, resident in VMEM)
    # shift_ref: (Bt*Cout, 1)       f32   (conv bias + BN shift)
    # alpha_ref: (Bt*Cout, 1)       f32   (PReLU slope)
    # o_ref:     (Bt*Cout, HW2)     f32
    # z_ref:     (Bt*Cout, 9*HW)    bf16  VMEM scratch (channel-mix results)
    Bt, Cin, HW = x_ref.shape
    Cout = w_ref.shape[1]

    # 1) Channel mix (tiny matmuls, fully unrolled):
    #    z[(b,co), k*HW + hw] = sum_ci W_k[co,ci] * x[b,ci,hw]
    for b in range(Bt):
        xb = x_ref[b]                                            # (Cin, HW)
        for k in range(9):
            zk = jnp.dot(w_ref[k], xb, preferred_element_type=jnp.float32)
            z_ref[b * Cout:(b + 1) * Cout, k * HW:(k + 1) * HW] = zk.astype(z_ref.dtype)

    # 2) ONE long-K spatial matmul: (Bt*Cout, 9*HW) @ (9*HW, HW2) -> (Bt*Cout, HW2)
    y = jnp.dot(z_ref[...], t_ref[...], preferred_element_type=jnp.float32)

    # 3) Fused epilogue: bias + BN shift, then PReLU; single lane-dense store.
    y = y + shift_ref[...]
    o_ref[...] = (jnp.maximum(y, 0.0)
                  + alpha_ref[...] * jnp.minimum(y, 0.0)).astype(o_ref.dtype)


def psp_upsample_forward(x, params):
    """x: (B, Cin, H, W) f32 NCHW -> (B, Cout, 2H, 2W) f32 NCHW."""
    B, Cin, H, W = x.shape
    w = params['w']                                   # (Cout, Cin, 3, 3)
    Cout = w.shape[0]
    H2, W2 = 2 * H, 2 * W
    HW, HW2 = H * W, H2 * W2

    Bt = _pick_batch_tile(B, Cout)
    nb = B // Bt

    # Composite spatial operator, concatenated over taps along K (static numpy).
    tcat = jnp.asarray(_tap_operators(H, W).reshape(9 * HW, HW2), jnp.bfloat16)

    # Fold BN scale into conv weights; conv bias + BN shift into one shift.
    s = params['gamma'] / jnp.sqrt(params['var'] + 1e-5)            # (Cout,)
    w_fold = (w * s[:, None, None, None]).astype(jnp.bfloat16)
    wt = jnp.transpose(w_fold, (2, 3, 0, 1)).reshape(9, Cout, Cin)  # k = kh*3+kw
    shift_c = ((params['b'] - params['mean']) * s
               + params['beta']).reshape(Cout, 1).astype(jnp.float32)
    alpha_c = jnp.full((Cout, 1), params['alpha'], jnp.float32)
    shift = jnp.tile(shift_c, (Bt, 1))                # (Bt*Cout, 1), row = b*Cout+co
    alpha = jnp.tile(alpha_c, (Bt, 1))

    x2 = x.reshape(B, Cin, HW).astype(jnp.bfloat16)

    flops = 2 * B * (9 * Cout * Cin * HW + Cout * 9 * HW * HW2)
    bytes_accessed = (x2.size * 2 + wt.size * 2 + tcat.size * 2
                      + shift.size * 4 + alpha.size * 4 + B * Cout * HW2 * 4)

    out = pl.pallas_call(
        _psp_upsample_kernel,
        out_shape=jax.ShapeDtypeStruct((B * Cout, HW2), jnp.float32),
        grid_spec=pltpu.PrefetchScalarGridSpec(
            num_scalar_prefetch=0,
            grid=(nb,),
            in_specs=[
                pl.BlockSpec((Bt, Cin, HW), lambda i: (i, 0, 0)),      # x tile
                pl.BlockSpec((9, Cout, Cin), lambda i: (0, 0, 0)),     # folded W
                pl.BlockSpec((9 * HW, HW2), lambda i: (0, 0)),         # T (resident)
                pl.BlockSpec((Bt * Cout, 1), lambda i: (0, 0)),        # shift
                pl.BlockSpec((Bt * Cout, 1), lambda i: (0, 0)),        # alpha
            ],
            out_specs=pl.BlockSpec((Bt * Cout, HW2), lambda i: (i, 0)),
            scratch_shapes=[pltpu.VMEM((Bt * Cout, 9 * HW), jnp.bfloat16)],
        ),
        compiler_params=pltpu.CompilerParams(
            dimension_semantics=("parallel",)),
        cost_estimate=pl.CostEstimate(flops=flops, transcendentals=0,
                                      bytes_accessed=bytes_accessed),
    )(x2, wt, tcat, shift, alpha)

    return out.reshape(B, Cout, H2, W2)


# ---------------------------------------------------------------------------
# Pure-JAX reference (f32, highest precision) for a sanity check
# ---------------------------------------------------------------------------
def reference_forward(x, params):
    B, Cin, H, W = x.shape
    hi = jax.lax.Precision.HIGHEST
    Ah = jnp.asarray(_interp_matrix(2 * H, H, align_corners=True))
    Aw = jnp.asarray(_interp_matrix(2 * W, W, align_corners=True))
    u = jnp.einsum('ph,bchw->bcpw', Ah, x, precision=hi)
    u = jnp.einsum('qw,bcpw->bcpq', Aw, u, precision=hi)
    y = jax.lax.conv_general_dilated(
        u, params['w'], window_strides=(1, 1), padding=((1, 1), (1, 1)),
        dimension_numbers=('NCHW', 'OIHW', 'NCHW'), precision=hi)
    y = y + params['b'][None, :, None, None]
    s = params['gamma'] / jnp.sqrt(params['var'] + 1e-5)
    y = (y - params['mean'][None, :, None, None]) * s[None, :, None, None] \
        + params['beta'][None, :, None, None]
    return jnp.maximum(y, 0.0) + params['alpha'] * jnp.minimum(y, 0.0)


# ---------------------------------------------------------------------------
# Deterministic parameter init
# ---------------------------------------------------------------------------
def init_params(key, in_ch, out_ch):
    ks = jax.random.split(key, 6)
    nrm = lambda k, shape, s=0.05: s * jax.random.normal(k, shape, jnp.float32)
    return dict(
        w=nrm(ks[0], (out_ch, in_ch, 3, 3)),
        b=nrm(ks[1], (out_ch,)),
        gamma=1.0 + nrm(ks[2], (out_ch,), 0.1),
        beta=nrm(ks[3], (out_ch,), 0.1),
        mean=nrm(ks[4], (out_ch,), 0.1),
        var=1.0 + jnp.abs(nrm(ks[5], (out_ch,), 0.1)),
        alpha=jnp.float32(0.25),   # nn.PReLU() default single shared parameter
    )


if __name__ == "__main__":
    key = jax.random.PRNGKey(0)
    kx, kp = jax.random.split(key)

    B, Cin, H, W = 2, 32, 16, 16
    Cout = 16
    x = jax.random.normal(kx, (B, Cin, H, W), jnp.float32)
    params = init_params(kp, Cin, Cout)

    out = jax.block_until_ready(psp_upsample_forward(x, params))
    assert out.shape == (B, Cout, 2 * H, 2 * W), out.shape
    assert bool(jnp.all(jnp.isfinite(out)))

    ref = jax.block_until_ready(reference_forward(x, params))
    np.testing.assert_allclose(np.asarray(out), np.asarray(ref),
                               rtol=5e-2, atol=3e-2)
    print("KERNEL_OK")
</pallas_src>

<mosaic_0001>
module attributes {stable_mosaic.version = 11 : i64} {
  func.func @_psp_upsample_kernel(%arg0: i32, %arg1: memref<2x32x256xbf16, #tpu.memory_space<vmem>>, %arg2: memref<9x16x32xbf16, #tpu.memory_space<vmem>>, %arg3: memref<2304x1024xbf16, #tpu.memory_space<vmem>>, %arg4: memref<32x1xf32, #tpu.memory_space<vmem>>, %arg5: memref<32x1xf32, #tpu.memory_space<vmem>>, %arg6: memref<32x1024xf32, #tpu.memory_space<vmem>>, %arg7: memref<32x2304xbf16, #tpu.memory_space<vmem>>) attributes {dimension_semantics = [#tpu.dimension_semantics<parallel>], iteration_bounds = array<i64: 1>, scalar_prefetch = 0 : i64, scratch_operands = 1 : i64, tpu.core_type = #tpu.core_type<tc>, window_params = [{transform_indices = @transform_0, window_bounds = array<i64: 2, 32, 256>}, {pipeline_mode = #tpu.pipeline_mode<synchronous>, transform_indices = @transform_1, window_bounds = array<i64: 9, 16, 32>}, {pipeline_mode = #tpu.pipeline_mode<synchronous>, transform_indices = @transform_2, window_bounds = array<i64: 2304, 1024>}, {pipeline_mode = #tpu.pipeline_mode<synchronous>, transform_indices = @transform_3, window_bounds = array<i64: 32, 1>}, {pipeline_mode = #tpu.pipeline_mode<synchronous>, transform_indices = @transform_4, window_bounds = array<i64: 32, 1>}, {transform_indices = @transform_5, window_bounds = array<i64: 32, 1024>}]} {
    %c0 = arith.constant 0 : index
    %c0_0 = arith.constant 0 : index
    %c0_1 = arith.constant 0 : index
    %0 = vector.load %arg1[%c0, %c0_0, %c0_1] : memref<2x32x256xbf16, #tpu.memory_space<vmem>>, vector<1x32x256xbf16>
    %1 = vector.shape_cast %0 : vector<1x32x256xbf16> to vector<32x256xbf16>
    %c0_2 = arith.constant 0 : index
    %c0_3 = arith.constant 0 : index
    %c0_4 = arith.constant 0 : index
    %2 = vector.load %arg2[%c0_2, %c0_3, %c0_4] : memref<9x16x32xbf16, #tpu.memory_space<vmem>>, vector<1x16x32xbf16>
    %3 = vector.shape_cast %2 : vector<1x16x32xbf16> to vector<16x32xbf16>
    %cst = arith.constant dense<0.000000e+00> : vector<16x256xf32>
    %4 = tpu.matmul %3, %1, %cst {dimension_numbers = #tpu.dot_dimension_numbers<[1], [0], [0], [1], [0, 0, 1, 1], [], []>} : vector<16x32xbf16>, vector<32x256xbf16>, vector<16x256xf32> -> vector<16x256xf32>
    %5 = arith.truncf %4 : vector<16x256xf32> to vector<16x256xbf16>
    %c0_5 = arith.constant 0 : index
    %c0_6 = arith.constant 0 : index
    %6 = vector.load %arg7[%c0_5, %c0_6] : memref<32x2304xbf16, #tpu.memory_space<vmem>>, vector<16x256xbf16>
    tpu.vector_store %arg7[%c0_5, %c0_6], %5 {strides = array<i32>} : memref<32x2304xbf16, #tpu.memory_space<vmem>>, vector<16x256xbf16>,
    %c1 = arith.constant 1 : index
    %c0_7 = arith.constant 0 : index
    %c0_8 = arith.constant 0 : index
    %7 = vector.load %arg2[%c1, %c0_7, %c0_8] : memref<9x16x32xbf16, #tpu.memory_space<vmem>>, vector<1x16x32xbf16>
    %8 = vector.shape_cast %7 : vector<1x16x32xbf16> to vector<16x32xbf16>
    %cst_9 = arith.constant dense<0.000000e+00> : vector<16x256xf32>
    %9 = tpu.matmul %8, %1, %cst_9 {dimension_numbers = #tpu.dot_dimension_numbers<[1], [0], [0], [1], [0, 0, 1, 1], [], []>} : vector<16x32xbf16>, vector<32x256xbf16>, vector<16x256xf32> -> vector<16x256xf32>
    %10 = arith.truncf %9 : vector<16x256xf32> to vector<16x256xbf16>
    %c0_10 = arith.constant 0 : index
    %c256 = arith.constant 256 : index
    %11 = vector.load %arg7[%c0_10, %c256] : memref<32x2304xbf16, #tpu.memory_space<vmem>>, vector<16x256xbf16>
    tpu.vector_store %arg7[%c0_10, %c256], %10 {strides = array<i32>} : memref<32x2304xbf16, #tpu.memory_space<vmem>>, vector<16x256xbf16>,
    %c2 = arith.constant 2 : index
    %c0_11 = arith.constant 0 : index
    %c0_12 = arith.constant 0 : index
    %12 = vector.load %arg2[%c2, %c0_11, %c0_12] : memref<9x16x32xbf16, #tpu.memory_space<vmem>>, vector<1x16x32xbf16>
    %13 = vector.shape_cast %12 : vector<1x16x32xbf16> to vector<16x32xbf16>
    %cst_13 = arith.constant dense<0.000000e+00> : vector<16x256xf32>
    %14 = tpu.matmul %13, %1, %cst_13 {dimension_numbers = #tpu.dot_dimension_numbers<[1], [0], [0], [1], [0, 0, 1, 1], [], []>} : vector<16x32xbf16>, vector<32x256xbf16>, vector<16x256xf32> -> vector<16x256xf32>
    %15 = arith.truncf %14 : vector<16x256xf32> to vector<16x256xbf16>
    %c0_14 = arith.constant 0 : index
    %c512 = arith.constant 512 : index
    %16 = vector.load %arg7[%c0_14, %c512] : memref<32x2304xbf16, #tpu.memory_space<vmem>>, vector<16x256xbf16>
    tpu.vector_store %arg7[%c0_14, %c512], %15 {strides = array<i32>} : memref<32x2304xbf16, #tpu.memory_space<vmem>>, vector<16x256xbf16>,
    %c3 = arith.constant 3 : index
    %c0_15 = arith.constant 0 : index
    %c0_16 = arith.constant 0 : index
    %17 = vector.load %arg2[%c3, %c0_15, %c0_16] : memref<9x16x32xbf16, #tpu.memory_space<vmem>>, vector<1x16x32xbf16>
    %18 = vector.shape_cast %17 : vector<1x16x32xbf16> to vector<16x32xbf16>
    %cst_17 = arith.constant dense<0.000000e+00> : vector<16x256xf32>
    %19 = tpu.matmul %18, %1, %cst_17 {dimension_numbers = #tpu.dot_dimension_numbers<[1], [0], [0], [1], [0, 0, 1, 1], [], []>} : vector<16x32xbf16>, vector<32x256xbf16>, vector<16x256xf32> -> vector<16x256xf32>
    %20 = arith.truncf %19 : vector<16x256xf32> to vector<16x256xbf16>
    %c0_18 = arith.constant 0 : index
    %c768 = arith.constant 768 : index
    %21 = vector.load %arg7[%c0_18, %c768] : memref<32x2304xbf16, #tpu.memory_space<vmem>>, vector<16x256xbf16>
    tpu.vector_store %arg7[%c0_18, %c768], %20 {strides = array<i32>} : memref<32x2304xbf16, #tpu.memory_space<vmem>>, vector<16x256xbf16>,
    %c4 = arith.constant 4 : index
    %c0_19 = arith.constant 0 : index
    %c0_20 = arith.constant 0 : index
    %22 = vector.load %arg2[%c4, %c0_19, %c0_20] : memref<9x16x32xbf16, #tpu.memory_space<vmem>>, vector<1x16x32xbf16>
    %23 = vector.shape_cast %22 : vector<1x16x32xbf16> to vector<16x32xbf16>
    %cst_21 = arith.constant dense<0.000000e+00> : vector<16x256xf32>
    %24 = tpu.matmul %23, %1, %cst_21 {dimension_numbers = #tpu.dot_dimension_numbers<[1], [0], [0], [1], [0, 0, 1, 1], [], []>} : vector<16x32xbf16>, vector<32x256xbf16>, vector<16x256xf32> -> vector<16x256xf32>
    %25 = arith.truncf %24 : vector<16x256xf32> to vector<16x256xbf16>
    %c0_22 = arith.constant 0 : index
    %c1024 = arith.constant 1024 : index
    %26 = vector.load %arg7[%c0_22, %c1024] : memref<32x2304xbf16, #tpu.memory_space<vmem>>, vector<16x256xbf16>
    tpu.vector_store %arg7[%c0_22, %c1024], %25 {strides = array<i32>} : memref<32x2304xbf16, #tpu.memory_space<vmem>>, vector<16x256xbf16>,
    %c5 = arith.constant 5 : index
    %c0_23 = arith.constant 0 : index
    %c0_24 = arith.constant 0 : index
    %27 = vector.load %arg2[%c5, %c0_23, %c0_24] : memref<9x16x32xbf16, #tpu.memory_space<vmem>>, vector<1x16x32xbf16>
    %28 = vector.shape_cast %27 : vector<1x16x32xbf16> to vector<16x32xbf16>
    %cst_25 = arith.constant dense<0.000000e+00> : vector<16x256xf32>
    %29 = tpu.matmul %28, %1, %cst_25 {dimension_numbers = #tpu.dot_dimension_numbers<[1], [0], [0], [1], [0, 0, 1, 1], [], []>} : vector<16x32xbf16>, vector<32x256xbf16>, vector<16x256xf32> -> vector<16x256xf32>
    %30 = arith.truncf %29 : vector<16x256xf32> to vector<16x256xbf16>
    %c0_26 = arith.constant 0 : index
    %c1280 = arith.constant 1280 : index
    %31 = vector.load %arg7[%c0_26, %c1280] : memref<32x2304xbf16, #tpu.memory_space<vmem>>, vector<16x256xbf16>
    tpu.vector_store %arg7[%c0_26, %c1280], %30 {strides = array<i32>} : memref<32x2304xbf16, #tpu.memory_space<vmem>>, vector<16x256xbf16>,
    %c6 = arith.constant 6 : index
    %c0_27 = arith.constant 0 : index
    %c0_28 = arith.constant 0 : index
    %32 = vector.load %arg2[%c6, %c0_27, %c0_28] : memref<9x16x32xbf16, #tpu.memory_space<vmem>>, vector<1x16x32xbf16>
    %33 = vector.shape_cast %32 : vector<1x16x32xbf16> to vector<16x32xbf16>
    %cst_29 = arith.constant dense<0.000000e+00> : vector<16x256xf32>
    %34 = tpu.matmul %33, %1, %cst_29 {dimension_numbers = #tpu.dot_dimension_numbers<[1], [0], [0], [1], [0, 0, 1, 1], [], []>} : vector<16x32xbf16>, vector<32x256xbf16>, vector<16x256xf32> -> vector<16x256xf32>
    %35 = arith.truncf %34 : vector<16x256xf32> to vector<16x256xbf16>
    %c0_30 = arith.constant 0 : index
    %c1536 = arith.constant 1536 : index
    %36 = vector.load %arg7[%c0_30, %c1536] : memref<32x2304xbf16, #tpu.memory_space<vmem>>, vector<16x256xbf16>
    tpu.vector_store %arg7[%c0_30, %c1536], %35 {strides = array<i32>} : memref<32x2304xbf16, #tpu.memory_space<vmem>>, vector<16x256xbf16>,
    %c7 = arith.constant 7 : index
    %c0_31 = arith.constant 0 : index
    %c0_32 = arith.constant 0 : index
    %37 = vector.load %arg2[%c7, %c0_31, %c0_32] : memref<9x16x32xbf16, #tpu.memory_space<vmem>>, vector<1x16x32xbf16>
    %38 = vector.shape_cast %37 : vector<1x16x32xbf16> to vector<16x32xbf16>
    %cst_33 = arith.constant dense<0.000000e+00> : vector<16x256xf32>
    %39 = tpu.matmul %38, %1, %cst_33 {dimension_numbers = #tpu.dot_dimension_numbers<[1], [0], [0], [1], [0, 0, 1, 1], [], []>} : vector<16x32xbf16>, vector<32x256xbf16>, vector<16x256xf32> -> vector<16x256xf32>
    %40 = arith.truncf %39 : vector<16x256xf32> to vector<16x256xbf16>
    %c0_34 = arith.constant 0 : index
    %c1792 = arith.constant 1792 : index
    %41 = vector.load %arg7[%c0_34, %c1792] : memref<32x2304xbf16, #tpu.memory_space<vmem>>, vector<16x256xbf16>
    tpu.vector_store %arg7[%c0_34, %c1792], %40 {strides = array<i32>} : memref<32x2304xbf16, #tpu.memory_space<vmem>>, vector<16x256xbf16>,
    %c8 = arith.constant 8 : index
    %c0_35 = arith.constant 0 : index
    %c0_36 = arith.constant 0 : index
    %42 = vector.load %arg2[%c8, %c0_35, %c0_36] : memref<9x16x32xbf16, #tpu.memory_space<vmem>>, vector<1x16x32xbf16>
    %43 = vector.shape_cast %42 : vector<1x16x32xbf16> to vector<16x32xbf16>
    %cst_37 = arith.constant dense<0.000000e+00> : vector<16x256xf32>
    %44 = tpu.matmul %43, %1, %cst_37 {dimension_numbers = #tpu.dot_dimension_numbers<[1], [0], [0], [1], [0, 0, 1, 1], [], []>} : vector<16x32xbf16>, vector<32x256xbf16>, vector<16x256xf32> -> vector<16x256xf32>
    %45 = arith.truncf %44 : vector<16x256xf32> to vector<16x256xbf16>
    %c0_38 = arith.constant 0 : index
    %c2048 = arith.constant 2048 : index
    %46 = vector.load %arg7[%c0_38, %c2048] : memref<32x2304xbf16, #tpu.memory_space<vmem>>, vector<16x256xbf16>
    tpu.vector_store %arg7[%c0_38, %c2048], %45 {strides = array<i32>} : memref<32x2304xbf16, #tpu.memory_space<vmem>>, vector<16x256xbf16>,
    %c1_39 = arith.constant 1 : index
    %c0_40 = arith.constant 0 : index
    %c0_41 = arith.constant 0 : index
    %47 = vector.load %arg1[%c1_39, %c0_40, %c0_41] : memref<2x32x256xbf16, #tpu.memory_space<vmem>>, vector<1x32x256xbf16>
    %48 = vector.shape_cast %47 : vector<1x32x256xbf16> to vector<32x256xbf16>
    %c0_42 = arith.constant 0 : index
    %c0_43 = arith.constant 0 : index
    %c0_44 = arith.constant 0 : index
    %49 = vector.load %arg2[%c0_42, %c0_43, %c0_44] : memref<9x16x32xbf16, #tpu.memory_space<vmem>>, vector<1x16x32xbf16>
    %50 = vector.shape_cast %49 : vector<1x16x32xbf16> to vector<16x32xbf16>
    %cst_45 = arith.constant dense<0.000000e+00> : vector<16x256xf32>
    %51 = tpu.matmul %50, %48, %cst_45 {dimension_numbers = #tpu.dot_dimension_numbers<[1], [0], [0], [1], [0, 0, 1, 1], [], []>} : vector<16x32xbf16>, vector<32x256xbf16>, vector<16x256xf32> -> vector<16x256xf32>
    %52 = arith.truncf %51 : vector<16x256xf32> to vector<16x256xbf16>
    %c16 = arith.constant 16 : index
    %c0_46 = arith.constant 0 : index
    %53 = vector.load %arg7[%c16, %c0_46] : memref<32x2304xbf16, #tpu.memory_space<vmem>>, vector<16x256xbf16>
    tpu.vector_store %arg7[%c16, %c0_46], %52 {strides = array<i32>} : memref<32x2304xbf16, #tpu.memory_space<vmem>>, vector<16x256xbf16>,
    %c1_47 = arith.constant 1 : index
    %c0_48 = arith.constant 0 : index
    %c0_49 = arith.constant 0 : index
    %54 = vector.load %arg2[%c1_47, %c0_48, %c0_49] : memref<9x16x32xbf16, #tpu.memory_space<vmem>>, vector<1x16x32xbf16>
    %55 = vector.shape_cast %54 : vector<1x16x32xbf16> to vector<16x32xbf16>
    %cst_50 = arith.constant dense<0.000000e+00> : vector<16x256xf32>
    %56 = tpu.matmul %55, %48, %cst_50 {dimension_numbers = #tpu.dot_dimension_numbers<[1], [0], [0], [1], [0, 0, 1, 1], [], []>} : vector<16x32xbf16>, vector<32x256xbf16>, vector<16x256xf32> -> vector<16x256xf32>
    %57 = arith.truncf %56 : vector<16x256xf32> to vector<16x256xbf16>
    %c16_51 = arith.constant 16 : index
    %c256_52 = arith.constant 256 : index
    %58 = vector.load %arg7[%c16_51, %c256_52] : memref<32x2304xbf16, #tpu.memory_space<vmem>>, vector<16x256xbf16>
    tpu.vector_store %arg7[%c16_51, %c256_52], %57 {strides = array<i32>} : memref<32x2304xbf16, #tpu.memory_space<vmem>>, vector<16x256xbf16>,
    %c2_53 = arith.constant 2 : index
    %c0_54 = arith.constant 0 : index
    %c0_55 = arith.constant 0 : index
    %59 = vector.load %arg2[%c2_53, %c0_54, %c0_55] : memref<9x16x32xbf16, #tpu.memory_space<vmem>>, vector<1x16x32xbf16>
    %60 = vector.shape_cast %59 : vector<1x16x32xbf16> to vector<16x32xbf16>
    %cst_56 = arith.constant dense<0.000000e+00> : vector<16x256xf32>
    %61 = tpu.matmul %60, %48, %cst_56 {dimension_numbers = #tpu.dot_dimension_numbers<[1], [0], [0], [1], [0, 0, 1, 1], [], []>} : vector<16x32xbf16>, vector<32x256xbf16>, vector<16x256xf32> -> vector<16x256xf32>
    %62 = arith.truncf %61 : vector<16x256xf32> to vector<16x256xbf16>
    %c16_57 = arith.constant 16 : index
    %c512_58 = arith.constant 512 : index
    %63 = vector.load %arg7[%c16_57, %c512_58] : memref<32x2304xbf16, #tpu.memory_space<vmem>>, vector<16x256xbf16>
    tpu.vector_store %arg7[%c16_57, %c512_58], %62 {strides = array<i32>} : memref<32x2304xbf16, #tpu.memory_space<vmem>>, vector<16x256xbf16>,
    %c3_59 = arith.constant 3 : index
    %c0_60 = arith.constant 0 : index
    %c0_61 = arith.constant 0 : index
    %64 = vector.load %arg2[%c3_59, %c0_60, %c0_61] : memref<9x16x32xbf16, #tpu.memory_space<vmem>>, vector<1x16x32xbf16>
    %65 = vector.shape_cast %64 : vector<1x16x32xbf16> to vector<16x32xbf16>
    %cst_62 = arith.constant dense<0.000000e+00> : vector<16x256xf32>
    %66 = tpu.matmul %65, %48, %cst_62 {dimension_numbers = #tpu.dot_dimension_numbers<[1], [0], [0], [1], [0, 0, 1, 1], [], []>} : vector<16x32xbf16>, vector<32x256xbf16>, vector<16x256xf32> -> vector<16x256xf32>
    %67 = arith.truncf %66 : vector<16x256xf32> to vector<16x256xbf16>
    %c16_63 = arith.constant 16 : index
    %c768_64 = arith.constant 768 : index
    %68 = vector.load %arg7[%c16_63, %c768_64] : memref<32x2304xbf16, #tpu.memory_space<vmem>>, vector<16x256xbf16>
    tpu.vector_store %arg7[%c16_63, %c768_64], %67 {strides = array<i32>} : memref<32x2304xbf16, #tpu.memory_space<vmem>>, vector<16x256xbf16>,
    %c4_65 = arith.constant 4 : index
    %c0_66 = arith.constant 0 : index
    %c0_67 = arith.constant 0 : index
    %69 = vector.load %arg2[%c4_65, %c0_66, %c0_67] : memref<9x16x32xbf16, #tpu.memory_space<vmem>>, vector<1x16x32xbf16>
    %70 = vector.shape_cast %69 : vector<1x16x32xbf16> to vector<16x32xbf16>
    %cst_68 = arith.constant dense<0.000000e+00> : vector<16x256xf32>
    %71 = tpu.matmul %70, %48, %cst_68 {dimension_numbers = #tpu.dot_dimension_numbers<[1], [0], [0], [1], [0, 0, 1, 1], [], []>} : vector<16x32xbf16>, vector<32x256xbf16>, vector<16x256xf32> -> vector<16x256xf32>
    %72 = arith.truncf %71 : vector<16x256xf32> to vector<16x256xbf16>
    %c16_69 = arith.constant 16 : index
    %c1024_70 = arith.constant 1024 : index
    %73 = vector.load %arg7[%c16_69, %c1024_70] : memref<32x2304xbf16, #tpu.memory_space<vmem>>, vector<16x256xbf16>
    tpu.vector_store %arg7[%c16_69, %c1024_70], %72 {strides = array<i32>} : memref<32x2304xbf16, #tpu.memory_space<vmem>>, vector<16x256xbf16>,
    %c5_71 = arith.constant 5 : index
    %c0_72 = arith.constant 0 : index
    %c0_73 = arith.constant 0 : index
    %74 = vector.load %arg2[%c5_71, %c0_72, %c0_73] : memref<9x16x32xbf16, #tpu.memory_space<vmem>>, vector<1x16x32xbf16>
    %75 = vector.shape_cast %74 : vector<1x16x32xbf16> to vector<16x32xbf16>
    %cst_74 = arith.constant dense<0.000000e+00> : vector<16x256xf32>
    %76 = tpu.matmul %75, %48, %cst_74 {dimension_numbers = #tpu.dot_dimension_numbers<[1], [0], [0], [1], [0, 0, 1, 1], [], []>} : vector<16x32xbf16>, vector<32x256xbf16>, vector<16x256xf32> -> vector<16x256xf32>
    %77 = arith.truncf %76 : vector<16x256xf32> to vector<16x256xbf16>
    %c16_75 = arith.constant 16 : index
    %c1280_76 = arith.constant 1280 : index
    %78 = vector.load %arg7[%c16_75, %c1280_76] : memref<32x2304xbf16, #tpu.memory_space<vmem>>, vector<16x256xbf16>
    tpu.vector_store %arg7[%c16_75, %c1280_76], %77 {strides = array<i32>} : memref<32x2304xbf16, #tpu.memory_space<vmem>>, vector<16x256xbf16>,
    %c6_77 = arith.constant 6 : index
    %c0_78 = arith.constant 0 : index
    %c0_79 = arith.constant 0 : index
    %79 = vector.load %arg2[%c6_77, %c0_78, %c0_79] : memref<9x16x32xbf16, #tpu.memory_space<vmem>>, vector<1x16x32xbf16>
    %80 = vector.shape_cast %79 : vector<1x16x32xbf16> to vector<16x32xbf16>
    %cst_80 = arith.constant dense<0.000000e+00> : vector<16x256xf32>
    %81 = tpu.matmul %80, %48, %cst_80 {dimension_numbers = #tpu.dot_dimension_numbers<[1], [0], [0], [1], [0, 0, 1, 1], [], []>} : vector<16x32xbf16>, vector<32x256xbf16>, vector<16x256xf32> -> vector<16x256xf32>
    %82 = arith.truncf %81 : vector<16x256xf32> to vector<16x256xbf16>
    %c16_81 = arith.constant 16 : index
    %c1536_82 = arith.constant 1536 : index
    %83 = vector.load %arg7[%c16_81, %c1536_82] : memref<32x2304xbf16, #tpu.memory_space<vmem>>, vector<16x256xbf16>
    tpu.vector_store %arg7[%c16_81, %c1536_82], %82 {strides = array<i32>} : memref<32x2304xbf16, #tpu.memory_space<vmem>>, vector<16x256xbf16>,
    %c7_83 = arith.constant 7 : index
    %c0_84 = arith.constant 0 : index
    %c0_85 = arith.constant 0 : index
    %84 = vector.load %arg2[%c7_83, %c0_84, %c0_85] : memref<9x16x32xbf16, #tpu.memory_space<vmem>>, vector<1x16x32xbf16>
    %85 = vector.shape_cast %84 : vector<1x16x32xbf16> to vector<16x32xbf16>
    %cst_86 = arith.constant dense<0.000000e+00> : vector<16x256xf32>
    %86 = tpu.matmul %85, %48, %cst_86 {dimension_numbers = #tpu.dot_dimension_numbers<[1], [0], [0], [1], [0, 0, 1, 1], [], []>} : vector<16x32xbf16>, vector<32x256xbf16>, vector<16x256xf32> -> vector<16x256xf32>
    %87 = arith.truncf %86 : vector<16x256xf32> to vector<16x256xbf16>
    %c16_87 = arith.constant 16 : index
    %c1792_88 = arith.constant 1792 : index
    %88 = vector.load %arg7[%c16_87, %c1792_88] : memref<32x2304xbf16, #tpu.memory_space<vmem>>, vector<16x256xbf16>
    tpu.vector_store %arg7[%c16_87, %c1792_88], %87 {strides = array<i32>} : memref<32x2304xbf16, #tpu.memory_space<vmem>>, vector<16x256xbf16>,
    %c8_89 = arith.constant 8 : index
    %c0_90 = arith.constant 0 : index
    %c0_91 = arith.constant 0 : index
    %89 = vector.load %arg2[%c8_89, %c0_90, %c0_91] : memref<9x16x32xbf16, #tpu.memory_space<vmem>>, vector<1x16x32xbf16>
    %90 = vector.shape_cast %89 : vector<1x16x32xbf16> to vector<16x32xbf16>
    %cst_92 = arith.constant dense<0.000000e+00> : vector<16x256xf32>
    %91 = tpu.matmul %90, %48, %cst_92 {dimension_numbers = #tpu.dot_dimension_numbers<[1], [0], [0], [1], [0, 0, 1, 1], [], []>} : vector<16x32xbf16>, vector<32x256xbf16>, vector<16x256xf32> -> vector<16x256xf32>
    %92 = arith.truncf %91 : vector<16x256xf32> to vector<16x256xbf16>
    %c16_93 = arith.constant 16 : index
    %c2048_94 = arith.constant 2048 : index
    %93 = vector.load %arg7[%c16_93, %c2048_94] : memref<32x2304xbf16, #tpu.memory_space<vmem>>, vector<16x256xbf16>
    tpu.vector_store %arg7[%c16_93, %c2048_94], %92 {strides = array<i32>} : memref<32x2304xbf16, #tpu.memory_space<vmem>>, vector<16x256xbf16>,
    %c0_95 = arith.constant 0 : index
    %c0_96 = arith.constant 0 : index
    %94 = vector.load %arg7[%c0_95, %c0_96] : memref<32x2304xbf16, #tpu.memory_space<vmem>>, vector<32x2304xbf16>
    %c0_97 = arith.constant 0 : index
    %c0_98 = arith.constant 0 : index
    %95 = vector.load %arg3[%c0_97, %c0_98] : memref<2304x1024xbf16, #tpu.memory_space<vmem>>, vector<2304x1024xbf16>
    %cst_99 = arith.constant dense<0.000000e+00> : vector<32x1024xf32>
    %96 = tpu.matmul %94, %95, %cst_99 {dimension_numbers = #tpu.dot_dimension_numbers<[1], [0], [0], [1], [0, 0, 1, 1], [], []>} : vector<32x2304xbf16>, vector<2304x1024xbf16>, vector<32x1024xf32> -> vector<32x1024xf32>
    %c0_100 = arith.constant 0 : index
    %c0_101 = arith.constant 0 : index
    %97 = vector.load %arg4[%c0_100, %c0_101] : memref<32x1xf32, #tpu.memory_space<vmem>>, vector<32x1xf32>
    %98 = vector.broadcast %97 : vector<32x1xf32> to vector<32x1024xf32>
    %99 = arith.addf %96, %98 : vector<32x1024xf32>
    %cst_102 = arith.constant 0.000000e+00 : f32
    %100 = vector.broadcast %cst_102 : f32 to vector<32x1024xf32>
    %101 = arith.maximumf %99, %100 : vector<32x1024xf32>
    %c0_103 = arith.constant 0 : index
    %c0_104 = arith.constant 0 : index
    %102 = vector.load %arg5[%c0_103, %c0_104] : memref<32x1xf32, #tpu.memory_space<vmem>>, vector<32x1xf32>
    %cst_105 = arith.constant 0.000000e+00 : f32
    %103 = vector.broadcast %cst_105 : f32 to vector<32x1024xf32>
    %104 = arith.minimumf %99, %103 : vector<32x1024xf32>
    %105 = vector.broadcast %102 : vector<32x1xf32> to vector<32x1024xf32>
    %106 = arith.mulf %105, %104 : vector<32x1024xf32>
    %107 = arith.addf %101, %106 : vector<32x1024xf32>
    %c0_106 = arith.constant 0 : index
    %c0_107 = arith.constant 0 : index
    %108 = vector.load %arg6[%c0_106, %c0_107] : memref<32x1024xf32, #tpu.memory_space<vmem>>, vector<32x1024xf32>
    tpu.vector_store %arg6[%c0_106, %c0_107], %107 {strides = array<i32>} : memref<32x1024xf32, #tpu.memory_space<vmem>>, vector<32x1024xf32>,
    return
  }
  func.func @transform_0(%arg0: i32) -> (i32, i32, i32) {
    %c0_i32 = arith.constant 0 : i32
    %c0_i32_0 = arith.constant 0 : i32
    %c0_i32_1 = arith.constant 0 : i32
    return %arg0, %c0_i32, %c0_i32_0 : i32, i32, i32
  }
  func.func @transform_1(%arg0: i32) -> (i32, i32, i32) {
    %c0_i32 = arith.constant 0 : i32
    %c0_i32_0 = arith.constant 0 : i32
    %c0_i32_1 = arith.constant 0 : i32
    %c0_i32_2 = arith.constant 0 : i32
    return %c0_i32, %c0_i32_0, %c0_i32_1 : i32, i32, i32
  }
  func.func @transform_2(%arg0: i32) -> (i32, i32) {
    %c0_i32 = arith.constant 0 : i32
    %c0_i32_0 = arith.constant 0 : i32
    %c0_i32_1 = arith.constant 0 : i32
    return %c0_i32, %c0_i32_0 : i32, i32
  }
  func.func @transform_3(%arg0: i32) -> (i32, i32) {
    %c0_i32 = arith.constant 0 : i32
    %c0_i32_0 = arith.constant 0 : i32
    %c0_i32_1 = arith.constant 0 : i32
    return %c0_i32, %c0_i32_0 : i32, i32
  }
  func.func @transform_4(%arg0: i32) -> (i32, i32) {
    %c0_i32 = arith.constant 0 : i32
    %c0_i32_0 = arith.constant 0 : i32
    %c0_i32_1 = arith.constant 0 : i32
    return %c0_i32, %c0_i32_0 : i32, i32
  }
  func.func @transform_5(%arg0: i32) -> (i32, i32) {
    %c0_i32 = arith.constant 0 : i32
    %c0_i32_0 = arith.constant 0 : i32
    return %arg0, %c0_i32 : i32, i32
  }
}

</mosaic_0001>

<llo_original>
// kernel: tpu_custom_call.1
$region0: #{tpu_custom_call.1}
  #allocation0 [shape = 'u32[]', space=smem, size = 0x4, offset = 0x4, fixed_abs, tag = 'smem constant byte address 0x4 - core index']
  #allocation1 [shape = 'u32[144,128]{1,0:T(1,128)}', space=vmem, size = 0x12000, scoped, tag = 'internal scratch']
  #allocation2 [shape = 'bf16[32,2304]{1,0:T(16,128)(2,1)}', space=vmem, size = 0x24000, scoped, tag = 'scratch operand']
  %s0 = inlined_call_operand.hbm [shape: bf16[2,32,256], index: 0, kind: input, shape index: {}]
  %s1 = inlined_call_operand.hbm [shape: bf16[9,16,32], index: 1, kind: input, shape index: {}]
  %s2 = inlined_call_operand.hbm [shape: bf16[2304,1024], index: 2, kind: input, shape index: {}]
  %s3 = inlined_call_operand.vmem [shape: f32[32,1], index: 3, kind: input, shape index: {}]
  %s4 = inlined_call_operand.vmem [shape: f32[32,1], index: 4, kind: input, shape index: {}]
  %s5 = inlined_call_operand.hbm [shape: f32[32,1024], index: 5, kind: output, shape index: {}]
  %s6 = sld [smem:[#allocation0]]
  $region42: #{tpu_custom_call.1} parent=0
    _
  %s8 = ssub.s32 1, %s6
  %s9 = scalar_select 0, %s8, %s6
  $region1: #{tpu_custom_call.1} parent=0
    #allocation3 [shape = 'u8[32768]{0}', space=vmem, size = 0x8000, scoped, tag = 'input window, operand 0, single buffered']
    #allocation4 [shape = 's32[1]{0}', space=sflag, size = 0x4, scoped, tag = 'scoped memory for tpu_custom_call.1']
    #allocation5 [shape = 's32[1]{0}', space=sflag, size = 0x4, scoped, tag = 'scoped memory for tpu_custom_call.1']
    #allocation6 [shape = 'u8[36864]{0}', space=vmem, size = 0x9000, scoped, tag = 'input window, operand 1, single buffered']
    #allocation7 [shape = 's32[1]{0}', space=sflag, size = 0x4, scoped, tag = 'scoped memory for tpu_custom_call.1']
    #allocation8 [shape = 'u8[4718592]{0}', space=vmem, size = 0x480000, scoped, tag = 'input window, operand 2, single buffered']
    #allocation9 [shape = 'u8[131072]{0}', space=vmem, size = 0x20000, scoped, tag = 'output window, operand 0, single buffered']
    %10 = vsyncpa [#allocation4], 0
    %11 = vsyncpa [#allocation7], 0
    %12 = vsyncpa [#allocation5], 0
    // Predicated region
    $region2: #{tpu_custom_call.1} parent=1 // pred_check
      _
    $region3: #{tpu_custom_call.1} parent=1 // pred_check_branch
      %14 = sbr.rel (0) target = $region5
    $region4: #{tpu_custom_call.1} parent=1 // pred_region
      %s16 = ssub.s32 1024, 1024
      %17 = vsyncadd [#allocation4], %s16
      %s18 = sshll.u32 [#allocation3], 4
      %s19 = int_to_ptr.vmem [resolvable:$true] %s18
      %24 = dma.hbm_to_vmem [thread:$0]  %s0, 1024, %s19, [#allocation4], 128, 128, 8
    $region5: #{tpu_custom_call.1} parent=1 // pred_fallthru
      _
    // Predicated region
    $region6: #{tpu_custom_call.1} parent=1 // pred_check
      _
    $region7: #{tpu_custom_call.1} parent=1 // pred_check_branch
      %26 = sbr.rel (0) target = $region9
    $region8: #{tpu_custom_call.1} parent=1 // pred_region
      %s28 = ssub.s32 1152, 1152
      %29 = vsyncadd [#allocation7], %s28
      %s30 = sshll.u32 [#allocation6], 4
      %s31 = int_to_ptr.vmem [resolvable:$true] %s30
      %36 = dma.hbm_to_vmem [thread:$0]  %s1, 1152, %s31, [#allocation7], 64, 64, 4
    $region9: #{tpu_custom_call.1} parent=1 // pred_fallthru
      _
    // Predicated region
    $region10: #{tpu_custom_call.1} parent=1 // pred_check
      _
    $region11: #{tpu_custom_call.1} parent=1 // pred_check_branch
      %38 = sbr.rel (0) target = $region13
    $region12: #{tpu_custom_call.1} parent=1 // pred_region
      %s40 = ssub.s32 147456, 147456
      %41 = vsyncadd [#allocation7], %s40
      %s42 = sshll.u32 [#allocation8], 4
      %s43 = int_to_ptr.vmem [resolvable:$true] %s42
      %48 = dma.hbm_to_vmem [thread:$0]  %s2, 147456, %s43, [#allocation7], 512, 512, 32
    $region13: #{tpu_custom_call.1} parent=1 // pred_fallthru
      _
    // Predicated region
    $region14: #{tpu_custom_call.1} parent=1 // pred_check
      _
    $region15: #{tpu_custom_call.1} parent=1 // pred_check_branch
      %50 = sbr.rel (0) target = $region17
    $region16: #{tpu_custom_call.1} parent=1 // pred_region
      _
    $region17: #{tpu_custom_call.1} parent=1 // pred_fallthru
      _
    // Predicated region
    $region18: #{tpu_custom_call.1} parent=1 // pred_check
      _
    $region19: #{tpu_custom_call.1} parent=1 // pred_check_branch
      %52 = sbr.rel (0) target = $region21
    $region20: #{tpu_custom_call.1} parent=1 // pred_region
      _
    $region21: #{tpu_custom_call.1} parent=1 // pred_fallthru
      _
    // Predicated region
    $region22: #{tpu_custom_call.1} parent=1 // pred_check
      _
    $region23: #{tpu_custom_call.1} parent=1 // pred_check_branch
      %54 = sbr.rel (0) target = $region25
    $region24: #{tpu_custom_call.1} parent=1 // pred_region
      %55 = dma.done [#allocation4], 1024
    $region25: #{tpu_custom_call.1} parent=1 // pred_fallthru
      _
    // Predicated region
    $region26: #{tpu_custom_call.1} parent=1 // pred_check
      _
    $region27: #{tpu_custom_call.1} parent=1 // pred_check_branch
      %57 = sbr.rel (0) target = $region29
    $region28: #{tpu_custom_call.1} parent=1 // pred_region
      %58 = dma.done [#allocation7], 1152
    $region29: #{tpu_custom_call.1} parent=1 // pred_fallthru
      _
    // Predicated region
    $region30: #{tpu_custom_call.1} parent=1 // pred_check
      _
    $region31: #{tpu_custom_call.1} parent=1 // pred_check_branch
      %60 = sbr.rel (0) target = $region33
    $region32: #{tpu_custom_call.1} parent=1 // pred_region
      %61 = dma.done [#allocation7], 147456
    $region33: #{tpu_custom_call.1} parent=1 // pred_fallthru
      _
    %v63 = vld [vmem:[#allocation3] sm:$0xff]
    %v64 = vld [vmem:[#allocation3 + $0x8] sm:$0xff]
    %v65 = vld [vmem:[#allocation3 + $0x10] sm:$0xff]
    %v66 = vld [vmem:[#allocation3 + $0x18] sm:$0xff]
    %v67 = vld [vmem:[#allocation6] sm:$0xf]
    %v68 = vld [vmem:[#allocation6 + $0x4] sm:$0xf]
    %v71 = vunpack.c.l.b16 %v67
    %v72 = vunpack.c.l.b16 %v68
    %v73 = vpack.c.b16 %v72, %v71
    %v78 = vunpack.c.l.b16 %v63
    %v79 = vunpack.c.h.b16 %v63
    %v80 = vunpack.c.l.b16 %v64
    %v81 = vunpack.c.h.b16 %v64
    %v82 = vunpack.c.l.b16 %v65
    %v83 = vunpack.c.h.b16 %v65
    %v84 = vunpack.c.l.b16 %v66
    %v85 = vunpack.c.h.b16 %v66
    %v86 = vpack.c.b16 %v80, %v78
    %v87 = vpack.c.b16 %v81, %v79
    %v88 = vpack.c.b16 %v84, %v82
    %v89 = vpack.c.b16 %v85, %v83
    %vm94 = vcmask 261120
    %v96 = vsel %vm94, %v73, 0
    %98 = vmatprep.subr.bf16.mxu0 %v87
    %99 = vmatpush1.bf16.msra.mxu0 %v86
    %100 = vmatprep.subr.bf16.mxu0 %v89
    %101 = vmatpush1.bf16.msra.mxu0 %v88
    %102 = vmatprep.subr.bf16.mxu0 0
    %103 = vmatpush1.bf16.msra.mxu0 0
    %104 = vmatprep.subr.bf16.mxu0 0
    %105 = vmatpush1.bf16.msra.mxu0 0
    %106 = vmatprep.subr.bf16.mxu0 0
    %107 = vmatpush1.bf16.msra.mxu0 0
    %108 = vmatprep.subr.bf16.mxu0 0
    %109 = vmatpush1.bf16.msra.mxu0 0
    %110 = vmatprep.subr.bf16.mxu0 0
    %111 = vmatpush1.bf16.msra.mxu0 0
    %112 = vmatprep.subr.bf16.mxu0 0
    %113 = vmatpush1.bf16.msra.mxu0 0
    %114 = vmatprep.subr.bf16.mxu0 0
    %115 = vmatpush1.bf16.msra.mxu0 0
    %116 = vmatprep.subr.bf16.mxu0 0
    %117 = vmatpush1.bf16.msra.mxu0 0
    %118 = vmatprep.subr.bf16.mxu0 0
    %119 = vmatpush1.bf16.msra.mxu0 0
    %120 = vmatprep.subr.bf16.mxu0 0
    %121 = vmatpush1.bf16.msra.mxu0 0
    %122 = vmatprep.subr.bf16.mxu0 0
    %123 = vmatpush1.bf16.msra.mxu0 0
    %124 = vmatprep.subr.bf16.mxu0 0
    %125 = vmatpush1.bf16.msra.mxu0 0
    %126 = vmatprep.subr.bf16.mxu0 0
    %127 = vmatpush1.bf16.msra.mxu0 0
    %128 = vmatprep.subr.bf16.mxu0 0
    %129 = vmatpush1.bf16.msra.mxu0 0
    %130 = vmatprep.mubr.bf16.mxu0 0
    %131 = vmatmul.mubr.bf16.gmra.mrb[0].mxu0 %v96
    %v132 = vpop.f32.mrb[0].mxu0
    %v133 = vadd.f32 0.0, %v132
    %v134 = vpop.f32.mrb[0].mxu0
    %v135 = vadd.f32 0.0, %v134
    %v136 = vpop.f32.mrb[0].mxu0
    %v137 = vadd.f32 0.0, %v136
    %v138 = vpop.f32.mrb[0].mxu0
    %v139 = vadd.f32 0.0, %v138
    %140 = vdwg.mxu0
    %v141 = vpack.c.bf16 %v137, %v133
    %v142 = vpack.c.bf16 %v139, %v135
    %143 = vst [vmem:[#allocation2] sm:$0xff] %v141
    %144 = vst [vmem:[#allocation2 + $0x8] sm:$0xff] %v142
    %s145 = scalar_lea.vmem [#allocation6], 8
    %v146 = vld [vmem:[%s145] sm:$0xf]
    %v147 = vld [vmem:[%s145 + $0x4] sm:$0xf]
    %v150 = vunpack.c.l.b16 %v146
    %v151 = vunpack.c.l.b16 %v147
    %v152 = vpack.c.b16 %v151, %v150
    %v154 = vsel %vm94, %v152, 0
    %156 = vmatprep.subr.bf16.mxu0 %v87
    %157 = vmatpush1.bf16.msra.mxu0 %v86
    %158 = vmatprep.subr.bf16.mxu0 %v89
    %159 = vmatpush1.bf16.msra.mxu0 %v88
    %160 = vmatprep.subr.bf16.mxu0 0
    %161 = vmatpush1.bf16.msra.mxu0 0
    %162 = vmatprep.subr.bf16.mxu0 0
    %163 = vmatpush1.bf16.msra.mxu0 0
    %164 = vmatprep.subr.bf16.mxu0 0
    %165 = vmatpush1.bf16.msra.mxu0 0
    %166 = vmatprep.subr.bf16.mxu0 0
    %167 = vmatpush1.bf16.msra.mxu0 0
    %168 = vmatprep.subr.bf16.mxu0 0
    %169 = vmatpush1.bf16.msra.mxu0 0
    %170 = vmatprep.subr.bf16.mxu0 0
    %171 = vmatpush1.bf16.msra.mxu0 0
    %172 = vmatprep.subr.bf16.mxu0 0
    %173 = vmatpush1.bf16.msra.mxu0 0
    %174 = vmatprep.subr.bf16.mxu0 0
    %175 = vmatpush1.bf16.msra.mxu0 0
    %176 = vmatprep.subr.bf16.mxu0 0
    %177 = vmatpush1.bf16.msra.mxu0 0
    %178 = vmatprep.subr.bf16.mxu0 0
    %179 = vmatpush1.bf16.msra.mxu0 0
    %180 = vmatprep.subr.bf16.mxu0 0
    %181 = vmatpush1.bf16.msra.mxu0 0
    %182 = vmatprep.subr.bf16.mxu0 0
    %183 = vmatpush1.bf16.msra.mxu0 0
    %184 = vmatprep.subr.bf16.mxu0 0
    %185 = vmatpush1.bf16.msra.mxu0 0
    %186 = vmatprep.subr.bf16.mxu0 0
    %187 = vmatpush1.bf16.msra.mxu0 0
    %188 = vmatprep.mubr.bf16.mxu0 0
    %189 = vmatmul.mubr.bf16.gmra.mrb[0].mxu0 %v154
    %v190 = vpop.f32.mrb[0].mxu0
    %v191 = vadd.f32 0.0, %v190
    %v192 = vpop.f32.mrb[0].mxu0
    %v193 = vadd.f32 0.0, %v192
    %v194 = vpop.f32.mrb[0].mxu0
    %v195 = vadd.f32 0.0, %v194
    %v196 = vpop.f32.mrb[0].mxu0
    %v197 = vadd.f32 0.0, %v196
    %198 = vdwg.mxu0
    %v199 = vpack.c.bf16 %v195, %v191
    %v200 = vpack.c.bf16 %v197, %v193
    %201 = vst [vmem:[#allocation2 + $0x10] sm:$0xff] %v199
    %202 = vst [vmem:[#allocation2 + $0x18] sm:$0xff] %v200
    %s203 = scalar_lea.vmem [#allocation6], 16
    %v204 = vld [vmem:[%s203] sm:$0xf]
    %v205 = vld [vmem:[%s203 + $0x4] sm:$0xf]
    %v208 = vunpack.c.l.b16 %v204
    %v209 = vunpack.c.l.b16 %v205
    %v210 = vpack.c.b16 %v209, %v208
    %v212 = vsel %vm94, %v210, 0
    %214 = vmatprep.subr.bf16.mxu0 %v87
    %215 = vmatpush1.bf16.msra.mxu0 %v86
    %216 = vmatprep.subr.bf16.mxu0 %v89
    %217 = vmatpush1.bf16.msra.mxu0 %v88
    %218 = vmatprep.subr.bf16.mxu0 0
    %219 = vmatpush1.bf16.msra.mxu0 0
    %220 = vmatprep.subr.bf16.mxu0 0
    %221 = vmatpush1.bf16.msra.mxu0 0
    %222 = vmatprep.subr.bf16.mxu0 0
    %223 = vmatpush1.bf16.msra.mxu0 0
    %224 = vmatprep.subr.bf16.mxu0 0
    %225 = vmatpush1.bf16.msra.mxu0 0
    %226 = vmatprep.subr.bf16.mxu0 0
    %227 = vmatpush1.bf16.msra.mxu0 0
    %228 = vmatprep.subr.bf16.mxu0 0
    %229 = vmatpush1.bf16.msra.mxu0 0
    %230 = vmatprep.subr.bf16.mxu0 0
    %231 = vmatpush1.bf16.msra.mxu0 0
    %232 = vmatprep.subr.bf16.mxu0 0
    %233 = vmatpush1.bf16.msra.mxu0 0
    %234 = vmatprep.subr.bf16.mxu0 0
    %235 = vmatpush1.bf16.msra.mxu0 0
    %236 = vmatprep.subr.bf16.mxu0 0
    %237 = vmatpush1.bf16.msra.mxu0 0
    %238 = vmatprep.subr.bf16.mxu0 0
    %239 = vmatpush1.bf16.msra.mxu0 0
    %240 = vmatprep.subr.bf16.mxu0 0
    %241 = vmatpush1.bf16.msra.mxu0 0
    %242 = vmatprep.subr.bf16.mxu0 0
    %243 = vmatpush1.bf16.msra.mxu0 0
    %244 = vmatprep.subr.bf16.mxu0 0
    %245 = vmatpush1.bf16.msra.mxu0 0
    %246 = vmatprep.mubr.bf16.mxu0 0
    %247 = vmatmul.mubr.bf16.gmra.mrb[0].mxu0 %v212
    %v248 = vpop.f32.mrb[0].mxu0
    %v249 = vadd.f32 0.0, %v248
    %v250 = vpop.f32.mrb[0].mxu0
    %v251 = vadd.f32 0.0, %v250
    %v252 = vpop.f32.mrb[0].mxu0
    %v253 = vadd.f32 0.0, %v252
    %v254 = vpop.f32.mrb[0].mxu0
    %v255 = vadd.f32 0.0, %v254
    %256 = vdwg.mxu0
    %v257 = vpack.c.bf16 %v253, %v249
    %v258 = vpack.c.bf16 %v255, %v251
    %259 = vst [vmem:[#allocation2 + $0x20] sm:$0xff] %v257
    %260 = vst [vmem:[#allocation2 + $0x28] sm:$0xff] %v258
    %s261 = scalar_lea.vmem [#allocation6], 24
    %v262 = vld [vmem:[%s261] sm:$0xf]
    %v263 = vld [vmem:[%s261 + $0x4] sm:$0xf]
    %v266 = vunpack.c.l.b16 %v262
    %v267 = vunpack.c.l.b16 %v263
    %v268 = vpack.c.b16 %v267, %v266
    %v270 = vsel %vm94, %v268, 0
    %272 = vmatprep.subr.bf16.mxu0 %v87
    %273 = vmatpush1.bf16.msra.mxu0 %v86
    %274 = vmatprep.subr.bf16.mxu0 %v89
    %275 = vmatpush1.bf16.msra.mxu0 %v88
    %276 = vmatprep.subr.bf16.mxu0 0
    %277 = vmatpush1.bf16.msra.mxu0 0
    %278 = vmatprep.subr.bf16.mxu0 0
    %279 = vmatpush1.bf16.msra.mxu0 0
    %280 = vmatprep.subr.bf16.mxu0 0
    %281 = vmatpush1.bf16.msra.mxu0 0
    %282 = vmatprep.subr.bf16.mxu0 0
    %283 = vmatpush1.bf16.msra.mxu0 0
    %284 = vmatprep.subr.bf16.mxu0 0
    %285 = vmatpush1.bf16.msra.mxu0 0
    %286 = vmatprep.subr.bf16.mxu0 0
    %287 = vmatpush1.bf16.msra.mxu0 0
    %288 = vmatprep.subr.bf16.mxu0 0
    %289 = vmatpush1.bf16.msra.mxu0 0
    %290 = vmatprep.subr.bf16.mxu0 0
    %291 = vmatpush1.bf16.msra.mxu0 0
    %292 = vmatprep.subr.bf16.mxu0 0
    %293 = vmatpush1.bf16.msra.mxu0 0
    %294 = vmatprep.subr.bf16.mxu0 0
    %295 = vmatpush1.bf16.msra.mxu0 0
    %296 = vmatprep.subr.bf16.mxu0 0
    %297 = vmatpush1.bf16.msra.mxu0 0
    %298 = vmatprep.subr.bf16.mxu0 0
    %299 = vmatpush1.bf16.msra.mxu0 0
    %300 = vmatprep.subr.bf16.mxu0 0
    %301 = vmatpush1.bf16.msra.mxu0 0
    %302 = vmatprep.subr.bf16.mxu0 0
    %303 = vmatpush1.bf16.msra.mxu0 0
    %304 = vmatprep.mubr.bf16.mxu0 0
    %305 = vmatmul.mubr.bf16.gmra.mrb[0].mxu0 %v270
    %v306 = vpop.f32.mrb[0].mxu0
    %v307 = vadd.f32 0.0, %v306
    %v308 = vpop.f32.mrb[0].mxu0
    %v309 = vadd.f32 0.0, %v308
    %v310 = vpop.f32.mrb[0].mxu0
    %v311 = vadd.f32 0.0, %v310
    %v312 = vpop.f32.mrb[0].mxu0
    %v313 = vadd.f32 0.0, %v312
    %314 = vdwg.mxu0
    %v315 = vpack.c.bf16 %v311, %v307
    %v316 = vpack.c.bf16 %v313, %v309
    %317 = vst [vmem:[#allocation2 + $0x30] sm:$0xff] %v315
    %318 = vst [vmem:[#allocation2 + $0x38] sm:$0xff] %v316
    %s319 = scalar_lea.vmem [#allocation6], 32
    %v320 = vld [vmem:[%s319] sm:$0xf]
    %v321 = vld [vmem:[%s319 + $0x4] sm:$0xf]
    %v324 = vunpack.c.l.b16 %v320
    %v325 = vunpack.c.l.b16 %v321
    %v326 = vpack.c.b16 %v325, %v324
    %v328 = vsel %vm94, %v326, 0
    %330 = vmatprep.subr.bf16.mxu0 %v87
    %331 = vmatpush1.bf16.msra.mxu0 %v86
    %332 = vmatprep.subr.bf16.mxu0 %v89
    %333 = vmatpush1.bf16.msra.mxu0 %v88
    %334 = vmatprep.subr.bf16.mxu0 0
    %335 = vmatpush1.bf16.msra.mxu0 0
    %336 = vmatprep.subr.bf16.mxu0 0
    %337 = vmatpush1.bf16.msra.mxu0 0
    %338 = vmatprep.subr.bf16.mxu0 0
    %339 = vmatpush1.bf16.msra.mxu0 0
    %340 = vmatprep.subr.bf16.mxu0 0
    %341 = vmatpush1.bf16.msra.mxu0 0
    %342 = vmatprep.subr.bf16.mxu0 0
    %343 = vmatpush1.bf16.msra.mxu0 0
    %344 = vmatprep.subr.bf16.mxu0 0
    %345 = vmatpush1.bf16.msra.mxu0 0
    %346 = vmatprep.subr.bf16.mxu0 0
    %347 = vmatpush1.bf16.msra.mxu0 0
    %348 = vmatprep.subr.bf16.mxu0 0
    %349 = vmatpush1.bf16.msra.mxu0 0
    %350 = vmatprep.subr.bf16.mxu0 0
    %351 = vmatpush1.bf16.msra.mxu0 0
    %352 = vmatprep.subr.bf16.mxu0 0
    %353 = vmatpush1.bf16.msra.mxu0 0
    %354 = vmatprep.subr.bf16.mxu0 0
    %355 = vmatpush1.bf16.msra.mxu0 0
    %356 = vmatprep.subr.bf16.mxu0 0
    %357 = vmatpush1.bf16.msra.mxu0 0
    %358 = vmatprep.subr.bf16.mxu0 0
    %359 = vmatpush1.bf16.msra.mxu0 0
    %360 = vmatprep.subr.bf16.mxu0 0
    %361 = vmatpush1.bf16.msra.mxu0 0
    %362 = vmatprep.mubr.bf16.mxu0 0
    %363 = vmatmul.mubr.bf16.gmra.mrb[0].mxu0 %v328
    %v364 = vpop.f32.mrb[0].mxu0
    %v365 = vadd.f32 0.0, %v364
    %v366 = vpop.f32.mrb[0].mxu0
    %v367 = vadd.f32 0.0, %v366
    %v368 = vpop.f32.mrb[0].mxu0
    %v369 = vadd.f32 0.0, %v368
    %v370 = vpop.f32.mrb[0].mxu0
    %v371 = vadd.f32 0.0, %v370
    %372 = vdwg.mxu0
    %v373 = vpack.c.bf16 %v369, %v365
    %v374 = vpack.c.bf16 %v371, %v367
    %375 = vst [vmem:[#allocation2 + $0x40] sm:$0xff] %v373
    %376 = vst [vmem:[#allocation2 + $0x48] sm:$0xff] %v374
    %s377 = scalar_lea.vmem [#allocation6], 40
    %v378 = vld [vmem:[%s377] sm:$0xf]
    %v379 = vld [vmem:[%s377 + $0x4] sm:$0xf]
    %v382 = vunpack.c.l.b16 %v378
    %v383 = vunpack.c.l.b16 %v379
    %v384 = vpack.c.b16 %v383, %v382
    %v386 = vsel %vm94, %v384, 0
    %388 = vmatprep.subr.bf16.mxu0 %v87
    %389 = vmatpush1.bf16.msra.mxu0 %v86
    %390 = vmatprep.subr.bf16.mxu0 %v89
    %391 = vmatpush1.bf16.msra.mxu0 %v88
    %392 = vmatprep.subr.bf16.mxu0 0
    %393 = vmatpush1.bf16.msra.mxu0 0
    %394 = vmatprep.subr.bf16.mxu0 0
    %395 = vmatpush1.bf16.msra.mxu0 0
    %396 = vmatprep.subr.bf16.mxu0 0
    %397 = vmatpush1.bf16.msra.mxu0 0
    %398 = vmatprep.subr.bf16.mxu0 0
    %399 = vmatpush1.bf16.msra.mxu0 0
    %400 = vmatprep.subr.bf16.mxu0 0
    %401 = vmatpush1.bf16.msra.mxu0 0
    %402 = vmatprep.subr.bf16.mxu0 0
    %403 = vmatpush1.bf16.msra.mxu0 0
    %404 = vmatprep.subr.bf16.mxu0 0
    %405 = vmatpush1.bf16.msra.mxu0 0
    %406 = vmatprep.subr.bf16.mxu0 0
    %407 = vmatpush1.bf16.msra.mxu0 0
    %408 = vmatprep.subr.bf16.mxu0 0
    %409 = vmatpush1.bf16.msra.mxu0 0
    %410 = vmatprep.subr.bf16.mxu0 0
    %411 = vmatpush1.bf16.msra.mxu0 0
    %412 = vmatprep.subr.bf16.mxu0 0
    %413 = vmatpush1.bf16.msra.mxu0 0
    %414 = vmatprep.subr.bf16.mxu0 0
    %415 = vmatpush1.bf16.msra.mxu0 0
    %416 = vmatprep.subr.bf16.mxu0 0
    %417 = vmatpush1.bf16.msra.mxu0 0
    %418 = vmatprep.subr.bf16.mxu0 0
    %419 = vmatpush1.bf16.msra.mxu0 0
    %420 = vmatprep.mubr.bf16.mxu0 0
    %421 = vmatmul.mubr.bf16.gmra.mrb[0].mxu0 %v386
    %v422 = vpop.f32.mrb[0].mxu0
    %v423 = vadd.f32 0.0, %v422
    %v424 = vpop.f32.mrb[0].mxu0
    %v425 = vadd.f32 0.0, %v424
    %v426 = vpop.f32.mrb[0].mxu0
    %v427 = vadd.f32 0.0, %v426
    %v428 = vpop.f32.mrb[0].mxu0
    %v429 = vadd.f32 0.0, %v428
    %430 = vdwg.mxu0
    %v431 = vpack.c.bf16 %v427, %v423
    %v432 = vpack.c.bf16 %v429, %v425
    %433 = vst [vmem:[#allocation2 + $0x50] sm:$0xff] %v431
    %434 = vst [vmem:[#allocation2 + $0x58] sm:$0xff] %v432
    %s435 = scalar_lea.vmem [#allocation6], 48
    %v436 = vld [vmem:[%s435] sm:$0xf]
    %v437 = vld [vmem:[%s435 + $0x4] sm:$0xf]
    %v440 = vunpack.c.l.b16 %v436
    %v441 = vunpack.c.l.b16 %v437
    %v442 = vpack.c.b16 %v441, %v440
    %v444 = vsel %vm94, %v442, 0
    %446 = vmatprep.subr.bf16.mxu0 %v87
    %447 = vmatpush1.bf16.msra.mxu0 %v86
    %448 = vmatprep.subr.bf16.mxu0 %v89
    %449 = vmatpush1.bf16.msra.mxu0 %v88
    %450 = vmatprep.subr.bf16.mxu0 0
    %451 = vmatpush1.bf16.msra.mxu0 0
    %452 = vmatprep.subr.bf16.mxu0 0
    %453 = vmatpush1.bf16.msra.mxu0 0
    %454 = vmatprep.subr.bf16.mxu0 0
    %455 = vmatpush1.bf16.msra.mxu0 0
    %456 = vmatprep.subr.bf16.mxu0 0
    %457 = vmatpush1.bf16.msra.mxu0 0
    %458 = vmatprep.subr.bf16.mxu0 0
    %459 = vmatpush1.bf16.msra.mxu0 0
    %460 = vmatprep.subr.bf16.mxu0 0
    %461 = vmatpush1.bf16.msra.mxu0 0
    %462 = vmatprep.subr.bf16.mxu0 0
    %463 = vmatpush1.bf16.msra.mxu0 0
    %464 = vmatprep.subr.bf16.mxu0 0
    %465 = vmatpush1.bf16.msra.mxu0 0
    %466 = vmatprep.subr.bf16.mxu0 0
    %467 = vmatpush1.bf16.msra.mxu0 0
    %468 = vmatprep.subr.bf16.mxu0 0
    %469 = vmatpush1.bf16.msra.mxu0 0
    %470 = vmatprep.subr.bf16.mxu0 0
    %471 = vmatpush1.bf16.msra.mxu0 0
    %472 = vmatprep.subr.bf16.mxu0 0
    %473 = vmatpush1.bf16.msra.mxu0 0
    %474 = vmatprep.subr.bf16.mxu0 0
    %475 = vmatpush1.bf16.msra.mxu0 0
    %476 = vmatprep.subr.bf16.mxu0 0
    %477 = vmatpush1.bf16.msra.mxu0 0
    %478 = vmatprep.mubr.bf16.mxu0 0
    %479 = vmatmul.mubr.bf16.gmra.mrb[0].mxu0 %v444
    %v480 = vpop.f32.mrb[0].mxu0
    %v481 = vadd.f32 0.0, %v480
    %v482 = vpop.f32.mrb[0].mxu0
    %v483 = vadd.f32 0.0, %v482
    %v484 = vpop.f32.mrb[0].mxu0
    %v485 = vadd.f32 0.0, %v484
    %v486 = vpop.f32.mrb[0].mxu0
    %v487 = vadd.f32 0.0, %v486
    %488 = vdwg.mxu0
    %v489 = vpack.c.bf16 %v485, %v481
    %v490 = vpack.c.bf16 %v487, %v483
    %491 = vst [vmem:[#allocation2 + $0x60] sm:$0xff] %v489
    %492 = vst [vmem:[#allocation2 + $0x68] sm:$0xff] %v490
    %s493 = scalar_lea.vmem [#allocation6], 56
    %v494 = vld [vmem:[%s493] sm:$0xf]
    %v495 = vld [vmem:[%s493 + $0x4] sm:$0xf]
    %v498 = vunpack.c.l.b16 %v494
    %v499 = vunpack.c.l.b16 %v495
    %v500 = vpack.c.b16 %v499, %v498
    %v502 = vsel %vm94, %v500, 0
    %504 = vmatprep.subr.bf16.mxu0 %v87
    %505 = vmatpush1.bf16.msra.mxu0 %v86
    %506 = vmatprep.subr.bf16.mxu0 %v89
    %507 = vmatpush1.bf16.msra.mxu0 %v88
    %508 = vmatprep.subr.bf16.mxu0 0
    %509 = vmatpush1.bf16.msra.mxu0 0
    %510 = vmatprep.subr.bf16.mxu0 0
    %511 = vmatpush1.bf16.msra.mxu0 0
    %512 = vmatprep.subr.bf16.mxu0 0
    %513 = vmatpush1.bf16.msra.mxu0 0
    %514 = vmatprep.subr.bf16.mxu0 0
    %515 = vmatpush1.bf16.msra.mxu0 0
    %516 = vmatprep.subr.bf16.mxu0 0
    %517 = vmatpush1.bf16.msra.mxu0 0
    %518 = vmatprep.subr.bf16.mxu0 0
    %519 = vmatpush1.bf16.msra.mxu0 0
    %520 = vmatprep.subr.bf16.mxu0 0
    %521 = vmatpush1.bf16.msra.mxu0 0
    %522 = vmatprep.subr.bf16.mxu0 0
    %523 = vmatpush1.bf16.msra.mxu0 0
    %524 = vmatprep.subr.bf16.mxu0 0
    %525 = vmatpush1.bf16.msra.mxu0 0
    %526 = vmatprep.subr.bf16.mxu0 0
    %527 = vmatpush1.bf16.msra.mxu0 0
    %528 = vmatprep.subr.bf16.mxu0 0
    %529 = vmatpush1.bf16.msra.mxu0 0
    %530 = vmatprep.subr.bf16.mxu0 0
    %531 = vmatpush1.bf16.msra.mxu0 0
    %532 = vmatprep.subr.bf16.mxu0 0
    %533 = vmatpush1.bf16.msra.mxu0 0
    %534 = vmatprep.subr.bf16.mxu0 0
    %535 = vmatpush1.bf16.msra.mxu0 0
    %536 = vmatprep.mubr.bf16.mxu0 0
    %537 = vmatmul.mubr.bf16.gmra.mrb[0].mxu0 %v502
    %v538 = vpop.f32.mrb[0].mxu0
    %v539 = vadd.f32 0.0, %v538
    %v540 = vpop.f32.mrb[0].mxu0
    %v541 = vadd.f32 0.0, %v540
    %v542 = vpop.f32.mrb[0].mxu0
    %v543 = vadd.f32 0.0, %v542
    %v544 = vpop.f32.mrb[0].mxu0
    %v545 = vadd.f32 0.0, %v544
    %546 = vdwg.mxu0
    %v547 = vpack.c.bf16 %v543, %v539
    %v548 = vpack.c.bf16 %v545, %v541
    %549 = vst [vmem:[#allocation2 + $0x70] sm:$0xff] %v547
    %550 = vst [vmem:[#allocation2 + $0x78] sm:$0xff] %v548
    %s551 = scalar_lea.vmem [#allocation6], 64
    %v552 = vld [vmem:[%s551] sm:$0xf]
    %v553 = vld [vmem:[%s551 + $0x4] sm:$0xf]
    %v556 = vunpack.c.l.b16 %v552
    %v557 = vunpack.c.l.b16 %v553
    %v558 = vpack.c.b16 %v557, %v556
    %v560 = vsel %vm94, %v558, 0
    %562 = vmatprep.subr.bf16.mxu0 %v87
    %563 = vmatpush1.bf16.msra.mxu0 %v86
    %564 = vmatprep.subr.bf16.mxu0 %v89
    %565 = vmatpush1.bf16.msra.mxu0 %v88
    %566 = vmatprep.subr.bf16.mxu0 0
    %567 = vmatpush1.bf16.msra.mxu0 0
    %568 = vmatprep.subr.bf16.mxu0 0
    %569 = vmatpush1.bf16.msra.mxu0 0
    %570 = vmatprep.subr.bf16.mxu0 0
    %571 = vmatpush1.bf16.msra.mxu0 0
    %572 = vmatprep.subr.bf16.mxu0 0
    %573 = vmatpush1.bf16.msra.mxu0 0
    %574 = vmatprep.subr.bf16.mxu0 0
    %575 = vmatpush1.bf16.msra.mxu0 0
    %576 = vmatprep.subr.bf16.mxu0 0
    %577 = vmatpush1.bf16.msra.mxu0 0
    %578 = vmatprep.subr.bf16.mxu0 0
    %579 = vmatpush1.bf16.msra.mxu0 0
    %580 = vmatprep.subr.bf16.mxu0 0
    %581 = vmatpush1.bf16.msra.mxu0 0
    %582 = vmatprep.subr.bf16.mxu0 0
    %583 = vmatpush1.bf16.msra.mxu0 0
    %584 = vmatprep.subr.bf16.mxu0 0
    %585 = vmatpush1.bf16.msra.mxu0 0
    %586 = vmatprep.subr.bf16.mxu0 0
    %587 = vmatpush1.bf16.msra.mxu0 0
    %588 = vmatprep.subr.bf16.mxu0 0
    %589 = vmatpush1.bf16.msra.mxu0 0
    %590 = vmatprep.subr.bf16.mxu0 0
    %591 = vmatpush1.bf16.msra.mxu0 0
    %592 = vmatprep.subr.bf16.mxu0 0
    %593 = vmatpush1.bf16.msra.mxu0 0
    %594 = vmatprep.mubr.bf16.mxu0 0
    %595 = vmatmul.mubr.bf16.gmra.mrb[0].mxu0 %v560
    %v596 = vpop.f32.mrb[0].mxu0
    %v597 = vadd.f32 0.0, %v596
    %v598 = vpop.f32.mrb[0].mxu0
    %v599 = vadd.f32 0.0, %v598
    %v600 = vpop.f32.mrb[0].mxu0
    %v601 = vadd.f32 0.0, %v600
    %v602 = vpop.f32.mrb[0].mxu0
    %v603 = vadd.f32 0.0, %v602
    %604 = vdwg.mxu0
    %v605 = vpack.c.bf16 %v601, %v597
    %v606 = vpack.c.bf16 %v603, %v599
    %607 = vst [vmem:[#allocation2 + $0x80] sm:$0xff] %v605
    %608 = vst [vmem:[#allocation2 + $0x88] sm:$0xff] %v606
    %s609 = scalar_lea.vmem [#allocation3], 32
    %v610 = vld [vmem:[%s609] sm:$0xff]
    %v611 = vld [vmem:[%s609 + $0x8] sm:$0xff]
    %v612 = vld [vmem:[%s609 + $0x10] sm:$0xff]
    %v613 = vld [vmem:[%s609 + $0x18] sm:$0xff]
    %v614 = vld [vmem:[#allocation6] sm:$0xf]
    %v615 = vld [vmem:[#allocation6 + $0x4] sm:$0xf]
    %v618 = vunpack.c.l.b16 %v614
    %v619 = vunpack.c.l.b16 %v615
    %v620 = vpack.c.b16 %v619, %v618
    %v625 = vunpack.c.l.b16 %v610
    %v626 = vunpack.c.h.b16 %v610
    %v627 = vunpack.c.l.b16 %v611
    %v628 = vunpack.c.h.b16 %v611
    %v629 = vunpack.c.l.b16 %v612
    %v630 = vunpack.c.h.b16 %v612
    %v631 = vunpack.c.l.b16 %v613
    %v632 = vunpack.c.h.b16 %v613
    %v633 = vpack.c.b16 %v627, %v625
    %v634 = vpack.c.b16 %v628, %v626
    %v635 = vpack.c.b16 %v631, %v629
    %v636 = vpack.c.b16 %v632, %v630
    %v642 = vsel %vm94, %v620, 0
    %644 = vmatprep.subr.bf16.mxu0 %v634
    %645 = vmatpush1.bf16.msra.mxu0 %v633
    %646 = vmatprep.subr.bf16.mxu0 %v636
    %647 = vmatpush1.bf16.msra.mxu0 %v635
    %648 = vmatprep.subr.bf16.mxu0 0
    %649 = vmatpush1.bf16.msra.mxu0 0
    %650 = vmatprep.subr.bf16.mxu0 0
    %651 = vmatpush1.bf16.msra.mxu0 0
    %652 = vmatprep.subr.bf16.mxu0 0
    %653 = vmatpush1.bf16.msra.mxu0 0
    %654 = vmatprep.subr.bf16.mxu0 0
    %655 = vmatpush1.bf16.msra.mxu0 0
    %656 = vmatprep.subr.bf16.mxu0 0
    %657 = vmatpush1.bf16.msra.mxu0 0
    %658 = vmatprep.subr.bf16.mxu0 0
    %659 = vmatpush1.bf16.msra.mxu0 0
    %660 = vmatprep.subr.bf16.mxu0 0
    %661 = vmatpush1.bf16.msra.mxu0 0
    %662 = vmatprep.subr.bf16.mxu0 0
    %663 = vmatpush1.bf16.msra.mxu0 0
    %664 = vmatprep.subr.bf16.mxu0 0
    %665 = vmatpush1.bf16.msra.mxu0 0
    %666 = vmatprep.subr.bf16.mxu0 0
    %667 = vmatpush1.bf16.msra.mxu0 0
    %668 = vmatprep.subr.bf16.mxu0 0
    %669 = vmatpush1.bf16.msra.mxu0 0
    %670 = vmatprep.subr.bf16.mxu0 0
    %671 = vmatpush1.bf16.msra.mxu0 0
    %672 = vmatprep.subr.bf16.mxu0 0
    %673 = vmatpush1.bf16.msra.mxu0 0
    %674 = vmatprep.subr.bf16.mxu0 0
    %675 = vmatpush1.bf16.msra.mxu0 0
    %676 = vmatprep.mubr.bf16.mxu0 0
    %677 = vmatmul.mubr.bf16.gmra.mrb[0].mxu0 %v642
    %v678 = vpop.f32.mrb[0].mxu0
    %v679 = vadd.f32 0.0, %v678
    %v680 = vpop.f32.mrb[0].mxu0
    %v681 = vadd.f32 0.0, %v680
    %v682 = vpop.f32.mrb[0].mxu0
    %v683 = vadd.f32 0.0, %v682
    %v684 = vpop.f32.mrb[0].mxu0
    %v685 = vadd.f32 0.0, %v684
    %686 = vdwg.mxu0
    %v687 = vpack.c.bf16 %v683, %v679
    %v688 = vpack.c.bf16 %v685, %v681
    %689 = vst [vmem:[#allocation2 + $0x90] sm:$0xff] %v687
    %690 = vst [vmem:[#allocation2 + $0x98] sm:$0xff] %v688
    %v691 = vld [vmem:[%s145] sm:$0xf]
    %v692 = vld [vmem:[%s145 + $0x4] sm:$0xf]
    %v695 = vunpack.c.l.b16 %v691
    %v696 = vunpack.c.l.b16 %v692
    %v697 = vpack.c.b16 %v696, %v695
    %v699 = vsel %vm94, %v697, 0
    %701 = vmatprep.subr.bf16.mxu0 %v634
    %702 = vmatpush1.bf16.msra.mxu0 %v633
    %703 = vmatprep.subr.bf16.mxu0 %v636
    %704 = vmatpush1.bf16.msra.mxu0 %v635
    %705 = vmatprep.subr.bf16.mxu0 0
    %706 = vmatpush1.bf16.msra.mxu0 0
    %707 = vmatprep.subr.bf16.mxu0 0
    %708 = vmatpush1.bf16.msra.mxu0 0
    %709 = vmatprep.subr.bf16.mxu0 0
    %710 = vmatpush1.bf16.msra.mxu0 0
    %711 = vmatprep.subr.bf16.mxu0 0
    %712 = vmatpush1.bf16.msra.mxu0 0
    %713 = vmatprep.subr.bf16.mxu0 0
    %714 = vmatpush1.bf16.msra.mxu0 0
    %715 = vmatprep.subr.bf16.mxu0 0
    %716 = vmatpush1.bf16.msra.mxu0 0
    %717 = vmatprep.subr.bf16.mxu0 0
    %718 = vmatpush1.bf16.msra.mxu0 0
    %719 = vmatprep.subr.bf16.mxu0 0
    %720 = vmatpush1.bf16.msra.mxu0 0
    %721 = vmatprep.subr.bf16.mxu0 0
    %722 = vmatpush1.bf16.msra.mxu0 0
    %723 = vmatprep.subr.bf16.mxu0 0
    %724 = vmatpush1.bf16.msra.mxu0 0
    %725 = vmatprep.subr.bf16.mxu0 0
    %726 = vmatpush1.bf16.msra.mxu0 0
    %727 = vmatprep.subr.bf16.mxu0 0
    %728 = vmatpush1.bf16.msra.mxu0 0
    %729 = vmatprep.subr.bf16.mxu0 0
    %730 = vmatpush1.bf16.msra.mxu0 0
    %731 = vmatprep.subr.bf16.mxu0 0
    %732 = vmatpush1.bf16.msra.mxu0 0
    %733 = vmatprep.mubr.bf16.mxu0 0
    %734 = vmatmul.mubr.bf16.gmra.mrb[0].mxu0 %v699
    %v735 = vpop.f32.mrb[0].mxu0
    %v736 = vadd.f32 0.0, %v735
    %v737 = vpop.f32.mrb[0].mxu0
    %v738 = vadd.f32 0.0, %v737
    %v739 = vpop.f32.mrb[0].mxu0
    %v740 = vadd.f32 0.0, %v739
    %v741 = vpop.f32.mrb[0].mxu0
    %v742 = vadd.f32 0.0, %v741
    %743 = vdwg.mxu0
    %v744 = vpack.c.bf16 %v740, %v736
    %v745 = vpack.c.bf16 %v742, %v738
    %746 = vst [vmem:[#allocation2 + $0xa0] sm:$0xff] %v744
    %747 = vst [vmem:[#allocation2 + $0xa8] sm:$0xff] %v745
    %v748 = vld [vmem:[%s203] sm:$0xf]
    %v749 = vld [vmem:[%s203 + $0x4] sm:$0xf]
    %v752 = vunpack.c.l.b16 %v748
    %v753 = vunpack.c.l.b16 %v749
    %v754 = vpack.c.b16 %v753, %v752
    %v756 = vsel %vm94, %v754, 0
    %758 = vmatprep.subr.bf16.mxu0 %v634
    %759 = vmatpush1.bf16.msra.mxu0 %v633
    %760 = vmatprep.subr.bf16.mxu0 %v636
    %761 = vmatpush1.bf16.msra.mxu0 %v635
    %762 = vmatprep.subr.bf16.mxu0 0
    %763 = vmatpush1.bf16.msra.mxu0 0
    %764 = vmatprep.subr.bf16.mxu0 0
    %765 = vmatpush1.bf16.msra.mxu0 0
    %766 = vmatprep.subr.bf16.mxu0 0
    %767 = vmatpush1.bf16.msra.mxu0 0
    %768 = vmatprep.subr.bf16.mxu0 0
    %769 = vmatpush1.bf16.msra.mxu0 0
    %770 = vmatprep.subr.bf16.mxu0 0
    %771 = vmatpush1.bf16.msra.mxu0 0
    %772 = vmatprep.subr.bf16.mxu0 0
    %773 = vmatpush1.bf16.msra.mxu0 0
    %774 = vmatprep.subr.bf16.mxu0 0
    %775 = vmatpush1.bf16.msra.mxu0 0
    %776 = vmatprep.subr.bf16.mxu0 0
    %777 = vmatpush1.bf16.msra.mxu0 0
    %778 = vmatprep.subr.bf16.mxu0 0
    %779 = vmatpush1.bf16.msra.mxu0 0
    %780 = vmatprep.subr.bf16.mxu0 0
    %781 = vmatpush1.bf16.msra.mxu0 0
    %782 = vmatprep.subr.bf16.mxu0 0
    %783 = vmatpush1.bf16.msra.mxu0 0
    %784 = vmatprep.subr.bf16.mxu0 0
    %785 = vmatpush1.bf16.msra.mxu0 0
    %786 = vmatprep.subr.bf16.mxu0 0
    %787 = vmatpush1.bf16.msra.mxu0 0
    %788 = vmatprep.subr.bf16.mxu0 0
    %789 = vmatpush1.bf16.msra.mxu0 0
    %790 = vmatprep.mubr.bf16.mxu0 0
    %791 = vmatmul.mubr.bf16.gmra.mrb[0].mxu0 %v756
    %v792 = vpop.f32.mrb[0].mxu0
    %v793 = vadd.f32 0.0, %v792
    %v794 = vpop.f32.mrb[0].mxu0
    %v795 = vadd.f32 0.0, %v794
    %v796 = vpop.f32.mrb[0].mxu0
    %v797 = vadd.f32 0.0, %v796
    %v798 = vpop.f32.mrb[0].mxu0
    %v799 = vadd.f32 0.0, %v798
    %800 = vdwg.mxu0
    %v801 = vpack.c.bf16 %v797, %v793
    %v802 = vpack.c.bf16 %v799, %v795
    %803 = vst [vmem:[#allocation2 + $0xb0] sm:$0xff] %v801
    %804 = vst [vmem:[#allocation2 + $0xb8] sm:$0xff] %v802
    %v805 = vld [vmem:[%s261] sm:$0xf]
    %v806 = vld [vmem:[%s261 + $0x4] sm:$0xf]
    %v809 = vunpack.c.l.b16 %v805
    %v810 = vunpack.c.l.b16 %v806
    %v811 = vpack.c.b16 %v810, %v809
    %v813 = vsel %vm94, %v811, 0
    %815 = vmatprep.subr.bf16.mxu0 %v634
    %816 = vmatpush1.bf16.msra.mxu0 %v633
    %817 = vmatprep.subr.bf16.mxu0 %v636
    %818 = vmatpush1.bf16.msra.mxu0 %v635
    %819 = vmatprep.subr.bf16.mxu0 0
    %820 = vmatpush1.bf16.msra.mxu0 0
    %821 = vmatprep.subr.bf16.mxu0 0
    %822 = vmatpush1.bf16.msra.mxu0 0
    %823 = vmatprep.subr.bf16.mxu0 0
    %824 = vmatpush1.bf16.msra.mxu0 0
    %825 = vmatprep.subr.bf16.mxu0 0
    %826 = vmatpush1.bf16.msra.mxu0 0
    %827 = vmatprep.subr.bf16.mxu0 0
    %828 = vmatpush1.bf16.msra.mxu0 0
    %829 = vmatprep.subr.bf16.mxu0 0
    %830 = vmatpush1.bf16.msra.mxu0 0
    %831 = vmatprep.subr.bf16.mxu0 0
    %832 = vmatpush1.bf16.msra.mxu0 0
    %833 = vmatprep.subr.bf16.mxu0 0
    %834 = vmatpush1.bf16.msra.mxu0 0
    %835 = vmatprep.subr.bf16.mxu0 0
    %836 = vmatpush1.bf16.msra.mxu0 0
    %837 = vmatprep.subr.bf16.mxu0 0
    %838 = vmatpush1.bf16.msra.mxu0 0
    %839 = vmatprep.subr.bf16.mxu0 0
    %840 = vmatpush1.bf16.msra.mxu0 0
    %841 = vmatprep.subr.bf16.mxu0 0
    %842 = vmatpush1.bf16.msra.mxu0 0
    %843 = vmatprep.subr.bf16.mxu0 0
    %844 = vmatpush1.bf16.msra.mxu0 0
    %845 = vmatprep.subr.bf16.mxu0 0
    %846 = vmatpush1.bf16.msra.mxu0 0
    %847 = vmatprep.mubr.bf16.mxu0 0
    %848 = vmatmul.mubr.bf16.gmra.mrb[0].mxu0 %v813
    %v849 = vpop.f32.mrb[0].mxu0
    %v850 = vadd.f32 0.0, %v849
    %v851 = vpop.f32.mrb[0].mxu0
    %v852 = vadd.f32 0.0, %v851
    %v853 = vpop.f32.mrb[0].mxu0
    %v854 = vadd.f32 0.0, %v853
    %v855 = vpop.f32.mrb[0].mxu0
    %v856 = vadd.f32 0.0, %v855
    %857 = vdwg.mxu0
    %v858 = vpack.c.bf16 %v854, %v850
    %v859 = vpack.c.bf16 %v856, %v852
    %860 = vst [vmem:[#allocation2 + $0xc0] sm:$0xff] %v858
    %861 = vst [vmem:[#allocation2 + $0xc8] sm:$0xff] %v859
    %v862 = vld [vmem:[%s319] sm:$0xf]
    %v863 = vld [vmem:[%s319 + $0x4] sm:$0xf]
    %v866 = vunpack.c.l.b16 %v862
    %v867 = vunpack.c.l.b16 %v863
    %v868 = vpack.c.b16 %v867, %v866
    %v870 = vsel %vm94, %v868, 0
    %872 = vmatprep.subr.bf16.mxu0 %v634
    %873 = vmatpush1.bf16.msra.mxu0 %v633
    %874 = vmatprep.subr.bf16.mxu0 %v636
    %875 = vmatpush1.bf16.msra.mxu0 %v635
    %876 = vmatprep.subr.bf16.mxu0 0
    %877 = vmatpush1.bf16.msra.mxu0 0
    %878 = vmatprep.subr.bf16.mxu0 0
    %879 = vmatpush1.bf16.msra.mxu0 0
    %880 = vmatprep.subr.bf16.mxu0 0
    %881 = vmatpush1.bf16.msra.mxu0 0
    %882 = vmatprep.subr.bf16.mxu0 0
    %883 = vmatpush1.bf16.msra.mxu0 0
    %884 = vmatprep.subr.bf16.mxu0 0
    %885 = vmatpush1.bf16.msra.mxu0 0
    %886 = vmatprep.subr.bf16.mxu0 0
    %887 = vmatpush1.bf16.msra.mxu0 0
    %888 = vmatprep.subr.bf16.mxu0 0
    %889 = vmatpush1.bf16.msra.mxu0 0
    %890 = vmatprep.subr.bf16.mxu0 0
    %891 = vmatpush1.bf16.msra.mxu0 0
    %892 = vmatprep.subr.bf16.mxu0 0
    %893 = vmatpush1.bf16.msra.mxu0 0
    %894 = vmatprep.subr.bf16.mxu0 0
    %895 = vmatpush1.bf16.msra.mxu0 0
    %896 = vmatprep.subr.bf16.mxu0 0
    %897 = vmatpush1.bf16.msra.mxu0 0
    %898 = vmatprep.subr.bf16.mxu0 0
    %899 = vmatpush1.bf16.msra.mxu0 0
    %900 = vmatprep.subr.bf16.mxu0 0
    %901 = vmatpush1.bf16.msra.mxu0 0
    %902 = vmatprep.subr.bf16.mxu0 0
    %903 = vmatpush1.bf16.msra.mxu0 0
    %904 = vmatprep.mubr.bf16.mxu0 0
    %905 = vmatmul.mubr.bf16.gmra.mrb[0].mxu0 %v870
    %v906 = vpop.f32.mrb[0].mxu0
    %v907 = vadd.f32 0.0, %v906
    %v908 = vpop.f32.mrb[0].mxu0
    %v909 = vadd.f32 0.0, %v908
    %v910 = vpop.f32.mrb[0].mxu0
    %v911 = vadd.f32 0.0, %v910
    %v912 = vpop.f32.mrb[0].mxu0
    %v913 = vadd.f32 0.0, %v912
    %914 = vdwg.mxu0
    %v915 = vpack.c.bf16 %v911, %v907
    %v916 = vpack.c.bf16 %v913, %v909
    %917 = vst [vmem:[#allocation2 + $0xd0] sm:$0xff] %v915
    %918 = vst [vmem:[#allocation2 + $0xd8] sm:$0xff] %v916
    %v919 = vld [vmem:[%s377] sm:$0xf]
    %v920 = vld [vmem:[%s377 + $0x4] sm:$0xf]
    %v923 = vunpack.c.l.b16 %v919
    %v924 = vunpack.c.l.b16 %v920
    %v925 = vpack.c.b16 %v924, %v923
    %v927 = vsel %vm94, %v925, 0
    %929 = vmatprep.subr.bf16.mxu0 %v634
    %930 = vmatpush1.bf16.msra.mxu0 %v633
    %931 = vmatprep.subr.bf16.mxu0 %v636
    %932 = vmatpush1.bf16.msra.mxu0 %v635
    %933 = vmatprep.subr.bf16.mxu0 0
    %934 = vmatpush1.bf16.msra.mxu0 0
    %935 = vmatprep.subr.bf16.mxu0 0
    %936 = vmatpush1.bf16.msra.mxu0 0
    %937 = vmatprep.subr.bf16.mxu0 0
    %938 = vmatpush1.bf16.msra.mxu0 0
    %939 = vmatprep.subr.bf16.mxu0 0
    %940 = vmatpush1.bf16.msra.mxu0 0
    %941 = vmatprep.subr.bf16.mxu0 0
    %942 = vmatpush1.bf16.msra.mxu0 0
    %943 = vmatprep.subr.bf16.mxu0 0
    %944 = vmatpush1.bf16.msra.mxu0 0
    %945 = vmatprep.subr.bf16.mxu0 0
    %946 = vmatpush1.bf16.msra.mxu0 0
    %947 = vmatprep.subr.bf16.mxu0 0
    %948 = vmatpush1.bf16.msra.mxu0 0
    %949 = vmatprep.subr.bf16.mxu0 0
    %950 = vmatpush1.bf16.msra.mxu0 0
    %951 = vmatprep.subr.bf16.mxu0 0
    %952 = vmatpush1.bf16.msra.mxu0 0
    %953 = vmatprep.subr.bf16.mxu0 0
    %954 = vmatpush1.bf16.msra.mxu0 0
    %955 = vmatprep.subr.bf16.mxu0 0
    %956 = vmatpush1.bf16.msra.mxu0 0
    %957 = vmatprep.subr.bf16.mxu0 0
    %958 = vmatpush1.bf16.msra.mxu0 0
    %959 = vmatprep.subr.bf16.mxu0 0
    %960 = vmatpush1.bf16.msra.mxu0 0
    %961 = vmatprep.mubr.bf16.mxu0 0
    %962 = vmatmul.mubr.bf16.gmra.mrb[0].mxu0 %v927
    %v963 = vpop.f32.mrb[0].mxu0
    %v964 = vadd.f32 0.0, %v963
    %v965 = vpop.f32.mrb[0].mxu0
    %v966 = vadd.f32 0.0, %v965
    %v967 = vpop.f32.mrb[0].mxu0
    %v968 = vadd.f32 0.0, %v967
    %v969 = vpop.f32.mrb[0].mxu0
    %v970 = vadd.f32 0.0, %v969
    %971 = vdwg.mxu0
    %v972 = vpack.c.bf16 %v968, %v964
    %v973 = vpack.c.bf16 %v970, %v966
    %974 = vst [vmem:[#allocation2 + $0xe0] sm:$0xff] %v972
    %975 = vst [vmem:[#allocation2 + $0xe8] sm:$0xff] %v973
    %v976 = vld [vmem:[%s435] sm:$0xf]
    %v977 = vld [vmem:[%s435 + $0x4] sm:$0xf]
    %v980 = vunpack.c.l.b16 %v976
    %v981 = vunpack.c.l.b16 %v977
    %v982 = vpack.c.b16 %v981, %v980
    %v984 = vsel %vm94, %v982, 0
    %986 = vmatprep.subr.bf16.mxu0 %v634
    %987 = vmatpush1.bf16.msra.mxu0 %v633
    %988 = vmatprep.subr.bf16.mxu0 %v636
    %989 = vmatpush1.bf16.msra.mxu0 %v635
    %990 = vmatprep.subr.bf16.mxu0 0
    %991 = vmatpush1.bf16.msra.mxu0 0
    %992 = vmatprep.subr.bf16.mxu0 0
    %993 = vmatpush1.bf16.msra.mxu0 0
    %994 = vmatprep.subr.bf16.mxu0 0
    %995 = vmatpush1.bf16.msra.mxu0 0
    %996 = vmatprep.subr.bf16.mxu0 0
    %997 = vmatpush1.bf16.msra.mxu0 0
    %998 = vmatprep.subr.bf16.mxu0 0
    %999 = vmatpush1.bf16.msra.mxu0 0
    %1000 = vmatprep.subr.bf16.mxu0 0
    %1001 = vmatpush1.bf16.msra.mxu0 0
    %1002 = vmatprep.subr.bf16.mxu0 0
    %1003 = vmatpush1.bf16.msra.mxu0 0
    %1004 = vmatprep.subr.bf16.mxu0 0
    %1005 = vmatpush1.bf16.msra.mxu0 0
    %1006 = vmatprep.subr.bf16.mxu0 0
    %1007 = vmatpush1.bf16.msra.mxu0 0
    %1008 = vmatprep.subr.bf16.mxu0 0
    %1009 = vmatpush1.bf16.msra.mxu0 0
    %1010 = vmatprep.subr.bf16.mxu0 0
    %1011 = vmatpush1.bf16.msra.mxu0 0
    %1012 = vmatprep.subr.bf16.mxu0 0
    %1013 = vmatpush1.bf16.msra.mxu0 0
    %1014 = vmatprep.subr.bf16.mxu0 0
    %1015 = vmatpush1.bf16.msra.mxu0 0
    %1016 = vmatprep.subr.bf16.mxu0 0
    %1017 = vmatpush1.bf16.msra.mxu0 0
    %1018 = vmatprep.mubr.bf16.mxu0 0
    %1019 = vmatmul.mubr.bf16.gmra.mrb[0].mxu0 %v984
    %v1020 = vpop.f32.mrb[0].mxu0
    %v1021 = vadd.f32 0.0, %v1020
    %v1022 = vpop.f32.mrb[0].mxu0
    %v1023 = vadd.f32 0.0, %v1022
    %v1024 = vpop.f32.mrb[0].mxu0
    %v1025 = vadd.f32 0.0, %v1024
    %v1026 = vpop.f32.mrb[0].mxu0
    %v1027 = vadd.f32 0.0, %v1026
    %1028 = vdwg.mxu0
    %v1029 = vpack.c.bf16 %v1025, %v1021
    %v1030 = vpack.c.bf16 %v1027, %v1023
    %1031 = vst [vmem:[#allocation2 + $0xf0] sm:$0xff] %v1029
    %1032 = vst [vmem:[#allocation2 + $0xf8] sm:$0xff] %v1030
    %v1033 = vld [vmem:[%s493] sm:$0xf]
    %v1034 = vld [vmem:[%s493 + $0x4] sm:$0xf]
    %v1037 = vunpack.c.l.b16 %v1033
    %v1038 = vunpack.c.l.b16 %v1034
    %v1039 = vpack.c.b16 %v1038, %v1037
    %v1041 = vsel %vm94, %v1039, 0
    %1043 = vmatprep.subr.bf16.mxu0 %v634
    %1044 = vmatpush1.bf16.msra.mxu0 %v633
    %1045 = vmatprep.subr.bf16.mxu0 %v636
    %1046 = vmatpush1.bf16.msra.mxu0 %v635
    %1047 = vmatprep.subr.bf16.mxu0 0
    %1048 = vmatpush1.bf16.msra.mxu0 0
    %1049 = vmatprep.subr.bf16.mxu0 0
    %1050 = vmatpush1.bf16.msra.mxu0 0
    %1051 = vmatprep.subr.bf16.mxu0 0
    %1052 = vmatpush1.bf16.msra.mxu0 0
    %1053 = vmatprep.subr.bf16.mxu0 0
    %1054 = vmatpush1.bf16.msra.mxu0 0
    %1055 = vmatprep.subr.bf16.mxu0 0
    %1056 = vmatpush1.bf16.msra.mxu0 0
    %1057 = vmatprep.subr.bf16.mxu0 0
    %1058 = vmatpush1.bf16.msra.mxu0 0
    %1059 = vmatprep.subr.bf16.mxu0 0
    %1060 = vmatpush1.bf16.msra.mxu0 0
    %1061 = vmatprep.subr.bf16.mxu0 0
    %1062 = vmatpush1.bf16.msra.mxu0 0
    %1063 = vmatprep.subr.bf16.mxu0 0
    %1064 = vmatpush1.bf16.msra.mxu0 0
    %1065 = vmatprep.subr.bf16.mxu0 0
    %1066 = vmatpush1.bf16.msra.mxu0 0
    %1067 = vmatprep.subr.bf16.mxu0 0
    %1068 = vmatpush1.bf16.msra.mxu0 0
    %1069 = vmatprep.subr.bf16.mxu0 0
    %1070 = vmatpush1.bf16.msra.mxu0 0
    %1071 = vmatprep.subr.bf16.mxu0 0
    %1072 = vmatpush1.bf16.msra.mxu0 0
    %1073 = vmatprep.subr.bf16.mxu0 0
    %1074 = vmatpush1.bf16.msra.mxu0 0
    %1075 = vmatprep.mubr.bf16.mxu0 0
    %1076 = vmatmul.mubr.bf16.gmra.mrb[0].mxu0 %v1041
    %v1077 = vpop.f32.mrb[0].mxu0
    %v1078 = vadd.f32 0.0, %v1077
    %v1079 = vpop.f32.mrb[0].mxu0
    %v1080 = vadd.f32 0.0, %v1079
    %v1081 = vpop.f32.mrb[0].mxu0
    %v1082 = vadd.f32 0.0, %v1081
    %v1083 = vpop.f32.mrb[0].mxu0
    %v1084 = vadd.f32 0.0, %v1083
    %1085 = vdwg.mxu0
    %v1086 = vpack.c.bf16 %v1082, %v1078
    %v1087 = vpack.c.bf16 %v1084, %v1080
    %1088 = vst [vmem:[#allocation2 + $0x100] sm:$0xff] %v1086
    %1089 = vst [vmem:[#allocation2 + $0x108] sm:$0xff] %v1087
    %v1090 = vld [vmem:[%s551] sm:$0xf]
    %v1091 = vld [vmem:[%s551 + $0x4] sm:$0xf]
    %v1094 = vunpack.c.l.b16 %v1090
    %v1095 = vunpack.c.l.b16 %v1091
    %v1096 = vpack.c.b16 %v1095, %v1094
    %v1098 = vsel %vm94, %v1096, 0
    %1100 = vmatprep.subr.bf16.mxu0 %v634
    %1101 = vmatpush1.bf16.msra.mxu0 %v633
    %1102 = vmatprep.subr.bf16.mxu0 %v636
    %1103 = vmatpush1.bf16.msra.mxu0 %v635
    %1104 = vmatprep.subr.bf16.mxu0 0
    %1105 = vmatpush1.bf16.msra.mxu0 0
    %1106 = vmatprep.subr.bf16.mxu0 0
    %1107 = vmatpush1.bf16.msra.mxu0 0
    %1108 = vmatprep.subr.bf16.mxu0 0
    %1109 = vmatpush1.bf16.msra.mxu0 0
    %1110 = vmatprep.subr.bf16.mxu0 0
    %1111 = vmatpush1.bf16.msra.mxu0 0
    %1112 = vmatprep.subr.bf16.mxu0 0
    %1113 = vmatpush1.bf16.msra.mxu0 0
    %1114 = vmatprep.subr.bf16.mxu0 0
    %1115 = vmatpush1.bf16.msra.mxu0 0
    %1116 = vmatprep.subr.bf16.mxu0 0
    %1117 = vmatpush1.bf16.msra.mxu0 0
    %1118 = vmatprep.subr.bf16.mxu0 0
    %1119 = vmatpush1.bf16.msra.mxu0 0
    %1120 = vmatprep.subr.bf16.mxu0 0
    %1121 = vmatpush1.bf16.msra.mxu0 0
    %1122 = vmatprep.subr.bf16.mxu0 0
    %1123 = vmatpush1.bf16.msra.mxu0 0
    %1124 = vmatprep.subr.bf16.mxu0 0
    %1125 = vmatpush1.bf16.msra.mxu0 0
    %1126 = vmatprep.subr.bf16.mxu0 0
    %1127 = vmatpush1.bf16.msra.mxu0 0
    %1128 = vmatprep.subr.bf16.mxu0 0
    %1129 = vmatpush1.bf16.msra.mxu0 0
    %1130 = vmatprep.subr.bf16.mxu0 0
    %1131 = vmatpush1.bf16.msra.mxu0 0
    %1132 = vmatprep.mubr.bf16.mxu0 0
    %1133 = vmatmul.mubr.bf16.gmra.mrb[0].mxu0 %v1098
    %v1134 = vpop.f32.mrb[0].mxu0
    %v1135 = vadd.f32 0.0, %v1134
    %v1136 = vpop.f32.mrb[0].mxu0
    %v1137 = vadd.f32 0.0, %v1136
    %v1138 = vpop.f32.mrb[0].mxu0
    %v1139 = vadd.f32 0.0, %v1138
    %v1140 = vpop.f32.mrb[0].mxu0
    %v1141 = vadd.f32 0.0, %v1140
    %1142 = vdwg.mxu0
    %v1143 = vpack.c.bf16 %v1139, %v1135
    %v1144 = vpack.c.bf16 %v1141, %v1137
    %1145 = vst [vmem:[#allocation2 + $0x110] sm:$0xff] %v1143
    %1146 = vst [vmem:[#allocation2 + $0x118] sm:$0xff] %v1144
    %v1147 = vld [vmem:[#allocation2] sm:$0xff]
    %v1148 = vld [vmem:[#allocation2 + $0x8] sm:$0xff]
    %v1149 = vld [vmem:[#allocation2 + $0x10] sm:$0xff]
    %v1150 = vld [vmem:[#allocation2 + $0x18] sm:$0xff]
    %v1151 = vld [vmem:[#allocation2 + $0x20] sm:$0xff]
    %v1152 = vld [vmem:[#allocation2 + $0x28] sm:$0xff]
    %v1153 = vld [vmem:[#allocation2 + $0x30] sm:$0xff]
    %v1154 = vld [vmem:[#allocation2 + $0x38] sm:$0xff]
    %v1155 = vld [vmem:[#allocation2 + $0x40] sm:$0xff]
    %v1156 = vld [vmem:[#allocation2 + $0x48] sm:$0xff]
    %v1157 = vld [vmem:[#allocation2 + $0x50] sm:$0xff]
    %v1158 = vld [vmem:[#allocation2 + $0x58] sm:$0xff]
    %v1159 = vld [vmem:[#allocation2 + $0x60] sm:$0xff]
    %v1160 = vld [vmem:[#allocation2 + $0x68] sm:$0xff]
    %v1161 = vld [vmem:[#allocation2 + $0x70] sm:$0xff]
    %v1162 = vld [vmem:[#allocation2 + $0x78] sm:$0xff]
    %v1163 = vld [vmem:[#allocation2 + $0x80] sm:$0xff]
    %v1164 = vld [vmem:[#allocation2 + $0x88] sm:$0xff]
    %v1165 = vld [vmem:[#allocation2 + $0x90] sm:$0xff]
    %v1166 = vld [vmem:[#allocation2 + $0x98] sm:$0xff]
    %v1167 = vld [vmem:[#allocation2 + $0xa0] sm:$0xff]
    %v1168 = vld [vmem:[#allocation2 + $0xa8] sm:$0xff]
    %v1169 = vld [vmem:[#allocation2 + $0xb0] sm:$0xff]
    %v1170 = vld [vmem:[#allocation2 + $0xb8] sm:$0xff]
    %v1171 = vld [vmem:[#allocation2 + $0xc0] sm:$0xff]
    %v1172 = vld [vmem:[#allocation2 + $0xc8] sm:$0xff]
    %v1173 = vld [vmem:[#allocation2 + $0xd0] sm:$0xff]
    %v1174 = vld [vmem:[#allocation2 + $0xd8] sm:$0xff]
    %v1175 = vld [vmem:[#allocation2 + $0xe0] sm:$0xff]
    %v1176 = vld [vmem:[#allocation2 + $0xe8] sm:$0xff]
    %v1177 = vld [vmem:[#allocation2 + $0xf0] sm:$0xff]
    %v1178 = vld [vmem:[#allocation2 + $0xf8] sm:$0xff]
    %v1179 = vld [vmem:[#allocation2 + $0x100] sm:$0xff]
    %v1180 = vld [vmem:[#allocation2 + $0x108] sm:$0xff]
    %v1181 = vld [vmem:[#allocation2 + $0x110] sm:$0xff]
    %v1182 = vld [vmem:[#allocation2 + $0x118] sm:$0xff]
    %v1183 = vld [vmem:[#allocation8] sm:$0xff]
    %v1184 = vld [vmem:[#allocation8 + $0x8] sm:$0xff]
    %v1185 = vld [vmem:[#allocation8 + $0x10] sm:$0xff]
    %v1186 = vld [vmem:[#allocation8 + $0x18] sm:$0xff]
    %v1187 = vld [vmem:[#allocation8 + $0x20] sm:$0xff]
    %v1188 = vld [vmem:[#allocation8 + $0x28] sm:$0xff]
    %v1189 = vld [vmem:[#allocation8 + $0x30] sm:$0xff]
    %v1190 = vld [vmem:[#allocation8 + $0x38] sm:$0xff]
    %v1191 = vld [vmem:[#allocation8 + $0x40] sm:$0xff]
    %v1192 = vld [vmem:[#allocation8 + $0x48] sm:$0xff]
    %v1193 = vld [vmem:[#allocation8 + $0x50] sm:$0xff]
    %v1194 = vld [vmem:[#allocation8 + $0x58] sm:$0xff]
    %v1195 = vld [vmem:[#allocation8 + $0x60] sm:$0xff]
    %v1196 = vld [vmem:[#allocation8 + $0x68] sm:$0xff]
    %v1197 = vld [vmem:[#allocation8 + $0x70] sm:$0xff]
    %v1198 = vld [vmem:[#allocation8 + $0x78] sm:$0xff]
    %v1199 = vld [vmem:[#allocation8 + $0x80] sm:$0xff]
    %v1200 = vld [vmem:[#allocation8 + $0x88] sm:$0xff]
    %v1201 = vld [vmem:[#allocation8 + $0x90] sm:$0xff]
    %v1202 = vld [vmem:[#allocation8 + $0x98] sm:$0xff]
    %v1203 = vld [vmem:[#allocation8 + $0xa0] sm:$0xff]
    %v1204 = vld [vmem:[#allocation8 + $0xa8] sm:$0xff]
    %v1205 = vld [vmem:[#allocation8 + $0xb0] sm:$0xff]
    %v1206 = vld [vmem:[#allocation8 + $0xb8] sm:$0xff]
    %v1207 = vld [vmem:[#allocation8 + $0xc0] sm:$0xff]
    %v1208 = vld [vmem:[#allocation8 + $0xc8] sm:$0xff]
    %v1209 = vld [vmem:[#allocation8 + $0xd0] sm:$0xff]
    %v1210 = vld [vmem:[#allocation8 + $0xd8] sm:$0xff]
    %v1211 = vld [vmem:[#allocation8 + $0xe0] sm:$0xff]
    %v1212 = vld [vmem:[#allocation8 + $0xe8] sm:$0xff]
    %v1213 = vld [vmem:[#allocation8 + $0xf0] sm:$0xff]
    %v1214 = vld [vmem:[#allocation8 + $0xf8] sm:$0xff]
    %v1215 = vld [vmem:[#allocation8 + $0x100] sm:$0xff]
    %v1216 = vld [vmem:[#allocation8 + $0x108] sm:$0xff]
    %v1217 = vld [vmem:[#allocation8 + $0x110] sm:$0xff]
    %v1218 = vld [vmem:[#allocation8 + $0x118] sm:$0xff]
    %v1219 = vld [vmem:[#allocation8 + $0x120] sm:$0xff]
    %v1220 = vld [vmem:[#allocation8 + $0x128] sm:$0xff]
    %v1221 = vld [vmem:[#allocation8 + $0x130] sm:$0xff]
    %v1222 = vld [vmem:[#allocation8 + $0x138] sm:$0xff]
    %v1223 = vld [vmem:[#allocation8 + $0x140] sm:$0xff]
    %v1224 = vld [vmem:[#allocation8 + $0x148] sm:$0xff]
    %v1225 = vld [vmem:[#allocation8 + $0x150] sm:$0xff]
    %v1226 = vld [vmem:[#allocation8 + $0x158] sm:$0xff]
    %v1227 = vld [vmem:[#allocation8 + $0x160] sm:$0xff]
    %v1228 = vld [vmem:[#allocation8 + $0x168] sm:$0xff]
    %v1229 = vld [vmem:[#allocation8 + $0x170] sm:$0xff]
    %v1230 = vld [vmem:[#allocation8 + $0x178] sm:$0xff]
    %v1231 = vld [vmem:[#allocation8 + $0x180] sm:$0xff]
    %v1232 = vld [vmem:[#allocation8 + $0x188] sm:$0xff]
    %v1233 = vld [vmem:[#allocation8 + $0x190] sm:$0xff]
    %v1234 = vld [vmem:[#allocation8 + $0x198] sm:$0xff]
    %v1235 = vld [vmem:[#allocation8 + $0x1a0] sm:$0xff]
    %v1236 = vld [vmem:[#allocation8 + $0x1a8] sm:$0xff]
    %v1237 = vld [vmem:[#allocation8 + $0x1b0] sm:$0xff]
    %v1238 = vld [vmem:[#allocation8 + $0x1b8] sm:$0xff]
    %v1239 = vld [vmem:[#allocation8 + $0x1c0] sm:$0xff]
    %v1240 = vld [vmem:[#allocation8 + $0x1c8] sm:$0xff]
    %v1241 = vld [vmem:[#allocation8 + $0x1d0] sm:$0xff]
    %v1242 = vld [vmem:[#allocation8 + $0x1d8] sm:$0xff]
    %v1243 = vld [vmem:[#allocation8 + $0x1e0] sm:$0xff]
    %v1244 = vld [vmem:[#allocation8 + $0x1e8] sm:$0xff]
    %v1245 = vld [vmem:[#allocation8 + $0x1f0] sm:$0xff]
    %v1246 = vld [vmem:[#allocation8 + $0x1f8] sm:$0xff]
    %v1247 = vld [vmem:[#allocation8 + $0x200] sm:$0xff]
    %v1248 = vld [vmem:[#allocation8 + $0x208] sm:$0xff]
    %v1249 = vld [vmem:[#allocation8 + $0x210] sm:$0xff]
    %v1250 = vld [vmem:[#allocation8 + $0x218] sm:$0xff]
    %v1251 = vld [vmem:[#allocation8 + $0x220] sm:$0xff]
    %v1252 = vld [vmem:[#allocation8 + $0x228] sm:$0xff]
    %v1253 = vld [vmem:[#allocation8 + $0x230] sm:$0xff]
    %v1254 = vld [vmem:[#allocation8 + $0x238] sm:$0xff]
    %v1255 = vld [vmem:[#allocation8 + $0x240] sm:$0xff]
    %v1256 = vld [vmem:[#allocation8 + $0x248] sm:$0xff]
    %v1257 = vld [vmem:[#allocation8 + $0x250] sm:$0xff]
    %v1258 = vld [vmem:[#allocation8 + $0x258] sm:$0xff]
    %v1259 = vld [vmem:[#allocation8 + $0x260] sm:$0xff]
    %v1260 = vld [vmem:[#allocation8 + $0x268] sm:$0xff]
    %v1261 = vld [vmem:[#allocation8 + $0x270] sm:$0xff]
    %v1262 = vld [vmem:[#allocation8 + $0x278] sm:$0xff]
    %v1263 = vld [vmem:[#allocation8 + $0x280] sm:$0xff]
    %v1264 = vld [vmem:[#allocation8 + $0x288] sm:$0xff]
    %v1265 = vld [vmem:[#allocation8 + $0x290] sm:$0xff]
    %v1266 = vld [vmem:[#allocation8 + $0x298] sm:$0xff]
    %v1267 = vld [vmem:[#allocation8 + $0x2a0] sm:$0xff]
    %v1268 = vld [vmem:[#allocation8 + $0x2a8] sm:$0xff]
    %v1269 = vld [vmem:[#allocation8 + $0x2b0] sm:$0xff]
    %v1270 = vld [vmem:[#allocation8 + $0x2b8] sm:$0xff]
    %v1271 = vld [vmem:[#allocation8 + $0x2c0] sm:$0xff]
    %v1272 = vld [vmem:[#allocation8 + $0x2c8] sm:$0xff]
    %v1273 = vld [vmem:[#allocation8 + $0x2d0] sm:$0xff]
    %v1274 = vld [vmem:[#allocation8 + $0x2d8] sm:$0xff]
    %v1275 = vld [vmem:[#allocation8 + $0x2e0] sm:$0xff]
    %v1276 = vld [vmem:[#allocation8 + $0x2e8] sm:$0xff]
    %v1277 = vld [vmem:[#allocation8 + $0x2f0] sm:$0xff]
    %v1278 = vld [vmem:[#allocation8 + $0x2f8] sm:$0xff]
    %v1279 = vld [vmem:[#allocation8 + $0x300] sm:$0xff]
    %v1280 = vld [vmem:[#allocation8 + $0x308] sm:$0xff]
    %v1281 = vld [vmem:[#allocation8 + $0x310] sm:$0xff]
    %v1282 = vld [vmem:[#allocation8 + $0x318] sm:$0xff]
    %v1283 = vld [vmem:[#allocation8 + $0x320] sm:$0xff]
    %v1284 = vld [vmem:[#allocation8 + $0x328] sm:$0xff]
    %v1285 = vld [vmem:[#allocation8 + $0x330] sm:$0xff]
    %v1286 = vld [vmem:[#allocation8 + $0x338] sm:$0xff]
    %v1287 = vld [vmem:[#allocation8 + $0x340] sm:$0xff]
    %v1288 = vld [vmem:[#allocation8 + $0x348] sm:$0xff]
    %v1289 = vld [vmem:[#allocation8 + $0x350] sm:$0xff]
    %v1290 = vld [vmem:[#allocation8 + $0x358] sm:$0xff]
    %v1291 = vld [vmem:[#allocation8 + $0x360] sm:$0xff]
    %v1292 = vld [vmem:[#allocation8 + $0x368] sm:$0xff]
    %v1293 = vld [vmem:[#allocation8 + $0x370] sm:$0xff]
    %v1294 = vld [vmem:[#allocation8 + $0x378] sm:$0xff]
    %v1295 = vld [vmem:[#allocation8 + $0x380] sm:$0xff]
    %v1296 = vld [vmem:[#allocation8 + $0x388] sm:$0xff]
    %v1297 = vld [vmem:[#allocation8 + $0x390] sm:$0xff]
    %v1298 = vld [vmem:[#allocation8 + $0x398] sm:$0xff]
    %v1299 = vld [vmem:[#allocation8 + $0x3a0] sm:$0xff]
    %v1300 = vld [vmem:[#allocation8 + $0x3a8] sm:$0xff]
    %v1301 = vld [vmem:[#allocation8 + $0x3b0] sm:$0xff]
    %v1302 = vld [vmem:[#allocation8 + $0x3b8] sm:$0xff]
    %v1303 = vld [vmem:[#allocation8 + $0x3c0] sm:$0xff]
    %v1304 = vld [vmem:[#allocation8 + $0x3c8] sm:$0xff]
    %v1305 = vld [vmem:[#allocation8 + $0x3d0] sm:$0xff]
    %v1306 = vld [vmem:[#allocation8 + $0x3d8] sm:$0xff]
    %v1307 = vld [vmem:[#allocation8 + $0x3e0] sm:$0xff]
    %v1308 = vld [vmem:[#allocation8 + $0x3e8] sm:$0xff]
    %v1309 = vld [vmem:[#allocation8 + $0x3f0] sm:$0xff]
    %v1310 = vld [vmem:[#allocation8 + $0x3f8] sm:$0xff]
    %v1311 = vld [vmem:[#allocation8 + $0x400] sm:$0xff]
    %v1312 = vld [vmem:[#allocation8 + $0x408] sm:$0xff]
    %v1313 = vld [vmem:[#allocation8 + $0x410] sm:$0xff]
    %v1314 = vld [vmem:[#allocation8 + $0x418] sm:$0xff]
    %v1315 = vld [vmem:[#allocation8 + $0x420] sm:$0xff]
    %v1316 = vld [vmem:[#allocation8 + $0x428] sm:$0xff]
    %v1317 = vld [vmem:[#allocation8 + $0x430] sm:$0xff]
    %v1318 = vld [vmem:[#allocation8 + $0x438] sm:$0xff]
    %v1319 = vld [vmem:[#allocation8 + $0x440] sm:$0xff]
    %v1320 = vld [vmem:[#allocation8 + $0x448] sm:$0xff]
    %v1321 = vld [vmem:[#allocation8 + $0x450] sm:$0xff]
    %v1322 = vld [vmem:[#allocation8 + $0x458] sm:$0xff]
    %v1323 = vld [vmem:[#allocation8 + $0x460] sm:$0xff]
    %v1324 = vld [vmem:[#allocation8 + $0x468] sm:$0xff]
    %v1325 = vld [vmem:[#allocation8 + $0x470] sm:$0xff]
    %v1326 = vld [vmem:[#allocation8 + $0x478] sm:$0xff]
    %v1327 = vld [vmem:[#allocation8 + $0x480] sm:$0xff]
    %v1328 = vld [vmem:[#allocation8 + $0x488] sm:$0xff]
    %v1329 = vld [vmem:[#allocation8 + $0x490] sm:$0xff]
    %v1330 = vld [vmem:[#allocation8 + $0x498] sm:$0xff]
    %v1331 = vld [vmem:[#allocation8 + $0x4a0] sm:$0xff]
    %v1332 = vld [vmem:[#allocation8 + $0x4a8] sm:$0xff]
    %v1333 = vld [vmem:[#allocation8 + $0x4b0] sm:$0xff]
    %v1334 = vld [vmem:[#allocation8 + $0x4b8] sm:$0xff]
    %v1335 = vld [vmem:[#allocation8 + $0x4c0] sm:$0xff]
    %v1336 = vld [vmem:[#allocation8 + $0x4c8] sm:$0xff]
    %v1337 = vld [vmem:[#allocation8 + $0x4d0] sm:$0xff]
    %v1338 = vld [vmem:[#allocation8 + $0x4d8] sm:$0xff]
    %v1339 = vld [vmem:[#allocation8 + $0x4e0] sm:$0xff]
    %v1340 = vld [vmem:[#allocation8 + $0x4e8] sm:$0xff]
    %v1341 = vld [vmem:[#allocation8 + $0x4f0] sm:$0xff]
    %v1342 = vld [vmem:[#allocation8 + $0x4f8] sm:$0xff]
    %v1343 = vld [vmem:[#allocation8 + $0x500] sm:$0xff]
    %v1344 = vld [vmem:[#allocation8 + $0x508] sm:$0xff]
    %v1345 = vld [vmem:[#allocation8 + $0x510] sm:$0xff]
    %v1346 = vld [vmem:[#allocation8 + $0x518] sm:$0xff]
    %v1347 = vld [vmem:[#allocation8 + $0x520] sm:$0xff]
    %v1348 = vld [vmem:[#allocation8 + $0x528] sm:$0xff]
    %v1349 = vld [vmem:[#allocation8 + $0x530] sm:$0xff]
    %v1350 = vld [vmem:[#allocation8 + $0x538] sm:$0xff]
    %v1351 = vld [vmem:[#allocation8 + $0x540] sm:$0xff]
    %v1352 = vld [vmem:[#allocation8 + $0x548] sm:$0xff]
    %v1353 = vld [vmem:[#allocation8 + $0x550] sm:$0xff]
    %v1354 = vld [vmem:[#allocation8 + $0x558] sm:$0xff]
    %v1355 = vld [vmem:[#allocation8 + $0x560] sm:$0xff]
    %v1356 = vld [vmem:[#allocation8 + $0x568] sm:$0xff]
    %v1357 = vld [vmem:[#allocation8 + $0x570] sm:$0xff]
    %v1358 = vld [vmem:[#allocation8 + $0x578] sm:$0xff]
    %v1359 = vld [vmem:[#allocation8 + $0x580] sm:$0xff]
    %v1360 = vld [vmem:[#allocation8 + $0x588] sm:$0xff]
    %v1361 = vld [vmem:[#allocation8 + $0x590] sm:$0xff]
    %v1362 = vld [vmem:[#allocation8 + $0x598] sm:$0xff]
    %v1363 = vld [vmem:[#allocation8 + $0x5a0] sm:$0xff]
    %v1364 = vld [vmem:[#allocation8 + $0x5a8] sm:$0xff]
    %v1365 = vld [vmem:[#allocation8 + $0x5b0] sm:$0xff]
    %v1366 = vld [vmem:[#allocation8 + $0x5b8] sm:$0xff]
    %v1367 = vld [vmem:[#allocation8 + $0x5c0] sm:$0xff]
    %v1368 = vld [vmem:[#allocation8 + $0x5c8] sm:$0xff]
    %v1369 = vld [vmem:[#allocation8 + $0x5d0] sm:$0xff]
    %v1370 = vld [vmem:[#allocation8 + $0x5d8] sm:$0xff]
    %v1371 = vld [vmem:[#allocation8 + $0x5e0] sm:$0xff]
    %v1372 = vld [vmem:[#allocation8 + $0x5e8] sm:$0xff]
    %v1373 = vld [vmem:[#allocation8 + $0x5f0] sm:$0xff]
    %v1374 = vld [vmem:[#allocation8 + $0x5f8] sm:$0xff]
    %v1375 = vld [vmem:[#allocation8 + $0x600] sm:$0xff]
    %v1376 = vld [vmem:[#allocation8 + $0x608] sm:$0xff]
    %v1377 = vld [vmem:[#allocation8 + $0x610] sm:$0xff]
    %v1378 = vld [vmem:[#allocation8 + $0x618] sm:$0xff]
    %v1379 = vld [vmem:[#allocation8 + $0x620] sm:$0xff]
    %v1380 = vld [vmem:[#allocation8 + $0x628] sm:$0xff]
    %v1381 = vld [vmem:[#allocation8 + $0x630] sm:$0xff]
    %v1382 = vld [vmem:[#allocation8 + $0x638] sm:$0xff]
    %v1383 = vld [vmem:[#allocation8 + $0x640] sm:$0xff]
    %v1384 = vld [vmem:[#allocation8 + $0x648] sm:$0xff]
    %v1385 = vld [vmem:[#allocation8 + $0x650] sm:$0xff]
    %v1386 = vld [vmem:[#allocation8 + $0x658] sm:$0xff]
    %v1387 = vld [vmem:[#allocation8 + $0x660] sm:$0xff]
    %v1388 = vld [vmem:[#allocation8 + $0x668] sm:$0xff]
    %v1389 = vld [vmem:[#allocation8 + $0x670] sm:$0xff]
    %v1390 = vld [vmem:[#allocation8 + $0x678] sm:$0xff]
    %v1391 = vld [vmem:[#allocation8 + $0x680] sm:$0xff]
    %v1392 = vld [vmem:[#allocation8 + $0x688] sm:$0xff]
    %v1393 = vld [vmem:[#allocation8 + $0x690] sm:$0xff]
    %v1394 = vld [vmem:[#allocation8 + $0x698] sm:$0xff]
    %v1395 = vld [vmem:[#allocation8 + $0x6a0] sm:$0xff]
    %v1396 = vld [vmem:[#allocation8 + $0x6a8] sm:$0xff]
    %v1397 = vld [vmem:[#allocation8 + $0x6b0] sm:$0xff]
    %v1398 = vld [vmem:[#allocation8 + $0x6b8] sm:$0xff]
    %v1399 = vld [vmem:[#allocation8 + $0x6c0] sm:$0xff]
    %v1400 = vld [vmem:[#allocation8 + $0x6c8] sm:$0xff]
    %v1401 = vld [vmem:[#allocation8 + $0x6d0] sm:$0xff]
    %v1402 = vld [vmem:[#allocation8 + $0x6d8] sm:$0xff]
    %v1403 = vld [vmem:[#allocation8 + $0x6e0] sm:$0xff]
    %v1404 = vld [vmem:[#allocation8 + $0x6e8] sm:$0xff]
    %v1405 = vld [vmem:[#allocation8 + $0x6f0] sm:$0xff]
    %v1406 = vld [vmem:[#allocation8 + $0x6f8] sm:$0xff]
    %v1407 = vld [vmem:[#allocation8 + $0x700] sm:$0xff]
    %v1408 = vld [vmem:[#allocation8 + $0x708] sm:$0xff]
    %v1409 = vld [vmem:[#allocation8 + $0x710] sm:$0xff]
    %v1410 = vld [vmem:[#allocation8 + $0x718] sm:$0xff]
    %v1411 = vld [vmem:[#allocation8 + $0x720] sm:$0xff]
    %v1412 = vld [vmem:[#allocation8 + $0x728] sm:$0xff]
    %v1413 = vld [vmem:[#allocation8 + $0x730] sm:$0xff]
    %v1414 = vld [vmem:[#allocation8 + $0x738] sm:$0xff]
    %v1415 = vld [vmem:[#allocation8 + $0x740] sm:$0xff]
    %v1416 = vld [vmem:[#allocation8 + $0x748] sm:$0xff]
    %v1417 = vld [vmem:[#allocation8 + $0x750] sm:$0xff]
    %v1418 = vld [vmem:[#allocation8 + $0x758] sm:$0xff]
    %v1419 = vld [vmem:[#allocation8 + $0x760] sm:$0xff]
    %v1420 = vld [vmem:[#allocation8 + $0x768] sm:$0xff]
    %v1421 = vld [vmem:[#allocation8 + $0x770] sm:$0xff]
    %v1422 = vld [vmem:[#allocation8 + $0x778] sm:$0xff]
    %v1423 = vld [vmem:[#allocation8 + $0x780] sm:$0xff]
    %v1424 = vld [vmem:[#allocation8 + $0x788] sm:$0xff]
    %v1425 = vld [vmem:[#allocation8 + $0x790] sm:$0xff]
    %v1426 = vld [vmem:[#allocation8 + $0x798] sm:$0xff]
    %v1427 = vld [vmem:[#allocation8 + $0x7a0] sm:$0xff]
    %v1428 = vld [vmem:[#allocation8 + $0x7a8] sm:$0xff]
    %v1429 = vld [vmem:[#allocation8 + $0x7b0] sm:$0xff]
    %v1430 = vld [vmem:[#allocation8 + $0x7b8] sm:$0xff]
    %v1431 = vld [vmem:[#allocation8 + $0x7c0] sm:$0xff]
    %v1432 = vld [vmem:[#allocation8 + $0x7c8] sm:$0xff]
    %v1433 = vld [vmem:[#allocation8 + $0x7d0] sm:$0xff]
    %v1434 = vld [vmem:[#allocation8 + $0x7d8] sm:$0xff]
    %v1435 = vld [vmem:[#allocation8 + $0x7e0] sm:$0xff]
    %v1436 = vld [vmem:[#allocation8 + $0x7e8] sm:$0xff]
    %v1437 = vld [vmem:[#allocation8 + $0x7f0] sm:$0xff]
    %v1438 = vld [vmem:[#allocation8 + $0x7f8] sm:$0xff]
    %v1439 = vld [vmem:[#allocation8 + $0x800] sm:$0xff]
    %v1440 = vld [vmem:[#allocation8 + $0x808] sm:$0xff]
    %v1441 = vld [vmem:[#allocation8 + $0x810] sm:$0xff]
    %v1442 = vld [vmem:[#allocation8 + $0x818] sm:$0xff]
    %v1443 = vld [vmem:[#allocation8 + $0x820] sm:$0xff]
    %v1444 = vld [vmem:[#allocation8 + $0x828] sm:$0xff]
    %v1445 = vld [vmem:[#allocation8 + $0x830] sm:$0xff]
    %v1446 = vld [vmem:[#allocation8 + $0x838] sm:$0xff]
    %v1447 = vld [vmem:[#allocation8 + $0x840] sm:$0xff]
    %v1448 = vld [vmem:[#allocation8 + $0x848] sm:$0xff]
    %v1449 = vld [vmem:[#allocation8 + $0x850] sm:$0xff]
    %v1450 = vld [vmem:[#allocation8 + $0x858] sm:$0xff]
    %v1451 = vld [vmem:[#allocation8 + $0x860] sm:$0xff]
    %v1452 = vld [vmem:[#allocation8 + $0x868] sm:$0xff]
    %v1453 = vld [vmem:[#allocation8 + $0x870] sm:$0xff]
    %v1454 = vld [vmem:[#allocation8 + $0x878] sm:$0xff]
    %v1455 = vld [vmem:[#allocation8 + $0x880] sm:$0xff]
    %v1456 = vld [vmem:[#allocation8 + $0x888] sm:$0xff]
    %v1457 = vld [vmem:[#allocation8 + $0x890] sm:$0xff]
    %v1458 = vld [vmem:[#allocation8 + $0x898] sm:$0xff]
    %v1459 = vld [vmem:[#allocation8 + $0x8a0] sm:$0xff]
    %v1460 = vld [vmem:[#allocation8 + $0x8a8] sm:$0xff]
    %v1461 = vld [vmem:[#allocation8 + $0x8b0] sm:$0xff]
    %v1462 = vld [vmem:[#allocation8 + $0x8b8] sm:$0xff]
    %v1463 = vld [vmem:[#allocation8 + $0x8c0] sm:$0xff]
    %v1464 = vld [vmem:[#allocation8 + $0x8c8] sm:$0xff]
    %v1465 = vld [vmem:[#allocation8 + $0x8d0] sm:$0xff]
    %v1466 = vld [vmem:[#allocation8 + $0x8d8] sm:$0xff]
    %v1467 = vld [vmem:[#allocation8 + $0x8e0] sm:$0xff]
    %v1468 = vld [vmem:[#allocation8 + $0x8e8] sm:$0xff]
    %v1469 = vld [vmem:[#allocation8 + $0x8f0] sm:$0xff]
    %v1470 = vld [vmem:[#allocation8 + $0x8f8] sm:$0xff]
    %v1471 = vld [vmem:[#allocation8 + $0x900] sm:$0xff]
    %v1472 = vld [vmem:[#allocation8 + $0x908] sm:$0xff]
    %v1473 = vld [vmem:[#allocation8 + $0x910] sm:$0xff]
    %v1474 = vld [vmem:[#allocation8 + $0x918] sm:$0xff]
    %v1475 = vld [vmem:[#allocation8 + $0x920] sm:$0xff]
    %v1476 = vld [vmem:[#allocation8 + $0x928] sm:$0xff]
    %v1477 = vld [vmem:[#allocation8 + $0x930] sm:$0xff]
    %v1478 = vld [vmem:[#allocation8 + $0x938] sm:$0xff]
    %v1479 = vld [vmem:[#allocation8 + $0x940] sm:$0xff]
    %v1480 = vld [vmem:[#allocation8 + $0x948] sm:$0xff]
    %v1481 = vld [vmem:[#allocation8 + $0x950] sm:$0xff]
    %v1482 = vld [vmem:[#allocation8 + $0x958] sm:$0xff]
    %v1483 = vld [vmem:[#allocation8 + $0x960] sm:$0xff]
    %v1484 = vld [vmem:[#allocation8 + $0x968] sm:$0xff]
    %v1485 = vld [vmem:[#allocation8 + $0x970] sm:$0xff]
    %v1486 = vld [vmem:[#allocation8 + $0x978] sm:$0xff]
    %v1487 = vld [vmem:[#allocation8 + $0x980] sm:$0xff]
    %v1488 = vld [vmem:[#allocation8 + $0x988] sm:$0xff]
    %v1489 = vld [vmem:[#allocation8 + $0x990] sm:$0xff]
    %v1490 = vld [vmem:[#allocation8 + $0x998] sm:$0xff]
    %v1491 = vld [vmem:[#allocation8 + $0x9a0] sm:$0xff]
    %v1492 = vld [vmem:[#allocation8 + $0x9a8] sm:$0xff]
    %v1493 = vld [vmem:[#allocation8 + $0x9b0] sm:$0xff]
    %v1494 = vld [vmem:[#allocation8 + $0x9b8] sm:$0xff]
    %v1495 = vld [vmem:[#allocation8 + $0x9c0] sm:$0xff]
    %v1496 = vld [vmem:[#allocation8 + $0x9c8] sm:$0xff]
    %v1497 = vld [vmem:[#allocation8 + $0x9d0] sm:$0xff]
    %v1498 = vld [vmem:[#allocation8 + $0x9d8] sm:$0xff]
    %v1499 = vld [vmem:[#allocation8 + $0x9e0] sm:$0xff]
    %v1500 = vld [vmem:[#allocation8 + $0x9e8] sm:$0xff]
    %v1501 = vld [vmem:[#allocation8 + $0x9f0] sm:$0xff]
    %v1502 = vld [vmem:[#allocation8 + $0x9f8] sm:$0xff]
    %v1503 = vld [vmem:[#allocation8 + $0xa00] sm:$0xff]
    %v1504 = vld [vmem:[#allocation8 + $0xa08] sm:$0xff]
    %v1505 = vld [vmem:[#allocation8 + $0xa10] sm:$0xff]
    %v1506 = vld [vmem:[#allocation8 + $0xa18] sm:$0xff]
    %v1507 = vld [vmem:[#allocation8 + $0xa20] sm:$0xff]
    %v1508 = vld [vmem:[#allocation8 + $0xa28] sm:$0xff]
    %v1509 = vld [vmem:[#allocation8 + $0xa30] sm:$0xff]
    %v1510 = vld [vmem:[#allocation8 + $0xa38] sm:$0xff]
    %v1511 = vld [vmem:[#allocation8 + $0xa40] sm:$0xff]
    %v1512 = vld [vmem:[#allocation8 + $0xa48] sm:$0xff]
    %v1513 = vld [vmem:[#allocation8 + $0xa50] sm:$0xff]
    %v1514 = vld [vmem:[#allocation8 + $0xa58] sm:$0xff]
    %v1515 = vld [vmem:[#allocation8 + $0xa60] sm:$0xff]
    %v1516 = vld [vmem:[#allocation8 + $0xa68] sm:$0xff]
    %v1517 = vld [vmem:[#allocation8 + $0xa70] sm:$0xff]
    %v1518 = vld [vmem:[#allocation8 + $0xa78] sm:$0xff]
    %v1519 = vld [vmem:[#allocation8 + $0xa80] sm:$0xff]
    %v1520 = vld [vmem:[#allocation8 + $0xa88] sm:$0xff]
    %v1521 = vld [vmem:[#allocation8 + $0xa90] sm:$0xff]
    %v1522 = vld [vmem:[#allocation8 + $0xa98] sm:$0xff]
    %v1523 = vld [vmem:[#allocation8 + $0xaa0] sm:$0xff]
    %v1524 = vld [vmem:[#allocation8 + $0xaa8] sm:$0xff]
    %v1525 = vld [vmem:[#allocation8 + $0xab0] sm:$0xff]
    %v1526 = vld [vmem:[#allocation8 + $0xab8] sm:$0xff]
    %v1527 = vld [vmem:[#allocation8 + $0xac0] sm:$0xff]
    %v1528 = vld [vmem:[#allocation8 + $0xac8] sm:$0xff]
    %v1529 = vld [vmem:[#allocation8 + $0xad0] sm:$0xff]
    %v1530 = vld [vmem:[#allocation8 + $0xad8] sm:$0xff]
    %v1531 = vld [vmem:[#allocation8 + $0xae0] sm:$0xff]
    %v1532 = vld [vmem:[#allocation8 + $0xae8] sm:$0xff]
    %v1533 = vld [vmem:[#allocation8 + $0xaf0] sm:$0xff]
    %v1534 = vld [vmem:[#allocation8 + $0xaf8] sm:$0xff]
    %v1535 = vld [vmem:[#allocation8 + $0xb00] sm:$0xff]
    %v1536 = vld [vmem:[#allocation8 + $0xb08] sm:$0xff]
    %v1537 = vld [vmem:[#allocation8 + $0xb10] sm:$0xff]
    %v1538 = vld [vmem:[#allocation8 + $0xb18] sm:$0xff]
    %v1539 = vld [vmem:[#allocation8 + $0xb20] sm:$0xff]
    %v1540 = vld [vmem:[#allocation8 + $0xb28] sm:$0xff]
    %v1541 = vld [vmem:[#allocation8 + $0xb30] sm:$0xff]
    %v1542 = vld [vmem:[#allocation8 + $0xb38] sm:$0xff]
    %v1543 = vld [vmem:[#allocation8 + $0xb40] sm:$0xff]
    %v1544 = vld [vmem:[#allocation8 + $0xb48] sm:$0xff]
    %v1545 = vld [vmem:[#allocation8 + $0xb50] sm:$0xff]
    %v1546 = vld [vmem:[#allocation8 + $0xb58] sm:$0xff]
    %v1547 = vld [vmem:[#allocation8 + $0xb60] sm:$0xff]
    %v1548 = vld [vmem:[#allocation8 + $0xb68] sm:$0xff]
    %v1549 = vld [vmem:[#allocation8 + $0xb70] sm:$0xff]
    %v1550 = vld [vmem:[#allocation8 + $0xb78] sm:$0xff]
    %v1551 = vld [vmem:[#allocation8 + $0xb80] sm:$0xff]
    %v1552 = vld [vmem:[#allocation8 + $0xb88] sm:$0xff]
    %v1553 = vld [vmem:[#allocation8 + $0xb90] sm:$0xff]
    %v1554 = vld [vmem:[#allocation8 + $0xb98] sm:$0xff]
    %v1555 = vld [vmem:[#allocation8 + $0xba0] sm:$0xff]
    %v1556 = vld [vmem:[#allocation8 + $0xba8] sm:$0xff]
    %v1557 = vld [vmem:[#allocation8 + $0xbb0] sm:$0xff]
    %v1558 = vld [vmem:[#allocation8 + $0xbb8] sm:$0xff]
    %v1559 = vld [vmem:[#allocation8 + $0xbc0] sm:$0xff]
    %v1560 = vld [vmem:[#allocation8 + $0xbc8] sm:$0xff]
    %v1561 = vld [vmem:[#allocation8 + $0xbd0] sm:$0xff]
    %v1562 = vld [vmem:[#allocation8 + $0xbd8] sm:$0xff]
    %v1563 = vld [vmem:[#allocation8 + $0xbe0] sm:$0xff]
    %v1564 = vld [vmem:[#allocation8 + $0xbe8] sm:$0xff]
    %v1565 = vld [vmem:[#allocation8 + $0xbf0] sm:$0xff]
    %v1566 = vld [vmem:[#allocation8 + $0xbf8] sm:$0xff]
    %v1567 = vld [vmem:[#allocation8 + $0xc00] sm:$0xff]
    %v1568 = vld [vmem:[#allocation8 + $0xc08] sm:$0xff]
    %v1569 = vld [vmem:[#allocation8 + $0xc10] sm:$0xff]
    %v1570 = vld [vmem:[#allocation8 + $0xc18] sm:$0xff]
    %v1571 = vld [vmem:[#allocation8 + $0xc20] sm:$0xff]
    %v1572 = vld [vmem:[#allocation8 + $0xc28] sm:$0xff]
    %v1573 = vld [vmem:[#allocation8 + $0xc30] sm:$0xff]
    %v1574 = vld [vmem:[#allocation8 + $0xc38] sm:$0xff]
    %v1575 = vld [vmem:[#allocation8 + $0xc40] sm:$0xff]
    %v1576 = vld [vmem:[#allocation8 + $0xc48] sm:$0xff]
    %v1577 = vld [vmem:[#allocation8 + $0xc50] sm:$0xff]
    %v1578 = vld [vmem:[#allocation8 + $0xc58] sm:$0xff]
    %v1579 = vld [vmem:[#allocation8 + $0xc60] sm:$0xff]
    %v1580 = vld [vmem:[#allocation8 + $0xc68] sm:$0xff]
    %v1581 = vld [vmem:[#allocation8 + $0xc70] sm:$0xff]
    %v1582 = vld [vmem:[#allocation8 + $0xc78] sm:$0xff]
    %v1583 = vld [vmem:[#allocation8 + $0xc80] sm:$0xff]
    %v1584 = vld [vmem:[#allocation8 + $0xc88] sm:$0xff]
    %v1585 = vld [vmem:[#allocation8 + $0xc90] sm:$0xff]
    %v1586 = vld [vmem:[#allocation8 + $0xc98] sm:$0xff]
    %v1587 = vld [vmem:[#allocation8 + $0xca0] sm:$0xff]
    %v1588 = vld [vmem:[#allocation8 + $0xca8] sm:$0xff]
    %v1589 = vld [vmem:[#allocation8 + $0xcb0] sm:$0xff]
    %v1590 = vld [vmem:[#allocation8 + $0xcb8] sm:$0xff]
    %v1591 = vld [vmem:[#allocation8 + $0xcc0] sm:$0xff]
    %v1592 = vld [vmem:[#allocation8 + $0xcc8] sm:$0xff]
    %v1593 = vld [vmem:[#allocation8 + $0xcd0] sm:$0xff]
    %v1594 = vld [vmem:[#allocation8 + $0xcd8] sm:$0xff]
    %v1595 = vld [vmem:[#allocation8 + $0xce0] sm:$0xff]
    %v1596 = vld [vmem:[#allocation8 + $0xce8] sm:$0xff]
    %v1597 = vld [vmem:[#allocation8 + $0xcf0] sm:$0xff]
    %v1598 = vld [vmem:[#allocation8 + $0xcf8] sm:$0xff]
    %v1599 = vld [vmem:[#allocation8 + $0xd00] sm:$0xff]
    %v1600 = vld [vmem:[#allocation8 + $0xd08] sm:$0xff]
    %v1601 = vld [vmem:[#allocation8 + $0xd10] sm:$0xff]
    %v1602 = vld [vmem:[#allocation8 + $0xd18] sm:$0xff]
    %v1603 = vld [vmem:[#allocation8 + $0xd20] sm:$0xff]
    %v1604 = vld [vmem:[#allocation8 + $0xd28] sm:$0xff]
    %v1605 = vld [vmem:[#allocation8 + $0xd30] sm:$0xff]
    %v1606 = vld [vmem:[#allocation8 + $0xd38] sm:$0xff]
    %v1607 = vld [vmem:[#allocation8 + $0xd40] sm:$0xff]
    %v1608 = vld [vmem:[#allocation8 + $0xd48] sm:$0xff]
    %v1609 = vld [vmem:[#allocation8 + $0xd50] sm:$0xff]
    %v1610 = vld [vmem:[#allocation8 + $0xd58] sm:$0xff]
    %v1611 = vld [vmem:[#allocation8 + $0xd60] sm:$0xff]
    %v1612 = vld [vmem:[#allocation8 + $0xd68] sm:$0xff]
    %v1613 = vld [vmem:[#allocation8 + $0xd70] sm:$0xff]
    %v1614 = vld [vmem:[#allocation8 + $0xd78] sm:$0xff]
    %v1615 = vld [vmem:[#allocation8 + $0xd80] sm:$0xff]
    %v1616 = vld [vmem:[#allocation8 + $0xd88] sm:$0xff]
    %v1617 = vld [vmem:[#allocation8 + $0xd90] sm:$0xff]
    %v1618 = vld [vmem:[#allocation8 + $0xd98] sm:$0xff]
    %v1619 = vld [vmem:[#allocation8 + $0xda0] sm:$0xff]
    %v1620 = vld [vmem:[#allocation8 + $0xda8] sm:$0xff]
    %v1621 = vld [vmem:[#allocation8 + $0xdb0] sm:$0xff]
    %v1622 = vld [vmem:[#allocation8 + $0xdb8] sm:$0xff]
    %v1623 = vld [vmem:[#allocation8 + $0xdc0] sm:$0xff]
    %v1624 = vld [vmem:[#allocation8 + $0xdc8] sm:$0xff]
    %v1625 = vld [vmem:[#allocation8 + $0xdd0] sm:$0xff]
    %v1626 = vld [vmem:[#allocation8 + $0xdd8] sm:$0xff]
    %v1627 = vld [vmem:[#allocation8 + $0xde0] sm:$0xff]
    %v1628 = vld [vmem:[#allocation8 + $0xde8] sm:$0xff]
    %v1629 = vld [vmem:[#allocation8 + $0xdf0] sm:$0xff]
    %v1630 = vld [vmem:[#allocation8 + $0xdf8] sm:$0xff]
    %v1631 = vld [vmem:[#allocation8 + $0xe00] sm:$0xff]
    %v1632 = vld [vmem:[#allocation8 + $0xe08] sm:$0xff]
    %v1633 = vld [vmem:[#allocation8 + $0xe10] sm:$0xff]
    %v1634 = vld [vmem:[#allocation8 + $0xe18] sm:$0xff]
    %v1635 = vld [vmem:[#allocation8 + $0xe20] sm:$0xff]
    %v1636 = vld [vmem:[#allocation8 + $0xe28] sm:$0xff]
    %v1637 = vld [vmem:[#allocation8 + $0xe30] sm:$0xff]
    %v1638 = vld [vmem:[#allocation8 + $0xe38] sm:$0xff]
    %v1639 = vld [vmem:[#allocation8 + $0xe40] sm:$0xff]
    %v1640 = vld [vmem:[#allocation8 + $0xe48] sm:$0xff]
    %v1641 = vld [vmem:[#allocation8 + $0xe50] sm:$0xff]
    %v1642 = vld [vmem:[#allocation8 + $0xe58] sm:$0xff]
    %v1643 = vld [vmem:[#allocation8 + $0xe60] sm:$0xff]
    %v1644 = vld [vmem:[#allocation8 + $0xe68] sm:$0xff]
    %v1645 = vld [vmem:[#allocation8 + $0xe70] sm:$0xff]
    %v1646 = vld [vmem:[#allocation8 + $0xe78] sm:$0xff]
    %v1647 = vld [vmem:[#allocation8 + $0xe80] sm:$0xff]
    %v1648 = vld [vmem:[#allocation8 + $0xe88] sm:$0xff]
    %v1649 = vld [vmem:[#allocation8 + $0xe90] sm:$0xff]
    %v1650 = vld [vmem:[#allocation8 + $0xe98] sm:$0xff]
    %v1651 = vld [vmem:[#allocation8 + $0xea0] sm:$0xff]
    %v1652 = vld [vmem:[#allocation8 + $0xea8] sm:$0xff]
    %v1653 = vld [vmem:[#allocation8 + $0xeb0] sm:$0xff]
    %v1654 = vld [vmem:[#allocation8 + $0xeb8] sm:$0xff]
    %v1655 = vld [vmem:[#allocation8 + $0xec0] sm:$0xff]
    %v1656 = vld [vmem:[#allocation8 + $0xec8] sm:$0xff]
    %v1657 = vld [vmem:[#allocation8 + $0xed0] sm:$0xff]
    %v1658 = vld [vmem:[#allocation8 + $0xed8] sm:$0xff]
    %v1659 = vld [vmem:[#allocation8 + $0xee0] sm:$0xff]
    %v1660 = vld [vmem:[#allocation8 + $0xee8] sm:$0xff]
    %v1661 = vld [vmem:[#allocation8 + $0xef0] sm:$0xff]
    %v1662 = vld [vmem:[#allocation8 + $0xef8] sm:$0xff]
    %v1663 = vld [vmem:[#allocation8 + $0xf00] sm:$0xff]
    %v1664 = vld [vmem:[#allocation8 + $0xf08] sm:$0xff]
    %v1665 = vld [vmem:[#allocation8 + $0xf10] sm:$0xff]
    %v1666 = vld [vmem:[#allocation8 + $0xf18] sm:$0xff]
    %v1667 = vld [vmem:[#allocation8 + $0xf20] sm:$0xff]
    %v1668 = vld [vmem:[#allocation8 + $0xf28] sm:$0xff]
    %v1669 = vld [vmem:[#allocation8 + $0xf30] sm:$0xff]
    %v1670 = vld [vmem:[#allocation8 + $0xf38] sm:$0xff]
    %v1671 = vld [vmem:[#allocation8 + $0xf40] sm:$0xff]
    %v1672 = vld [vmem:[#allocation8 + $0xf48] sm:$0xff]
    %v1673 = vld [vmem:[#allocation8 + $0xf50] sm:$0xff]
    %v1674 = vld [vmem:[#allocation8 + $0xf58] sm:$0xff]
    %v1675 = vld [vmem:[#allocation8 + $0xf60] sm:$0xff]
    %v1676 = vld [vmem:[#allocation8 + $0xf68] sm:$0xff]
    %v1677 = vld [vmem:[#allocation8 + $0xf70] sm:$0xff]
    %v1678 = vld [vmem:[#allocation8 + $0xf78] sm:$0xff]
    %v1679 = vld [vmem:[#allocation8 + $0xf80] sm:$0xff]
    %v1680 = vld [vmem:[#allocation8 + $0xf88] sm:$0xff]
    %v1681 = vld [vmem:[#allocation8 + $0xf90] sm:$0xff]
    %v1682 = vld [vmem:[#allocation8 + $0xf98] sm:$0xff]
    %v1683 = vld [vmem:[#allocation8 + $0xfa0] sm:$0xff]
    %v1684 = vld [vmem:[#allocation8 + $0xfa8] sm:$0xff]
    %v1685 = vld [vmem:[#allocation8 + $0xfb0] sm:$0xff]
    %v1686 = vld [vmem:[#allocation8 + $0xfb8] sm:$0xff]
    %v1687 = vld [vmem:[#allocation8 + $0xfc0] sm:$0xff]
    %v1688 = vld [vmem:[#allocation8 + $0xfc8] sm:$0xff]
    %v1689 = vld [vmem:[#allocation8 + $0xfd0] sm:$0xff]
    %v1690 = vld [vmem:[#allocation8 + $0xfd8] sm:$0xff]
    %v1691 = vld [vmem:[#allocation8 + $0xfe0] sm:$0xff]
    %v1692 = vld [vmem:[#allocation8 + $0xfe8] sm:$0xff]
    %v1693 = vld [vmem:[#allocation8 + $0xff0] sm:$0xff]
    %v1694 = vld [vmem:[#allocation8 + $0xff8] sm:$0xff]
    %v1695 = vld [vmem:[#allocation8 + $0x1000] sm:$0xff]
    %v1696 = vld [vmem:[#allocation8 + $0x1008] sm:$0xff]
    %v1697 = vld [vmem:[#allocation8 + $0x1010] sm:$0xff]
    %v1698 = vld [vmem:[#allocation8 + $0x1018] sm:$0xff]
    %v1699 = vld [vmem:[#allocation8 + $0x1020] sm:$0xff]
    %v1700 = vld [vmem:[#allocation8 + $0x1028] sm:$0xff]
    %v1701 = vld [vmem:[#allocation8 + $0x1030] sm:$0xff]
    %v1702 = vld [vmem:[#allocation8 + $0x1038] sm:$0xff]
    %v1703 = vld [vmem:[#allocation8 + $0x1040] sm:$0xff]
    %v1704 = vld [vmem:[#allocation8 + $0x1048] sm:$0xff]
    %v1705 = vld [vmem:[#allocation8 + $0x1050] sm:$0xff]
    %v1706 = vld [vmem:[#allocation8 + $0x1058] sm:$0xff]
    %v1707 = vld [vmem:[#allocation8 + $0x1060] sm:$0xff]
    %v1708 = vld [vmem:[#allocation8 + $0x1068] sm:$0xff]
    %v1709 = vld [vmem:[#allocation8 + $0x1070] sm:$0xff]
    %v1710 = vld [vmem:[#allocation8 + $0x1078] sm:$0xff]
    %v1711 = vld [vmem:[#allocation8 + $0x1080] sm:$0xff]
    %v1712 = vld [vmem:[#allocation8 + $0x1088] sm:$0xff]
    %v1713 = vld [vmem:[#allocation8 + $0x1090] sm:$0xff]
    %v1714 = vld [vmem:[#allocation8 + $0x1098] sm:$0xff]
    %v1715 = vld [vmem:[#allocation8 + $0x10a0] sm:$0xff]
    %v1716 = vld [vmem:[#allocation8 + $0x10a8] sm:$0xff]
    %v1717 = vld [vmem:[#allocation8 + $0x10b0] sm:$0xff]
    %v1718 = vld [vmem:[#allocation8 + $0x10b8] sm:$0xff]
    %v1719 = vld [vmem:[#allocation8 + $0x10c0] sm:$0xff]
    %v1720 = vld [vmem:[#allocation8 + $0x10c8] sm:$0xff]
    %v1721 = vld [vmem:[#allocation8 + $0x10d0] sm:$0xff]
    %v1722 = vld [vmem:[#allocation8 + $0x10d8] sm:$0xff]
    %v1723 = vld [vmem:[#allocation8 + $0x10e0] sm:$0xff]
    %v1724 = vld [vmem:[#allocation8 + $0x10e8] sm:$0xff]
    %v1725 = vld [vmem:[#allocation8 + $0x10f0] sm:$0xff]
    %v1726 = vld [vmem:[#allocation8 + $0x10f8] sm:$0xff]
    %v1727 = vld [vmem:[#allocation8 + $0x1100] sm:$0xff]
    %v1728 = vld [vmem:[#allocation8 + $0x1108] sm:$0xff]
    %v1729 = vld [vmem:[#allocation8 + $0x1110] sm:$0xff]
    %v1730 = vld [vmem:[#allocation8 + $0x1118] sm:$0xff]
    %v1731 = vld [vmem:[#allocation8 + $0x1120] sm:$0xff]
    %v1732 = vld [vmem:[#allocation8 + $0x1128] sm:$0xff]
    %v1733 = vld [vmem:[#allocation8 + $0x1130] sm:$0xff]
    %v1734 = vld [vmem:[#allocation8 + $0x1138] sm:$0xff]
    %v1735 = vld [vmem:[#allocation8 + $0x1140] sm:$0xff]
    %v1736 = vld [vmem:[#allocation8 + $0x1148] sm:$0xff]
    %v1737 = vld [vmem:[#allocation8 + $0x1150] sm:$0xff]
    %v1738 = vld [vmem:[#allocation8 + $0x1158] sm:$0xff]
    %v1739 = vld [vmem:[#allocation8 + $0x1160] sm:$0xff]
    %v1740 = vld [vmem:[#allocation8 + $0x1168] sm:$0xff]
    %v1741 = vld [vmem:[#allocation8 + $0x1170] sm:$0xff]
    %v1742 = vld [vmem:[#allocation8 + $0x1178] sm:$0xff]
    %v1743 = vld [vmem:[#allocation8 + $0x1180] sm:$0xff]
    %v1744 = vld [vmem:[#allocation8 + $0x1188] sm:$0xff]
    %v1745 = vld [vmem:[#allocation8 + $0x1190] sm:$0xff]
    %v1746 = vld [vmem:[#allocation8 + $0x1198] sm:$0xff]
    %v1747 = vld [vmem:[#allocation8 + $0x11a0] sm:$0xff]
    %v1748 = vld [vmem:[#allocation8 + $0x11a8] sm:$0xff]
    %v1749 = vld [vmem:[#allocation8 + $0x11b0] sm:$0xff]
    %v1750 = vld [vmem:[#allocation8 + $0x11b8] sm:$0xff]
    %v1751 = vld [vmem:[#allocation8 + $0x11c0] sm:$0xff]
    %v1752 = vld [vmem:[#allocation8 + $0x11c8] sm:$0xff]
    %v1753 = vld [vmem:[#allocation8 + $0x11d0] sm:$0xff]
    %v1754 = vld [vmem:[#allocation8 + $0x11d8] sm:$0xff]
    %v1755 = vld [vmem:[#allocation8 + $0x11e0] sm:$0xff]
    %v1756 = vld [vmem:[#allocation8 + $0x11e8] sm:$0xff]
    %v1757 = vld [vmem:[#allocation8 + $0x11f0] sm:$0xff]
    %v1758 = vld [vmem:[#allocation8 + $0x11f8] sm:$0xff]
    %v1759 = vld [vmem:[#allocation8 + $0x1200] sm:$0xff]
    %v1760 = vld [vmem:[#allocation8 + $0x1208] sm:$0xff]
    %v1761 = vld [vmem:[#allocation8 + $0x1210] sm:$0xff]
    %v1762 = vld [vmem:[#allocation8 + $0x1218] sm:$0xff]
    %v1763 = vld [vmem:[#allocation8 + $0x1220] sm:$0xff]
    %v1764 = vld [vmem:[#allocation8 + $0x1228] sm:$0xff]
    %v1765 = vld [vmem:[#allocation8 + $0x1230] sm:$0xff]
    %v1766 = vld [vmem:[#allocation8 + $0x1238] sm:$0xff]
    %v1767 = vld [vmem:[#allocation8 + $0x1240] sm:$0xff]
    %v1768 = vld [vmem:[#allocation8 + $0x1248] sm:$0xff]
    %v1769 = vld [vmem:[#allocation8 + $0x1250] sm:$0xff]
    %v1770 = vld [vmem:[#allocation8 + $0x1258] sm:$0xff]
    %v1771 = vld [vmem:[#allocation8 + $0x1260] sm:$0xff]
    %v1772 = vld [vmem:[#allocation8 + $0x1268] sm:$0xff]
    %v1773 = vld [vmem:[#allocation8 + $0x1270] sm:$0xff]
    %v1774 = vld [vmem:[#allocation8 + $0x1278] sm:$0xff]
    %v1775 = vld [vmem:[#allocation8 + $0x1280] sm:$0xff]
    %v1776 = vld [vmem:[#allocation8 + $0x1288] sm:$0xff]
    %v1777 = vld [vmem:[#allocation8 + $0x1290] sm:$0xff]
    %v1778 = vld [vmem:[#allocation8 + $0x1298] sm:$0xff]
    %v1779 = vld [vmem:[#allocation8 + $0x12a0] sm:$0xff]
    %v1780 = vld [vmem:[#allocation8 + $0x12a8] sm:$0xff]
    %v1781 = vld [vmem:[#allocation8 + $0x12b0] sm:$0xff]
    %v1782 = vld [vmem:[#allocation8 + $0x12b8] sm:$0xff]
    %v1783 = vld [vmem:[#allocation8 + $0x12c0] sm:$0xff]
    %v1784 = vld [vmem:[#allocation8 + $0x12c8] sm:$0xff]
    %v1785 = vld [vmem:[#allocation8 + $0x12d0] sm:$0xff]
    %v1786 = vld [vmem:[#allocation8 + $0x12d8] sm:$0xff]
    %v1787 = vld [vmem:[#allocation8 + $0x12e0] sm:$0xff]
    %v1788 = vld [vmem:[#allocation8 + $0x12e8] sm:$0xff]
    %v1789 = vld [vmem:[#allocation8 + $0x12f0] sm:$0xff]
    %v1790 = vld [vmem:[#allocation8 + $0x12f8] sm:$0xff]
    %v1791 = vld [vmem:[#allocation8 + $0x1300] sm:$0xff]
    %v1792 = vld [vmem:[#allocation8 + $0x1308] sm:$0xff]
    %v1793 = vld [vmem:[#allocation8 + $0x1310] sm:$0xff]
    %v1794 = vld [vmem:[#allocation8 + $0x1318] sm:$0xff]
    %v1795 = vld [vmem:[#allocation8 + $0x1320] sm:$0xff]
    %v1796 = vld [vmem:[#allocation8 + $0x1328] sm:$0xff]
    %v1797 = vld [vmem:[#allocation8 + $0x1330] sm:$0xff]
    %v1798 = vld [vmem:[#allocation8 + $0x1338] sm:$0xff]
    %v1799 = vld [vmem:[#allocation8 + $0x1340] sm:$0xff]
    %v1800 = vld [vmem:[#allocation8 + $0x1348] sm:$0xff]
    %v1801 = vld [vmem:[#allocation8 + $0x1350] sm:$0xff]
    %v1802 = vld [vmem:[#allocation8 + $0x1358] sm:$0xff]
    %v1803 = vld [vmem:[#allocation8 + $0x1360] sm:$0xff]
    %v1804 = vld [vmem:[#allocation8 + $0x1368] sm:$0xff]
    %v1805 = vld [vmem:[#allocation8 + $0x1370] sm:$0xff]
    %v1806 = vld [vmem:[#allocation8 + $0x1378] sm:$0xff]
    %v1807 = vld [vmem:[#allocation8 + $0x1380] sm:$0xff]
    %v1808 = vld [vmem:[#allocation8 + $0x1388] sm:$0xff]
    %v1809 = vld [vmem:[#allocation8 + $0x1390] sm:$0xff]
    %v1810 = vld [vmem:[#allocation8 + $0x1398] sm:$0xff]
    %v1811 = vld [vmem:[#allocation8 + $0x13a0] sm:$0xff]
    %v1812 = vld [vmem:[#allocation8 + $0x13a8] sm:$0xff]
    %v1813 = vld [vmem:[#allocation8 + $0x13b0] sm:$0xff]
    %v1814 = vld [vmem:[#allocation8 + $0x13b8] sm:$0xff]
    %v1815 = vld [vmem:[#allocation8 + $0x13c0] sm:$0xff]
    %v1816 = vld [vmem:[#allocation8 + $0x13c8] sm:$0xff]
    %v1817 = vld [vmem:[#allocation8 + $0x13d0] sm:$0xff]
    %v1818 = vld [vmem:[#allocation8 + $0x13d8] sm:$0xff]
    %v1819 = vld [vmem:[#allocation8 + $0x13e0] sm:$0xff]
    %v1820 = vld [vmem:[#allocation8 + $0x13e8] sm:$0xff]
    %v1821 = vld [vmem:[#allocation8 + $0x13f0] sm:$0xff]
    %v1822 = vld [vmem:[#allocation8 + $0x13f8] sm:$0xff]
    %v1823 = vld [vmem:[#allocation8 + $0x1400] sm:$0xff]
    %v1824 = vld [vmem:[#allocation8 + $0x1408] sm:$0xff]
    %v1825 = vld [vmem:[#allocation8 + $0x1410] sm:$0xff]
    %v1826 = vld [vmem:[#allocation8 + $0x1418] sm:$0xff]
    %v1827 = vld [vmem:[#allocation8 + $0x1420] sm:$0xff]
    %v1828 = vld [vmem:[#allocation8 + $0x1428] sm:$0xff]
    %v1829 = vld [vmem:[#allocation8 + $0x1430] sm:$0xff]
    %v1830 = vld [vmem:[#allocation8 + $0x1438] sm:$0xff]
    %v1831 = vld [vmem:[#allocation8 + $0x1440] sm:$0xff]
    %v1832 = vld [vmem:[#allocation8 + $0x1448] sm:$0xff]
    %v1833 = vld [vmem:[#allocation8 + $0x1450] sm:$0xff]
    %v1834 = vld [vmem:[#allocation8 + $0x1458] sm:$0xff]
    %v1835 = vld [vmem:[#allocation8 + $0x1460] sm:$0xff]
    %v1836 = vld [vmem:[#allocation8 + $0x1468] sm:$0xff]
    %v1837 = vld [vmem:[#allocation8 + $0x1470] sm:$0xff]
    %v1838 = vld [vmem:[#allocation8 + $0x1478] sm:$0xff]
    %v1839 = vld [vmem:[#allocation8 + $0x1480] sm:$0xff]
    %v1840 = vld [vmem:[#allocation8 + $0x1488] sm:$0xff]
    %v1841 = vld [vmem:[#allocation8 + $0x1490] sm:$0xff]
    %v1842 = vld [vmem:[#allocation8 + $0x1498] sm:$0xff]
    %v1843 = vld [vmem:[#allocation8 + $0x14a0] sm:$0xff]
    %v1844 = vld [vmem:[#allocation8 + $0x14a8] sm:$0xff]
    %v1845 = vld [vmem:[#allocation8 + $0x14b0] sm:$0xff]
    %v1846 = vld [vmem:[#allocation8 + $0x14b8] sm:$0xff]
    %v1847 = vld [vmem:[#allocation8 + $0x14c0] sm:$0xff]
    %v1848 = vld [vmem:[#allocation8 + $0x14c8] sm:$0xff]
    %v1849 = vld [vmem:[#allocation8 + $0x14d0] sm:$0xff]
    %v1850 = vld [vmem:[#allocation8 + $0x14d8] sm:$0xff]
    %v1851 = vld [vmem:[#allocation8 + $0x14e0] sm:$0xff]
    %v1852 = vld [vmem:[#allocation8 + $0x14e8] sm:$0xff]
    %v1853 = vld [vmem:[#allocation8 + $0x14f0] sm:$0xff]
    %v1854 = vld [vmem:[#allocation8 + $0x14f8] sm:$0xff]
    %v1855 = vld [vmem:[#allocation8 + $0x1500] sm:$0xff]
    %v1856 = vld [vmem:[#allocation8 + $0x1508] sm:$0xff]
    %v1857 = vld [vmem:[#allocation8 + $0x1510] sm:$0xff]
    %v1858 = vld [vmem:[#allocation8 + $0x1518] sm:$0xff]
    %v1859 = vld [vmem:[#allocation8 + $0x1520] sm:$0xff]
    %v1860 = vld [vmem:[#allocation8 + $0x1528] sm:$0xff]
    %v1861 = vld [vmem:[#allocation8 + $0x1530] sm:$0xff]
    %v1862 = vld [vmem:[#allocation8 + $0x1538] sm:$0xff]
    %v1863 = vld [vmem:[#allocation8 + $0x1540] sm:$0xff]
    %v1864 = vld [vmem:[#allocation8 + $0x1548] sm:$0xff]
    %v1865 = vld [vmem:[#allocation8 + $0x1550] sm:$0xff]
    %v1866 = vld [vmem:[#allocation8 + $0x1558] sm:$0xff]
    %v1867 = vld [vmem:[#allocation8 + $0x1560] sm:$0xff]
    %v1868 = vld [vmem:[#allocation8 + $0x1568] sm:$0xff]
    %v1869 = vld [vmem:[#allocation8 + $0x1570] sm:$0xff]
    %v1870 = vld [vmem:[#allocation8 + $0x1578] sm:$0xff]
    %v1871 = vld [vmem:[#allocation8 + $0x1580] sm:$0xff]
    %v1872 = vld [vmem:[#allocation8 + $0x1588] sm:$0xff]
    %v1873 = vld [vmem:[#allocation8 + $0x1590] sm:$0xff]
    %v1874 = vld [vmem:[#allocation8 + $0x1598] sm:$0xff]
    %v1875 = vld [vmem:[#allocation8 + $0x15a0] sm:$0xff]
    %v1876 = vld [vmem:[#allocation8 + $0x15a8] sm:$0xff]
    %v1877 = vld [vmem:[#allocation8 + $0x15b0] sm:$0xff]
    %v1878 = vld [vmem:[#allocation8 + $0x15b8] sm:$0xff]
    %v1879 = vld [vmem:[#allocation8 + $0x15c0] sm:$0xff]
    %v1880 = vld [vmem:[#allocation8 + $0x15c8] sm:$0xff]
    %v1881 = vld [vmem:[#allocation8 + $0x15d0] sm:$0xff]
    %v1882 = vld [vmem:[#allocation8 + $0x15d8] sm:$0xff]
    %v1883 = vld [vmem:[#allocation8 + $0x15e0] sm:$0xff]
    %v1884 = vld [vmem:[#allocation8 + $0x15e8] sm:$0xff]
    %v1885 = vld [vmem:[#allocation8 + $0x15f0] sm:$0xff]
    %v1886 = vld [vmem:[#allocation8 + $0x15f8] sm:$0xff]
    %v1887 = vld [vmem:[#allocation8 + $0x1600] sm:$0xff]
    %v1888 = vld [vmem:[#allocation8 + $0x1608] sm:$0xff]
    %v1889 = vld [vmem:[#allocation8 + $0x1610] sm:$0xff]
    %v1890 = vld [vmem:[#allocation8 + $0x1618] sm:$0xff]
    %v1891 = vld [vmem:[#allocation8 + $0x1620] sm:$0xff]
    %v1892 = vld [vmem:[#allocation8 + $0x1628] sm:$0xff]
    %v1893 = vld [vmem:[#allocation8 + $0x1630] sm:$0xff]
    %v1894 = vld [vmem:[#allocation8 + $0x1638] sm:$0xff]
    %v1895 = vld [vmem:[#allocation8 + $0x1640] sm:$0xff]
    %v1896 = vld [vmem:[#allocation8 + $0x1648] sm:$0xff]
    %v1897 = vld [vmem:[#allocation8 + $0x1650] sm:$0xff]
    %v1898 = vld [vmem:[#allocation8 + $0x1658] sm:$0xff]
    %v1899 = vld [vmem:[#allocation8 + $0x1660] sm:$0xff]
    %v1900 = vld [vmem:[#allocation8 + $0x1668] sm:$0xff]
    %v1901 = vld [vmem:[#allocation8 + $0x1670] sm:$0xff]
    %v1902 = vld [vmem:[#allocation8 + $0x1678] sm:$0xff]
    %v1903 = vld [vmem:[#allocation8 + $0x1680] sm:$0xff]
    %v1904 = vld [vmem:[#allocation8 + $0x1688] sm:$0xff]
    %v1905 = vld [vmem:[#allocation8 + $0x1690] sm:$0xff]
    %v1906 = vld [vmem:[#allocation8 + $0x1698] sm:$0xff]
    %v1907 = vld [vmem:[#allocation8 + $0x16a0] sm:$0xff]
    %v1908 = vld [vmem:[#allocation8 + $0x16a8] sm:$0xff]
    %v1909 = vld [vmem:[#allocation8 + $0x16b0] sm:$0xff]
    %v1910 = vld [vmem:[#allocation8 + $0x16b8] sm:$0xff]
    %v1911 = vld [vmem:[#allocation8 + $0x16c0] sm:$0xff]
    %v1912 = vld [vmem:[#allocation8 + $0x16c8] sm:$0xff]
    %v1913 = vld [vmem:[#allocation8 + $0x16d0] sm:$0xff]
    %v1914 = vld [vmem:[#allocation8 + $0x16d8] sm:$0xff]
    %v1915 = vld [vmem:[#allocation8 + $0x16e0] sm:$0xff]
    %v1916 = vld [vmem:[#allocation8 + $0x16e8] sm:$0xff]
    %v1917 = vld [vmem:[#allocation8 + $0x16f0] sm:$0xff]
    %v1918 = vld [vmem:[#allocation8 + $0x16f8] sm:$0xff]
    %v1919 = vld [vmem:[#allocation8 + $0x1700] sm:$0xff]
    %v1920 = vld [vmem:[#allocation8 + $0x1708] sm:$0xff]
    %v1921 = vld [vmem:[#allocation8 + $0x1710] sm:$0xff]
    %v1922 = vld [vmem:[#allocation8 + $0x1718] sm:$0xff]
    %v1923 = vld [vmem:[#allocation8 + $0x1720] sm:$0xff]
    %v1924 = vld [vmem:[#allocation8 + $0x1728] sm:$0xff]
    %v1925 = vld [vmem:[#allocation8 + $0x1730] sm:$0xff]
    %v1926 = vld [vmem:[#allocation8 + $0x1738] sm:$0xff]
    %v1927 = vld [vmem:[#allocation8 + $0x1740] sm:$0xff]
    %v1928 = vld [vmem:[#allocation8 + $0x1748] sm:$0xff]
    %v1929 = vld [vmem:[#allocation8 + $0x1750] sm:$0xff]
    %v1930 = vld [vmem:[#allocation8 + $0x1758] sm:$0xff]
    %v1931 = vld [vmem:[#allocation8 + $0x1760] sm:$0xff]
    %v1932 = vld [vmem:[#allocation8 + $0x1768] sm:$0xff]
    %v1933 = vld [vmem:[#allocation8 + $0x1770] sm:$0xff]
    %v1934 = vld [vmem:[#allocation8 + $0x1778] sm:$0xff]
    %v1935 = vld [vmem:[#allocation8 + $0x1780] sm:$0xff]
    %v1936 = vld [vmem:[#allocation8 + $0x1788] sm:$0xff]
    %v1937 = vld [vmem:[#allocation8 + $0x1790] sm:$0xff]
    %v1938 = vld [vmem:[#allocation8 + $0x1798] sm:$0xff]
    %v1939 = vld [vmem:[#allocation8 + $0x17a0] sm:$0xff]
    %v1940 = vld [vmem:[#allocation8 + $0x17a8] sm:$0xff]
    %v1941 = vld [vmem:[#allocation8 + $0x17b0] sm:$0xff]
    %v1942 = vld [vmem:[#allocation8 + $0x17b8] sm:$0xff]
    %v1943 = vld [vmem:[#allocation8 + $0x17c0] sm:$0xff]
    %v1944 = vld [vmem:[#allocation8 + $0x17c8] sm:$0xff]
    %v1945 = vld [vmem:[#allocation8 + $0x17d0] sm:$0xff]
    %v1946 = vld [vmem:[#allocation8 + $0x17d8] sm:$0xff]
    %v1947 = vld [vmem:[#allocation8 + $0x17e0] sm:$0xff]
    %v1948 = vld [vmem:[#allocation8 + $0x17e8] sm:$0xff]
    %v1949 = vld [vmem:[#allocation8 + $0x17f0] sm:$0xff]
    %v1950 = vld [vmem:[#allocation8 + $0x17f8] sm:$0xff]
    %v1951 = vld [vmem:[#allocation8 + $0x1800] sm:$0xff]
    %v1952 = vld [vmem:[#allocation8 + $0x1808] sm:$0xff]
    %v1953 = vld [vmem:[#allocation8 + $0x1810] sm:$0xff]
    %v1954 = vld [vmem:[#allocation8 + $0x1818] sm:$0xff]
    %v1955 = vld [vmem:[#allocation8 + $0x1820] sm:$0xff]
    %v1956 = vld [vmem:[#allocation8 + $0x1828] sm:$0xff]
    %v1957 = vld [vmem:[#allocation8 + $0x1830] sm:$0xff]
    %v1958 = vld [vmem:[#allocation8 + $0x1838] sm:$0xff]
    %v1959 = vld [vmem:[#allocation8 + $0x1840] sm:$0xff]
    %v1960 = vld [vmem:[#allocation8 + $0x1848] sm:$0xff]
    %v1961 = vld [vmem:[#allocation8 + $0x1850] sm:$0xff]
    %v1962 = vld [vmem:[#allocation8 + $0x1858] sm:$0xff]
    %v1963 = vld [vmem:[#allocation8 + $0x1860] sm:$0xff]
    %v1964 = vld [vmem:[#allocation8 + $0x1868] sm:$0xff]
    %v1965 = vld [vmem:[#allocation8 + $0x1870] sm:$0xff]
    %v1966 = vld [vmem:[#allocation8 + $0x1878] sm:$0xff]
    %v1967 = vld [vmem:[#allocation8 + $0x1880] sm:$0xff]
    %v1968 = vld [vmem:[#allocation8 + $0x1888] sm:$0xff]
    %v1969 = vld [vmem:[#allocation8 + $0x1890] sm:$0xff]
    %v1970 = vld [vmem:[#allocation8 + $0x1898] sm:$0xff]
    %v1971 = vld [vmem:[#allocation8 + $0x18a0] sm:$0xff]
    %v1972 = vld [vmem:[#allocation8 + $0x18a8] sm:$0xff]
    %v1973 = vld [vmem:[#allocation8 + $0x18b0] sm:$0xff]
    %v1974 = vld [vmem:[#allocation8 + $0x18b8] sm:$0xff]
    %v1975 = vld [vmem:[#allocation8 + $0x18c0] sm:$0xff]
    %v1976 = vld [vmem:[#allocation8 + $0x18c8] sm:$0xff]
    %v1977 = vld [vmem:[#allocation8 + $0x18d0] sm:$0xff]
    %v1978 = vld [vmem:[#allocation8 + $0x18d8] sm:$0xff]
    %v1979 = vld [vmem:[#allocation8 + $0x18e0] sm:$0xff]
    %v1980 = vld [vmem:[#allocation8 + $0x18e8] sm:$0xff]
    %v1981 = vld [vmem:[#allocation8 + $0x18f0] sm:$0xff]
    %v1982 = vld [vmem:[#allocation8 + $0x18f8] sm:$0xff]
    %v1983 = vld [vmem:[#allocation8 + $0x1900] sm:$0xff]
    %v1984 = vld [vmem:[#allocation8 + $0x1908] sm:$0xff]
    %v1985 = vld [vmem:[#allocation8 + $0x1910] sm:$0xff]
    %v1986 = vld [vmem:[#allocation8 + $0x1918] sm:$0xff]
    %v1987 = vld [vmem:[#allocation8 + $0x1920] sm:$0xff]
    %v1988 = vld [vmem:[#allocation8 + $0x1928] sm:$0xff]
    %v1989 = vld [vmem:[#allocation8 + $0x1930] sm:$0xff]
    %v1990 = vld [vmem:[#allocation8 + $0x1938] sm:$0xff]
    %v1991 = vld [vmem:[#allocation8 + $0x1940] sm:$0xff]
    %v1992 = vld [vmem:[#allocation8 + $0x1948] sm:$0xff]
    %v1993 = vld [vmem:[#allocation8 + $0x1950] sm:$0xff]
    %v1994 = vld [vmem:[#allocation8 + $0x1958] sm:$0xff]
    %v1995 = vld [vmem:[#allocation8 + $0x1960] sm:$0xff]
    %v1996 = vld [vmem:[#allocation8 + $0x1968] sm:$0xff]
    %v1997 = vld [vmem:[#allocation8 + $0x1970] sm:$0xff]
    %v1998 = vld [vmem:[#allocation8 + $0x1978] sm:$0xff]
    %v1999 = vld [vmem:[#allocation8 + $0x1980] sm:$0xff]
    %v2000 = vld [vmem:[#allocation8 + $0x1988] sm:$0xff]
    %v2001 = vld [vmem:[#allocation8 + $0x1990] sm:$0xff]
    %v2002 = vld [vmem:[#allocation8 + $0x1998] sm:$0xff]
    %v2003 = vld [vmem:[#allocation8 + $0x19a0] sm:$0xff]
    %v2004 = vld [vmem:[#allocation8 + $0x19a8] sm:$0xff]
    %v2005 = vld [vmem:[#allocation8 + $0x19b0] sm:$0xff]
    %v2006 = vld [vmem:[#allocation8 + $0x19b8] sm:$0xff]
    %v2007 = vld [vmem:[#allocation8 + $0x19c0] sm:$0xff]
    %v2008 = vld [vmem:[#allocation8 + $0x19c8] sm:$0xff]
    %v2009 = vld [vmem:[#allocation8 + $0x19d0] sm:$0xff]
    %v2010 = vld [vmem:[#allocation8 + $0x19d8] sm:$0xff]
    %v2011 = vld [vmem:[#allocation8 + $0x19e0] sm:$0xff]
    %v2012 = vld [vmem:[#allocation8 + $0x19e8] sm:$0xff]
    %v2013 = vld [vmem:[#allocation8 + $0x19f0] sm:$0xff]
    %v2014 = vld [vmem:[#allocation8 + $0x19f8] sm:$0xff]
    %v2015 = vld [vmem:[#allocation8 + $0x1a00] sm:$0xff]
    %v2016 = vld [vmem:[#allocation8 + $0x1a08] sm:$0xff]
    %v2017 = vld [vmem:[#allocation8 + $0x1a10] sm:$0xff]
    %v2018 = vld [vmem:[#allocation8 + $0x1a18] sm:$0xff]
    %v2019 = vld [vmem:[#allocation8 + $0x1a20] sm:$0xff]
    %v2020 = vld [vmem:[#allocation8 + $0x1a28] sm:$0xff]
    %v2021 = vld [vmem:[#allocation8 + $0x1a30] sm:$0xff]
    %v2022 = vld [vmem:[#allocation8 + $0x1a38] sm:$0xff]
    %v2023 = vld [vmem:[#allocation8 + $0x1a40] sm:$0xff]
    %v2024 = vld [vmem:[#allocation8 + $0x1a48] sm:$0xff]
    %v2025 = vld [vmem:[#allocation8 + $0x1a50] sm:$0xff]
    %v2026 = vld [vmem:[#allocation8 + $0x1a58] sm:$0xff]
    %v2027 = vld [vmem:[#allocation8 + $0x1a60] sm:$0xff]
    %v2028 = vld [vmem:[#allocation8 + $0x1a68] sm:$0xff]
    %v2029 = vld [vmem:[#allocation8 + $0x1a70] sm:$0xff]
    %v2030 = vld [vmem:[#allocation8 + $0x1a78] sm:$0xff]
    %v2031 = vld [vmem:[#allocation8 + $0x1a80] sm:$0xff]
    %v2032 = vld [vmem:[#allocation8 + $0x1a88] sm:$0xff]
    %v2033 = vld [vmem:[#allocation8 + $0x1a90] sm:$0xff]
    %v2034 = vld [vmem:[#allocation8 + $0x1a98] sm:$0xff]
    %v2035 = vld [vmem:[#allocation8 + $0x1aa0] sm:$0xff]
    %v2036 = vld [vmem:[#allocation8 + $0x1aa8] sm:$0xff]
    %v2037 = vld [vmem:[#allocation8 + $0x1ab0] sm:$0xff]
    %v2038 = vld [vmem:[#allocation8 + $0x1ab8] sm:$0xff]
    %v2039 = vld [vmem:[#allocation8 + $0x1ac0] sm:$0xff]
    %v2040 = vld [vmem:[#allocation8 + $0x1ac8] sm:$0xff]
    %v2041 = vld [vmem:[#allocation8 + $0x1ad0] sm:$0xff]
    %v2042 = vld [vmem:[#allocation8 + $0x1ad8] sm:$0xff]
    %v2043 = vld [vmem:[#allocation8 + $0x1ae0] sm:$0xff]
    %v2044 = vld [vmem:[#allocation8 + $0x1ae8] sm:$0xff]
    %v2045 = vld [vmem:[#allocation8 + $0x1af0] sm:$0xff]
    %v2046 = vld [vmem:[#allocation8 + $0x1af8] sm:$0xff]
    %v2047 = vld [vmem:[#allocation8 + $0x1b00] sm:$0xff]
    %v2048 = vld [vmem:[#allocation8 + $0x1b08] sm:$0xff]
    %v2049 = vld [vmem:[#allocation8 + $0x1b10] sm:$0xff]
    %v2050 = vld [vmem:[#allocation8 + $0x1b18] sm:$0xff]
    %v2051 = vld [vmem:[#allocation8 + $0x1b20] sm:$0xff]
    %v2052 = vld [vmem:[#allocation8 + $0x1b28] sm:$0xff]
    %v2053 = vld [vmem:[#allocation8 + $0x1b30] sm:$0xff]
    %v2054 = vld [vmem:[#allocation8 + $0x1b38] sm:$0xff]
    %v2055 = vld [vmem:[#allocation8 + $0x1b40] sm:$0xff]
    %v2056 = vld [vmem:[#allocation8 + $0x1b48] sm:$0xff]
    %v2057 = vld [vmem:[#allocation8 + $0x1b50] sm:$0xff]
    %v2058 = vld [vmem:[#allocation8 + $0x1b58] sm:$0xff]
    %v2059 = vld [vmem:[#allocation8 + $0x1b60] sm:$0xff]
    %v2060 = vld [vmem:[#allocation8 + $0x1b68] sm:$0xff]
    %v2061 = vld [vmem:[#allocation8 + $0x1b70] sm:$0xff]
    %v2062 = vld [vmem:[#allocation8 + $0x1b78] sm:$0xff]
    %v2063 = vld [vmem:[#allocation8 + $0x1b80] sm:$0xff]
    %v2064 = vld [vmem:[#allocation8 + $0x1b88] sm:$0xff]
    %v2065 = vld [vmem:[#allocation8 + $0x1b90] sm:$0xff]
    %v2066 = vld [vmem:[#allocation8 + $0x1b98] sm:$0xff]
    %v2067 = vld [vmem:[#allocation8 + $0x1ba0] sm:$0xff]
    %v2068 = vld [vmem:[#allocation8 + $0x1ba8] sm:$0xff]
    %v2069 = vld [vmem:[#allocation8 + $0x1bb0] sm:$0xff]
    %v2070 = vld [vmem:[#allocation8 + $0x1bb8] sm:$0xff]
    %v2071 = vld [vmem:[#allocation8 + $0x1bc0] sm:$0xff]
    %v2072 = vld [vmem:[#allocation8 + $0x1bc8] sm:$0xff]
    %v2073 = vld [vmem:[#allocation8 + $0x1bd0] sm:$0xff]
    %v2074 = vld [vmem:[#allocation8 + $0x1bd8] sm:$0xff]
    %v2075 = vld [vmem:[#allocation8 + $0x1be0] sm:$0xff]
    %v2076 = vld [vmem:[#allocation8 + $0x1be8] sm:$0xff]
    %v2077 = vld [vmem:[#allocation8 + $0x1bf0] sm:$0xff]
    %v2078 = vld [vmem:[#allocation8 + $0x1bf8] sm:$0xff]
    %v2079 = vld [vmem:[#allocation8 + $0x1c00] sm:$0xff]
    %v2080 = vld [vmem:[#allocation8 + $0x1c08] sm:$0xff]
    %v2081 = vld [vmem:[#allocation8 + $0x1c10] sm:$0xff]
    %v2082 = vld [vmem:[#allocation8 + $0x1c18] sm:$0xff]
    %v2083 = vld [vmem:[#allocation8 + $0x1c20] sm:$0xff]
    %v2084 = vld [vmem:[#allocation8 + $0x1c28] sm:$0xff]
    %v2085 = vld [vmem:[#allocation8 + $0x1c30] sm:$0xff]
    %v2086 = vld [vmem:[#allocation8 + $0x1c38] sm:$0xff]
    %v2087 = vld [vmem:[#allocation8 + $0x1c40] sm:$0xff]
    %v2088 = vld [vmem:[#allocation8 + $0x1c48] sm:$0xff]
    %v2089 = vld [vmem:[#allocation8 + $0x1c50] sm:$0xff]
    %v2090 = vld [vmem:[#allocation8 + $0x1c58] sm:$0xff]
    %v2091 = vld [vmem:[#allocation8 + $0x1c60] sm:$0xff]
    %v2092 = vld [vmem:[#allocation8 + $0x1c68] sm:$0xff]
    %v2093 = vld [vmem:[#allocation8 + $0x1c70] sm:$0xff]
    %v2094 = vld [vmem:[#allocation8 + $0x1c78] sm:$0xff]
    %v2095 = vld [vmem:[#allocation8 + $0x1c80] sm:$0xff]
    %v2096 = vld [vmem:[#allocation8 + $0x1c88] sm:$0xff]
    %v2097 = vld [vmem:[#allocation8 + $0x1c90] sm:$0xff]
    %v2098 = vld [vmem:[#allocation8 + $0x1c98] sm:$0xff]
    %v2099 = vld [vmem:[#allocation8 + $0x1ca0] sm:$0xff]
    %v2100 = vld [vmem:[#allocation8 + $0x1ca8] sm:$0xff]
    %v2101 = vld [vmem:[#allocation8 + $0x1cb0] sm:$0xff]
    %v2102 = vld [vmem:[#allocation8 + $0x1cb8] sm:$0xff]
    %v2103 = vld [vmem:[#allocation8 + $0x1cc0] sm:$0xff]
    %v2104 = vld [vmem:[#allocation8 + $0x1cc8] sm:$0xff]
    %v2105 = vld [vmem:[#allocation8 + $0x1cd0] sm:$0xff]
    %v2106 = vld [vmem:[#allocation8 + $0x1cd8] sm:$0xff]
    %v2107 = vld [vmem:[#allocation8 + $0x1ce0] sm:$0xff]
    %v2108 = vld [vmem:[#allocation8 + $0x1ce8] sm:$0xff]
    %v2109 = vld [vmem:[#allocation8 + $0x1cf0] sm:$0xff]
    %v2110 = vld [vmem:[#allocation8 + $0x1cf8] sm:$0xff]
    %v2111 = vld [vmem:[#allocation8 + $0x1d00] sm:$0xff]
    %v2112 = vld [vmem:[#allocation8 + $0x1d08] sm:$0xff]
    %v2113 = vld [vmem:[#allocation8 + $0x1d10] sm:$0xff]
    %v2114 = vld [vmem:[#allocation8 + $0x1d18] sm:$0xff]
    %v2115 = vld [vmem:[#allocation8 + $0x1d20] sm:$0xff]
    %v2116 = vld [vmem:[#allocation8 + $0x1d28] sm:$0xff]
    %v2117 = vld [vmem:[#allocation8 + $0x1d30] sm:$0xff]
    %v2118 = vld [vmem:[#allocation8 + $0x1d38] sm:$0xff]
    %v2119 = vld [vmem:[#allocation8 + $0x1d40] sm:$0xff]
    %v2120 = vld [vmem:[#allocation8 + $0x1d48] sm:$0xff]
    %v2121 = vld [vmem:[#allocation8 + $0x1d50] sm:$0xff]
    %v2122 = vld [vmem:[#allocation8 + $0x1d58] sm:$0xff]
    %v2123 = vld [vmem:[#allocation8 + $0x1d60] sm:$0xff]
    %v2124 = vld [vmem:[#allocation8 + $0x1d68] sm:$0xff]
    %v2125 = vld [vmem:[#allocation8 + $0x1d70] sm:$0xff]
    %v2126 = vld [vmem:[#allocation8 + $0x1d78] sm:$0xff]
    %v2127 = vld [vmem:[#allocation8 + $0x1d80] sm:$0xff]
    %v2128 = vld [vmem:[#allocation8 + $0x1d88] sm:$0xff]
    %v2129 = vld [vmem:[#allocation8 + $0x1d90] sm:$0xff]
    %v2130 = vld [vmem:[#allocation8 + $0x1d98] sm:$0xff]
    %v2131 = vld [vmem:[#allocation8 + $0x1da0] sm:$0xff]
    %v2132 = vld [vmem:[#allocation8 + $0x1da8] sm:$0xff]
    %v2133 = vld [vmem:[#allocation8 + $0x1db0] sm:$0xff]
    %v2134 = vld [vmem:[#allocation8 + $0x1db8] sm:$0xff]
    %v2135 = vld [vmem:[#allocation8 + $0x1dc0] sm:$0xff]
    %v2136 = vld [vmem:[#allocation8 + $0x1dc8] sm:$0xff]
    %v2137 = vld [vmem:[#allocation8 + $0x1dd0] sm:$0xff]
    %v2138 = vld [vmem:[#allocation8 + $0x1dd8] sm:$0xff]
    %v2139 = vld [vmem:[#allocation8 + $0x1de0] sm:$0xff]
    %v2140 = vld [vmem:[#allocation8 + $0x1de8] sm:$0xff]
    %v2141 = vld [vmem:[#allocation8 + $0x1df0] sm:$0xff]
    %v2142 = vld [vmem:[#allocation8 + $0x1df8] sm:$0xff]
    %v2143 = vld [vmem:[#allocation8 + $0x1e00] sm:$0xff]
    %v2144 = vld [vmem:[#allocation8 + $0x1e08] sm:$0xff]
    %v2145 = vld [vmem:[#allocation8 + $0x1e10] sm:$0xff]
    %v2146 = vld [vmem:[#allocation8 + $0x1e18] sm:$0xff]
    %v2147 = vld [vmem:[#allocation8 + $0x1e20] sm:$0xff]
    %v2148 = vld [vmem:[#allocation8 + $0x1e28] sm:$0xff]
    %v2149 = vld [vmem:[#allocation8 + $0x1e30] sm:$0xff]
    %v2150 = vld [vmem:[#allocation8 + $0x1e38] sm:$0xff]
    %v2151 = vld [vmem:[#allocation8 + $0x1e40] sm:$0xff]
    %v2152 = vld [vmem:[#allocation8 + $0x1e48] sm:$0xff]
    %v2153 = vld [vmem:[#allocation8 + $0x1e50] sm:$0xff]
    %v2154 = vld [vmem:[#allocation8 + $0x1e58] sm:$0xff]
    %v2155 = vld [vmem:[#allocation8 + $0x1e60] sm:$0xff]
    %v2156 = vld [vmem:[#allocation8 + $0x1e68] sm:$0xff]
    %v2157 = vld [vmem:[#allocation8 + $0x1e70] sm:$0xff]
    %v2158 = vld [vmem:[#allocation8 + $0x1e78] sm:$0xff]
    %v2159 = vld [vmem:[#allocation8 + $0x1e80] sm:$0xff]
    %v2160 = vld [vmem:[#allocation8 + $0x1e88] sm:$0xff]
    %v2161 = vld [vmem:[#allocation8 + $0x1e90] sm:$0xff]
    %v2162 = vld [vmem:[#allocation8 + $0x1e98] sm:$0xff]
    %v2163 = vld [vmem:[#allocation8 + $0x1ea0] sm:$0xff]
    %v2164 = vld [vmem:[#allocation8 + $0x1ea8] sm:$0xff]
    %v2165 = vld [vmem:[#allocation8 + $0x1eb0] sm:$0xff]
    %v2166 = vld [vmem:[#allocation8 + $0x1eb8] sm:$0xff]
    %v2167 = vld [vmem:[#allocation8 + $0x1ec0] sm:$0xff]
    %v2168 = vld [vmem:[#allocation8 + $0x1ec8] sm:$0xff]
    %v2169 = vld [vmem:[#allocation8 + $0x1ed0] sm:$0xff]
    %v2170 = vld [vmem:[#allocation8 + $0x1ed8] sm:$0xff]
    %v2171 = vld [vmem:[#allocation8 + $0x1ee0] sm:$0xff]
    %v2172 = vld [vmem:[#allocation8 + $0x1ee8] sm:$0xff]
    %v2173 = vld [vmem:[#allocation8 + $0x1ef0] sm:$0xff]
    %v2174 = vld [vmem:[#allocation8 + $0x1ef8] sm:$0xff]
    %v2175 = vld [vmem:[#allocation8 + $0x1f00] sm:$0xff]
    %v2176 = vld [vmem:[#allocation8 + $0x1f08] sm:$0xff]
    %v2177 = vld [vmem:[#allocation8 + $0x1f10] sm:$0xff]
    %v2178 = vld [vmem:[#allocation8 + $0x1f18] sm:$0xff]
    %v2179 = vld [vmem:[#allocation8 + $0x1f20] sm:$0xff]
    %v2180 = vld [vmem:[#allocation8 + $0x1f28] sm:$0xff]
    %v2181 = vld [vmem:[#allocation8 + $0x1f30] sm:$0xff]
    %v2182 = vld [vmem:[#allocation8 + $0x1f38] sm:$0xff]
    %v2183 = vld [vmem:[#allocation8 + $0x1f40] sm:$0xff]
    %v2184 = vld [vmem:[#allocation8 + $0x1f48] sm:$0xff]
    %v2185 = vld [vmem:[#allocation8 + $0x1f50] sm:$0xff]
    %v2186 = vld [vmem:[#allocation8 + $0x1f58] sm:$0xff]
    %v2187 = vld [vmem:[#allocation8 + $0x1f60] sm:$0xff]
    %v2188 = vld [vmem:[#allocation8 + $0x1f68] sm:$0xff]
    %v2189 = vld [vmem:[#allocation8 + $0x1f70] sm:$0xff]
    %v2190 = vld [vmem:[#allocation8 + $0x1f78] sm:$0xff]
    %v2191 = vld [vmem:[#allocation8 + $0x1f80] sm:$0xff]
    %v2192 = vld [vmem:[#allocation8 + $0x1f88] sm:$0xff]
    %v2193 = vld [vmem:[#allocation8 + $0x1f90] sm:$0xff]
    %v2194 = vld [vmem:[#allocation8 + $0x1f98] sm:$0xff]
    %v2195 = vld [vmem:[#allocation8 + $0x1fa0] sm:$0xff]
    %v2196 = vld [vmem:[#allocation8 + $0x1fa8] sm:$0xff]
    %v2197 = vld [vmem:[#allocation8 + $0x1fb0] sm:$0xff]
    %v2198 = vld [vmem:[#allocation8 + $0x1fb8] sm:$0xff]
    %v2199 = vld [vmem:[#allocation8 + $0x1fc0] sm:$0xff]
    %v2200 = vld [vmem:[#allocation8 + $0x1fc8] sm:$0xff]
    %v2201 = vld [vmem:[#allocation8 + $0x1fd0] sm:$0xff]
    %v2202 = vld [vmem:[#allocation8 + $0x1fd8] sm:$0xff]
    %v2203 = vld [vmem:[#allocation8 + $0x1fe0] sm:$0xff]
    %v2204 = vld [vmem:[#allocation8 + $0x1fe8] sm:$0xff]
    %v2205 = vld [vmem:[#allocation8 + $0x1ff0] sm:$0xff]
    %v2206 = vld [vmem:[#allocation8 + $0x1ff8] sm:$0xff]
    %v2207 = vld [vmem:[#allocation8 + $0x2000] sm:$0xff]
    %v2208 = vld [vmem:[#allocation8 + $0x2008] sm:$0xff]
    %v2209 = vld [vmem:[#allocation8 + $0x2010] sm:$0xff]
    %v2210 = vld [vmem:[#allocation8 + $0x2018] sm:$0xff]
    %v2211 = vld [vmem:[#allocation8 + $0x2020] sm:$0xff]
    %v2212 = vld [vmem:[#allocation8 + $0x2028] sm:$0xff]
    %v2213 = vld [vmem:[#allocation8 + $0x2030] sm:$0xff]
    %v2214 = vld [vmem:[#allocation8 + $0x2038] sm:$0xff]
    %v2215 = vld [vmem:[#allocation8 + $0x2040] sm:$0xff]
    %v2216 = vld [vmem:[#allocation8 + $0x2048] sm:$0xff]
    %v2217 = vld [vmem:[#allocation8 + $0x2050] sm:$0xff]
    %v2218 = vld [vmem:[#allocation8 + $0x2058] sm:$0xff]
    %v2219 = vld [vmem:[#allocation8 + $0x2060] sm:$0xff]
    %v2220 = vld [vmem:[#allocation8 + $0x2068] sm:$0xff]
    %v2221 = vld [vmem:[#allocation8 + $0x2070] sm:$0xff]
    %v2222 = vld [vmem:[#allocation8 + $0x2078] sm:$0xff]
    %v2223 = vld [vmem:[#allocation8 + $0x2080] sm:$0xff]
    %v2224 = vld [vmem:[#allocation8 + $0x2088] sm:$0xff]
    %v2225 = vld [vmem:[#allocation8 + $0x2090] sm:$0xff]
    %v2226 = vld [vmem:[#allocation8 + $0x2098] sm:$0xff]
    %v2227 = vld [vmem:[#allocation8 + $0x20a0] sm:$0xff]
    %v2228 = vld [vmem:[#allocation8 + $0x20a8] sm:$0xff]
    %v2229 = vld [vmem:[#allocation8 + $0x20b0] sm:$0xff]
    %v2230 = vld [vmem:[#allocation8 + $0x20b8] sm:$0xff]
    %v2231 = vld [vmem:[#allocation8 + $0x20c0] sm:$0xff]
    %v2232 = vld [vmem:[#allocation8 + $0x20c8] sm:$0xff]
    %v2233 = vld [vmem:[#allocation8 + $0x20d0] sm:$0xff]
    %v2234 = vld [vmem:[#allocation8 + $0x20d8] sm:$0xff]
    %v2235 = vld [vmem:[#allocation8 + $0x20e0] sm:$0xff]
    %v2236 = vld [vmem:[#allocation8 + $0x20e8] sm:$0xff]
    %v2237 = vld [vmem:[#allocation8 + $0x20f0] sm:$0xff]
    %v2238 = vld [vmem:[#allocation8 + $0x20f8] sm:$0xff]
    %v2239 = vld [vmem:[#allocation8 + $0x2100] sm:$0xff]
    %v2240 = vld [vmem:[#allocation8 + $0x2108] sm:$0xff]
    %v2241 = vld [vmem:[#allocation8 + $0x2110] sm:$0xff]
    %v2242 = vld [vmem:[#allocation8 + $0x2118] sm:$0xff]
    %v2243 = vld [vmem:[#allocation8 + $0x2120] sm:$0xff]
    %v2244 = vld [vmem:[#allocation8 + $0x2128] sm:$0xff]
    %v2245 = vld [vmem:[#allocation8 + $0x2130] sm:$0xff]
    %v2246 = vld [vmem:[#allocation8 + $0x2138] sm:$0xff]
    %v2247 = vld [vmem:[#allocation8 + $0x2140] sm:$0xff]
    %v2248 = vld [vmem:[#allocation8 + $0x2148] sm:$0xff]
    %v2249 = vld [vmem:[#allocation8 + $0x2150] sm:$0xff]
    %v2250 = vld [vmem:[#allocation8 + $0x2158] sm:$0xff]
    %v2251 = vld [vmem:[#allocation8 + $0x2160] sm:$0xff]
    %v2252 = vld [vmem:[#allocation8 + $0x2168] sm:$0xff]
    %v2253 = vld [vmem:[#allocation8 + $0x2170] sm:$0xff]
    %v2254 = vld [vmem:[#allocation8 + $0x2178] sm:$0xff]
    %v2255 = vld [vmem:[#allocation8 + $0x2180] sm:$0xff]
    %v2256 = vld [vmem:[#allocation8 + $0x2188] sm:$0xff]
    %v2257 = vld [vmem:[#allocation8 + $0x2190] sm:$0xff]
    %v2258 = vld [vmem:[#allocation8 + $0x2198] sm:$0xff]
    %v2259 = vld [vmem:[#allocation8 + $0x21a0] sm:$0xff]
    %v2260 = vld [vmem:[#allocation8 + $0x21a8] sm:$0xff]
    %v2261 = vld [vmem:[#allocation8 + $0x21b0] sm:$0xff]
    %v2262 = vld [vmem:[#allocation8 + $0x21b8] sm:$0xff]
    %v2263 = vld [vmem:[#allocation8 + $0x21c0] sm:$0xff]
    %v2264 = vld [vmem:[#allocation8 + $0x21c8] sm:$0xff]
    %v2265 = vld [vmem:[#allocation8 + $0x21d0] sm:$0xff]
    %v2266 = vld [vmem:[#allocation8 + $0x21d8] sm:$0xff]
    %v2267 = vld [vmem:[#allocation8 + $0x21e0] sm:$0xff]
    %v2268 = vld [vmem:[#allocation8 + $0x21e8] sm:$0xff]
    %v2269 = vld [vmem:[#allocation8 + $0x21f0] sm:$0xff]
    %v2270 = vld [vmem:[#allocation8 + $0x21f8] sm:$0xff]
    %v2271 = vld [vmem:[#allocation8 + $0x2200] sm:$0xff]
    %v2272 = vld [vmem:[#allocation8 + $0x2208] sm:$0xff]
    %v2273 = vld [vmem:[#allocation8 + $0x2210] sm:$0xff]
    %v2274 = vld [vmem:[#allocation8 + $0x2218] sm:$0xff]
    %v2275 = vld [vmem:[#allocation8 + $0x2220] sm:$0xff]
    %v2276 = vld [vmem:[#allocation8 + $0x2228] sm:$0xff]
    %v2277 = vld [vmem:[#allocation8 + $0x2230] sm:$0xff]
    %v2278 = vld [vmem:[#allocation8 + $0x2238] sm:$0xff]
    %v2279 = vld [vmem:[#allocation8 + $0x2240] sm:$0xff]
    %v2280 = vld [vmem:[#allocation8 + $0x2248] sm:$0xff]
    %v2281 = vld [vmem:[#allocation8 + $0x2250] sm:$0xff]
    %v2282 = vld [vmem:[#allocation8 + $0x2258] sm:$0xff]
    %v2283 = vld [vmem:[#allocation8 + $0x2260] sm:$0xff]
    %v2284 = vld [vmem:[#allocation8 + $0x2268] sm:$0xff]
    %v2285 = vld [vmem:[#allocation8 + $0x2270] sm:$0xff]
    %v2286 = vld [vmem:[#allocation8 + $0x2278] sm:$0xff]
    %v2287 = vld [vmem:[#allocation8 + $0x2280] sm:$0xff]
    %v2288 = vld [vmem:[#allocation8 + $0x2288] sm:$0xff]
    %v2289 = vld [vmem:[#allocation8 + $0x2290] sm:$0xff]
    %v2290 = vld [vmem:[#allocation8 + $0x2298] sm:$0xff]
    %v2291 = vld [vmem:[#allocation8 + $0x22a0] sm:$0xff]
    %v2292 = vld [vmem:[#allocation8 + $0x22a8] sm:$0xff]
    %v2293 = vld [vmem:[#allocation8 + $0x22b0] sm:$0xff]
    %v2294 = vld [vmem:[#allocation8 + $0x22b8] sm:$0xff]
    %v2295 = vld [vmem:[#allocation8 + $0x22c0] sm:$0xff]
    %v2296 = vld [vmem:[#allocation8 + $0x22c8] sm:$0xff]
    %v2297 = vld [vmem:[#allocation8 + $0x22d0] sm:$0xff]
    %v2298 = vld [vmem:[#allocation8 + $0x22d8] sm:$0xff]
    %v2299 = vld [vmem:[#allocation8 + $0x22e0] sm:$0xff]
    %v2300 = vld [vmem:[#allocation8 + $0x22e8] sm:$0xff]
    %v2301 = vld [vmem:[#allocation8 + $0x22f0] sm:$0xff]
    %v2302 = vld [vmem:[#allocation8 + $0x22f8] sm:$0xff]
    %v2303 = vld [vmem:[#allocation8 + $0x2300] sm:$0xff]
    %v2304 = vld [vmem:[#allocation8 + $0x2308] sm:$0xff]
    %v2305 = vld [vmem:[#allocation8 + $0x2310] sm:$0xff]
    %v2306 = vld [vmem:[#allocation8 + $0x2318] sm:$0xff]
    %v2307 = vld [vmem:[#allocation8 + $0x2320] sm:$0xff]
    %v2308 = vld [vmem:[#allocation8 + $0x2328] sm:$0xff]
    %v2309 = vld [vmem:[#allocation8 + $0x2330] sm:$0xff]
    %v2310 = vld [vmem:[#allocation8 + $0x2338] sm:$0xff]
    %v2311 = vld [vmem:[#allocation8 + $0x2340] sm:$0xff]
    %v2312 = vld [vmem:[#allocation8 + $0x2348] sm:$0xff]
    %v2313 = vld [vmem:[#allocation8 + $0x2350] sm:$0xff]
    %v2314 = vld [vmem:[#allocation8 + $0x2358] sm:$0xff]
    %v2315 = vld [vmem:[#allocation8 + $0x2360] sm:$0xff]
    %v2316 = vld [vmem:[#allocation8 + $0x2368] sm:$0xff]
    %v2317 = vld [vmem:[#allocation8 + $0x2370] sm:$0xff]
    %v2318 = vld [vmem:[#allocation8 + $0x2378] sm:$0xff]
    %v2319 = vld [vmem:[#allocation8 + $0x2380] sm:$0xff]
    %v2320 = vld [vmem:[#allocation8 + $0x2388] sm:$0xff]
    %v2321 = vld [vmem:[#allocation8 + $0x2390] sm:$0xff]
    %v2322 = vld [vmem:[#allocation8 + $0x2398] sm:$0xff]
    %v2323 = vld [vmem:[#allocation8 + $0x23a0] sm:$0xff]
    %v2324 = vld [vmem:[#allocation8 + $0x23a8] sm:$0xff]
    %v2325 = vld [vmem:[#allocation8 + $0x23b0] sm:$0xff]
    %v2326 = vld [vmem:[#allocation8 + $0x23b8] sm:$0xff]
    %v2327 = vld [vmem:[#allocation8 + $0x23c0] sm:$0xff]
    %v2328 = vld [vmem:[#allocation8 + $0x23c8] sm:$0xff]
    %v2329 = vld [vmem:[#allocation8 + $0x23d0] sm:$0xff]
    %v2330 = vld [vmem:[#allocation8 + $0x23d8] sm:$0xff]
    %v2331 = vld [vmem:[#allocation8 + $0x23e0] sm:$0xff]
    %v2332 = vld [vmem:[#allocation8 + $0x23e8] sm:$0xff]
    %v2333 = vld [vmem:[#allocation8 + $0x23f0] sm:$0xff]
    %v2334 = vld [vmem:[#allocation8 + $0x23f8] sm:$0xff]
    %v2335 = vld [vmem:[%s3] sm:$0xff]
    %v2336 = vld [vmem:[%s3 + $0x8] sm:$0xff]
    %v2337 = vld [vmem:[%s3 + $0x10] sm:$0xff]
    %v2338 = vld [vmem:[%s3 + $0x18] sm:$0xff]
    %2340 = vset.pattern.permute.xlu0 0
    %2341 = vperm.xlu0 %2340, %v2335
    %v2342 = vpop.permute.xlu0 %2341
    %2345 = vset.pattern.permute.xlu0 0
    %2346 = vperm.xlu0 %2345, %v2336
    %v2347 = vpop.permute.xlu0 %2346
    %2350 = vset.pattern.permute.xlu0 0
    %2351 = vperm.xlu0 %2350, %v2337
    %v2352 = vpop.permute.xlu0 %2351
    %2355 = vset.pattern.permute.xlu0 0
    %2356 = vperm.xlu0 %2355, %v2338
    %v2357 = vpop.permute.xlu0 %2356
    %v3511 = vunpack.c.l.b16 %v1183
    %v3512 = vunpack.c.h.b16 %v1183
    %v3513 = vunpack.c.l.b16 %v1184
    %v3514 = vunpack.c.h.b16 %v1184
    %v3515 = vunpack.c.l.b16 %v1185
    %v3516 = vunpack.c.h.b16 %v1185
    %v3517 = vunpack.c.l.b16 %v1186
    %v3518 = vunpack.c.h.b16 %v1186
    %v3519 = vunpack.c.l.b16 %v1187
    %v3520 = vunpack.c.h.b16 %v1187
    %v3521 = vunpack.c.l.b16 %v1188
    %v3522 = vunpack.c.h.b16 %v1188
    %v3523 = vunpack.c.l.b16 %v1189
    %v3524 = vunpack.c.h.b16 %v1189
    %v3525 = vunpack.c.l.b16 %v1190
    %v3526 = vunpack.c.h.b16 %v1190
    %v3527 = vunpack.c.l.b16 %v1191
    %v3528 = vunpack.c.h.b16 %v1191
    %v3529 = vunpack.c.l.b16 %v1192
    %v3530 = vunpack.c.h.b16 %v1192
    %v3531 = vunpack.c.l.b16 %v1193
    %v3532 = vunpack.c.h.b16 %v1193
    %v3533 = vunpack.c.l.b16 %v1194
    %v3534 = vunpack.c.h.b16 %v1194
    %v3535 = vunpack.c.l.b16 %v1195
    %v3536 = vunpack.c.h.b16 %v1195
    %v3537 = vunpack.c.l.b16 %v1196
    %v3538 = vunpack.c.h.b16 %v1196
    %v3539 = vunpack.c.l.b16 %v1197
    %v3540 = vunpack.c.h.b16 %v1197
    %v3541 = vunpack.c.l.b16 %v1198
    %v3542 = vunpack.c.h.b16 %v1198
    %v3543 = vunpack.c.l.b16 %v1199
    %v3544 = vunpack.c.h.b16 %v1199
    %v3545 = vunpack.c.l.b16 %v1200
    %v3546 = vunpack.c.h.b16 %v1200
    %v3547 = vunpack.c.l.b16 %v1201
    %v3548 = vunpack.c.h.b16 %v1201
    %v3549 = vunpack.c.l.b16 %v1202
    %v3550 = vunpack.c.h.b16 %v1202
    %v3551 = vunpack.c.l.b16 %v1203
    %v3552 = vunpack.c.h.b16 %v1203
    %v3553 = vunpack.c.l.b16 %v1204
    %v3554 = vunpack.c.h.b16 %v1204
    %v3555 = vunpack.c.l.b16 %v1205
    %v3556 = vunpack.c.h.b16 %v1205
    %v3557 = vunpack.c.l.b16 %v1206
    %v3558 = vunpack.c.h.b16 %v1206
    %v3559 = vunpack.c.l.b16 %v1207
    %v3560 = vunpack.c.h.b16 %v1207
    %v3561 = vunpack.c.l.b16 %v1208
    %v3562 = vunpack.c.h.b16 %v1208
    %v3563 = vunpack.c.l.b16 %v1209
    %v3564 = vunpack.c.h.b16 %v1209
    %v3565 = vunpack.c.l.b16 %v1210
    %v3566 = vunpack.c.h.b16 %v1210
    %v3567 = vunpack.c.l.b16 %v1211
    %v3568 = vunpack.c.h.b16 %v1211
    %v3569 = vunpack.c.l.b16 %v1212
    %v3570 = vunpack.c.h.b16 %v1212
    %v3571 = vunpack.c.l.b16 %v1213
    %v3572 = vunpack.c.h.b16 %v1213
    %v3573 = vunpack.c.l.b16 %v1214
    %v3574 = vunpack.c.h.b16 %v1214
    %v3575 = vunpack.c.l.b16 %v1215
    %v3576 = vunpack.c.h.b16 %v1215
    %v3577 = vunpack.c.l.b16 %v1216
    %v3578 = vunpack.c.h.b16 %v1216
    %v3579 = vunpack.c.l.b16 %v1217
    %v3580 = vunpack.c.h.b16 %v1217
    %v3581 = vunpack.c.l.b16 %v1218
    %v3582 = vunpack.c.h.b16 %v1218
    %v3583 = vunpack.c.l.b16 %v1219
    %v3584 = vunpack.c.h.b16 %v1219
    %v3585 = vunpack.c.l.b16 %v1220
    %v3586 = vunpack.c.h.b16 %v1220
    %v3587 = vunpack.c.l.b16 %v1221
    %v3588 = vunpack.c.h.b16 %v1221
    %v3589 = vunpack.c.l.b16 %v1222
    %v3590 = vunpack.c.h.b16 %v1222
    %v3591 = vunpack.c.l.b16 %v1223
    %v3592 = vunpack.c.h.b16 %v1223
    %v3593 = vunpack.c.l.b16 %v1224
    %v3594 = vunpack.c.h.b16 %v1224
    %v3595 = vunpack.c.l.b16 %v1225
    %v3596 = vunpack.c.h.b16 %v1225
    %v3597 = vunpack.c.l.b16 %v1226
    %v3598 = vunpack.c.h.b16 %v1226
    %v3599 = vunpack.c.l.b16 %v1227
    %v3600 = vunpack.c.h.b16 %v1227
    %v3601 = vunpack.c.l.b16 %v1228
    %v3602 = vunpack.c.h.b16 %v1228
    %v3603 = vunpack.c.l.b16 %v1229
    %v3604 = vunpack.c.h.b16 %v1229
    %v3605 = vunpack.c.l.b16 %v1230
    %v3606 = vunpack.c.h.b16 %v1230
    %v3607 = vunpack.c.l.b16 %v1231
    %v3608 = vunpack.c.h.b16 %v1231
    %v3609 = vunpack.c.l.b16 %v1232
    %v3610 = vunpack.c.h.b16 %v1232
    %v3611 = vunpack.c.l.b16 %v1233
    %v3612 = vunpack.c.h.b16 %v1233
    %v3613 = vunpack.c.l.b16 %v1234
    %v3614 = vunpack.c.h.b16 %v1234
    %v3615 = vunpack.c.l.b16 %v1235
    %v3616 = vunpack.c.h.b16 %v1235
    %v3617 = vunpack.c.l.b16 %v1236
    %v3618 = vunpack.c.h.b16 %v1236
    %v3619 = vunpack.c.l.b16 %v1237
    %v3620 = vunpack.c.h.b16 %v1237
    %v3621 = vunpack.c.l.b16 %v1238
    %v3622 = vunpack.c.h.b16 %v1238
    %v3623 = vunpack.c.l.b16 %v1239
    %v3624 = vunpack.c.h.b16 %v1239
    %v3625 = vunpack.c.l.b16 %v1240
    %v3626 = vunpack.c.h.b16 %v1240
    %v3627 = vunpack.c.l.b16 %v1241
    %v3628 = vunpack.c.h.b16 %v1241
    %v3629 = vunpack.c.l.b16 %v1242
    %v3630 = vunpack.c.h.b16 %v1242
    %v3631 = vunpack.c.l.b16 %v1243
    %v3632 = vunpack.c.h.b16 %v1243
    %v3633 = vunpack.c.l.b16 %v1244
    %v3634 = vunpack.c.h.b16 %v1244
    %v3635 = vunpack.c.l.b16 %v1245
    %v3636 = vunpack.c.h.b16 %v1245
    %v3637 = vunpack.c.l.b16 %v1246
    %v3638 = vunpack.c.h.b16 %v1246
    %v3639 = vunpack.c.l.b16 %v1247
    %v3640 = vunpack.c.h.b16 %v1247
    %v3641 = vunpack.c.l.b16 %v1248
    %v3642 = vunpack.c.h.b16 %v1248
    %v3643 = vunpack.c.l.b16 %v1249
    %v3644 = vunpack.c.h.b16 %v1249
    %v3645 = vunpack.c.l.b16 %v1250
    %v3646 = vunpack.c.h.b16 %v1250
    %v3647 = vunpack.c.l.b16 %v1251
    %v3648 = vunpack.c.h.b16 %v1251
    %v3649 = vunpack.c.l.b16 %v1252
    %v3650 = vunpack.c.h.b16 %v1252
    %v3651 = vunpack.c.l.b16 %v1253
    %v3652 = vunpack.c.h.b16 %v1253
    %v3653 = vunpack.c.l.b16 %v1254
    %v3654 = vunpack.c.h.b16 %v1254
    %v3655 = vunpack.c.l.b16 %v1255
    %v3656 = vunpack.c.h.b16 %v1255
    %v3657 = vunpack.c.l.b16 %v1256
    %v3658 = vunpack.c.h.b16 %v1256
    %v3659 = vunpack.c.l.b16 %v1257
    %v3660 = vunpack.c.h.b16 %v1257
    %v3661 = vunpack.c.l.b16 %v1258
    %v3662 = vunpack.c.h.b16 %v1258
    %v3663 = vunpack.c.l.b16 %v1259
    %v3664 = vunpack.c.h.b16 %v1259
    %v3665 = vunpack.c.l.b16 %v1260
    %v3666 = vunpack.c.h.b16 %v1260
    %v3667 = vunpack.c.l.b16 %v1261
    %v3668 = vunpack.c.h.b16 %v1261
    %v3669 = vunpack.c.l.b16 %v1262
    %v3670 = vunpack.c.h.b16 %v1262
    %v3671 = vunpack.c.l.b16 %v1263
    %v3672 = vunpack.c.h.b16 %v1263
    %v3673 = vunpack.c.l.b16 %v1264
    %v3674 = vunpack.c.h.b16 %v1264
    %v3675 = vunpack.c.l.b16 %v1265
    %v3676 = vunpack.c.h.b16 %v1265
    %v3677 = vunpack.c.l.b16 %v1266
    %v3678 = vunpack.c.h.b16 %v1266
    %v3679 = vunpack.c.l.b16 %v1267
    %v3680 = vunpack.c.h.b16 %v1267
    %v3681 = vunpack.c.l.b16 %v1268
    %v3682 = vunpack.c.h.b16 %v1268
    %v3683 = vunpack.c.l.b16 %v1269
    %v3684 = vunpack.c.h.b16 %v1269
    %v3685 = vunpack.c.l.b16 %v1270
    %v3686 = vunpack.c.h.b16 %v1270
    %v3687 = vunpack.c.l.b16 %v1271
    %v3688 = vunpack.c.h.b16 %v1271
    %v3689 = vunpack.c.l.b16 %v1272
    %v3690 = vunpack.c.h.b16 %v1272
    %v3691 = vunpack.c.l.b16 %v1273
    %v3692 = vunpack.c.h.b16 %v1273
    %v3693 = vunpack.c.l.b16 %v1274
    %v3694 = vunpack.c.h.b16 %v1274
    %v3695 = vunpack.c.l.b16 %v1275
    %v3696 = vunpack.c.h.b16 %v1275
    %v3697 = vunpack.c.l.b16 %v1276
    %v3698 = vunpack.c.h.b16 %v1276
    %v3699 = vunpack.c.l.b16 %v1277
    %v3700 = vunpack.c.h.b16 %v1277
    %v3701 = vunpack.c.l.b16 %v1278
    %v3702 = vunpack.c.h.b16 %v1278
    %v3703 = vunpack.c.l.b16 %v1279
    %v3704 = vunpack.c.h.b16 %v1279
    %v3705 = vunpack.c.l.b16 %v1280
    %v3706 = vunpack.c.h.b16 %v1280
    %v3707 = vunpack.c.l.b16 %v1281
    %v3708 = vunpack.c.h.b16 %v1281
    %v3709 = vunpack.c.l.b16 %v1282
    %v3710 = vunpack.c.h.b16 %v1282
    %v3711 = vunpack.c.l.b16 %v1283
    %v3712 = vunpack.c.h.b16 %v1283
    %v3713 = vunpack.c.l.b16 %v1284
    %v3714 = vunpack.c.h.b16 %v1284
    %v3715 = vunpack.c.l.b16 %v1285
    %v3716 = vunpack.c.h.b16 %v1285
    %v3717 = vunpack.c.l.b16 %v1286
    %v3718 = vunpack.c.h.b16 %v1286
    %v3719 = vunpack.c.l.b16 %v1287
    %v3720 = vunpack.c.h.b16 %v1287
    %v3721 = vunpack.c.l.b16 %v1288
    %v3722 = vunpack.c.h.b16 %v1288
    %v3723 = vunpack.c.l.b16 %v1289
    %v3724 = vunpack.c.h.b16 %v1289
    %v3725 = vunpack.c.l.b16 %v1290
    %v3726 = vunpack.c.h.b16 %v1290
    %v3727 = vunpack.c.l.b16 %v1291
    %v3728 = vunpack.c.h.b16 %v1291
    %v3729 = vunpack.c.l.b16 %v1292
    %v3730 = vunpack.c.h.b16 %v1292
    %v3731 = vunpack.c.l.b16 %v1293
    %v3732 = vunpack.c.h.b16 %v1293
    %v3733 = vunpack.c.l.b16 %v1294
    %v3734 = vunpack.c.h.b16 %v1294
    %v3735 = vunpack.c.l.b16 %v1295
    %v3736 = vunpack.c.h.b16 %v1295
    %v3737 = vunpack.c.l.b16 %v1296
    %v3738 = vunpack.c.h.b16 %v1296
    %v3739 = vunpack.c.l.b16 %v1297
    %v3740 = vunpack.c.h.b16 %v1297
    %v3741 = vunpack.c.l.b16 %v1298
    %v3742 = vunpack.c.h.b16 %v1298
    %v3743 = vunpack.c.l.b16 %v1299
    %v3744 = vunpack.c.h.b16 %v1299
    %v3745 = vunpack.c.l.b16 %v1300
    %v3746 = vunpack.c.h.b16 %v1300
    %v3747 = vunpack.c.l.b16 %v1301
    %v3748 = vunpack.c.h.b16 %v1301
    %v3749 = vunpack.c.l.b16 %v1302
    %v3750 = vunpack.c.h.b16 %v1302
    %v3751 = vunpack.c.l.b16 %v1303
    %v3752 = vunpack.c.h.b16 %v1303
    %v3753 = vunpack.c.l.b16 %v1304
    %v3754 = vunpack.c.h.b16 %v1304
    %v3755 = vunpack.c.l.b16 %v1305
    %v3756 = vunpack.c.h.b16 %v1305
    %v3757 = vunpack.c.l.b16 %v1306
    %v3758 = vunpack.c.h.b16 %v1306
    %v3759 = vunpack.c.l.b16 %v1307
    %v3760 = vunpack.c.h.b16 %v1307
    %v3761 = vunpack.c.l.b16 %v1308
    %v3762 = vunpack.c.h.b16 %v1308
    %v3763 = vunpack.c.l.b16 %v1309
    %v3764 = vunpack.c.h.b16 %v1309
    %v3765 = vunpack.c.l.b16 %v1310
    %v3766 = vunpack.c.h.b16 %v1310
    %v3767 = vunpack.c.l.b16 %v1311
    %v3768 = vunpack.c.h.b16 %v1311
    %v3769 = vunpack.c.l.b16 %v1312
    %v3770 = vunpack.c.h.b16 %v1312
    %v3771 = vunpack.c.l.b16 %v1313
    %v3772 = vunpack.c.h.b16 %v1313
    %v3773 = vunpack.c.l.b16 %v1314
    %v3774 = vunpack.c.h.b16 %v1314
    %v3775 = vunpack.c.l.b16 %v1315
    %v3776 = vunpack.c.h.b16 %v1315
    %v3777 = vunpack.c.l.b16 %v1316
    %v3778 = vunpack.c.h.b16 %v1316
    %v3779 = vunpack.c.l.b16 %v1317
    %v3780 = vunpack.c.h.b16 %v1317
    %v3781 = vunpack.c.l.b16 %v1318
    %v3782 = vunpack.c.h.b16 %v1318
    %v3783 = vunpack.c.l.b16 %v1319
    %v3784 = vunpack.c.h.b16 %v1319
    %v3785 = vunpack.c.l.b16 %v1320
    %v3786 = vunpack.c.h.b16 %v1320
    %v3787 = vunpack.c.l.b16 %v1321
    %v3788 = vunpack.c.h.b16 %v1321
    %v3789 = vunpack.c.l.b16 %v1322
    %v3790 = vunpack.c.h.b16 %v1322
    %v3791 = vunpack.c.l.b16 %v1323
    %v3792 = vunpack.c.h.b16 %v1323
    %v3793 = vunpack.c.l.b16 %v1324
    %v3794 = vunpack.c.h.b16 %v1324
    %v3795 = vunpack.c.l.b16 %v1325
    %v3796 = vunpack.c.h.b16 %v1325
    %v3797 = vunpack.c.l.b16 %v1326
    %v3798 = vunpack.c.h.b16 %v1326
    %v3799 = vunpack.c.l.b16 %v1327
    %v3800 = vunpack.c.h.b16 %v1327
    %v3801 = vunpack.c.l.b16 %v1328
    %v3802 = vunpack.c.h.b16 %v1328
    %v3803 = vunpack.c.l.b16 %v1329
    %v3804 = vunpack.c.h.b16 %v1329
    %v3805 = vunpack.c.l.b16 %v1330
    %v3806 = vunpack.c.h.b16 %v1330
    %v3807 = vunpack.c.l.b16 %v1331
    %v3808 = vunpack.c.h.b16 %v1331
    %v3809 = vunpack.c.l.b16 %v1332
    %v3810 = vunpack.c.h.b16 %v1332
    %v3811 = vunpack.c.l.b16 %v1333
    %v3812 = vunpack.c.h.b16 %v1333
    %v3813 = vunpack.c.l.b16 %v1334
    %v3814 = vunpack.c.h.b16 %v1334
    %v3815 = vunpack.c.l.b16 %v1335
    %v3816 = vunpack.c.h.b16 %v1335
    %v3817 = vunpack.c.l.b16 %v1336
    %v3818 = vunpack.c.h.b16 %v1336
    %v3819 = vunpack.c.l.b16 %v1337
    %v3820 = vunpack.c.h.b16 %v1337
    %v3821 = vunpack.c.l.b16 %v1338
    %v3822 = vunpack.c.h.b16 %v1338
    %v3823 = vunpack.c.l.b16 %v1339
    %v3824 = vunpack.c.h.b16 %v1339
    %v3825 = vunpack.c.l.b16 %v1340
    %v3826 = vunpack.c.h.b16 %v1340
    %v3827 = vunpack.c.l.b16 %v1341
    %v3828 = vunpack.c.h.b16 %v1341
    %v3829 = vunpack.c.l.b16 %v1342
    %v3830 = vunpack.c.h.b16 %v1342
    %v3831 = vunpack.c.l.b16 %v1343
    %v3832 = vunpack.c.h.b16 %v1343
    %v3833 = vunpack.c.l.b16 %v1344
    %v3834 = vunpack.c.h.b16 %v1344
    %v3835 = vunpack.c.l.b16 %v1345
    %v3836 = vunpack.c.h.b16 %v1345
    %v3837 = vunpack.c.l.b16 %v1346
    %v3838 = vunpack.c.h.b16 %v1346
    %v3839 = vunpack.c.l.b16 %v1347
    %v3840 = vunpack.c.h.b16 %v1347
    %v3841 = vunpack.c.l.b16 %v1348
    %v3842 = vunpack.c.h.b16 %v1348
    %v3843 = vunpack.c.l.b16 %v1349
    %v3844 = vunpack.c.h.b16 %v1349
    %v3845 = vunpack.c.l.b16 %v1350
    %v3846 = vunpack.c.h.b16 %v1350
    %v3847 = vunpack.c.l.b16 %v1351
    %v3848 = vunpack.c.h.b16 %v1351
    %v3849 = vunpack.c.l.b16 %v1352
    %v3850 = vunpack.c.h.b16 %v1352
    %v3851 = vunpack.c.l.b16 %v1353
    %v3852 = vunpack.c.h.b16 %v1353
    %v3853 = vunpack.c.l.b16 %v1354
    %v3854 = vunpack.c.h.b16 %v1354
    %v3855 = vunpack.c.l.b16 %v1355
    %v3856 = vunpack.c.h.b16 %v1355
    %v3857 = vunpack.c.l.b16 %v1356
    %v3858 = vunpack.c.h.b16 %v1356
    %v3859 = vunpack.c.l.b16 %v1357
    %v3860 = vunpack.c.h.b16 %v1357
    %v3861 = vunpack.c.l.b16 %v1358
    %v3862 = vunpack.c.h.b16 %v1358
    %v3863 = vunpack.c.l.b16 %v1359
    %v3864 = vunpack.c.h.b16 %v1359
    %v3865 = vunpack.c.l.b16 %v1360
    %v3866 = vunpack.c.h.b16 %v1360
    %v3867 = vunpack.c.l.b16 %v1361
    %v3868 = vunpack.c.h.b16 %v1361
    %v3869 = vunpack.c.l.b16 %v1362
    %v3870 = vunpack.c.h.b16 %v1362
    %v3871 = vunpack.c.l.b16 %v1363
    %v3872 = vunpack.c.h.b16 %v1363
    %v3873 = vunpack.c.l.b16 %v1364
    %v3874 = vunpack.c.h.b16 %v1364
    %v3875 = vunpack.c.l.b16 %v1365
    %v3876 = vunpack.c.h.b16 %v1365
    %v3877 = vunpack.c.l.b16 %v1366
    %v3878 = vunpack.c.h.b16 %v1366
    %v3879 = vunpack.c.l.b16 %v1367
    %v3880 = vunpack.c.h.b16 %v1367
    %v3881 = vunpack.c.l.b16 %v1368
    %v3882 = vunpack.c.h.b16 %v1368
    %v3883 = vunpack.c.l.b16 %v1369
    %v3884 = vunpack.c.h.b16 %v1369
    %v3885 = vunpack.c.l.b16 %v1370
    %v3886 = vunpack.c.h.b16 %v1370
    %v3887 = vunpack.c.l.b16 %v1371
    %v3888 = vunpack.c.h.b16 %v1371
    %v3889 = vunpack.c.l.b16 %v1372
    %v3890 = vunpack.c.h.b16 %v1372
    %v3891 = vunpack.c.l.b16 %v1373
    %v3892 = vunpack.c.h.b16 %v1373
    %v3893 = vunpack.c.l.b16 %v1374
    %v3894 = vunpack.c.h.b16 %v1374
    %v3895 = vunpack.c.l.b16 %v1375
    %v3896 = vunpack.c.h.b16 %v1375
    %v3897 = vunpack.c.l.b16 %v1376
    %v3898 = vunpack.c.h.b16 %v1376
    %v3899 = vunpack.c.l.b16 %v1377
    %v3900 = vunpack.c.h.b16 %v1377
    %v3901 = vunpack.c.l.b16 %v1378
    %v3902 = vunpack.c.h.b16 %v1378
    %v3903 = vunpack.c.l.b16 %v1379
    %v3904 = vunpack.c.h.b16 %v1379
    %v3905 = vunpack.c.l.b16 %v1380
    %v3906 = vunpack.c.h.b16 %v1380
    %v3907 = vunpack.c.l.b16 %v1381
    %v3908 = vunpack.c.h.b16 %v1381
    %v3909 = vunpack.c.l.b16 %v1382
    %v3910 = vunpack.c.h.b16 %v1382
    %v3911 = vunpack.c.l.b16 %v1383
    %v3912 = vunpack.c.h.b16 %v1383
    %v3913 = vunpack.c.l.b16 %v1384
    %v3914 = vunpack.c.h.b16 %v1384
    %v3915 = vunpack.c.l.b16 %v1385
    %v3916 = vunpack.c.h.b16 %v1385
    %v3917 = vunpack.c.l.b16 %v1386
    %v3918 = vunpack.c.h.b16 %v1386
    %v3919 = vunpack.c.l.b16 %v1387
    %v3920 = vunpack.c.h.b16 %v1387
    %v3921 = vunpack.c.l.b16 %v1388
    %v3922 = vunpack.c.h.b16 %v1388
    %v3923 = vunpack.c.l.b16 %v1389
    %v3924 = vunpack.c.h.b16 %v1389
    %v3925 = vunpack.c.l.b16 %v1390
    %v3926 = vunpack.c.h.b16 %v1390
    %v3927 = vunpack.c.l.b16 %v1391
    %v3928 = vunpack.c.h.b16 %v1391
    %v3929 = vunpack.c.l.b16 %v1392
    %v3930 = vunpack.c.h.b16 %v1392
    %v3931 = vunpack.c.l.b16 %v1393
    %v3932 = vunpack.c.h.b16 %v1393
    %v3933 = vunpack.c.l.b16 %v1394
    %v3934 = vunpack.c.h.b16 %v1394
    %v3935 = vunpack.c.l.b16 %v1395
    %v3936 = vunpack.c.h.b16 %v1395
    %v3937 = vunpack.c.l.b16 %v1396
    %v3938 = vunpack.c.h.b16 %v1396
    %v3939 = vunpack.c.l.b16 %v1397
    %v3940 = vunpack.c.h.b16 %v1397
    %v3941 = vunpack.c.l.b16 %v1398
    %v3942 = vunpack.c.h.b16 %v1398
    %v3943 = vunpack.c.l.b16 %v1399
    %v3944 = vunpack.c.h.b16 %v1399
    %v3945 = vunpack.c.l.b16 %v1400
    %v3946 = vunpack.c.h.b16 %v1400
    %v3947 = vunpack.c.l.b16 %v1401
    %v3948 = vunpack.c.h.b16 %v1401
    %v3949 = vunpack.c.l.b16 %v1402
    %v3950 = vunpack.c.h.b16 %v1402
    %v3951 = vunpack.c.l.b16 %v1403
    %v3952 = vunpack.c.h.b16 %v1403
    %v3953 = vunpack.c.l.b16 %v1404
    %v3954 = vunpack.c.h.b16 %v1404
    %v3955 = vunpack.c.l.b16 %v1405
    %v3956 = vunpack.c.h.b16 %v1405
    %v3957 = vunpack.c.l.b16 %v1406
    %v3958 = vunpack.c.h.b16 %v1406
    %v3959 = vunpack.c.l.b16 %v1407
    %v3960 = vunpack.c.h.b16 %v1407
    %v3961 = vunpack.c.l.b16 %v1408
    %v3962 = vunpack.c.h.b16 %v1408
    %v3963 = vunpack.c.l.b16 %v1409
    %v3964 = vunpack.c.h.b16 %v1409
    %v3965 = vunpack.c.l.b16 %v1410
    %v3966 = vunpack.c.h.b16 %v1410
    %v3967 = vunpack.c.l.b16 %v1411
    %v3968 = vunpack.c.h.b16 %v1411
    %v3969 = vunpack.c.l.b16 %v1412
    %v3970 = vunpack.c.h.b16 %v1412
    %v3971 = vunpack.c.l.b16 %v1413
    %v3972 = vunpack.c.h.b16 %v1413
    %v3973 = vunpack.c.l.b16 %v1414
    %v3974 = vunpack.c.h.b16 %v1414
    %v3975 = vunpack.c.l.b16 %v1415
    %v3976 = vunpack.c.h.b16 %v1415
    %v3977 = vunpack.c.l.b16 %v1416
    %v3978 = vunpack.c.h.b16 %v1416
    %v3979 = vunpack.c.l.b16 %v1417
    %v3980 = vunpack.c.h.b16 %v1417
    %v3981 = vunpack.c.l.b16 %v1418
    %v3982 = vunpack.c.h.b16 %v1418
    %v3983 = vunpack.c.l.b16 %v1419
    %v3984 = vunpack.c.h.b16 %v1419
    %v3985 = vunpack.c.l.b16 %v1420
    %v3986 = vunpack.c.h.b16 %v1420
    %v3987 = vunpack.c.l.b16 %v1421
    %v3988 = vunpack.c.h.b16 %v1421
    %v3989 = vunpack.c.l.b16 %v1422
    %v3990 = vunpack.c.h.b16 %v1422
    %v3991 = vunpack.c.l.b16 %v1423
    %v3992 = vunpack.c.h.b16 %v1423
    %v3993 = vunpack.c.l.b16 %v1424
    %v3994 = vunpack.c.h.b16 %v1424
    %v3995 = vunpack.c.l.b16 %v1425
    %v3996 = vunpack.c.h.b16 %v1425
    %v3997 = vunpack.c.l.b16 %v1426
    %v3998 = vunpack.c.h.b16 %v1426
    %v3999 = vunpack.c.l.b16 %v1427
    %v4000 = vunpack.c.h.b16 %v1427
    %v4001 = vunpack.c.l.b16 %v1428
    %v4002 = vunpack.c.h.b16 %v1428
    %v4003 = vunpack.c.l.b16 %v1429
    %v4004 = vunpack.c.h.b16 %v1429
    %v4005 = vunpack.c.l.b16 %v1430
    %v4006 = vunpack.c.h.b16 %v1430
    %v4007 = vunpack.c.l.b16 %v1431
    %v4008 = vunpack.c.h.b16 %v1431
    %v4009 = vunpack.c.l.b16 %v1432
    %v4010 = vunpack.c.h.b16 %v1432
    %v4011 = vunpack.c.l.b16 %v1433
    %v4012 = vunpack.c.h.b16 %v1433
    %v4013 = vunpack.c.l.b16 %v1434
    %v4014 = vunpack.c.h.b16 %v1434
    %v4015 = vunpack.c.l.b16 %v1435
    %v4016 = vunpack.c.h.b16 %v1435
    %v4017 = vunpack.c.l.b16 %v1436
    %v4018 = vunpack.c.h.b16 %v1436
    %v4019 = vunpack.c.l.b16 %v1437
    %v4020 = vunpack.c.h.b16 %v1437
    %v4021 = vunpack.c.l.b16 %v1438
    %v4022 = vunpack.c.h.b16 %v1438
    %v4023 = vunpack.c.l.b16 %v1439
    %v4024 = vunpack.c.h.b16 %v1439
    %v4025 = vunpack.c.l.b16 %v1440
    %v4026 = vunpack.c.h.b16 %v1440
    %v4027 = vunpack.c.l.b16 %v1441
    %v4028 = vunpack.c.h.b16 %v1441
    %v4029 = vunpack.c.l.b16 %v1442
    %v4030 = vunpack.c.h.b16 %v1442
    %v4031 = vunpack.c.l.b16 %v1443
    %v4032 = vunpack.c.h.b16 %v1443
    %v4033 = vunpack.c.l.b16 %v1444
    %v4034 = vunpack.c.h.b16 %v1444
    %v4035 = vunpack.c.l.b16 %v1445
    %v4036 = vunpack.c.h.b16 %v1445
    %v4037 = vunpack.c.l.b16 %v1446
    %v4038 = vunpack.c.h.b16 %v1446
    %v4039 = vunpack.c.l.b16 %v1447
    %v4040 = vunpack.c.h.b16 %v1447
    %v4041 = vunpack.c.l.b16 %v1448
    %v4042 = vunpack.c.h.b16 %v1448
    %v4043 = vunpack.c.l.b16 %v1449
    %v4044 = vunpack.c.h.b16 %v1449
    %v4045 = vunpack.c.l.b16 %v1450
    %v4046 = vunpack.c.h.b16 %v1450
    %v4047 = vunpack.c.l.b16 %v1451
    %v4048 = vunpack.c.h.b16 %v1451
    %v4049 = vunpack.c.l.b16 %v1452
    %v4050 = vunpack.c.h.b16 %v1452
    %v4051 = vunpack.c.l.b16 %v1453
    %v4052 = vunpack.c.h.b16 %v1453
    %v4053 = vunpack.c.l.b16 %v1454
    %v4054 = vunpack.c.h.b16 %v1454
    %v4055 = vunpack.c.l.b16 %v1455
    %v4056 = vunpack.c.h.b16 %v1455
    %v4057 = vunpack.c.l.b16 %v1456
    %v4058 = vunpack.c.h.b16 %v1456
    %v4059 = vunpack.c.l.b16 %v1457
    %v4060 = vunpack.c.h.b16 %v1457
    %v4061 = vunpack.c.l.b16 %v1458
    %v4062 = vunpack.c.h.b16 %v1458
    %v4063 = vunpack.c.l.b16 %v1459
    %v4064 = vunpack.c.h.b16 %v1459
    %v4065 = vunpack.c.l.b16 %v1460
    %v4066 = vunpack.c.h.b16 %v1460
    %v4067 = vunpack.c.l.b16 %v1461
    %v4068 = vunpack.c.h.b16 %v1461
    %v4069 = vunpack.c.l.b16 %v1462
    %v4070 = vunpack.c.h.b16 %v1462
    %v4071 = vunpack.c.l.b16 %v1463
    %v4072 = vunpack.c.h.b16 %v1463
    %v4073 = vunpack.c.l.b16 %v1464
    %v4074 = vunpack.c.h.b16 %v1464
    %v4075 = vunpack.c.l.b16 %v1465
    %v4076 = vunpack.c.h.b16 %v1465
    %v4077 = vunpack.c.l.b16 %v1466
    %v4078 = vunpack.c.h.b16 %v1466
    %v4079 = vunpack.c.l.b16 %v1467
    %v4080 = vunpack.c.h.b16 %v1467
    %v4081 = vunpack.c.l.b16 %v1468
    %v4082 = vunpack.c.h.b16 %v1468
    %v4083 = vunpack.c.l.b16 %v1469
    %v4084 = vunpack.c.h.b16 %v1469
    %v4085 = vunpack.c.l.b16 %v1470
    %v4086 = vunpack.c.h.b16 %v1470
    %v4087 = vunpack.c.l.b16 %v1471
    %v4088 = vunpack.c.h.b16 %v1471
    %v4089 = vunpack.c.l.b16 %v1472
    %v4090 = vunpack.c.h.b16 %v1472
    %v4091 = vunpack.c.l.b16 %v1473
    %v4092 = vunpack.c.h.b16 %v1473
    %v4093 = vunpack.c.l.b16 %v1474
    %v4094 = vunpack.c.h.b16 %v1474
    %v4095 = vunpack.c.l.b16 %v1475
    %v4096 = vunpack.c.h.b16 %v1475
    %v4097 = vunpack.c.l.b16 %v1476
    %v4098 = vunpack.c.h.b16 %v1476
    %v4099 = vunpack.c.l.b16 %v1477
    %v4100 = vunpack.c.h.b16 %v1477
    %v4101 = vunpack.c.l.b16 %v1478
    %v4102 = vunpack.c.h.b16 %v1478
    %v4103 = vunpack.c.l.b16 %v1479
    %v4104 = vunpack.c.h.b16 %v1479
    %v4105 = vunpack.c.l.b16 %v1480
    %v4106 = vunpack.c.h.b16 %v1480
    %v4107 = vunpack.c.l.b16 %v1481
    %v4108 = vunpack.c.h.b16 %v1481
    %v4109 = vunpack.c.l.b16 %v1482
    %v4110 = vunpack.c.h.b16 %v1482
    %v4111 = vunpack.c.l.b16 %v1483
    %v4112 = vunpack.c.h.b16 %v1483
    %v4113 = vunpack.c.l.b16 %v1484
    %v4114 = vunpack.c.h.b16 %v1484
    %v4115 = vunpack.c.l.b16 %v1485
    %v4116 = vunpack.c.h.b16 %v1485
    %v4117 = vunpack.c.l.b16 %v1486
    %v4118 = vunpack.c.h.b16 %v1486
    %v4119 = vunpack.c.l.b16 %v1487
    %v4120 = vunpack.c.h.b16 %v1487
    %v4121 = vunpack.c.l.b16 %v1488
    %v4122 = vunpack.c.h.b16 %v1488
    %v4123 = vunpack.c.l.b16 %v1489
    %v4124 = vunpack.c.h.b16 %v1489
    %v4125 = vunpack.c.l.b16 %v1490
    %v4126 = vunpack.c.h.b16 %v1490
    %v4127 = vunpack.c.l.b16 %v1491
    %v4128 = vunpack.c.h.b16 %v1491
    %v4129 = vunpack.c.l.b16 %v1492
    %v4130 = vunpack.c.h.b16 %v1492
    %v4131 = vunpack.c.l.b16 %v1493
    %v4132 = vunpack.c.h.b16 %v1493
    %v4133 = vunpack.c.l.b16 %v1494
    %v4134 = vunpack.c.h.b16 %v1494
    %v4135 = vunpack.c.l.b16 %v1495
    %v4136 = vunpack.c.h.b16 %v1495
    %v4137 = vunpack.c.l.b16 %v1496
    %v4138 = vunpack.c.h.b16 %v1496
    %v4139 = vunpack.c.l.b16 %v1497
    %v4140 = vunpack.c.h.b16 %v1497
    %v4141 = vunpack.c.l.b16 %v1498
    %v4142 = vunpack.c.h.b16 %v1498
    %v4143 = vunpack.c.l.b16 %v1499
    %v4144 = vunpack.c.h.b16 %v1499
    %v4145 = vunpack.c.l.b16 %v1500
    %v4146 = vunpack.c.h.b16 %v1500
    %v4147 = vunpack.c.l.b16 %v1501
    %v4148 = vunpack.c.h.b16 %v1501
    %v4149 = vunpack.c.l.b16 %v1502
    %v4150 = vunpack.c.h.b16 %v1502
    %v4151 = vunpack.c.l.b16 %v1503
    %v4152 = vunpack.c.h.b16 %v1503
    %v4153 = vunpack.c.l.b16 %v1504
    %v4154 = vunpack.c.h.b16 %v1504
    %v4155 = vunpack.c.l.b16 %v1505
    %v4156 = vunpack.c.h.b16 %v1505
    %v4157 = vunpack.c.l.b16 %v1506
    %v4158 = vunpack.c.h.b16 %v1506
    %v4159 = vunpack.c.l.b16 %v1507
    %v4160 = vunpack.c.h.b16 %v1507
    %v4161 = vunpack.c.l.b16 %v1508
    %v4162 = vunpack.c.h.b16 %v1508
    %v4163 = vunpack.c.l.b16 %v1509
    %v4164 = vunpack.c.h.b16 %v1509
    %v4165 = vunpack.c.l.b16 %v1510
    %v4166 = vunpack.c.h.b16 %v1510
    %v4167 = vunpack.c.l.b16 %v1511
    %v4168 = vunpack.c.h.b16 %v1511
    %v4169 = vunpack.c.l.b16 %v1512
    %v4170 = vunpack.c.h.b16 %v1512
    %v4171 = vunpack.c.l.b16 %v1513
    %v4172 = vunpack.c.h.b16 %v1513
    %v4173 = vunpack.c.l.b16 %v1514
    %v4174 = vunpack.c.h.b16 %v1514
    %v4175 = vunpack.c.l.b16 %v1515
    %v4176 = vunpack.c.h.b16 %v1515
    %v4177 = vunpack.c.l.b16 %v1516
    %v4178 = vunpack.c.h.b16 %v1516
    %v4179 = vunpack.c.l.b16 %v1517
    %v4180 = vunpack.c.h.b16 %v1517
    %v4181 = vunpack.c.l.b16 %v1518
    %v4182 = vunpack.c.h.b16 %v1518
    %v4183 = vunpack.c.l.b16 %v1519
    %v4184 = vunpack.c.h.b16 %v1519
    %v4185 = vunpack.c.l.b16 %v1520
    %v4186 = vunpack.c.h.b16 %v1520
    %v4187 = vunpack.c.l.b16 %v1521
    %v4188 = vunpack.c.h.b16 %v1521
    %v4189 = vunpack.c.l.b16 %v1522
    %v4190 = vunpack.c.h.b16 %v1522
    %v4191 = vunpack.c.l.b16 %v1523
    %v4192 = vunpack.c.h.b16 %v1523
    %v4193 = vunpack.c.l.b16 %v1524
    %v4194 = vunpack.c.h.b16 %v1524
    %v4195 = vunpack.c.l.b16 %v1525
    %v4196 = vunpack.c.h.b16 %v1525
    %v4197 = vunpack.c.l.b16 %v1526
    %v4198 = vunpack.c.h.b16 %v1526
    %v4199 = vunpack.c.l.b16 %v1527
    %v4200 = vunpack.c.h.b16 %v1527
    %v4201 = vunpack.c.l.b16 %v1528
    %v4202 = vunpack.c.h.b16 %v1528
    %v4203 = vunpack.c.l.b16 %v1529
    %v4204 = vunpack.c.h.b16 %v1529
    %v4205 = vunpack.c.l.b16 %v1530
    %v4206 = vunpack.c.h.b16 %v1530
    %v4207 = vunpack.c.l.b16 %v1531
    %v4208 = vunpack.c.h.b16 %v1531
    %v4209 = vunpack.c.l.b16 %v1532
    %v4210 = vunpack.c.h.b16 %v1532
    %v4211 = vunpack.c.l.b16 %v1533
    %v4212 = vunpack.c.h.b16 %v1533
    %v4213 = vunpack.c.l.b16 %v1534
    %v4214 = vunpack.c.h.b16 %v1534
    %v4215 = vunpack.c.l.b16 %v1535
    %v4216 = vunpack.c.h.b16 %v1535
    %v4217 = vunpack.c.l.b16 %v1536
    %v4218 = vunpack.c.h.b16 %v1536
    %v4219 = vunpack.c.l.b16 %v1537
    %v4220 = vunpack.c.h.b16 %v1537
    %v4221 = vunpack.c.l.b16 %v1538
    %v4222 = vunpack.c.h.b16 %v1538
    %v4223 = vunpack.c.l.b16 %v1539
    %v4224 = vunpack.c.h.b16 %v1539
    %v4225 = vunpack.c.l.b16 %v1540
    %v4226 = vunpack.c.h.b16 %v1540
    %v4227 = vunpack.c.l.b16 %v1541
    %v4228 = vunpack.c.h.b16 %v1541
    %v4229 = vunpack.c.l.b16 %v1542
    %v4230 = vunpack.c.h.b16 %v1542
    %v4231 = vunpack.c.l.b16 %v1543
    %v4232 = vunpack.c.h.b16 %v1543
    %v4233 = vunpack.c.l.b16 %v1544
    %v4234 = vunpack.c.h.b16 %v1544
    %v4235 = vunpack.c.l.b16 %v1545
    %v4236 = vunpack.c.h.b16 %v1545
    %v4237 = vunpack.c.l.b16 %v1546
    %v4238 = vunpack.c.h.b16 %v1546
    %v4239 = vunpack.c.l.b16 %v1547
    %v4240 = vunpack.c.h.b16 %v1547
    %v4241 = vunpack.c.l.b16 %v1548
    %v4242 = vunpack.c.h.b16 %v1548
    %v4243 = vunpack.c.l.b16 %v1549
    %v4244 = vunpack.c.h.b16 %v1549
    %v4245 = vunpack.c.l.b16 %v1550
    %v4246 = vunpack.c.h.b16 %v1550
    %v4247 = vunpack.c.l.b16 %v1551
    %v4248 = vunpack.c.h.b16 %v1551
    %v4249 = vunpack.c.l.b16 %v1552
    %v4250 = vunpack.c.h.b16 %v1552
    %v4251 = vunpack.c.l.b16 %v1553
    %v4252 = vunpack.c.h.b16 %v1553
    %v4253 = vunpack.c.l.b16 %v1554
    %v4254 = vunpack.c.h.b16 %v1554
    %v4255 = vunpack.c.l.b16 %v1555
    %v4256 = vunpack.c.h.b16 %v1555
    %v4257 = vunpack.c.l.b16 %v1556
    %v4258 = vunpack.c.h.b16 %v1556
    %v4259 = vunpack.c.l.b16 %v1557
    %v4260 = vunpack.c.h.b16 %v1557
    %v4261 = vunpack.c.l.b16 %v1558
    %v4262 = vunpack.c.h.b16 %v1558
    %v4263 = vunpack.c.l.b16 %v1559
    %v4264 = vunpack.c.h.b16 %v1559
    %v4265 = vunpack.c.l.b16 %v1560
    %v4266 = vunpack.c.h.b16 %v1560
    %v4267 = vunpack.c.l.b16 %v1561
    %v4268 = vunpack.c.h.b16 %v1561
    %v4269 = vunpack.c.l.b16 %v1562
    %v4270 = vunpack.c.h.b16 %v1562
    %v4271 = vunpack.c.l.b16 %v1563
    %v4272 = vunpack.c.h.b16 %v1563
    %v4273 = vunpack.c.l.b16 %v1564
    %v4274 = vunpack.c.h.b16 %v1564
    %v4275 = vunpack.c.l.b16 %v1565
    %v4276 = vunpack.c.h.b16 %v1565
    %v4277 = vunpack.c.l.b16 %v1566
    %v4278 = vunpack.c.h.b16 %v1566
    %v4279 = vunpack.c.l.b16 %v1567
    %v4280 = vunpack.c.h.b16 %v1567
    %v4281 = vunpack.c.l.b16 %v1568
    %v4282 = vunpack.c.h.b16 %v1568
    %v4283 = vunpack.c.l.b16 %v1569
    %v4284 = vunpack.c.h.b16 %v1569
    %v4285 = vunpack.c.l.b16 %v1570
    %v4286 = vunpack.c.h.b16 %v1570
    %v4287 = vunpack.c.l.b16 %v1571
    %v4288 = vunpack.c.h.b16 %v1571
    %v4289 = vunpack.c.l.b16 %v1572
    %v4290 = vunpack.c.h.b16 %v1572
    %v4291 = vunpack.c.l.b16 %v1573
    %v4292 = vunpack.c.h.b16 %v1573
    %v4293 = vunpack.c.l.b16 %v1574
    %v4294 = vunpack.c.h.b16 %v1574
    %v4295 = vunpack.c.l.b16 %v1575
    %v4296 = vunpack.c.h.b16 %v1575
    %v4297 = vunpack.c.l.b16 %v1576
    %v4298 = vunpack.c.h.b16 %v1576
    %v4299 = vunpack.c.l.b16 %v1577
    %v4300 = vunpack.c.h.b16 %v1577
    %v4301 = vunpack.c.l.b16 %v1578
    %v4302 = vunpack.c.h.b16 %v1578
    %v4303 = vunpack.c.l.b16 %v1579
    %v4304 = vunpack.c.h.b16 %v1579
    %v4305 = vunpack.c.l.b16 %v1580
    %v4306 = vunpack.c.h.b16 %v1580
    %v4307 = vunpack.c.l.b16 %v1581
    %v4308 = vunpack.c.h.b16 %v1581
    %v4309 = vunpack.c.l.b16 %v1582
    %v4310 = vunpack.c.h.b16 %v1582
    %v4311 = vunpack.c.l.b16 %v1583
    %v4312 = vunpack.c.h.b16 %v1583
    %v4313 = vunpack.c.l.b16 %v1584
    %v4314 = vunpack.c.h.b16 %v1584
    %v4315 = vunpack.c.l.b16 %v1585
    %v4316 = vunpack.c.h.b16 %v1585
    %v4317 = vunpack.c.l.b16 %v1586
    %v4318 = vunpack.c.h.b16 %v1586
    %v4319 = vunpack.c.l.b16 %v1587
    %v4320 = vunpack.c.h.b16 %v1587
    %v4321 = vunpack.c.l.b16 %v1588
    %v4322 = vunpack.c.h.b16 %v1588
    %v4323 = vunpack.c.l.b16 %v1589
    %v4324 = vunpack.c.h.b16 %v1589
    %v4325 = vunpack.c.l.b16 %v1590
    %v4326 = vunpack.c.h.b16 %v1590
    %v4327 = vunpack.c.l.b16 %v1591
    %v4328 = vunpack.c.h.b16 %v1591
    %v4329 = vunpack.c.l.b16 %v1592
    %v4330 = vunpack.c.h.b16 %v1592
    %v4331 = vunpack.c.l.b16 %v1593
    %v4332 = vunpack.c.h.b16 %v1593
    %v4333 = vunpack.c.l.b16 %v1594
    %v4334 = vunpack.c.h.b16 %v1594
    %v4335 = vunpack.c.l.b16 %v1595
    %v4336 = vunpack.c.h.b16 %v1595
    %v4337 = vunpack.c.l.b16 %v1596
    %v4338 = vunpack.c.h.b16 %v1596
    %v4339 = vunpack.c.l.b16 %v1597
    %v4340 = vunpack.c.h.b16 %v1597
    %v4341 = vunpack.c.l.b16 %v1598
    %v4342 = vunpack.c.h.b16 %v1598
    %v4343 = vunpack.c.l.b16 %v1599
    %v4344 = vunpack.c.h.b16 %v1599
    %v4345 = vunpack.c.l.b16 %v1600
    %v4346 = vunpack.c.h.b16 %v1600
    %v4347 = vunpack.c.l.b16 %v1601
    %v4348 = vunpack.c.h.b16 %v1601
    %v4349 = vunpack.c.l.b16 %v1602
    %v4350 = vunpack.c.h.b16 %v1602
    %v4351 = vunpack.c.l.b16 %v1603
    %v4352 = vunpack.c.h.b16 %v1603
    %v4353 = vunpack.c.l.b16 %v1604
    %v4354 = vunpack.c.h.b16 %v1604
    %v4355 = vunpack.c.l.b16 %v1605
    %v4356 = vunpack.c.h.b16 %v1605
    %v4357 = vunpack.c.l.b16 %v1606
    %v4358 = vunpack.c.h.b16 %v1606
    %v4359 = vunpack.c.l.b16 %v1607
    %v4360 = vunpack.c.h.b16 %v1607
    %v4361 = vunpack.c.l.b16 %v1608
    %v4362 = vunpack.c.h.b16 %v1608
    %v4363 = vunpack.c.l.b16 %v1609
    %v4364 = vunpack.c.h.b16 %v1609
    %v4365 = vunpack.c.l.b16 %v1610
    %v4366 = vunpack.c.h.b16 %v1610
    %v4367 = vunpack.c.l.b16 %v1611
    %v4368 = vunpack.c.h.b16 %v1611
    %v4369 = vunpack.c.l.b16 %v1612
    %v4370 = vunpack.c.h.b16 %v1612
    %v4371 = vunpack.c.l.b16 %v1613
    %v4372 = vunpack.c.h.b16 %v1613
    %v4373 = vunpack.c.l.b16 %v1614
    %v4374 = vunpack.c.h.b16 %v1614
    %v4375 = vunpack.c.l.b16 %v1615
    %v4376 = vunpack.c.h.b16 %v1615
    %v4377 = vunpack.c.l.b16 %v1616
    %v4378 = vunpack.c.h.b16 %v1616
    %v4379 = vunpack.c.l.b16 %v1617
    %v4380 = vunpack.c.h.b16 %v1617
    %v4381 = vunpack.c.l.b16 %v1618
    %v4382 = vunpack.c.h.b16 %v1618
    %v4383 = vunpack.c.l.b16 %v1619
    %v4384 = vunpack.c.h.b16 %v1619
    %v4385 = vunpack.c.l.b16 %v1620
    %v4386 = vunpack.c.h.b16 %v1620
    %v4387 = vunpack.c.l.b16 %v1621
    %v4388 = vunpack.c.h.b16 %v1621
    %v4389 = vunpack.c.l.b16 %v1622
    %v4390 = vunpack.c.h.b16 %v1622
    %v4391 = vunpack.c.l.b16 %v1623
    %v4392 = vunpack.c.h.b16 %v1623
    %v4393 = vunpack.c.l.b16 %v1624
    %v4394 = vunpack.c.h.b16 %v1624
    %v4395 = vunpack.c.l.b16 %v1625
    %v4396 = vunpack.c.h.b16 %v1625
    %v4397 = vunpack.c.l.b16 %v1626
    %v4398 = vunpack.c.h.b16 %v1626
    %v4399 = vunpack.c.l.b16 %v1627
    %v4400 = vunpack.c.h.b16 %v1627
    %v4401 = vunpack.c.l.b16 %v1628
    %v4402 = vunpack.c.h.b16 %v1628
    %v4403 = vunpack.c.l.b16 %v1629
    %v4404 = vunpack.c.h.b16 %v1629
    %v4405 = vunpack.c.l.b16 %v1630
    %v4406 = vunpack.c.h.b16 %v1630
    %v4407 = vunpack.c.l.b16 %v1631
    %v4408 = vunpack.c.h.b16 %v1631
    %v4409 = vunpack.c.l.b16 %v1632
    %v4410 = vunpack.c.h.b16 %v1632
    %v4411 = vunpack.c.l.b16 %v1633
    %v4412 = vunpack.c.h.b16 %v1633
    %v4413 = vunpack.c.l.b16 %v1634
    %v4414 = vunpack.c.h.b16 %v1634
    %v4415 = vunpack.c.l.b16 %v1635
    %v4416 = vunpack.c.h.b16 %v1635
    %v4417 = vunpack.c.l.b16 %v1636
    %v4418 = vunpack.c.h.b16 %v1636
    %v4419 = vunpack.c.l.b16 %v1637
    %v4420 = vunpack.c.h.b16 %v1637
    %v4421 = vunpack.c.l.b16 %v1638
    %v4422 = vunpack.c.h.b16 %v1638
    %v4423 = vunpack.c.l.b16 %v1639
    %v4424 = vunpack.c.h.b16 %v1639
    %v4425 = vunpack.c.l.b16 %v1640
    %v4426 = vunpack.c.h.b16 %v1640
    %v4427 = vunpack.c.l.b16 %v1641
    %v4428 = vunpack.c.h.b16 %v1641
    %v4429 = vunpack.c.l.b16 %v1642
    %v4430 = vunpack.c.h.b16 %v1642
    %v4431 = vunpack.c.l.b16 %v1643
    %v4432 = vunpack.c.h.b16 %v1643
    %v4433 = vunpack.c.l.b16 %v1644
    %v4434 = vunpack.c.h.b16 %v1644
    %v4435 = vunpack.c.l.b16 %v1645
    %v4436 = vunpack.c.h.b16 %v1645
    %v4437 = vunpack.c.l.b16 %v1646
    %v4438 = vunpack.c.h.b16 %v1646
    %v4439 = vunpack.c.l.b16 %v1647
    %v4440 = vunpack.c.h.b16 %v1647
    %v4441 = vunpack.c.l.b16 %v1648
    %v4442 = vunpack.c.h.b16 %v1648
    %v4443 = vunpack.c.l.b16 %v1649
    %v4444 = vunpack.c.h.b16 %v1649
    %v4445 = vunpack.c.l.b16 %v1650
    %v4446 = vunpack.c.h.b16 %v1650
    %v4447 = vunpack.c.l.b16 %v1651
    %v4448 = vunpack.c.h.b16 %v1651
    %v4449 = vunpack.c.l.b16 %v1652
    %v4450 = vunpack.c.h.b16 %v1652
    %v4451 = vunpack.c.l.b16 %v1653
    %v4452 = vunpack.c.h.b16 %v1653
    %v4453 = vunpack.c.l.b16 %v1654
    %v4454 = vunpack.c.h.b16 %v1654
    %v4455 = vunpack.c.l.b16 %v1655
    %v4456 = vunpack.c.h.b16 %v1655
    %v4457 = vunpack.c.l.b16 %v1656
    %v4458 = vunpack.c.h.b16 %v1656
    %v4459 = vunpack.c.l.b16 %v1657
    %v4460 = vunpack.c.h.b16 %v1657
    %v4461 = vunpack.c.l.b16 %v1658
    %v4462 = vunpack.c.h.b16 %v1658
    %v4463 = vunpack.c.l.b16 %v1659
    %v4464 = vunpack.c.h.b16 %v1659
    %v4465 = vunpack.c.l.b16 %v1660
    %v4466 = vunpack.c.h.b16 %v1660
    %v4467 = vunpack.c.l.b16 %v1661
    %v4468 = vunpack.c.h.b16 %v1661
    %v4469 = vunpack.c.l.b16 %v1662
    %v4470 = vunpack.c.h.b16 %v1662
    %v4471 = vunpack.c.l.b16 %v1663
    %v4472 = vunpack.c.h.b16 %v1663
    %v4473 = vunpack.c.l.b16 %v1664
    %v4474 = vunpack.c.h.b16 %v1664
    %v4475 = vunpack.c.l.b16 %v1665
    %v4476 = vunpack.c.h.b16 %v1665
    %v4477 = vunpack.c.l.b16 %v1666
    %v4478 = vunpack.c.h.b16 %v1666
    %v4479 = vunpack.c.l.b16 %v1667
    %v4480 = vunpack.c.h.b16 %v1667
    %v4481 = vunpack.c.l.b16 %v1668
    %v4482 = vunpack.c.h.b16 %v1668
    %v4483 = vunpack.c.l.b16 %v1669
    %v4484 = vunpack.c.h.b16 %v1669
    %v4485 = vunpack.c.l.b16 %v1670
    %v4486 = vunpack.c.h.b16 %v1670
    %v4487 = vunpack.c.l.b16 %v1671
    %v4488 = vunpack.c.h.b16 %v1671
    %v4489 = vunpack.c.l.b16 %v1672
    %v4490 = vunpack.c.h.b16 %v1672
    %v4491 = vunpack.c.l.b16 %v1673
    %v4492 = vunpack.c.h.b16 %v1673
    %v4493 = vunpack.c.l.b16 %v1674
    %v4494 = vunpack.c.h.b16 %v1674
    %v4495 = vunpack.c.l.b16 %v1675
    %v4496 = vunpack.c.h.b16 %v1675
    %v4497 = vunpack.c.l.b16 %v1676
    %v4498 = vunpack.c.h.b16 %v1676
    %v4499 = vunpack.c.l.b16 %v1677
    %v4500 = vunpack.c.h.b16 %v1677
    %v4501 = vunpack.c.l.b16 %v1678
    %v4502 = vunpack.c.h.b16 %v1678
    %v4503 = vunpack.c.l.b16 %v1679
    %v4504 = vunpack.c.h.b16 %v1679
    %v4505 = vunpack.c.l.b16 %v1680
    %v4506 = vunpack.c.h.b16 %v1680
    %v4507 = vunpack.c.l.b16 %v1681
    %v4508 = vunpack.c.h.b16 %v1681
    %v4509 = vunpack.c.l.b16 %v1682
    %v4510 = vunpack.c.h.b16 %v1682
    %v4511 = vunpack.c.l.b16 %v1683
    %v4512 = vunpack.c.h.b16 %v1683
    %v4513 = vunpack.c.l.b16 %v1684
    %v4514 = vunpack.c.h.b16 %v1684
    %v4515 = vunpack.c.l.b16 %v1685
    %v4516 = vunpack.c.h.b16 %v1685
    %v4517 = vunpack.c.l.b16 %v1686
    %v4518 = vunpack.c.h.b16 %v1686
    %v4519 = vunpack.c.l.b16 %v1687
    %v4520 = vunpack.c.h.b16 %v1687
    %v4521 = vunpack.c.l.b16 %v1688
    %v4522 = vunpack.c.h.b16 %v1688
    %v4523 = vunpack.c.l.b16 %v1689
    %v4524 = vunpack.c.h.b16 %v1689
    %v4525 = vunpack.c.l.b16 %v1690
    %v4526 = vunpack.c.h.b16 %v1690
    %v4527 = vunpack.c.l.b16 %v1691
    %v4528 = vunpack.c.h.b16 %v1691
    %v4529 = vunpack.c.l.b16 %v1692
    %v4530 = vunpack.c.h.b16 %v1692
    %v4531 = vunpack.c.l.b16 %v1693
    %v4532 = vunpack.c.h.b16 %v1693
    %v4533 = vunpack.c.l.b16 %v1694
    %v4534 = vunpack.c.h.b16 %v1694
    %v4535 = vunpack.c.l.b16 %v1695
    %v4536 = vunpack.c.h.b16 %v1695
    %v4537 = vunpack.c.l.b16 %v1696
    %v4538 = vunpack.c.h.b16 %v1696
    %v4539 = vunpack.c.l.b16 %v1697
    %v4540 = vunpack.c.h.b16 %v1697
    %v4541 = vunpack.c.l.b16 %v1698
    %v4542 = vunpack.c.h.b16 %v1698
    %v4543 = vunpack.c.l.b16 %v1699
    %v4544 = vunpack.c.h.b16 %v1699
    %v4545 = vunpack.c.l.b16 %v1700
    %v4546 = vunpack.c.h.b16 %v1700
    %v4547 = vunpack.c.l.b16 %v1701
    %v4548 = vunpack.c.h.b16 %v1701
    %v4549 = vunpack.c.l.b16 %v1702
    %v4550 = vunpack.c.h.b16 %v1702
    %v4551 = vunpack.c.l.b16 %v1703
    %v4552 = vunpack.c.h.b16 %v1703
    %v4553 = vunpack.c.l.b16 %v1704
    %v4554 = vunpack.c.h.b16 %v1704
    %v4555 = vunpack.c.l.b16 %v1705
    %v4556 = vunpack.c.h.b16 %v1705
    %v4557 = vunpack.c.l.b16 %v1706
    %v4558 = vunpack.c.h.b16 %v1706
    %v4559 = vunpack.c.l.b16 %v1707
    %v4560 = vunpack.c.h.b16 %v1707
    %v4561 = vunpack.c.l.b16 %v1708
    %v4562 = vunpack.c.h.b16 %v1708
    %v4563 = vunpack.c.l.b16 %v1709
    %v4564 = vunpack.c.h.b16 %v1709
    %v4565 = vunpack.c.l.b16 %v1710
    %v4566 = vunpack.c.h.b16 %v1710
    %v4567 = vunpack.c.l.b16 %v1711
    %v4568 = vunpack.c.h.b16 %v1711
    %v4569 = vunpack.c.l.b16 %v1712
    %v4570 = vunpack.c.h.b16 %v1712
    %v4571 = vunpack.c.l.b16 %v1713
    %v4572 = vunpack.c.h.b16 %v1713
    %v4573 = vunpack.c.l.b16 %v1714
    %v4574 = vunpack.c.h.b16 %v1714
    %v4575 = vunpack.c.l.b16 %v1715
    %v4576 = vunpack.c.h.b16 %v1715
    %v4577 = vunpack.c.l.b16 %v1716
    %v4578 = vunpack.c.h.b16 %v1716
    %v4579 = vunpack.c.l.b16 %v1717
    %v4580 = vunpack.c.h.b16 %v1717
    %v4581 = vunpack.c.l.b16 %v1718
    %v4582 = vunpack.c.h.b16 %v1718
    %v4583 = vunpack.c.l.b16 %v1719
    %v4584 = vunpack.c.h.b16 %v1719
    %v4585 = vunpack.c.l.b16 %v1720
    %v4586 = vunpack.c.h.b16 %v1720
    %v4587 = vunpack.c.l.b16 %v1721
    %v4588 = vunpack.c.h.b16 %v1721
    %v4589 = vunpack.c.l.b16 %v1722
    %v4590 = vunpack.c.h.b16 %v1722
    %v4591 = vunpack.c.l.b16 %v1723
    %v4592 = vunpack.c.h.b16 %v1723
    %v4593 = vunpack.c.l.b16 %v1724
    %v4594 = vunpack.c.h.b16 %v1724
    %v4595 = vunpack.c.l.b16 %v1725
    %v4596 = vunpack.c.h.b16 %v1725
    %v4597 = vunpack.c.l.b16 %v1726
    %v4598 = vunpack.c.h.b16 %v1726
    %v4599 = vunpack.c.l.b16 %v1727
    %v4600 = vunpack.c.h.b16 %v1727
    %v4601 = vunpack.c.l.b16 %v1728
    %v4602 = vunpack.c.h.b16 %v1728
    %v4603 = vunpack.c.l.b16 %v1729
    %v4604 = vunpack.c.h.b16 %v1729
    %v4605 = vunpack.c.l.b16 %v1730
    %v4606 = vunpack.c.h.b16 %v1730
    %v4607 = vunpack.c.l.b16 %v1731
    %v4608 = vunpack.c.h.b16 %v1731
    %v4609 = vunpack.c.l.b16 %v1732
    %v4610 = vunpack.c.h.b16 %v1732
    %v4611 = vunpack.c.l.b16 %v1733
    %v4612 = vunpack.c.h.b16 %v1733
    %v4613 = vunpack.c.l.b16 %v1734
    %v4614 = vunpack.c.h.b16 %v1734
    %v4615 = vunpack.c.l.b16 %v1735
    %v4616 = vunpack.c.h.b16 %v1735
    %v4617 = vunpack.c.l.b16 %v1736
    %v4618 = vunpack.c.h.b16 %v1736
    %v4619 = vunpack.c.l.b16 %v1737
    %v4620 = vunpack.c.h.b16 %v1737
    %v4621 = vunpack.c.l.b16 %v1738
    %v4622 = vunpack.c.h.b16 %v1738
    %v4623 = vunpack.c.l.b16 %v1739
    %v4624 = vunpack.c.h.b16 %v1739
    %v4625 = vunpack.c.l.b16 %v1740
    %v4626 = vunpack.c.h.b16 %v1740
    %v4627 = vunpack.c.l.b16 %v1741
    %v4628 = vunpack.c.h.b16 %v1741
    %v4629 = vunpack.c.l.b16 %v1742
    %v4630 = vunpack.c.h.b16 %v1742
    %v4631 = vunpack.c.l.b16 %v1743
    %v4632 = vunpack.c.h.b16 %v1743
    %v4633 = vunpack.c.l.b16 %v1744
    %v4634 = vunpack.c.h.b16 %v1744
    %v4635 = vunpack.c.l.b16 %v1745
    %v4636 = vunpack.c.h.b16 %v1745
    %v4637 = vunpack.c.l.b16 %v1746
    %v4638 = vunpack.c.h.b16 %v1746
    %v4639 = vunpack.c.l.b16 %v1747
    %v4640 = vunpack.c.h.b16 %v1747
    %v4641 = vunpack.c.l.b16 %v1748
    %v4642 = vunpack.c.h.b16 %v1748
    %v4643 = vunpack.c.l.b16 %v1749
    %v4644 = vunpack.c.h.b16 %v1749
    %v4645 = vunpack.c.l.b16 %v1750
    %v4646 = vunpack.c.h.b16 %v1750
    %v4647 = vunpack.c.l.b16 %v1751
    %v4648 = vunpack.c.h.b16 %v1751
    %v4649 = vunpack.c.l.b16 %v1752
    %v4650 = vunpack.c.h.b16 %v1752
    %v4651 = vunpack.c.l.b16 %v1753
    %v4652 = vunpack.c.h.b16 %v1753
    %v4653 = vunpack.c.l.b16 %v1754
    %v4654 = vunpack.c.h.b16 %v1754
    %v4655 = vunpack.c.l.b16 %v1755
    %v4656 = vunpack.c.h.b16 %v1755
    %v4657 = vunpack.c.l.b16 %v1756
    %v4658 = vunpack.c.h.b16 %v1756
    %v4659 = vunpack.c.l.b16 %v1757
    %v4660 = vunpack.c.h.b16 %v1757
    %v4661 = vunpack.c.l.b16 %v1758
    %v4662 = vunpack.c.h.b16 %v1758
    %v4663 = vunpack.c.l.b16 %v1759
    %v4664 = vunpack.c.h.b16 %v1759
    %v4665 = vunpack.c.l.b16 %v1760
    %v4666 = vunpack.c.h.b16 %v1760
    %v4667 = vunpack.c.l.b16 %v1761
    %v4668 = vunpack.c.h.b16 %v1761
    %v4669 = vunpack.c.l.b16 %v1762
    %v4670 = vunpack.c.h.b16 %v1762
    %v4671 = vunpack.c.l.b16 %v1763
    %v4672 = vunpack.c.h.b16 %v1763
    %v4673 = vunpack.c.l.b16 %v1764
    %v4674 = vunpack.c.h.b16 %v1764
    %v4675 = vunpack.c.l.b16 %v1765
    %v4676 = vunpack.c.h.b16 %v1765
    %v4677 = vunpack.c.l.b16 %v1766
    %v4678 = vunpack.c.h.b16 %v1766
    %v4679 = vunpack.c.l.b16 %v1767
    %v4680 = vunpack.c.h.b16 %v1767
    %v4681 = vunpack.c.l.b16 %v1768
    %v4682 = vunpack.c.h.b16 %v1768
    %v4683 = vunpack.c.l.b16 %v1769
    %v4684 = vunpack.c.h.b16 %v1769
    %v4685 = vunpack.c.l.b16 %v1770
    %v4686 = vunpack.c.h.b16 %v1770
    %v4687 = vunpack.c.l.b16 %v1771
    %v4688 = vunpack.c.h.b16 %v1771
    %v4689 = vunpack.c.l.b16 %v1772
    %v4690 = vunpack.c.h.b16 %v1772
    %v4691 = vunpack.c.l.b16 %v1773
    %v4692 = vunpack.c.h.b16 %v1773
    %v4693 = vunpack.c.l.b16 %v1774
    %v4694 = vunpack.c.h.b16 %v1774
    %v4695 = vunpack.c.l.b16 %v1775
    %v4696 = vunpack.c.h.b16 %v1775
    %v4697 = vunpack.c.l.b16 %v1776
    %v4698 = vunpack.c.h.b16 %v1776
    %v4699 = vunpack.c.l.b16 %v1777
    %v4700 = vunpack.c.h.b16 %v1777
    %v4701 = vunpack.c.l.b16 %v1778
    %v4702 = vunpack.c.h.b16 %v1778
    %v4703 = vunpack.c.l.b16 %v1779
    %v4704 = vunpack.c.h.b16 %v1779
    %v4705 = vunpack.c.l.b16 %v1780
    %v4706 = vunpack.c.h.b16 %v1780
    %v4707 = vunpack.c.l.b16 %v1781
    %v4708 = vunpack.c.h.b16 %v1781
    %v4709 = vunpack.c.l.b16 %v1782
    %v4710 = vunpack.c.h.b16 %v1782
    %v4711 = vunpack.c.l.b16 %v1783
    %v4712 = vunpack.c.h.b16 %v1783
    %v4713 = vunpack.c.l.b16 %v1784
    %v4714 = vunpack.c.h.b16 %v1784
    %v4715 = vunpack.c.l.b16 %v1785
    %v4716 = vunpack.c.h.b16 %v1785
    %v4717 = vunpack.c.l.b16 %v1786
    %v4718 = vunpack.c.h.b16 %v1786
    %v4719 = vunpack.c.l.b16 %v1787
    %v4720 = vunpack.c.h.b16 %v1787
    %v4721 = vunpack.c.l.b16 %v1788
    %v4722 = vunpack.c.h.b16 %v1788
    %v4723 = vunpack.c.l.b16 %v1789
    %v4724 = vunpack.c.h.b16 %v1789
    %v4725 = vunpack.c.l.b16 %v1790
    %v4726 = vunpack.c.h.b16 %v1790
    %v4727 = vunpack.c.l.b16 %v1791
    %v4728 = vunpack.c.h.b16 %v1791
    %v4729 = vunpack.c.l.b16 %v1792
    %v4730 = vunpack.c.h.b16 %v1792
    %v4731 = vunpack.c.l.b16 %v1793
    %v4732 = vunpack.c.h.b16 %v1793
    %v4733 = vunpack.c.l.b16 %v1794
    %v4734 = vunpack.c.h.b16 %v1794
    %v4735 = vunpack.c.l.b16 %v1795
    %v4736 = vunpack.c.h.b16 %v1795
    %v4737 = vunpack.c.l.b16 %v1796
    %v4738 = vunpack.c.h.b16 %v1796
    %v4739 = vunpack.c.l.b16 %v1797
    %v4740 = vunpack.c.h.b16 %v1797
    %v4741 = vunpack.c.l.b16 %v1798
    %v4742 = vunpack.c.h.b16 %v1798
    %v4743 = vunpack.c.l.b16 %v1799
    %v4744 = vunpack.c.h.b16 %v1799
    %v4745 = vunpack.c.l.b16 %v1800
    %v4746 = vunpack.c.h.b16 %v1800
    %v4747 = vunpack.c.l.b16 %v1801
    %v4748 = vunpack.c.h.b16 %v1801
    %v4749 = vunpack.c.l.b16 %v1802
    %v4750 = vunpack.c.h.b16 %v1802
    %v4751 = vunpack.c.l.b16 %v1803
    %v4752 = vunpack.c.h.b16 %v1803
    %v4753 = vunpack.c.l.b16 %v1804
    %v4754 = vunpack.c.h.b16 %v1804
    %v4755 = vunpack.c.l.b16 %v1805
    %v4756 = vunpack.c.h.b16 %v1805
    %v4757 = vunpack.c.l.b16 %v1806
    %v4758 = vunpack.c.h.b16 %v1806
    %v4759 = vunpack.c.l.b16 %v1807
    %v4760 = vunpack.c.h.b16 %v1807
    %v4761 = vunpack.c.l.b16 %v1808
    %v4762 = vunpack.c.h.b16 %v1808
    %v4763 = vunpack.c.l.b16 %v1809
    %v4764 = vunpack.c.h.b16 %v1809
    %v4765 = vunpack.c.l.b16 %v1810
    %v4766 = vunpack.c.h.b16 %v1810
    %v4767 = vunpack.c.l.b16 %v1811
    %v4768 = vunpack.c.h.b16 %v1811
    %v4769 = vunpack.c.l.b16 %v1812
    %v4770 = vunpack.c.h.b16 %v1812
    %v4771 = vunpack.c.l.b16 %v1813
    %v4772 = vunpack.c.h.b16 %v1813
    %v4773 = vunpack.c.l.b16 %v1814
    %v4774 = vunpack.c.h.b16 %v1814
    %v4775 = vunpack.c.l.b16 %v1815
    %v4776 = vunpack.c.h.b16 %v1815
    %v4777 = vunpack.c.l.b16 %v1816
    %v4778 = vunpack.c.h.b16 %v1816
    %v4779 = vunpack.c.l.b16 %v1817
    %v4780 = vunpack.c.h.b16 %v1817
    %v4781 = vunpack.c.l.b16 %v1818
    %v4782 = vunpack.c.h.b16 %v1818
    %v4783 = vunpack.c.l.b16 %v1819
    %v4784 = vunpack.c.h.b16 %v1819
    %v4785 = vunpack.c.l.b16 %v1820
    %v4786 = vunpack.c.h.b16 %v1820
    %v4787 = vunpack.c.l.b16 %v1821
    %v4788 = vunpack.c.h.b16 %v1821
    %v4789 = vunpack.c.l.b16 %v1822
    %v4790 = vunpack.c.h.b16 %v1822
    %v4791 = vunpack.c.l.b16 %v1823
    %v4792 = vunpack.c.h.b16 %v1823
    %v4793 = vunpack.c.l.b16 %v1824
    %v4794 = vunpack.c.h.b16 %v1824
    %v4795 = vunpack.c.l.b16 %v1825
    %v4796 = vunpack.c.h.b16 %v1825
    %v4797 = vunpack.c.l.b16 %v1826
    %v4798 = vunpack.c.h.b16 %v1826
    %v4799 = vunpack.c.l.b16 %v1827
    %v4800 = vunpack.c.h.b16 %v1827
    %v4801 = vunpack.c.l.b16 %v1828
    %v4802 = vunpack.c.h.b16 %v1828
    %v4803 = vunpack.c.l.b16 %v1829
    %v4804 = vunpack.c.h.b16 %v1829
    %v4805 = vunpack.c.l.b16 %v1830
    %v4806 = vunpack.c.h.b16 %v1830
    %v4807 = vunpack.c.l.b16 %v1831
    %v4808 = vunpack.c.h.b16 %v1831
    %v4809 = vunpack.c.l.b16 %v1832
    %v4810 = vunpack.c.h.b16 %v1832
    %v4811 = vunpack.c.l.b16 %v1833
    %v4812 = vunpack.c.h.b16 %v1833
    %v4813 = vunpack.c.l.b16 %v1834
    %v4814 = vunpack.c.h.b16 %v1834
    %v4815 = vunpack.c.l.b16 %v1835
    %v4816 = vunpack.c.h.b16 %v1835
    %v4817 = vunpack.c.l.b16 %v1836
    %v4818 = vunpack.c.h.b16 %v1836
    %v4819 = vunpack.c.l.b16 %v1837
    %v4820 = vunpack.c.h.b16 %v1837
    %v4821 = vunpack.c.l.b16 %v1838
    %v4822 = vunpack.c.h.b16 %v1838
    %v4823 = vunpack.c.l.b16 %v1839
    %v4824 = vunpack.c.h.b16 %v1839
    %v4825 = vunpack.c.l.b16 %v1840
    %v4826 = vunpack.c.h.b16 %v1840
    %v4827 = vunpack.c.l.b16 %v1841
    %v4828 = vunpack.c.h.b16 %v1841
    %v4829 = vunpack.c.l.b16 %v1842
    %v4830 = vunpack.c.h.b16 %v1842
    %v4831 = vunpack.c.l.b16 %v1843
    %v4832 = vunpack.c.h.b16 %v1843
    %v4833 = vunpack.c.l.b16 %v1844
    %v4834 = vunpack.c.h.b16 %v1844
    %v4835 = vunpack.c.l.b16 %v1845
    %v4836 = vunpack.c.h.b16 %v1845
    %v4837 = vunpack.c.l.b16 %v1846
    %v4838 = vunpack.c.h.b16 %v1846
    %v4839 = vunpack.c.l.b16 %v1847
    %v4840 = vunpack.c.h.b16 %v1847
    %v4841 = vunpack.c.l.b16 %v1848
    %v4842 = vunpack.c.h.b16 %v1848
    %v4843 = vunpack.c.l.b16 %v1849
    %v4844 = vunpack.c.h.b16 %v1849
    %v4845 = vunpack.c.l.b16 %v1850
    %v4846 = vunpack.c.h.b16 %v1850
    %v4847 = vunpack.c.l.b16 %v1851
    %v4848 = vunpack.c.h.b16 %v1851
    %v4849 = vunpack.c.l.b16 %v1852
    %v4850 = vunpack.c.h.b16 %v1852
    %v4851 = vunpack.c.l.b16 %v1853
    %v4852 = vunpack.c.h.b16 %v1853
    %v4853 = vunpack.c.l.b16 %v1854
    %v4854 = vunpack.c.h.b16 %v1854
    %v4855 = vunpack.c.l.b16 %v1855
    %v4856 = vunpack.c.h.b16 %v1855
    %v4857 = vunpack.c.l.b16 %v1856
    %v4858 = vunpack.c.h.b16 %v1856
    %v4859 = vunpack.c.l.b16 %v1857
    %v4860 = vunpack.c.h.b16 %v1857
    %v4861 = vunpack.c.l.b16 %v1858
    %v4862 = vunpack.c.h.b16 %v1858
    %v4863 = vunpack.c.l.b16 %v1859
    %v4864 = vunpack.c.h.b16 %v1859
    %v4865 = vunpack.c.l.b16 %v1860
    %v4866 = vunpack.c.h.b16 %v1860
    %v4867 = vunpack.c.l.b16 %v1861
    %v4868 = vunpack.c.h.b16 %v1861
    %v4869 = vunpack.c.l.b16 %v1862
    %v4870 = vunpack.c.h.b16 %v1862
    %v4871 = vunpack.c.l.b16 %v1863
    %v4872 = vunpack.c.h.b16 %v1863
    %v4873 = vunpack.c.l.b16 %v1864
    %v4874 = vunpack.c.h.b16 %v1864
    %v4875 = vunpack.c.l.b16 %v1865
    %v4876 = vunpack.c.h.b16 %v1865
    %v4877 = vunpack.c.l.b16 %v1866
    %v4878 = vunpack.c.h.b16 %v1866
    %v4879 = vunpack.c.l.b16 %v1867
    %v4880 = vunpack.c.h.b16 %v1867
    %v4881 = vunpack.c.l.b16 %v1868
    %v4882 = vunpack.c.h.b16 %v1868
    %v4883 = vunpack.c.l.b16 %v1869
    %v4884 = vunpack.c.h.b16 %v1869
    %v4885 = vunpack.c.l.b16 %v1870
    %v4886 = vunpack.c.h.b16 %v1870
    %v4887 = vunpack.c.l.b16 %v1871
    %v4888 = vunpack.c.h.b16 %v1871
    %v4889 = vunpack.c.l.b16 %v1872
    %v4890 = vunpack.c.h.b16 %v1872
    %v4891 = vunpack.c.l.b16 %v1873
    %v4892 = vunpack.c.h.b16 %v1873
    %v4893 = vunpack.c.l.b16 %v1874
    %v4894 = vunpack.c.h.b16 %v1874
    %v4895 = vunpack.c.l.b16 %v1875
    %v4896 = vunpack.c.h.b16 %v1875
    %v4897 = vunpack.c.l.b16 %v1876
    %v4898 = vunpack.c.h.b16 %v1876
    %v4899 = vunpack.c.l.b16 %v1877
    %v4900 = vunpack.c.h.b16 %v1877
    %v4901 = vunpack.c.l.b16 %v1878
    %v4902 = vunpack.c.h.b16 %v1878
    %v4903 = vunpack.c.l.b16 %v1879
    %v4904 = vunpack.c.h.b16 %v1879
    %v4905 = vunpack.c.l.b16 %v1880
    %v4906 = vunpack.c.h.b16 %v1880
    %v4907 = vunpack.c.l.b16 %v1881
    %v4908 = vunpack.c.h.b16 %v1881
    %v4909 = vunpack.c.l.b16 %v1882
    %v4910 = vunpack.c.h.b16 %v1882
    %v4911 = vunpack.c.l.b16 %v1883
    %v4912 = vunpack.c.h.b16 %v1883
    %v4913 = vunpack.c.l.b16 %v1884
    %v4914 = vunpack.c.h.b16 %v1884
    %v4915 = vunpack.c.l.b16 %v1885
    %v4916 = vunpack.c.h.b16 %v1885
    %v4917 = vunpack.c.l.b16 %v1886
    %v4918 = vunpack.c.h.b16 %v1886
    %v4919 = vunpack.c.l.b16 %v1887
    %v4920 = vunpack.c.h.b16 %v1887
    %v4921 = vunpack.c.l.b16 %v1888
    %v4922 = vunpack.c.h.b16 %v1888
    %v4923 = vunpack.c.l.b16 %v1889
    %v4924 = vunpack.c.h.b16 %v1889
    %v4925 = vunpack.c.l.b16 %v1890
    %v4926 = vunpack.c.h.b16 %v1890
    %v4927 = vunpack.c.l.b16 %v1891
    %v4928 = vunpack.c.h.b16 %v1891
    %v4929 = vunpack.c.l.b16 %v1892
    %v4930 = vunpack.c.h.b16 %v1892
    %v4931 = vunpack.c.l.b16 %v1893
    %v4932 = vunpack.c.h.b16 %v1893
    %v4933 = vunpack.c.l.b16 %v1894
    %v4934 = vunpack.c.h.b16 %v1894
    %v4935 = vunpack.c.l.b16 %v1895
    %v4936 = vunpack.c.h.b16 %v1895
    %v4937 = vunpack.c.l.b16 %v1896
    %v4938 = vunpack.c.h.b16 %v1896
    %v4939 = vunpack.c.l.b16 %v1897
    %v4940 = vunpack.c.h.b16 %v1897
    %v4941 = vunpack.c.l.b16 %v1898
    %v4942 = vunpack.c.h.b16 %v1898
    %v4943 = vunpack.c.l.b16 %v1899
    %v4944 = vunpack.c.h.b16 %v1899
    %v4945 = vunpack.c.l.b16 %v1900
    %v4946 = vunpack.c.h.b16 %v1900
    %v4947 = vunpack.c.l.b16 %v1901
    %v4948 = vunpack.c.h.b16 %v1901
    %v4949 = vunpack.c.l.b16 %v1902
    %v4950 = vunpack.c.h.b16 %v1902
    %v4951 = vunpack.c.l.b16 %v1903
    %v4952 = vunpack.c.h.b16 %v1903
    %v4953 = vunpack.c.l.b16 %v1904
    %v4954 = vunpack.c.h.b16 %v1904
    %v4955 = vunpack.c.l.b16 %v1905
    %v4956 = vunpack.c.h.b16 %v1905
    %v4957 = vunpack.c.l.b16 %v1906
    %v4958 = vunpack.c.h.b16 %v1906
    %v4959 = vunpack.c.l.b16 %v1907
    %v4960 = vunpack.c.h.b16 %v1907
    %v4961 = vunpack.c.l.b16 %v1908
    %v4962 = vunpack.c.h.b16 %v1908
    %v4963 = vunpack.c.l.b16 %v1909
    %v4964 = vunpack.c.h.b16 %v1909
    %v4965 = vunpack.c.l.b16 %v1910
    %v4966 = vunpack.c.h.b16 %v1910
    %v4967 = vunpack.c.l.b16 %v1911
    %v4968 = vunpack.c.h.b16 %v1911
    %v4969 = vunpack.c.l.b16 %v1912
    %v4970 = vunpack.c.h.b16 %v1912
    %v4971 = vunpack.c.l.b16 %v1913
    %v4972 = vunpack.c.h.b16 %v1913
    %v4973 = vunpack.c.l.b16 %v1914
    %v4974 = vunpack.c.h.b16 %v1914
    %v4975 = vunpack.c.l.b16 %v1915
    %v4976 = vunpack.c.h.b16 %v1915
    %v4977 = vunpack.c.l.b16 %v1916
    %v4978 = vunpack.c.h.b16 %v1916
    %v4979 = vunpack.c.l.b16 %v1917
    %v4980 = vunpack.c.h.b16 %v1917
    %v4981 = vunpack.c.l.b16 %v1918
    %v4982 = vunpack.c.h.b16 %v1918
    %v4983 = vunpack.c.l.b16 %v1919
    %v4984 = vunpack.c.h.b16 %v1919
    %v4985 = vunpack.c.l.b16 %v1920
    %v4986 = vunpack.c.h.b16 %v1920
    %v4987 = vunpack.c.l.b16 %v1921
    %v4988 = vunpack.c.h.b16 %v1921
    %v4989 = vunpack.c.l.b16 %v1922
    %v4990 = vunpack.c.h.b16 %v1922
    %v4991 = vunpack.c.l.b16 %v1923
    %v4992 = vunpack.c.h.b16 %v1923
    %v4993 = vunpack.c.l.b16 %v1924
    %v4994 = vunpack.c.h.b16 %v1924
    %v4995 = vunpack.c.l.b16 %v1925
    %v4996 = vunpack.c.h.b16 %v1925
    %v4997 = vunpack.c.l.b16 %v1926
    %v4998 = vunpack.c.h.b16 %v1926
    %v4999 = vunpack.c.l.b16 %v1927
    %v5000 = vunpack.c.h.b16 %v1927
    %v5001 = vunpack.c.l.b16 %v1928
    %v5002 = vunpack.c.h.b16 %v1928
    %v5003 = vunpack.c.l.b16 %v1929
    %v5004 = vunpack.c.h.b16 %v1929
    %v5005 = vunpack.c.l.b16 %v1930
    %v5006 = vunpack.c.h.b16 %v1930
    %v5007 = vunpack.c.l.b16 %v1931
    %v5008 = vunpack.c.h.b16 %v1931
    %v5009 = vunpack.c.l.b16 %v1932
    %v5010 = vunpack.c.h.b16 %v1932
    %v5011 = vunpack.c.l.b16 %v1933
    %v5012 = vunpack.c.h.b16 %v1933
    %v5013 = vunpack.c.l.b16 %v1934
    %v5014 = vunpack.c.h.b16 %v1934
    %v5015 = vunpack.c.l.b16 %v1935
    %v5016 = vunpack.c.h.b16 %v1935
    %v5017 = vunpack.c.l.b16 %v1936
    %v5018 = vunpack.c.h.b16 %v1936
    %v5019 = vunpack.c.l.b16 %v1937
    %v5020 = vunpack.c.h.b16 %v1937
    %v5021 = vunpack.c.l.b16 %v1938
    %v5022 = vunpack.c.h.b16 %v1938
    %v5023 = vunpack.c.l.b16 %v1939
    %v5024 = vunpack.c.h.b16 %v1939
    %v5025 = vunpack.c.l.b16 %v1940
    %v5026 = vunpack.c.h.b16 %v1940
    %v5027 = vunpack.c.l.b16 %v1941
    %v5028 = vunpack.c.h.b16 %v1941
    %v5029 = vunpack.c.l.b16 %v1942
    %v5030 = vunpack.c.h.b16 %v1942
    %v5031 = vunpack.c.l.b16 %v1943
    %v5032 = vunpack.c.h.b16 %v1943
    %v5033 = vunpack.c.l.b16 %v1944
    %v5034 = vunpack.c.h.b16 %v1944
    %v5035 = vunpack.c.l.b16 %v1945
    %v5036 = vunpack.c.h.b16 %v1945
    %v5037 = vunpack.c.l.b16 %v1946
    %v5038 = vunpack.c.h.b16 %v1946
    %v5039 = vunpack.c.l.b16 %v1947
    %v5040 = vunpack.c.h.b16 %v1947
    %v5041 = vunpack.c.l.b16 %v1948
    %v5042 = vunpack.c.h.b16 %v1948
    %v5043 = vunpack.c.l.b16 %v1949
    %v5044 = vunpack.c.h.b16 %v1949
    %v5045 = vunpack.c.l.b16 %v1950
    %v5046 = vunpack.c.h.b16 %v1950
    %v5047 = vunpack.c.l.b16 %v1951
    %v5048 = vunpack.c.h.b16 %v1951
    %v5049 = vunpack.c.l.b16 %v1952
    %v5050 = vunpack.c.h.b16 %v1952
    %v5051 = vunpack.c.l.b16 %v1953
    %v5052 = vunpack.c.h.b16 %v1953
    %v5053 = vunpack.c.l.b16 %v1954
    %v5054 = vunpack.c.h.b16 %v1954
    %v5055 = vunpack.c.l.b16 %v1955
    %v5056 = vunpack.c.h.b16 %v1955
    %v5057 = vunpack.c.l.b16 %v1956
    %v5058 = vunpack.c.h.b16 %v1956
    %v5059 = vunpack.c.l.b16 %v1957
    %v5060 = vunpack.c.h.b16 %v1957
    %v5061 = vunpack.c.l.b16 %v1958
    %v5062 = vunpack.c.h.b16 %v1958
    %v5063 = vunpack.c.l.b16 %v1959
    %v5064 = vunpack.c.h.b16 %v1959
    %v5065 = vunpack.c.l.b16 %v1960
    %v5066 = vunpack.c.h.b16 %v1960
    %v5067 = vunpack.c.l.b16 %v1961
    %v5068 = vunpack.c.h.b16 %v1961
    %v5069 = vunpack.c.l.b16 %v1962
    %v5070 = vunpack.c.h.b16 %v1962
    %v5071 = vunpack.c.l.b16 %v1963
    %v5072 = vunpack.c.h.b16 %v1963
    %v5073 = vunpack.c.l.b16 %v1964
    %v5074 = vunpack.c.h.b16 %v1964
    %v5075 = vunpack.c.l.b16 %v1965
    %v5076 = vunpack.c.h.b16 %v1965
    %v5077 = vunpack.c.l.b16 %v1966
    %v5078 = vunpack.c.h.b16 %v1966
    %v5079 = vunpack.c.l.b16 %v1967
    %v5080 = vunpack.c.h.b16 %v1967
    %v5081 = vunpack.c.l.b16 %v1968
    %v5082 = vunpack.c.h.b16 %v1968
    %v5083 = vunpack.c.l.b16 %v1969
    %v5084 = vunpack.c.h.b16 %v1969
    %v5085 = vunpack.c.l.b16 %v1970
    %v5086 = vunpack.c.h.b16 %v1970
    %v5087 = vunpack.c.l.b16 %v1971
    %v5088 = vunpack.c.h.b16 %v1971
    %v5089 = vunpack.c.l.b16 %v1972
    %v5090 = vunpack.c.h.b16 %v1972
    %v5091 = vunpack.c.l.b16 %v1973
    %v5092 = vunpack.c.h.b16 %v1973
    %v5093 = vunpack.c.l.b16 %v1974
    %v5094 = vunpack.c.h.b16 %v1974
    %v5095 = vunpack.c.l.b16 %v1975
    %v5096 = vunpack.c.h.b16 %v1975
    %v5097 = vunpack.c.l.b16 %v1976
    %v5098 = vunpack.c.h.b16 %v1976
    %v5099 = vunpack.c.l.b16 %v1977
    %v5100 = vunpack.c.h.b16 %v1977
    %v5101 = vunpack.c.l.b16 %v1978
    %v5102 = vunpack.c.h.b16 %v1978
    %v5103 = vunpack.c.l.b16 %v1979
    %v5104 = vunpack.c.h.b16 %v1979
    %v5105 = vunpack.c.l.b16 %v1980
    %v5106 = vunpack.c.h.b16 %v1980
    %v5107 = vunpack.c.l.b16 %v1981
    %v5108 = vunpack.c.h.b16 %v1981
    %v5109 = vunpack.c.l.b16 %v1982
    %v5110 = vunpack.c.h.b16 %v1982
    %v5111 = vunpack.c.l.b16 %v1983
    %v5112 = vunpack.c.h.b16 %v1983
    %v5113 = vunpack.c.l.b16 %v1984
    %v5114 = vunpack.c.h.b16 %v1984
    %v5115 = vunpack.c.l.b16 %v1985
    %v5116 = vunpack.c.h.b16 %v1985
    %v5117 = vunpack.c.l.b16 %v1986
    %v5118 = vunpack.c.h.b16 %v1986
    %v5119 = vunpack.c.l.b16 %v1987
    %v5120 = vunpack.c.h.b16 %v1987
    %v5121 = vunpack.c.l.b16 %v1988
    %v5122 = vunpack.c.h.b16 %v1988
    %v5123 = vunpack.c.l.b16 %v1989
    %v5124 = vunpack.c.h.b16 %v1989
    %v5125 = vunpack.c.l.b16 %v1990
    %v5126 = vunpack.c.h.b16 %v1990
    %v5127 = vunpack.c.l.b16 %v1991
    %v5128 = vunpack.c.h.b16 %v1991
    %v5129 = vunpack.c.l.b16 %v1992
    %v5130 = vunpack.c.h.b16 %v1992
    %v5131 = vunpack.c.l.b16 %v1993
    %v5132 = vunpack.c.h.b16 %v1993
    %v5133 = vunpack.c.l.b16 %v1994
    %v5134 = vunpack.c.h.b16 %v1994
    %v5135 = vunpack.c.l.b16 %v1995
    %v5136 = vunpack.c.h.b16 %v1995
    %v5137 = vunpack.c.l.b16 %v1996
    %v5138 = vunpack.c.h.b16 %v1996
    %v5139 = vunpack.c.l.b16 %v1997
    %v5140 = vunpack.c.h.b16 %v1997
    %v5141 = vunpack.c.l.b16 %v1998
    %v5142 = vunpack.c.h.b16 %v1998
    %v5143 = vunpack.c.l.b16 %v1999
    %v5144 = vunpack.c.h.b16 %v1999
    %v5145 = vunpack.c.l.b16 %v2000
    %v5146 = vunpack.c.h.b16 %v2000
    %v5147 = vunpack.c.l.b16 %v2001
    %v5148 = vunpack.c.h.b16 %v2001
    %v5149 = vunpack.c.l.b16 %v2002
    %v5150 = vunpack.c.h.b16 %v2002
    %v5151 = vunpack.c.l.b16 %v2003
    %v5152 = vunpack.c.h.b16 %v2003
    %v5153 = vunpack.c.l.b16 %v2004
    %v5154 = vunpack.c.h.b16 %v2004
    %v5155 = vunpack.c.l.b16 %v2005
    %v5156 = vunpack.c.h.b16 %v2005
    %v5157 = vunpack.c.l.b16 %v2006
    %v5158 = vunpack.c.h.b16 %v2006
    %v5159 = vunpack.c.l.b16 %v2007
    %v5160 = vunpack.c.h.b16 %v2007
    %v5161 = vunpack.c.l.b16 %v2008
    %v5162 = vunpack.c.h.b16 %v2008
    %v5163 = vunpack.c.l.b16 %v2009
    %v5164 = vunpack.c.h.b16 %v2009
    %v5165 = vunpack.c.l.b16 %v2010
    %v5166 = vunpack.c.h.b16 %v2010
    %v5167 = vunpack.c.l.b16 %v2011
    %v5168 = vunpack.c.h.b16 %v2011
    %v5169 = vunpack.c.l.b16 %v2012
    %v5170 = vunpack.c.h.b16 %v2012
    %v5171 = vunpack.c.l.b16 %v2013
    %v5172 = vunpack.c.h.b16 %v2013
    %v5173 = vunpack.c.l.b16 %v2014
    %v5174 = vunpack.c.h.b16 %v2014
    %v5175 = vunpack.c.l.b16 %v2015
    %v5176 = vunpack.c.h.b16 %v2015
    %v5177 = vunpack.c.l.b16 %v2016
    %v5178 = vunpack.c.h.b16 %v2016
    %v5179 = vunpack.c.l.b16 %v2017
    %v5180 = vunpack.c.h.b16 %v2017
    %v5181 = vunpack.c.l.b16 %v2018
    %v5182 = vunpack.c.h.b16 %v2018
    %v5183 = vunpack.c.l.b16 %v2019
    %v5184 = vunpack.c.h.b16 %v2019
    %v5185 = vunpack.c.l.b16 %v2020
    %v5186 = vunpack.c.h.b16 %v2020
    %v5187 = vunpack.c.l.b16 %v2021
    %v5188 = vunpack.c.h.b16 %v2021
    %v5189 = vunpack.c.l.b16 %v2022
    %v5190 = vunpack.c.h.b16 %v2022
    %v5191 = vunpack.c.l.b16 %v2023
    %v5192 = vunpack.c.h.b16 %v2023
    %v5193 = vunpack.c.l.b16 %v2024
    %v5194 = vunpack.c.h.b16 %v2024
    %v5195 = vunpack.c.l.b16 %v2025
    %v5196 = vunpack.c.h.b16 %v2025
    %v5197 = vunpack.c.l.b16 %v2026
    %v5198 = vunpack.c.h.b16 %v2026
    %v5199 = vunpack.c.l.b16 %v2027
    %v5200 = vunpack.c.h.b16 %v2027
    %v5201 = vunpack.c.l.b16 %v2028
    %v5202 = vunpack.c.h.b16 %v2028
    %v5203 = vunpack.c.l.b16 %v2029
    %v5204 = vunpack.c.h.b16 %v2029
    %v5205 = vunpack.c.l.b16 %v2030
    %v5206 = vunpack.c.h.b16 %v2030
    %v5207 = vunpack.c.l.b16 %v2031
    %v5208 = vunpack.c.h.b16 %v2031
    %v5209 = vunpack.c.l.b16 %v2032
    %v5210 = vunpack.c.h.b16 %v2032
    %v5211 = vunpack.c.l.b16 %v2033
    %v5212 = vunpack.c.h.b16 %v2033
    %v5213 = vunpack.c.l.b16 %v2034
    %v5214 = vunpack.c.h.b16 %v2034
    %v5215 = vunpack.c.l.b16 %v2035
    %v5216 = vunpack.c.h.b16 %v2035
    %v5217 = vunpack.c.l.b16 %v2036
    %v5218 = vunpack.c.h.b16 %v2036
    %v5219 = vunpack.c.l.b16 %v2037
    %v5220 = vunpack.c.h.b16 %v2037
    %v5221 = vunpack.c.l.b16 %v2038
    %v5222 = vunpack.c.h.b16 %v2038
    %v5223 = vunpack.c.l.b16 %v2039
    %v5224 = vunpack.c.h.b16 %v2039
    %v5225 = vunpack.c.l.b16 %v2040
    %v5226 = vunpack.c.h.b16 %v2040
    %v5227 = vunpack.c.l.b16 %v2041
    %v5228 = vunpack.c.h.b16 %v2041
    %v5229 = vunpack.c.l.b16 %v2042
    %v5230 = vunpack.c.h.b16 %v2042
    %v5231 = vunpack.c.l.b16 %v2043
    %v5232 = vunpack.c.h.b16 %v2043
    %v5233 = vunpack.c.l.b16 %v2044
    %v5234 = vunpack.c.h.b16 %v2044
    %v5235 = vunpack.c.l.b16 %v2045
    %v5236 = vunpack.c.h.b16 %v2045
    %v5237 = vunpack.c.l.b16 %v2046
    %v5238 = vunpack.c.h.b16 %v2046
    %v5239 = vunpack.c.l.b16 %v2047
    %v5240 = vunpack.c.h.b16 %v2047
    %v5241 = vunpack.c.l.b16 %v2048
    %v5242 = vunpack.c.h.b16 %v2048
    %v5243 = vunpack.c.l.b16 %v2049
    %v5244 = vunpack.c.h.b16 %v2049
    %v5245 = vunpack.c.l.b16 %v2050
    %v5246 = vunpack.c.h.b16 %v2050
    %v5247 = vunpack.c.l.b16 %v2051
    %v5248 = vunpack.c.h.b16 %v2051
    %v5249 = vunpack.c.l.b16 %v2052
    %v5250 = vunpack.c.h.b16 %v2052
    %v5251 = vunpack.c.l.b16 %v2053
    %v5252 = vunpack.c.h.b16 %v2053
    %v5253 = vunpack.c.l.b16 %v2054
    %v5254 = vunpack.c.h.b16 %v2054
    %v5255 = vunpack.c.l.b16 %v2055
    %v5256 = vunpack.c.h.b16 %v2055
    %v5257 = vunpack.c.l.b16 %v2056
    %v5258 = vunpack.c.h.b16 %v2056
    %v5259 = vunpack.c.l.b16 %v2057
    %v5260 = vunpack.c.h.b16 %v2057
    %v5261 = vunpack.c.l.b16 %v2058
    %v5262 = vunpack.c.h.b16 %v2058
    %v5263 = vunpack.c.l.b16 %v2059
    %v5264 = vunpack.c.h.b16 %v2059
    %v5265 = vunpack.c.l.b16 %v2060
    %v5266 = vunpack.c.h.b16 %v2060
    %v5267 = vunpack.c.l.b16 %v2061
    %v5268 = vunpack.c.h.b16 %v2061
    %v5269 = vunpack.c.l.b16 %v2062
    %v5270 = vunpack.c.h.b16 %v2062
    %v5271 = vunpack.c.l.b16 %v2063
    %v5272 = vunpack.c.h.b16 %v2063
    %v5273 = vunpack.c.l.b16 %v2064
    %v5274 = vunpack.c.h.b16 %v2064
    %v5275 = vunpack.c.l.b16 %v2065
    %v5276 = vunpack.c.h.b16 %v2065
    %v5277 = vunpack.c.l.b16 %v2066
    %v5278 = vunpack.c.h.b16 %v2066
    %v5279 = vunpack.c.l.b16 %v2067
    %v5280 = vunpack.c.h.b16 %v2067
    %v5281 = vunpack.c.l.b16 %v2068
    %v5282 = vunpack.c.h.b16 %v2068
    %v5283 = vunpack.c.l.b16 %v2069
    %v5284 = vunpack.c.h.b16 %v2069
    %v5285 = vunpack.c.l.b16 %v2070
    %v5286 = vunpack.c.h.b16 %v2070
    %v5287 = vunpack.c.l.b16 %v2071
    %v5288 = vunpack.c.h.b16 %v2071
    %v5289 = vunpack.c.l.b16 %v2072
    %v5290 = vunpack.c.h.b16 %v2072
    %v5291 = vunpack.c.l.b16 %v2073
    %v5292 = vunpack.c.h.b16 %v2073
    %v5293 = vunpack.c.l.b16 %v2074
    %v5294 = vunpack.c.h.b16 %v2074
    %v5295 = vunpack.c.l.b16 %v2075
    %v5296 = vunpack.c.h.b16 %v2075
    %v5297 = vunpack.c.l.b16 %v2076
    %v5298 = vunpack.c.h.b16 %v2076
    %v5299 = vunpack.c.l.b16 %v2077
    %v5300 = vunpack.c.h.b16 %v2077
    %v5301 = vunpack.c.l.b16 %v2078
    %v5302 = vunpack.c.h.b16 %v2078
    %v5303 = vunpack.c.l.b16 %v2079
    %v5304 = vunpack.c.h.b16 %v2079
    %v5305 = vunpack.c.l.b16 %v2080
    %v5306 = vunpack.c.h.b16 %v2080
    %v5307 = vunpack.c.l.b16 %v2081
    %v5308 = vunpack.c.h.b16 %v2081
    %v5309 = vunpack.c.l.b16 %v2082
    %v5310 = vunpack.c.h.b16 %v2082
    %v5311 = vunpack.c.l.b16 %v2083
    %v5312 = vunpack.c.h.b16 %v2083
    %v5313 = vunpack.c.l.b16 %v2084
    %v5314 = vunpack.c.h.b16 %v2084
    %v5315 = vunpack.c.l.b16 %v2085
    %v5316 = vunpack.c.h.b16 %v2085
    %v5317 = vunpack.c.l.b16 %v2086
    %v5318 = vunpack.c.h.b16 %v2086
    %v5319 = vunpack.c.l.b16 %v2087
    %v5320 = vunpack.c.h.b16 %v2087
    %v5321 = vunpack.c.l.b16 %v2088
    %v5322 = vunpack.c.h.b16 %v2088
    %v5323 = vunpack.c.l.b16 %v2089
    %v5324 = vunpack.c.h.b16 %v2089
    %v5325 = vunpack.c.l.b16 %v2090
    %v5326 = vunpack.c.h.b16 %v2090
    %v5327 = vunpack.c.l.b16 %v2091
    %v5328 = vunpack.c.h.b16 %v2091
    %v5329 = vunpack.c.l.b16 %v2092
    %v5330 = vunpack.c.h.b16 %v2092
    %v5331 = vunpack.c.l.b16 %v2093
    %v5332 = vunpack.c.h.b16 %v2093
    %v5333 = vunpack.c.l.b16 %v2094
    %v5334 = vunpack.c.h.b16 %v2094
    %v5335 = vunpack.c.l.b16 %v2095
    %v5336 = vunpack.c.h.b16 %v2095
    %v5337 = vunpack.c.l.b16 %v2096
    %v5338 = vunpack.c.h.b16 %v2096
    %v5339 = vunpack.c.l.b16 %v2097
    %v5340 = vunpack.c.h.b16 %v2097
    %v5341 = vunpack.c.l.b16 %v2098
    %v5342 = vunpack.c.h.b16 %v2098
    %v5343 = vunpack.c.l.b16 %v2099
    %v5344 = vunpack.c.h.b16 %v2099
    %v5345 = vunpack.c.l.b16 %v2100
    %v5346 = vunpack.c.h.b16 %v2100
    %v5347 = vunpack.c.l.b16 %v2101
    %v5348 = vunpack.c.h.b16 %v2101
    %v5349 = vunpack.c.l.b16 %v2102
    %v5350 = vunpack.c.h.b16 %v2102
    %v5351 = vunpack.c.l.b16 %v2103
    %v5352 = vunpack.c.h.b16 %v2103
    %v5353 = vunpack.c.l.b16 %v2104
    %v5354 = vunpack.c.h.b16 %v2104
    %v5355 = vunpack.c.l.b16 %v2105
    %v5356 = vunpack.c.h.b16 %v2105
    %v5357 = vunpack.c.l.b16 %v2106
    %v5358 = vunpack.c.h.b16 %v2106
    %v5359 = vunpack.c.l.b16 %v2107
    %v5360 = vunpack.c.h.b16 %v2107
    %v5361 = vunpack.c.l.b16 %v2108
    %v5362 = vunpack.c.h.b16 %v2108
    %v5363 = vunpack.c.l.b16 %v2109
    %v5364 = vunpack.c.h.b16 %v2109
    %v5365 = vunpack.c.l.b16 %v2110
    %v5366 = vunpack.c.h.b16 %v2110
    %v5367 = vunpack.c.l.b16 %v2111
    %v5368 = vunpack.c.h.b16 %v2111
    %v5369 = vunpack.c.l.b16 %v2112
    %v5370 = vunpack.c.h.b16 %v2112
    %v5371 = vunpack.c.l.b16 %v2113
    %v5372 = vunpack.c.h.b16 %v2113
    %v5373 = vunpack.c.l.b16 %v2114
    %v5374 = vunpack.c.h.b16 %v2114
    %v5375 = vunpack.c.l.b16 %v2115
    %v5376 = vunpack.c.h.b16 %v2115
    %v5377 = vunpack.c.l.b16 %v2116
    %v5378 = vunpack.c.h.b16 %v2116
    %v5379 = vunpack.c.l.b16 %v2117
    %v5380 = vunpack.c.h.b16 %v2117
    %v5381 = vunpack.c.l.b16 %v2118
    %v5382 = vunpack.c.h.b16 %v2118
    %v5383 = vunpack.c.l.b16 %v2119
    %v5384 = vunpack.c.h.b16 %v2119
    %v5385 = vunpack.c.l.b16 %v2120
    %v5386 = vunpack.c.h.b16 %v2120
    %v5387 = vunpack.c.l.b16 %v2121
    %v5388 = vunpack.c.h.b16 %v2121
    %v5389 = vunpack.c.l.b16 %v2122
    %v5390 = vunpack.c.h.b16 %v2122
    %v5391 = vunpack.c.l.b16 %v2123
    %v5392 = vunpack.c.h.b16 %v2123
    %v5393 = vunpack.c.l.b16 %v2124
    %v5394 = vunpack.c.h.b16 %v2124
    %v5395 = vunpack.c.l.b16 %v2125
    %v5396 = vunpack.c.h.b16 %v2125
    %v5397 = vunpack.c.l.b16 %v2126
    %v5398 = vunpack.c.h.b16 %v2126
    %v5399 = vunpack.c.l.b16 %v2127
    %v5400 = vunpack.c.h.b16 %v2127
    %v5401 = vunpack.c.l.b16 %v2128
    %v5402 = vunpack.c.h.b16 %v2128
    %v5403 = vunpack.c.l.b16 %v2129
    %v5404 = vunpack.c.h.b16 %v2129
    %v5405 = vunpack.c.l.b16 %v2130
    %v5406 = vunpack.c.h.b16 %v2130
    %v5407 = vunpack.c.l.b16 %v2131
    %v5408 = vunpack.c.h.b16 %v2131
    %v5409 = vunpack.c.l.b16 %v2132
    %v5410 = vunpack.c.h.b16 %v2132
    %v5411 = vunpack.c.l.b16 %v2133
    %v5412 = vunpack.c.h.b16 %v2133
    %v5413 = vunpack.c.l.b16 %v2134
    %v5414 = vunpack.c.h.b16 %v2134
    %v5415 = vunpack.c.l.b16 %v2135
    %v5416 = vunpack.c.h.b16 %v2135
    %v5417 = vunpack.c.l.b16 %v2136
    %v5418 = vunpack.c.h.b16 %v2136
    %v5419 = vunpack.c.l.b16 %v2137
    %v5420 = vunpack.c.h.b16 %v2137
    %v5421 = vunpack.c.l.b16 %v2138
    %v5422 = vunpack.c.h.b16 %v2138
    %v5423 = vunpack.c.l.b16 %v2139
    %v5424 = vunpack.c.h.b16 %v2139
    %v5425 = vunpack.c.l.b16 %v2140
    %v5426 = vunpack.c.h.b16 %v2140
    %v5427 = vunpack.c.l.b16 %v2141
    %v5428 = vunpack.c.h.b16 %v2141
    %v5429 = vunpack.c.l.b16 %v2142
    %v5430 = vunpack.c.h.b16 %v2142
    %v5431 = vunpack.c.l.b16 %v2143
    %v5432 = vunpack.c.h.b16 %v2143
    %v5433 = vunpack.c.l.b16 %v2144
    %v5434 = vunpack.c.h.b16 %v2144
    %v5435 = vunpack.c.l.b16 %v2145
    %v5436 = vunpack.c.h.b16 %v2145
    %v5437 = vunpack.c.l.b16 %v2146
    %v5438 = vunpack.c.h.b16 %v2146
    %v5439 = vunpack.c.l.b16 %v2147
    %v5440 = vunpack.c.h.b16 %v2147
    %v5441 = vunpack.c.l.b16 %v2148
    %v5442 = vunpack.c.h.b16 %v2148
    %v5443 = vunpack.c.l.b16 %v2149
    %v5444 = vunpack.c.h.b16 %v2149
    %v5445 = vunpack.c.l.b16 %v2150
    %v5446 = vunpack.c.h.b16 %v2150
    %v5447 = vunpack.c.l.b16 %v2151
    %v5448 = vunpack.c.h.b16 %v2151
    %v5449 = vunpack.c.l.b16 %v2152
    %v5450 = vunpack.c.h.b16 %v2152
    %v5451 = vunpack.c.l.b16 %v2153
    %v5452 = vunpack.c.h.b16 %v2153
    %v5453 = vunpack.c.l.b16 %v2154
    %v5454 = vunpack.c.h.b16 %v2154
    %v5455 = vunpack.c.l.b16 %v2155
    %v5456 = vunpack.c.h.b16 %v2155
    %v5457 = vunpack.c.l.b16 %v2156
    %v5458 = vunpack.c.h.b16 %v2156
    %v5459 = vunpack.c.l.b16 %v2157
    %v5460 = vunpack.c.h.b16 %v2157
    %v5461 = vunpack.c.l.b16 %v2158
    %v5462 = vunpack.c.h.b16 %v2158
    %v5463 = vunpack.c.l.b16 %v2159
    %v5464 = vunpack.c.h.b16 %v2159
    %v5465 = vunpack.c.l.b16 %v2160
    %v5466 = vunpack.c.h.b16 %v2160
    %v5467 = vunpack.c.l.b16 %v2161
    %v5468 = vunpack.c.h.b16 %v2161
    %v5469 = vunpack.c.l.b16 %v2162
    %v5470 = vunpack.c.h.b16 %v2162
    %v5471 = vunpack.c.l.b16 %v2163
    %v5472 = vunpack.c.h.b16 %v2163
    %v5473 = vunpack.c.l.b16 %v2164
    %v5474 = vunpack.c.h.b16 %v2164
    %v5475 = vunpack.c.l.b16 %v2165
    %v5476 = vunpack.c.h.b16 %v2165
    %v5477 = vunpack.c.l.b16 %v2166
    %v5478 = vunpack.c.h.b16 %v2166
    %v5479 = vunpack.c.l.b16 %v2167
    %v5480 = vunpack.c.h.b16 %v2167
    %v5481 = vunpack.c.l.b16 %v2168
    %v5482 = vunpack.c.h.b16 %v2168
    %v5483 = vunpack.c.l.b16 %v2169
    %v5484 = vunpack.c.h.b16 %v2169
    %v5485 = vunpack.c.l.b16 %v2170
    %v5486 = vunpack.c.h.b16 %v2170
    %v5487 = vunpack.c.l.b16 %v2171
    %v5488 = vunpack.c.h.b16 %v2171
    %v5489 = vunpack.c.l.b16 %v2172
    %v5490 = vunpack.c.h.b16 %v2172
    %v5491 = vunpack.c.l.b16 %v2173
    %v5492 = vunpack.c.h.b16 %v2173
    %v5493 = vunpack.c.l.b16 %v2174
    %v5494 = vunpack.c.h.b16 %v2174
    %v5495 = vunpack.c.l.b16 %v2175
    %v5496 = vunpack.c.h.b16 %v2175
    %v5497 = vunpack.c.l.b16 %v2176
    %v5498 = vunpack.c.h.b16 %v2176
    %v5499 = vunpack.c.l.b16 %v2177
    %v5500 = vunpack.c.h.b16 %v2177
    %v5501 = vunpack.c.l.b16 %v2178
    %v5502 = vunpack.c.h.b16 %v2178
    %v5503 = vunpack.c.l.b16 %v2179
    %v5504 = vunpack.c.h.b16 %v2179
    %v5505 = vunpack.c.l.b16 %v2180
    %v5506 = vunpack.c.h.b16 %v2180
    %v5507 = vunpack.c.l.b16 %v2181
    %v5508 = vunpack.c.h.b16 %v2181
    %v5509 = vunpack.c.l.b16 %v2182
    %v5510 = vunpack.c.h.b16 %v2182
    %v5511 = vunpack.c.l.b16 %v2183
    %v5512 = vunpack.c.h.b16 %v2183
    %v5513 = vunpack.c.l.b16 %v2184
    %v5514 = vunpack.c.h.b16 %v2184
    %v5515 = vunpack.c.l.b16 %v2185
    %v5516 = vunpack.c.h.b16 %v2185
    %v5517 = vunpack.c.l.b16 %v2186
    %v5518 = vunpack.c.h.b16 %v2186
    %v5519 = vunpack.c.l.b16 %v2187
    %v5520 = vunpack.c.h.b16 %v2187
    %v5521 = vunpack.c.l.b16 %v2188
    %v5522 = vunpack.c.h.b16 %v2188
    %v5523 = vunpack.c.l.b16 %v2189
    %v5524 = vunpack.c.h.b16 %v2189
    %v5525 = vunpack.c.l.b16 %v2190
    %v5526 = vunpack.c.h.b16 %v2190
    %v5527 = vunpack.c.l.b16 %v2191
    %v5528 = vunpack.c.h.b16 %v2191
    %v5529 = vunpack.c.l.b16 %v2192
    %v5530 = vunpack.c.h.b16 %v2192
    %v5531 = vunpack.c.l.b16 %v2193
    %v5532 = vunpack.c.h.b16 %v2193
    %v5533 = vunpack.c.l.b16 %v2194
    %v5534 = vunpack.c.h.b16 %v2194
    %v5535 = vunpack.c.l.b16 %v2195
    %v5536 = vunpack.c.h.b16 %v2195
    %v5537 = vunpack.c.l.b16 %v2196
    %v5538 = vunpack.c.h.b16 %v2196
    %v5539 = vunpack.c.l.b16 %v2197
    %v5540 = vunpack.c.h.b16 %v2197
    %v5541 = vunpack.c.l.b16 %v2198
    %v5542 = vunpack.c.h.b16 %v2198
    %v5543 = vunpack.c.l.b16 %v2199
    %v5544 = vunpack.c.h.b16 %v2199
    %v5545 = vunpack.c.l.b16 %v2200
    %v5546 = vunpack.c.h.b16 %v2200
    %v5547 = vunpack.c.l.b16 %v2201
    %v5548 = vunpack.c.h.b16 %v2201
    %v5549 = vunpack.c.l.b16 %v2202
    %v5550 = vunpack.c.h.b16 %v2202
    %v5551 = vunpack.c.l.b16 %v2203
    %v5552 = vunpack.c.h.b16 %v2203
    %v5553 = vunpack.c.l.b16 %v2204
    %v5554 = vunpack.c.h.b16 %v2204
    %v5555 = vunpack.c.l.b16 %v2205
    %v5556 = vunpack.c.h.b16 %v2205
    %v5557 = vunpack.c.l.b16 %v2206
    %v5558 = vunpack.c.h.b16 %v2206
    %v5559 = vunpack.c.l.b16 %v2207
    %v5560 = vunpack.c.h.b16 %v2207
    %v5561 = vunpack.c.l.b16 %v2208
    %v5562 = vunpack.c.h.b16 %v2208
    %v5563 = vunpack.c.l.b16 %v2209
    %v5564 = vunpack.c.h.b16 %v2209
    %v5565 = vunpack.c.l.b16 %v2210
    %v5566 = vunpack.c.h.b16 %v2210
    %v5567 = vunpack.c.l.b16 %v2211
    %v5568 = vunpack.c.h.b16 %v2211
    %v5569 = vunpack.c.l.b16 %v2212
    %v5570 = vunpack.c.h.b16 %v2212
    %v5571 = vunpack.c.l.b16 %v2213
    %v5572 = vunpack.c.h.b16 %v2213
    %v5573 = vunpack.c.l.b16 %v2214
    %v5574 = vunpack.c.h.b16 %v2214
    %v5575 = vunpack.c.l.b16 %v2215
    %v5576 = vunpack.c.h.b16 %v2215
    %v5577 = vunpack.c.l.b16 %v2216
    %v5578 = vunpack.c.h.b16 %v2216
    %v5579 = vunpack.c.l.b16 %v2217
    %v5580 = vunpack.c.h.b16 %v2217
    %v5581 = vunpack.c.l.b16 %v2218
    %v5582 = vunpack.c.h.b16 %v2218
    %v5583 = vunpack.c.l.b16 %v2219
    %v5584 = vunpack.c.h.b16 %v2219
    %v5585 = vunpack.c.l.b16 %v2220
    %v5586 = vunpack.c.h.b16 %v2220
    %v5587 = vunpack.c.l.b16 %v2221
    %v5588 = vunpack.c.h.b16 %v2221
    %v5589 = vunpack.c.l.b16 %v2222
    %v5590 = vunpack.c.h.b16 %v2222
    %v5591 = vunpack.c.l.b16 %v2223
    %v5592 = vunpack.c.h.b16 %v2223
    %v5593 = vunpack.c.l.b16 %v2224
    %v5594 = vunpack.c.h.b16 %v2224
    %v5595 = vunpack.c.l.b16 %v2225
    %v5596 = vunpack.c.h.b16 %v2225
    %v5597 = vunpack.c.l.b16 %v2226
    %v5598 = vunpack.c.h.b16 %v2226
    %v5599 = vunpack.c.l.b16 %v2227
    %v5600 = vunpack.c.h.b16 %v2227
    %v5601 = vunpack.c.l.b16 %v2228
    %v5602 = vunpack.c.h.b16 %v2228
    %v5603 = vunpack.c.l.b16 %v2229
    %v5604 = vunpack.c.h.b16 %v2229
    %v5605 = vunpack.c.l.b16 %v2230
    %v5606 = vunpack.c.h.b16 %v2230
    %v5607 = vunpack.c.l.b16 %v2231
    %v5608 = vunpack.c.h.b16 %v2231
    %v5609 = vunpack.c.l.b16 %v2232
    %v5610 = vunpack.c.h.b16 %v2232
    %v5611 = vunpack.c.l.b16 %v2233
    %v5612 = vunpack.c.h.b16 %v2233
    %v5613 = vunpack.c.l.b16 %v2234
    %v5614 = vunpack.c.h.b16 %v2234
    %v5615 = vunpack.c.l.b16 %v2235
    %v5616 = vunpack.c.h.b16 %v2235
    %v5617 = vunpack.c.l.b16 %v2236
    %v5618 = vunpack.c.h.b16 %v2236
    %v5619 = vunpack.c.l.b16 %v2237
    %v5620 = vunpack.c.h.b16 %v2237
    %v5621 = vunpack.c.l.b16 %v2238
    %v5622 = vunpack.c.h.b16 %v2238
    %v5623 = vunpack.c.l.b16 %v2239
    %v5624 = vunpack.c.h.b16 %v2239
    %v5625 = vunpack.c.l.b16 %v2240
    %v5626 = vunpack.c.h.b16 %v2240
    %v5627 = vunpack.c.l.b16 %v2241
    %v5628 = vunpack.c.h.b16 %v2241
    %v5629 = vunpack.c.l.b16 %v2242
    %v5630 = vunpack.c.h.b16 %v2242
    %v5631 = vunpack.c.l.b16 %v2243
    %v5632 = vunpack.c.h.b16 %v2243
    %v5633 = vunpack.c.l.b16 %v2244
    %v5634 = vunpack.c.h.b16 %v2244
    %v5635 = vunpack.c.l.b16 %v2245
    %v5636 = vunpack.c.h.b16 %v2245
    %v5637 = vunpack.c.l.b16 %v2246
    %v5638 = vunpack.c.h.b16 %v2246
    %v5639 = vunpack.c.l.b16 %v2247
    %v5640 = vunpack.c.h.b16 %v2247
    %v5641 = vunpack.c.l.b16 %v2248
    %v5642 = vunpack.c.h.b16 %v2248
    %v5643 = vunpack.c.l.b16 %v2249
    %v5644 = vunpack.c.h.b16 %v2249
    %v5645 = vunpack.c.l.b16 %v2250
    %v5646 = vunpack.c.h.b16 %v2250
    %v5647 = vunpack.c.l.b16 %v2251
    %v5648 = vunpack.c.h.b16 %v2251
    %v5649 = vunpack.c.l.b16 %v2252
    %v5650 = vunpack.c.h.b16 %v2252
    %v5651 = vunpack.c.l.b16 %v2253
    %v5652 = vunpack.c.h.b16 %v2253
    %v5653 = vunpack.c.l.b16 %v2254
    %v5654 = vunpack.c.h.b16 %v2254
    %v5655 = vunpack.c.l.b16 %v2255
    %v5656 = vunpack.c.h.b16 %v2255
    %v5657 = vunpack.c.l.b16 %v2256
    %v5658 = vunpack.c.h.b16 %v2256
    %v5659 = vunpack.c.l.b16 %v2257
    %v5660 = vunpack.c.h.b16 %v2257
    %v5661 = vunpack.c.l.b16 %v2258
    %v5662 = vunpack.c.h.b16 %v2258
    %v5663 = vunpack.c.l.b16 %v2259
    %v5664 = vunpack.c.h.b16 %v2259
    %v5665 = vunpack.c.l.b16 %v2260
    %v5666 = vunpack.c.h.b16 %v2260
    %v5667 = vunpack.c.l.b16 %v2261
    %v5668 = vunpack.c.h.b16 %v2261
    %v5669 = vunpack.c.l.b16 %v2262
    %v5670 = vunpack.c.h.b16 %v2262
    %v5671 = vunpack.c.l.b16 %v2263
    %v5672 = vunpack.c.h.b16 %v2263
    %v5673 = vunpack.c.l.b16 %v2264
    %v5674 = vunpack.c.h.b16 %v2264
    %v5675 = vunpack.c.l.b16 %v2265
    %v5676 = vunpack.c.h.b16 %v2265
    %v5677 = vunpack.c.l.b16 %v2266
    %v5678 = vunpack.c.h.b16 %v2266
    %v5679 = vunpack.c.l.b16 %v2267
    %v5680 = vunpack.c.h.b16 %v2267
    %v5681 = vunpack.c.l.b16 %v2268
    %v5682 = vunpack.c.h.b16 %v2268
    %v5683 = vunpack.c.l.b16 %v2269
    %v5684 = vunpack.c.h.b16 %v2269
    %v5685 = vunpack.c.l.b16 %v2270
    %v5686 = vunpack.c.h.b16 %v2270
    %v5687 = vunpack.c.l.b16 %v2271
    %v5688 = vunpack.c.h.b16 %v2271
    %v5689 = vunpack.c.l.b16 %v2272
    %v5690 = vunpack.c.h.b16 %v2272
    %v5691 = vunpack.c.l.b16 %v2273
    %v5692 = vunpack.c.h.b16 %v2273
    %v5693 = vunpack.c.l.b16 %v2274
    %v5694 = vunpack.c.h.b16 %v2274
    %v5695 = vunpack.c.l.b16 %v2275
    %v5696 = vunpack.c.h.b16 %v2275
    %v5697 = vunpack.c.l.b16 %v2276
    %v5698 = vunpack.c.h.b16 %v2276
    %v5699 = vunpack.c.l.b16 %v2277
    %v5700 = vunpack.c.h.b16 %v2277
    %v5701 = vunpack.c.l.b16 %v2278
    %v5702 = vunpack.c.h.b16 %v2278
    %v5703 = vunpack.c.l.b16 %v2279
    %v5704 = vunpack.c.h.b16 %v2279
    %v5705 = vunpack.c.l.b16 %v2280
    %v5706 = vunpack.c.h.b16 %v2280
    %v5707 = vunpack.c.l.b16 %v2281
    %v5708 = vunpack.c.h.b16 %v2281
    %v5709 = vunpack.c.l.b16 %v2282
    %v5710 = vunpack.c.h.b16 %v2282
    %v5711 = vunpack.c.l.b16 %v2283
    %v5712 = vunpack.c.h.b16 %v2283
    %v5713 = vunpack.c.l.b16 %v2284
    %v5714 = vunpack.c.h.b16 %v2284
    %v5715 = vunpack.c.l.b16 %v2285
    %v5716 = vunpack.c.h.b16 %v2285
    %v5717 = vunpack.c.l.b16 %v2286
    %v5718 = vunpack.c.h.b16 %v2286
    %v5719 = vunpack.c.l.b16 %v2287
    %v5720 = vunpack.c.h.b16 %v2287
    %v5721 = vunpack.c.l.b16 %v2288
    %v5722 = vunpack.c.h.b16 %v2288
    %v5723 = vunpack.c.l.b16 %v2289
    %v5724 = vunpack.c.h.b16 %v2289
    %v5725 = vunpack.c.l.b16 %v2290
    %v5726 = vunpack.c.h.b16 %v2290
    %v5727 = vunpack.c.l.b16 %v2291
    %v5728 = vunpack.c.h.b16 %v2291
    %v5729 = vunpack.c.l.b16 %v2292
    %v5730 = vunpack.c.h.b16 %v2292
    %v5731 = vunpack.c.l.b16 %v2293
    %v5732 = vunpack.c.h.b16 %v2293
    %v5733 = vunpack.c.l.b16 %v2294
    %v5734 = vunpack.c.h.b16 %v2294
    %v5735 = vunpack.c.l.b16 %v2295
    %v5736 = vunpack.c.h.b16 %v2295
    %v5737 = vunpack.c.l.b16 %v2296
    %v5738 = vunpack.c.h.b16 %v2296
    %v5739 = vunpack.c.l.b16 %v2297
    %v5740 = vunpack.c.h.b16 %v2297
    %v5741 = vunpack.c.l.b16 %v2298
    %v5742 = vunpack.c.h.b16 %v2298
    %v5743 = vunpack.c.l.b16 %v2299
    %v5744 = vunpack.c.h.b16 %v2299
    %v5745 = vunpack.c.l.b16 %v2300
    %v5746 = vunpack.c.h.b16 %v2300
    %v5747 = vunpack.c.l.b16 %v2301
    %v5748 = vunpack.c.h.b16 %v2301
    %v5749 = vunpack.c.l.b16 %v2302
    %v5750 = vunpack.c.h.b16 %v2302
    %v5751 = vunpack.c.l.b16 %v2303
    %v5752 = vunpack.c.h.b16 %v2303
    %v5753 = vunpack.c.l.b16 %v2304
    %v5754 = vunpack.c.h.b16 %v2304
    %v5755 = vunpack.c.l.b16 %v2305
    %v5756 = vunpack.c.h.b16 %v2305
    %v5757 = vunpack.c.l.b16 %v2306
    %v5758 = vunpack.c.h.b16 %v2306
    %v5759 = vunpack.c.l.b16 %v2307
    %v5760 = vunpack.c.h.b16 %v2307
    %v5761 = vunpack.c.l.b16 %v2308
    %v5762 = vunpack.c.h.b16 %v2308
    %v5763 = vunpack.c.l.b16 %v2309
    %v5764 = vunpack.c.h.b16 %v2309
    %v5765 = vunpack.c.l.b16 %v2310
    %v5766 = vunpack.c.h.b16 %v2310
    %v5767 = vunpack.c.l.b16 %v2311
    %v5768 = vunpack.c.h.b16 %v2311
    %v5769 = vunpack.c.l.b16 %v2312
    %v5770 = vunpack.c.h.b16 %v2312
    %v5771 = vunpack.c.l.b16 %v2313
    %v5772 = vunpack.c.h.b16 %v2313
    %v5773 = vunpack.c.l.b16 %v2314
    %v5774 = vunpack.c.h.b16 %v2314
    %v5775 = vunpack.c.l.b16 %v2315
    %v5776 = vunpack.c.h.b16 %v2315
    %v5777 = vunpack.c.l.b16 %v2316
    %v5778 = vunpack.c.h.b16 %v2316
    %v5779 = vunpack.c.l.b16 %v2317
    %v5780 = vunpack.c.h.b16 %v2317
    %v5781 = vunpack.c.l.b16 %v2318
    %v5782 = vunpack.c.h.b16 %v2318
    %v5783 = vunpack.c.l.b16 %v2319
    %v5784 = vunpack.c.h.b16 %v2319
    %v5785 = vunpack.c.l.b16 %v2320
    %v5786 = vunpack.c.h.b16 %v2320
    %v5787 = vunpack.c.l.b16 %v2321
    %v5788 = vunpack.c.h.b16 %v2321
    %v5789 = vunpack.c.l.b16 %v2322
    %v5790 = vunpack.c.h.b16 %v2322
    %v5791 = vunpack.c.l.b16 %v2323
    %v5792 = vunpack.c.h.b16 %v2323
    %v5793 = vunpack.c.l.b16 %v2324
    %v5794 = vunpack.c.h.b16 %v2324
    %v5795 = vunpack.c.l.b16 %v2325
    %v5796 = vunpack.c.h.b16 %v2325
    %v5797 = vunpack.c.l.b16 %v2326
    %v5798 = vunpack.c.h.b16 %v2326
    %v5799 = vunpack.c.l.b16 %v2327
    %v5800 = vunpack.c.h.b16 %v2327
    %v5801 = vunpack.c.l.b16 %v2328
    %v5802 = vunpack.c.h.b16 %v2328
    %v5803 = vunpack.c.l.b16 %v2329
    %v5804 = vunpack.c.h.b16 %v2329
    %v5805 = vunpack.c.l.b16 %v2330
    %v5806 = vunpack.c.h.b16 %v2330
    %v5807 = vunpack.c.l.b16 %v2331
    %v5808 = vunpack.c.h.b16 %v2331
    %v5809 = vunpack.c.l.b16 %v2332
    %v5810 = vunpack.c.h.b16 %v2332
    %v5811 = vunpack.c.l.b16 %v2333
    %v5812 = vunpack.c.h.b16 %v2333
    %v5813 = vunpack.c.l.b16 %v2334
    %v5814 = vunpack.c.h.b16 %v2334
    %v5815 = vpack.c.b16 %v3519, %v3511
    %v5816 = vpack.c.b16 %v3520, %v3512
    %v5817 = vpack.c.b16 %v3521, %v3513
    %v5818 = vpack.c.b16 %v3522, %v3514
    %v5819 = vpack.c.b16 %v3523, %v3515
    %v5820 = vpack.c.b16 %v3524, %v3516
    %v5821 = vpack.c.b16 %v3525, %v3517
    %v5822 = vpack.c.b16 %v3526, %v3518
    %v5823 = vpack.c.b16 %v3535, %v3527
    %v5824 = vpack.c.b16 %v3536, %v3528
    %v5825 = vpack.c.b16 %v3537, %v3529
    %v5826 = vpack.c.b16 %v3538, %v3530
    %v5827 = vpack.c.b16 %v3539, %v3531
    %v5828 = vpack.c.b16 %v3540, %v3532
    %v5829 = vpack.c.b16 %v3541, %v3533
    %v5830 = vpack.c.b16 %v3542, %v3534
    %v5831 = vpack.c.b16 %v3551, %v3543
    %v5832 = vpack.c.b16 %v3552, %v3544
    %v5833 = vpack.c.b16 %v3553, %v3545
    %v5834 = vpack.c.b16 %v3554, %v3546
    %v5835 = vpack.c.b16 %v3555, %v3547
    %v5836 = vpack.c.b16 %v3556, %v3548
    %v5837 = vpack.c.b16 %v3557, %v3549
    %v5838 = vpack.c.b16 %v3558, %v3550
    %v5839 = vpack.c.b16 %v3567, %v3559
    %v5840 = vpack.c.b16 %v3568, %v3560
    %v5841 = vpack.c.b16 %v3569, %v3561
    %v5842 = vpack.c.b16 %v3570, %v3562
    %v5843 = vpack.c.b16 %v3571, %v3563
    %v5844 = vpack.c.b16 %v3572, %v3564
    %v5845 = vpack.c.b16 %v3573, %v3565
    %v5846 = vpack.c.b16 %v3574, %v3566
    %v5847 = vpack.c.b16 %v3583, %v3575
    %v5848 = vpack.c.b16 %v3584, %v3576
    %v5849 = vpack.c.b16 %v3585, %v3577
    %v5850 = vpack.c.b16 %v3586, %v3578
    %v5851 = vpack.c.b16 %v3587, %v3579
    %v5852 = vpack.c.b16 %v3588, %v3580
    %v5853 = vpack.c.b16 %v3589, %v3581
    %v5854 = vpack.c.b16 %v3590, %v3582
    %v5855 = vpack.c.b16 %v3599, %v3591
    %v5856 = vpack.c.b16 %v3600, %v3592
    %v5857 = vpack.c.b16 %v3601, %v3593
    %v5858 = vpack.c.b16 %v3602, %v3594
    %v5859 = vpack.c.b16 %v3603, %v3595
    %v5860 = vpack.c.b16 %v3604, %v3596
    %v5861 = vpack.c.b16 %v3605, %v3597
    %v5862 = vpack.c.b16 %v3606, %v3598
    %v5863 = vpack.c.b16 %v3615, %v3607
    %v5864 = vpack.c.b16 %v3616, %v3608
    %v5865 = vpack.c.b16 %v3617, %v3609
    %v5866 = vpack.c.b16 %v3618, %v3610
    %v5867 = vpack.c.b16 %v3619, %v3611
    %v5868 = vpack.c.b16 %v3620, %v3612
    %v5869 = vpack.c.b16 %v3621, %v3613
    %v5870 = vpack.c.b16 %v3622, %v3614
    %v5871 = vpack.c.b16 %v3631, %v3623
    %v5872 = vpack.c.b16 %v3632, %v3624
    %v5873 = vpack.c.b16 %v3633, %v3625
    %v5874 = vpack.c.b16 %v3634, %v3626
    %v5875 = vpack.c.b16 %v3635, %v3627
    %v5876 = vpack.c.b16 %v3636, %v3628
    %v5877 = vpack.c.b16 %v3637, %v3629
    %v5878 = vpack.c.b16 %v3638, %v3630
    %v5879 = vpack.c.b16 %v3647, %v3639
    %v5880 = vpack.c.b16 %v3648, %v3640
    %v5881 = vpack.c.b16 %v3649, %v3641
    %v5882 = vpack.c.b16 %v3650, %v3642
    %v5883 = vpack.c.b16 %v3651, %v3643
    %v5884 = vpack.c.b16 %v3652, %v3644
    %v5885 = vpack.c.b16 %v3653, %v3645
    %v5886 = vpack.c.b16 %v3654, %v3646
    %v5887 = vpack.c.b16 %v3663, %v3655
    %v5888 = vpack.c.b16 %v3664, %v3656
    %v5889 = vpack.c.b16 %v3665, %v3657
    %v5890 = vpack.c.b16 %v3666, %v3658
    %v5891 = vpack.c.b16 %v3667, %v3659
    %v5892 = vpack.c.b16 %v3668, %v3660
    %v5893 = vpack.c.b16 %v3669, %v3661
    %v5894 = vpack.c.b16 %v3670, %v3662
    %v5895 = vpack.c.b16 %v3679, %v3671
    %v5896 = vpack.c.b16 %v3680, %v3672
    %v5897 = vpack.c.b16 %v3681, %v3673
    %v5898 = vpack.c.b16 %v3682, %v3674
    %v5899 = vpack.c.b16 %v3683, %v3675
    %v5900 = vpack.c.b16 %v3684, %v3676
    %v5901 = vpack.c.b16 %v3685, %v3677
    %v5902 = vpack.c.b16 %v3686, %v3678
    %v5903 = vpack.c.b16 %v3695, %v3687
    %v5904 = vpack.c.b16 %v3696, %v3688
    %v5905 = vpack.c.b16 %v3697, %v3689
    %v5906 = vpack.c.b16 %v3698, %v3690
    %v5907 = vpack.c.b16 %v3699, %v3691
    %v5908 = vpack.c.b16 %v3700, %v3692
    %v5909 = vpack.c.b16 %v3701, %v3693
    %v5910 = vpack.c.b16 %v3702, %v3694
    %v5911 = vpack.c.b16 %v3711, %v3703
    %v5912 = vpack.c.b16 %v3712, %v3704
    %v5913 = vpack.c.b16 %v3713, %v3705
    %v5914 = vpack.c.b16 %v3714, %v3706
    %v5915 = vpack.c.b16 %v3715, %v3707
    %v5916 = vpack.c.b16 %v3716, %v3708
    %v5917 = vpack.c.b16 %v3717, %v3709
    %v5918 = vpack.c.b16 %v3718, %v3710
    %v5919 = vpack.c.b16 %v3727, %v3719
    %v5920 = vpack.c.b16 %v3728, %v3720
    %v5921 = vpack.c.b16 %v3729, %v3721
    %v5922 = vpack.c.b16 %v3730, %v3722
    %v5923 = vpack.c.b16 %v3731, %v3723
    %v5924 = vpack.c.b16 %v3732, %v3724
    %v5925 = vpack.c.b16 %v3733, %v3725
    %v5926 = vpack.c.b16 %v3734, %v3726
    %v5927 = vpack.c.b16 %v3743, %v3735
    %v5928 = vpack.c.b16 %v3744, %v3736
    %v5929 = vpack.c.b16 %v3745, %v3737
    %v5930 = vpack.c.b16 %v3746, %v3738
    %v5931 = vpack.c.b16 %v3747, %v3739
    %v5932 = vpack.c.b16 %v3748, %v3740
    %v5933 = vpack.c.b16 %v3749, %v3741
    %v5934 = vpack.c.b16 %v3750, %v3742
    %v5935 = vpack.c.b16 %v3759, %v3751
    %v5936 = vpack.c.b16 %v3760, %v3752
    %v5937 = vpack.c.b16 %v3761, %v3753
    %v5938 = vpack.c.b16 %v3762, %v3754
    %v5939 = vpack.c.b16 %v3763, %v3755
    %v5940 = vpack.c.b16 %v3764, %v3756
    %v5941 = vpack.c.b16 %v3765, %v3757
    %v5942 = vpack.c.b16 %v3766, %v3758
    %v5943 = vpack.c.b16 %v3775, %v3767
    %v5944 = vpack.c.b16 %v3776, %v3768
    %v5945 = vpack.c.b16 %v3777, %v3769
    %v5946 = vpack.c.b16 %v3778, %v3770
    %v5947 = vpack.c.b16 %v3779, %v3771
    %v5948 = vpack.c.b16 %v3780, %v3772
    %v5949 = vpack.c.b16 %v3781, %v3773
    %v5950 = vpack.c.b16 %v3782, %v3774
    %v5951 = vpack.c.b16 %v3791, %v3783
    %v5952 = vpack.c.b16 %v3792, %v3784
    %v5953 = vpack.c.b16 %v3793, %v3785
    %v5954 = vpack.c.b16 %v3794, %v3786
    %v5955 = vpack.c.b16 %v3795, %v3787
    %v5956 = vpack.c.b16 %v3796, %v3788
    %v5957 = vpack.c.b16 %v3797, %v3789
    %v5958 = vpack.c.b16 %v3798, %v3790
    %v5959 = vpack.c.b16 %v3807, %v3799
    %v5960 = vpack.c.b16 %v3808, %v3800
    %v5961 = vpack.c.b16 %v3809, %v3801
    %v5962 = vpack.c.b16 %v3810, %v3802
    %v5963 = vpack.c.b16 %v3811, %v3803
    %v5964 = vpack.c.b16 %v3812, %v3804
    %v5965 = vpack.c.b16 %v3813, %v3805
    %v5966 = vpack.c.b16 %v3814, %v3806
    %v5967 = vpack.c.b16 %v3823, %v3815
    %v5968 = vpack.c.b16 %v3824, %v3816
    %v5969 = vpack.c.b16 %v3825, %v3817
    %v5970 = vpack.c.b16 %v3826, %v3818
    %v5971 = vpack.c.b16 %v3827, %v3819
    %v5972 = vpack.c.b16 %v3828, %v3820
    %v5973 = vpack.c.b16 %v3829, %v3821
    %v5974 = vpack.c.b16 %v3830, %v3822
    %v5975 = vpack.c.b16 %v3839, %v3831
    %v5976 = vpack.c.b16 %v3840, %v3832
    %v5977 = vpack.c.b16 %v3841, %v3833
    %v5978 = vpack.c.b16 %v3842, %v3834
    %v5979 = vpack.c.b16 %v3843, %v3835
    %v5980 = vpack.c.b16 %v3844, %v3836
    %v5981 = vpack.c.b16 %v3845, %v3837
    %v5982 = vpack.c.b16 %v3846, %v3838
    %v5983 = vpack.c.b16 %v3855, %v3847
    %v5984 = vpack.c.b16 %v3856, %v3848
    %v5985 = vpack.c.b16 %v3857, %v3849
    %v5986 = vpack.c.b16 %v3858, %v3850
    %v5987 = vpack.c.b16 %v3859, %v3851
    %v5988 = vpack.c.b16 %v3860, %v3852
    %v5989 = vpack.c.b16 %v3861, %v3853
    %v5990 = vpack.c.b16 %v3862, %v3854
    %v5991 = vpack.c.b16 %v3871, %v3863
    %v5992 = vpack.c.b16 %v3872, %v3864
    %v5993 = vpack.c.b16 %v3873, %v3865
    %v5994 = vpack.c.b16 %v3874, %v3866
    %v5995 = vpack.c.b16 %v3875, %v3867
    %v5996 = vpack.c.b16 %v3876, %v3868
    %v5997 = vpack.c.b16 %v3877, %v3869
    %v5998 = vpack.c.b16 %v3878, %v3870
    %v5999 = vpack.c.b16 %v3887, %v3879
    %v6000 = vpack.c.b16 %v3888, %v3880
    %v6001 = vpack.c.b16 %v3889, %v3881
    %v6002 = vpack.c.b16 %v3890, %v3882
    %v6003 = vpack.c.b16 %v3891, %v3883
    %v6004 = vpack.c.b16 %v3892, %v3884
    %v6005 = vpack.c.b16 %v3893, %v3885
    %v6006 = vpack.c.b16 %v3894, %v3886
    %v6007 = vpack.c.b16 %v3903, %v3895
    %v6008 = vpack.c.b16 %v3904, %v3896
    %v6009 = vpack.c.b16 %v3905, %v3897
    %v6010 = vpack.c.b16 %v3906, %v3898
    %v6011 = vpack.c.b16 %v3907, %v3899
    %v6012 = vpack.c.b16 %v3908, %v3900
    %v6013 = vpack.c.b16 %v3909, %v3901
    %v6014 = vpack.c.b16 %v3910, %v3902
    %v6015 = vpack.c.b16 %v3919, %v3911
    %v6016 = vpack.c.b16 %v3920, %v3912
    %v6017 = vpack.c.b16 %v3921, %v3913
    %v6018 = vpack.c.b16 %v3922, %v3914
    %v6019 = vpack.c.b16 %v3923, %v3915
    %v6020 = vpack.c.b16 %v3924, %v3916
    %v6021 = vpack.c.b16 %v3925, %v3917
    %v6022 = vpack.c.b16 %v3926, %v3918
    %v6023 = vpack.c.b16 %v3935, %v3927
    %v6024 = vpack.c.b16 %v3936, %v3928
    %v6025 = vpack.c.b16 %v3937, %v3929
    %v6026 = vpack.c.b16 %v3938, %v3930
    %v6027 = vpack.c.b16 %v3939, %v3931
    %v6028 = vpack.c.b16 %v3940, %v3932
    %v6029 = vpack.c.b16 %v3941, %v3933
    %v6030 = vpack.c.b16 %v3942, %v3934
    %v6031 = vpack.c.b16 %v3951, %v3943
    %v6032 = vpack.c.b16 %v3952, %v3944
    %v6033 = vpack.c.b16 %v3953, %v3945
    %v6034 = vpack.c.b16 %v3954, %v3946
    %v6035 = vpack.c.b16 %v3955, %v3947
    %v6036 = vpack.c.b16 %v3956, %v3948
    %v6037 = vpack.c.b16 %v3957, %v3949
    %v6038 = vpack.c.b16 %v3958, %v3950
    %v6039 = vpack.c.b16 %v3967, %v3959
    %v6040 = vpack.c.b16 %v3968, %v3960
    %v6041 = vpack.c.b16 %v3969, %v3961
    %v6042 = vpack.c.b16 %v3970, %v3962
    %v6043 = vpack.c.b16 %v3971, %v3963
    %v6044 = vpack.c.b16 %v3972, %v3964
    %v6045 = vpack.c.b16 %v3973, %v3965
    %v6046 = vpack.c.b16 %v3974, %v3966
    %v6047 = vpack.c.b16 %v3983, %v3975
    %v6048 = vpack.c.b16 %v3984, %v3976
    %v6049 = vpack.c.b16 %v3985, %v3977
    %v6050 = vpack.c.b16 %v3986, %v3978
    %v6051 = vpack.c.b16 %v3987, %v3979
    %v6052 = vpack.c.b16 %v3988, %v3980
    %v6053 = vpack.c.b16 %v3989, %v3981
    %v6054 = vpack.c.b16 %v3990, %v3982
    %v6055 = vpack.c.b16 %v3999, %v3991
    %v6056 = vpack.c.b16 %v4000, %v3992
    %v6057 = vpack.c.b16 %v4001, %v3993
    %v6058 = vpack.c.b16 %v4002, %v3994
    %v6059 = vpack.c.b16 %v4003, %v3995
    %v6060 = vpack.c.b16 %v4004, %v3996
    %v6061 = vpack.c.b16 %v4005, %v3997
    %v6062 = vpack.c.b16 %v4006, %v3998
    %v6063 = vpack.c.b16 %v4015, %v4007
    %v6064 = vpack.c.b16 %v4016, %v4008
    %v6065 = vpack.c.b16 %v4017, %v4009
    %v6066 = vpack.c.b16 %v4018, %v4010
    %v6067 = vpack.c.b16 %v4019, %v4011
    %v6068 = vpack.c.b16 %v4020, %v4012
    %v6069 = vpack.c.b16 %v4021, %v4013
    %v6070 = vpack.c.b16 %v4022, %v4014
    %v6071 = vpack.c.b16 %v4031, %v4023
    %v6072 = vpack.c.b16 %v4032, %v4024
    %v6073 = vpack.c.b16 %v4033, %v4025
    %v6074 = vpack.c.b16 %v4034, %v4026
    %v6075 = vpack.c.b16 %v4035, %v4027
    %v6076 = vpack.c.b16 %v4036, %v4028
    %v6077 = vpack.c.b16 %v4037, %v4029
    %v6078 = vpack.c.b16 %v4038, %v4030
    %v6079 = vpack.c.b16 %v4047, %v4039
    %v6080 = vpack.c.b16 %v4048, %v4040
    %v6081 = vpack.c.b16 %v4049, %v4041
    %v6082 = vpack.c.b16 %v4050, %v4042
    %v6083 = vpack.c.b16 %v4051, %v4043
    %v6084 = vpack.c.b16 %v4052, %v4044
    %v6085 = vpack.c.b16 %v4053, %v4045
    %v6086 = vpack.c.b16 %v4054, %v4046
    %v6087 = vpack.c.b16 %v4063, %v4055
    %v6088 = vpack.c.b16 %v4064, %v4056
    %v6089 = vpack.c.b16 %v4065, %v4057
    %v6090 = vpack.c.b16 %v4066, %v4058
    %v6091 = vpack.c.b16 %v4067, %v4059
    %v6092 = vpack.c.b16 %v4068, %v4060
    %v6093 = vpack.c.b16 %v4069, %v4061
    %v6094 = vpack.c.b16 %v4070, %v4062
    %v6095 = vpack.c.b16 %v4079, %v4071
    %v6096 = vpack.c.b16 %v4080, %v4072
    %v6097 = vpack.c.b16 %v4081, %v4073
    %v6098 = vpack.c.b16 %v4082, %v4074
    %v6099 = vpack.c.b16 %v4083, %v4075
    %v6100 = vpack.c.b16 %v4084, %v4076
    %v6101 = vpack.c.b16 %v4085, %v4077
    %v6102 = vpack.c.b16 %v4086, %v4078
    %v6103 = vpack.c.b16 %v4095, %v4087
    %v6104 = vpack.c.b16 %v4096, %v4088
    %v6105 = vpack.c.b16 %v4097, %v4089
    %v6106 = vpack.c.b16 %v4098, %v4090
    %v6107 = vpack.c.b16 %v4099, %v4091
    %v6108 = vpack.c.b16 %v4100, %v4092
    %v6109 = vpack.c.b16 %v4101, %v4093
    %v6110 = vpack.c.b16 %v4102, %v4094
    %v6111 = vpack.c.b16 %v4111, %v4103
    %v6112 = vpack.c.b16 %v4112, %v4104
    %v6113 = vpack.c.b16 %v4113, %v4105
    %v6114 = vpack.c.b16 %v4114, %v4106
    %v6115 = vpack.c.b16 %v4115, %v4107
    %v6116 = vpack.c.b16 %v4116, %v4108
    %v6117 = vpack.c.b16 %v4117, %v4109
    %v6118 = vpack.c.b16 %v4118, %v4110
    %v6119 = vpack.c.b16 %v4127, %v4119
    %v6120 = vpack.c.b16 %v4128, %v4120
    %v6121 = vpack.c.b16 %v4129, %v4121
    %v6122 = vpack.c.b16 %v4130, %v4122
    %v6123 = vpack.c.b16 %v4131, %v4123
    %v6124 = vpack.c.b16 %v4132, %v4124
    %v6125 = vpack.c.b16 %v4133, %v4125
    %v6126 = vpack.c.b16 %v4134, %v4126
    %v6127 = vpack.c.b16 %v4143, %v4135
    %v6128 = vpack.c.b16 %v4144, %v4136
    %v6129 = vpack.c.b16 %v4145, %v4137
    %v6130 = vpack.c.b16 %v4146, %v4138
    %v6131 = vpack.c.b16 %v4147, %v4139
    %v6132 = vpack.c.b16 %v4148, %v4140
    %v6133 = vpack.c.b16 %v4149, %v4141
    %v6134 = vpack.c.b16 %v4150, %v4142
    %v6135 = vpack.c.b16 %v4159, %v4151
    %v6136 = vpack.c.b16 %v4160, %v4152
    %v6137 = vpack.c.b16 %v4161, %v4153
    %v6138 = vpack.c.b16 %v4162, %v4154
    %v6139 = vpack.c.b16 %v4163, %v4155
    %v6140 = vpack.c.b16 %v4164, %v4156
    %v6141 = vpack.c.b16 %v4165, %v4157
    %v6142 = vpack.c.b16 %v4166, %v4158
    %v6143 = vpack.c.b16 %v4175, %v4167
    %v6144 = vpack.c.b16 %v4176, %v4168
    %v6145 = vpack.c.b16 %v4177, %v4169
    %v6146 = vpack.c.b16 %v4178, %v4170
    %v6147 = vpack.c.b16 %v4179, %v4171
    %v6148 = vpack.c.b16 %v4180, %v4172
    %v6149 = vpack.c.b16 %v4181, %v4173
    %v6150 = vpack.c.b16 %v4182, %v4174
    %v6151 = vpack.c.b16 %v4191, %v4183
    %v6152 = vpack.c.b16 %v4192, %v4184
    %v6153 = vpack.c.b16 %v4193, %v4185
    %v6154 = vpack.c.b16 %v4194, %v4186
    %v6155 = vpack.c.b16 %v4195, %v4187
    %v6156 = vpack.c.b16 %v4196, %v4188
    %v6157 = vpack.c.b16 %v4197, %v4189
    %v6158 = vpack.c.b16 %v4198, %v4190
    %v6159 = vpack.c.b16 %v4207, %v4199
    %v6160 = vpack.c.b16 %v4208, %v4200
    %v6161 = vpack.c.b16 %v4209, %v4201
    %v6162 = vpack.c.b16 %v4210, %v4202
    %v6163 = vpack.c.b16 %v4211, %v4203
    %v6164 = vpack.c.b16 %v4212, %v4204
    %v6165 = vpack.c.b16 %v4213, %v4205
    %v6166 = vpack.c.b16 %v4214, %v4206
    %v6167 = vpack.c.b16 %v4223, %v4215
    %v6168 = vpack.c.b16 %v4224, %v4216
    %v6169 = vpack.c.b16 %v4225, %v4217
    %v6170 = vpack.c.b16 %v4226, %v4218
    %v6171 = vpack.c.b16 %v4227, %v4219
    %v6172 = vpack.c.b16 %v4228, %v4220
    %v6173 = vpack.c.b16 %v4229, %v4221
    %v6174 = vpack.c.b16 %v4230, %v4222
    %v6175 = vpack.c.b16 %v4239, %v4231
    %v6176 = vpack.c.b16 %v4240, %v4232
    %v6177 = vpack.c.b16 %v4241, %v4233
    %v6178 = vpack.c.b16 %v4242, %v4234
    %v6179 = vpack.c.b16 %v4243, %v4235
    %v6180 = vpack.c.b16 %v4244, %v4236
    %v6181 = vpack.c.b16 %v4245, %v4237
    %v6182 = vpack.c.b16 %v4246, %v4238
    %v6183 = vpack.c.b16 %v4255, %v4247
    %v6184 = vpack.c.b16 %v4256, %v4248
    %v6185 = vpack.c.b16 %v4257, %v4249
    %v6186 = vpack.c.b16 %v4258, %v4250
    %v6187 = vpack.c.b16 %v4259, %v4251
    %v6188 = vpack.c.b16 %v4260, %v4252
    %v6189 = vpack.c.b16 %v4261, %v4253
    %v6190 = vpack.c.b16 %v4262, %v4254
    %v6191 = vpack.c.b16 %v4271, %v4263
    %v6192 = vpack.c.b16 %v4272, %v4264
    %v6193 = vpack.c.b16 %v4273, %v4265
    %v6194 = vpack.c.b16 %v4274, %v4266
    %v6195 = vpack.c.b16 %v4275, %v4267
    %v6196 = vpack.c.b16 %v4276, %v4268
    %v6197 = vpack.c.b16 %v4277, %v4269
    %v6198 = vpack.c.b16 %v4278, %v4270
    %v6199 = vpack.c.b16 %v4287, %v4279
    %v6200 = vpack.c.b16 %v4288, %v4280
    %v6201 = vpack.c.b16 %v4289, %v4281
    %v6202 = vpack.c.b16 %v4290, %v4282
    %v6203 = vpack.c.b16 %v4291, %v4283
    %v6204 = vpack.c.b16 %v4292, %v4284
    %v6205 = vpack.c.b16 %v4293, %v4285
    %v6206 = vpack.c.b16 %v4294, %v4286
    %v6207 = vpack.c.b16 %v4303, %v4295
    %v6208 = vpack.c.b16 %v4304, %v4296
    %v6209 = vpack.c.b16 %v4305, %v4297
    %v6210 = vpack.c.b16 %v4306, %v4298
    %v6211 = vpack.c.b16 %v4307, %v4299
    %v6212 = vpack.c.b16 %v4308, %v4300
    %v6213 = vpack.c.b16 %v4309, %v4301
    %v6214 = vpack.c.b16 %v4310, %v4302
    %v6215 = vpack.c.b16 %v4319, %v4311
    %v6216 = vpack.c.b16 %v4320, %v4312
    %v6217 = vpack.c.b16 %v4321, %v4313
    %v6218 = vpack.c.b16 %v4322, %v4314
    %v6219 = vpack.c.b16 %v4323, %v4315
    %v6220 = vpack.c.b16 %v4324, %v4316
    %v6221 = vpack.c.b16 %v4325, %v4317
    %v6222 = vpack.c.b16 %v4326, %v4318
    %v6223 = vpack.c.b16 %v4335, %v4327
    %v6224 = vpack.c.b16 %v4336, %v4328
    %v6225 = vpack.c.b16 %v4337, %v4329
    %v6226 = vpack.c.b16 %v4338, %v4330
    %v6227 = vpack.c.b16 %v4339, %v4331
    %v6228 = vpack.c.b16 %v4340, %v4332
    %v6229 = vpack.c.b16 %v4341, %v4333
    %v6230 = vpack.c.b16 %v4342, %v4334
    %v6231 = vpack.c.b16 %v4351, %v4343
    %v6232 = vpack.c.b16 %v4352, %v4344
    %v6233 = vpack.c.b16 %v4353, %v4345
    %v6234 = vpack.c.b16 %v4354, %v4346
    %v6235 = vpack.c.b16 %v4355, %v4347
    %v6236 = vpack.c.b16 %v4356, %v4348
    %v6237 = vpack.c.b16 %v4357, %v4349
    %v6238 = vpack.c.b16 %v4358, %v4350
    %v6239 = vpack.c.b16 %v4367, %v4359
    %v6240 = vpack.c.b16 %v4368, %v4360
    %v6241 = vpack.c.b16 %v4369, %v4361
    %v6242 = vpack.c.b16 %v4370, %v4362
    %v6243 = vpack.c.b16 %v4371, %v4363
    %v6244 = vpack.c.b16 %v4372, %v4364
    %v6245 = vpack.c.b16 %v4373, %v4365
    %v6246 = vpack.c.b16 %v4374, %v4366
    %v6247 = vpack.c.b16 %v4383, %v4375
    %v6248 = vpack.c.b16 %v4384, %v4376
    %v6249 = vpack.c.b16 %v4385, %v4377
    %v6250 = vpack.c.b16 %v4386, %v4378
    %v6251 = vpack.c.b16 %v4387, %v4379
    %v6252 = vpack.c.b16 %v4388, %v4380
    %v6253 = vpack.c.b16 %v4389, %v4381
    %v6254 = vpack.c.b16 %v4390, %v4382
    %v6255 = vpack.c.b16 %v4399, %v4391
    %v6256 = vpack.c.b16 %v4400, %v4392
    %v6257 = vpack.c.b16 %v4401, %v4393
    %v6258 = vpack.c.b16 %v4402, %v4394
    %v6259 = vpack.c.b16 %v4403, %v4395
    %v6260 = vpack.c.b16 %v4404, %v4396
    %v6261 = vpack.c.b16 %v4405, %v4397
    %v6262 = vpack.c.b16 %v4406, %v4398
    %v6263 = vpack.c.b16 %v4415, %v4407
    %v6264 = vpack.c.b16 %v4416, %v4408
    %v6265 = vpack.c.b16 %v4417, %v4409
    %v6266 = vpack.c.b16 %v4418, %v4410
    %v6267 = vpack.c.b16 %v4419, %v4411
    %v6268 = vpack.c.b16 %v4420, %v4412
    %v6269 = vpack.c.b16 %v4421, %v4413
    %v6270 = vpack.c.b16 %v4422, %v4414
    %v6271 = vpack.c.b16 %v4431, %v4423
    %v6272 = vpack.c.b16 %v4432, %v4424
    %v6273 = vpack.c.b16 %v4433, %v4425
    %v6274 = vpack.c.b16 %v4434, %v4426
    %v6275 = vpack.c.b16 %v4435, %v4427
    %v6276 = vpack.c.b16 %v4436, %v4428
    %v6277 = vpack.c.b16 %v4437, %v4429
    %v6278 = vpack.c.b16 %v4438, %v4430
    %v6279 = vpack.c.b16 %v4447, %v4439
    %v6280 = vpack.c.b16 %v4448, %v4440
    %v6281 = vpack.c.b16 %v4449, %v4441
    %v6282 = vpack.c.b16 %v4450, %v4442
    %v6283 = vpack.c.b16 %v4451, %v4443
    %v6284 = vpack.c.b16 %v4452, %v4444
    %v6285 = vpack.c.b16 %v4453, %v4445
    %v6286 = vpack.c.b16 %v4454, %v4446
    %v6287 = vpack.c.b16 %v4463, %v4455
    %v6288 = vpack.c.b16 %v4464, %v4456
    %v6289 = vpack.c.b16 %v4465, %v4457
    %v6290 = vpack.c.b16 %v4466, %v4458
    %v6291 = vpack.c.b16 %v4467, %v4459
    %v6292 = vpack.c.b16 %v4468, %v4460
    %v6293 = vpack.c.b16 %v4469, %v4461
    %v6294 = vpack.c.b16 %v4470, %v4462
    %v6295 = vpack.c.b16 %v4479, %v4471
    %v6296 = vpack.c.b16 %v4480, %v4472
    %v6297 = vpack.c.b16 %v4481, %v4473
    %v6298 = vpack.c.b16 %v4482, %v4474
    %v6299 = vpack.c.b16 %v4483, %v4475
    %v6300 = vpack.c.b16 %v4484, %v4476
    %v6301 = vpack.c.b16 %v4485, %v4477
    %v6302 = vpack.c.b16 %v4486, %v4478
    %v6303 = vpack.c.b16 %v4495, %v4487
    %v6304 = vpack.c.b16 %v4496, %v4488
    %v6305 = vpack.c.b16 %v4497, %v4489
    %v6306 = vpack.c.b16 %v4498, %v4490
    %v6307 = vpack.c.b16 %v4499, %v4491
    %v6308 = vpack.c.b16 %v4500, %v4492
    %v6309 = vpack.c.b16 %v4501, %v4493
    %v6310 = vpack.c.b16 %v4502, %v4494
    %v6311 = vpack.c.b16 %v4511, %v4503
    %v6312 = vpack.c.b16 %v4512, %v4504
    %v6313 = vpack.c.b16 %v4513, %v4505
    %v6314 = vpack.c.b16 %v4514, %v4506
    %v6315 = vpack.c.b16 %v4515, %v4507
    %v6316 = vpack.c.b16 %v4516, %v4508
    %v6317 = vpack.c.b16 %v4517, %v4509
    %v6318 = vpack.c.b16 %v4518, %v4510
    %v6319 = vpack.c.b16 %v4527, %v4519
    %v6320 = vpack.c.b16 %v4528, %v4520
    %v6321 = vpack.c.b16 %v4529, %v4521
    %v6322 = vpack.c.b16 %v4530, %v4522
    %v6323 = vpack.c.b16 %v4531, %v4523
    %v6324 = vpack.c.b16 %v4532, %v4524
    %v6325 = vpack.c.b16 %v4533, %v4525
    %v6326 = vpack.c.b16 %v4534, %v4526
    %v6327 = vpack.c.b16 %v4543, %v4535
    %v6328 = vpack.c.b16 %v4544, %v4536
    %v6329 = vpack.c.b16 %v4545, %v4537
    %v6330 = vpack.c.b16 %v4546, %v4538
    %v6331 = vpack.c.b16 %v4547, %v4539
    %v6332 = vpack.c.b16 %v4548, %v4540
    %v6333 = vpack.c.b16 %v4549, %v4541
    %v6334 = vpack.c.b16 %v4550, %v4542
    %v6335 = vpack.c.b16 %v4559, %v4551
    %v6336 = vpack.c.b16 %v4560, %v4552
    %v6337 = vpack.c.b16 %v4561, %v4553
    %v6338 = vpack.c.b16 %v4562, %v4554
    %v6339 = vpack.c.b16 %v4563, %v4555
    %v6340 = vpack.c.b16 %v4564, %v4556
    %v6341 = vpack.c.b16 %v4565, %v4557
    %v6342 = vpack.c.b16 %v4566, %v4558
    %v6343 = vpack.c.b16 %v4575, %v4567
    %v6344 = vpack.c.b16 %v4576, %v4568
    %v6345 = vpack.c.b16 %v4577, %v4569
    %v6346 = vpack.c.b16 %v4578, %v4570
    %v6347 = vpack.c.b16 %v4579, %v4571
    %v6348 = vpack.c.b16 %v4580, %v4572
    %v6349 = vpack.c.b16 %v4581, %v4573
    %v6350 = vpack.c.b16 %v4582, %v4574
    %v6351 = vpack.c.b16 %v4591, %v4583
    %v6352 = vpack.c.b16 %v4592, %v4584
    %v6353 = vpack.c.b16 %v4593, %v4585
    %v6354 = vpack.c.b16 %v4594, %v4586
    %v6355 = vpack.c.b16 %v4595, %v4587
    %v6356 = vpack.c.b16 %v4596, %v4588
    %v6357 = vpack.c.b16 %v4597, %v4589
    %v6358 = vpack.c.b16 %v4598, %v4590
    %v6359 = vpack.c.b16 %v4607, %v4599
    %v6360 = vpack.c.b16 %v4608, %v4600
    %v6361 = vpack.c.b16 %v4609, %v4601
    %v6362 = vpack.c.b16 %v4610, %v4602
    %v6363 = vpack.c.b16 %v4611, %v4603
    %v6364 = vpack.c.b16 %v4612, %v4604
    %v6365 = vpack.c.b16 %v4613, %v4605
    %v6366 = vpack.c.b16 %v4614, %v4606
    %v6367 = vpack.c.b16 %v4623, %v4615
    %v6368 = vpack.c.b16 %v4624, %v4616
    %v6369 = vpack.c.b16 %v4625, %v4617
    %v6370 = vpack.c.b16 %v4626, %v4618
    %v6371 = vpack.c.b16 %v4627, %v4619
    %v6372 = vpack.c.b16 %v4628, %v4620
    %v6373 = vpack.c.b16 %v4629, %v4621
    %v6374 = vpack.c.b16 %v4630, %v4622
    %v6375 = vpack.c.b16 %v4639, %v4631
    %v6376 = vpack.c.b16 %v4640, %v4632
    %v6377 = vpack.c.b16 %v4641, %v4633
    %v6378 = vpack.c.b16 %v4642, %v4634
    %v6379 = vpack.c.b16 %v4643, %v4635
    %v6380 = vpack.c.b16 %v4644, %v4636
    %v6381 = vpack.c.b16 %v4645, %v4637
    %v6382 = vpack.c.b16 %v4646, %v4638
    %v6383 = vpack.c.b16 %v4655, %v4647
    %v6384 = vpack.c.b16 %v4656, %v4648
    %v6385 = vpack.c.b16 %v4657, %v4649
    %v6386 = vpack.c.b16 %v4658, %v4650
    %v6387 = vpack.c.b16 %v4659, %v4651
    %v6388 = vpack.c.b16 %v4660, %v4652
    %v6389 = vpack.c.b16 %v4661, %v4653
    %v6390 = vpack.c.b16 %v4662, %v4654
    %v6391 = vpack.c.b16 %v4671, %v4663
    %v6392 = vpack.c.b16 %v4672, %v4664
    %v6393 = vpack.c.b16 %v4673, %v4665
    %v6394 = vpack.c.b16 %v4674, %v4666
    %v6395 = vpack.c.b16 %v4675, %v4667
    %v6396 = vpack.c.b16 %v4676, %v4668
    %v6397 = vpack.c.b16 %v4677, %v4669
    %v6398 = vpack.c.b16 %v4678, %v4670
    %v6399 = vpack.c.b16 %v4687, %v4679
    %v6400 = vpack.c.b16 %v4688, %v4680
    %v6401 = vpack.c.b16 %v4689, %v4681
    %v6402 = vpack.c.b16 %v4690, %v4682
    %v6403 = vpack.c.b16 %v4691, %v4683
    %v6404 = vpack.c.b16 %v4692, %v4684
    %v6405 = vpack.c.b16 %v4693, %v4685
    %v6406 = vpack.c.b16 %v4694, %v4686
    %v6407 = vpack.c.b16 %v4703, %v4695
    %v6408 = vpack.c.b16 %v4704, %v4696
    %v6409 = vpack.c.b16 %v4705, %v4697
    %v6410 = vpack.c.b16 %v4706, %v4698
    %v6411 = vpack.c.b16 %v4707, %v4699
    %v6412 = vpack.c.b16 %v4708, %v4700
    %v6413 = vpack.c.b16 %v4709, %v4701
    %v6414 = vpack.c.b16 %v4710, %v4702
    %v6415 = vpack.c.b16 %v4719, %v4711
    %v6416 = vpack.c.b16 %v4720, %v4712
    %v6417 = vpack.c.b16 %v4721, %v4713
    %v6418 = vpack.c.b16 %v4722, %v4714
    %v6419 = vpack.c.b16 %v4723, %v4715
    %v6420 = vpack.c.b16 %v4724, %v4716
    %v6421 = vpack.c.b16 %v4725, %v4717
    %v6422 = vpack.c.b16 %v4726, %v4718
    %v6423 = vpack.c.b16 %v4735, %v4727
    %v6424 = vpack.c.b16 %v4736, %v4728
    %v6425 = vpack.c.b16 %v4737, %v4729
    %v6426 = vpack.c.b16 %v4738, %v4730
    %v6427 = vpack.c.b16 %v4739, %v4731
    %v6428 = vpack.c.b16 %v4740, %v4732
    %v6429 = vpack.c.b16 %v4741, %v4733
    %v6430 = vpack.c.b16 %v4742, %v4734
    %v6431 = vpack.c.b16 %v4751, %v4743
    %v6432 = vpack.c.b16 %v4752, %v4744
    %v6433 = vpack.c.b16 %v4753, %v4745
    %v6434 = vpack.c.b16 %v4754, %v4746
    %v6435 = vpack.c.b16 %v4755, %v4747
    %v6436 = vpack.c.b16 %v4756, %v4748
    %v6437 = vpack.c.b16 %v4757, %v4749
    %v6438 = vpack.c.b16 %v4758, %v4750
    %v6439 = vpack.c.b16 %v4767, %v4759
    %v6440 = vpack.c.b16 %v4768, %v4760
    %v6441 = vpack.c.b16 %v4769, %v4761
    %v6442 = vpack.c.b16 %v4770, %v4762
    %v6443 = vpack.c.b16 %v4771, %v4763
    %v6444 = vpack.c.b16 %v4772, %v4764
    %v6445 = vpack.c.b16 %v4773, %v4765
    %v6446 = vpack.c.b16 %v4774, %v4766
    %v6447 = vpack.c.b16 %v4783, %v4775
    %v6448 = vpack.c.b16 %v4784, %v4776
    %v6449 = vpack.c.b16 %v4785, %v4777
    %v6450 = vpack.c.b16 %v4786, %v4778
    %v6451 = vpack.c.b16 %v4787, %v4779
    %v6452 = vpack.c.b16 %v4788, %v4780
    %v6453 = vpack.c.b16 %v4789, %v4781
    %v6454 = vpack.c.b16 %v4790, %v4782
    %v6455 = vpack.c.b16 %v4799, %v4791
    %v6456 = vpack.c.b16 %v4800, %v4792
    %v6457 = vpack.c.b16 %v4801, %v4793
    %v6458 = vpack.c.b16 %v4802, %v4794
    %v6459 = vpack.c.b16 %v4803, %v4795
    %v6460 = vpack.c.b16 %v4804, %v4796
    %v6461 = vpack.c.b16 %v4805, %v4797
    %v6462 = vpack.c.b16 %v4806, %v4798
    %v6463 = vpack.c.b16 %v4815, %v4807
    %v6464 = vpack.c.b16 %v4816, %v4808
    %v6465 = vpack.c.b16 %v4817, %v4809
    %v6466 = vpack.c.b16 %v4818, %v4810
    %v6467 = vpack.c.b16 %v4819, %v4811
    %v6468 = vpack.c.b16 %v4820, %v4812
    %v6469 = vpack.c.b16 %v4821, %v4813
    %v6470 = vpack.c.b16 %v4822, %v4814
    %v6471 = vpack.c.b16 %v4831, %v4823
    %v6472 = vpack.c.b16 %v4832, %v4824
    %v6473 = vpack.c.b16 %v4833, %v4825
    %v6474 = vpack.c.b16 %v4834, %v4826
    %v6475 = vpack.c.b16 %v4835, %v4827
    %v6476 = vpack.c.b16 %v4836, %v4828
    %v6477 = vpack.c.b16 %v4837, %v4829
    %v6478 = vpack.c.b16 %v4838, %v4830
    %v6479 = vpack.c.b16 %v4847, %v4839
    %v6480 = vpack.c.b16 %v4848, %v4840
    %v6481 = vpack.c.b16 %v4849, %v4841
    %v6482 = vpack.c.b16 %v4850, %v4842
    %v6483 = vpack.c.b16 %v4851, %v4843
    %v6484 = vpack.c.b16 %v4852, %v4844
    %v6485 = vpack.c.b16 %v4853, %v4845
    %v6486 = vpack.c.b16 %v4854, %v4846
    %v6487 = vpack.c.b16 %v4863, %v4855
    %v6488 = vpack.c.b16 %v4864, %v4856
    %v6489 = vpack.c.b16 %v4865, %v4857
    %v6490 = vpack.c.b16 %v4866, %v4858
    %v6491 = vpack.c.b16 %v4867, %v4859
    %v6492 = vpack.c.b16 %v4868, %v4860
    %v6493 = vpack.c.b16 %v4869, %v4861
    %v6494 = vpack.c.b16 %v4870, %v4862
    %v6495 = vpack.c.b16 %v4879, %v4871
    %v6496 = vpack.c.b16 %v4880, %v4872
    %v6497 = vpack.c.b16 %v4881, %v4873
    %v6498 = vpack.c.b16 %v4882, %v4874
    %v6499 = vpack.c.b16 %v4883, %v4875
    %v6500 = vpack.c.b16 %v4884, %v4876
    %v6501 = vpack.c.b16 %v4885, %v4877
    %v6502 = vpack.c.b16 %v4886, %v4878
    %v6503 = vpack.c.b16 %v4895, %v4887
    %v6504 = vpack.c.b16 %v4896, %v4888
    %v6505 = vpack.c.b16 %v4897, %v4889
    %v6506 = vpack.c.b16 %v4898, %v4890
    %v6507 = vpack.c.b16 %v4899, %v4891
    %v6508 = vpack.c.b16 %v4900, %v4892
    %v6509 = vpack.c.b16 %v4901, %v4893
    %v6510 = vpack.c.b16 %v4902, %v4894
    %v6511 = vpack.c.b16 %v4911, %v4903
    %v6512 = vpack.c.b16 %v4912, %v4904
    %v6513 = vpack.c.b16 %v4913, %v4905
    %v6514 = vpack.c.b16 %v4914, %v4906
    %v6515 = vpack.c.b16 %v4915, %v4907
    %v6516 = vpack.c.b16 %v4916, %v4908
    %v6517 = vpack.c.b16 %v4917, %v4909
    %v6518 = vpack.c.b16 %v4918, %v4910
    %v6519 = vpack.c.b16 %v4927, %v4919
    %v6520 = vpack.c.b16 %v4928, %v4920
    %v6521 = vpack.c.b16 %v4929, %v4921
    %v6522 = vpack.c.b16 %v4930, %v4922
    %v6523 = vpack.c.b16 %v4931, %v4923
    %v6524 = vpack.c.b16 %v4932, %v4924
    %v6525 = vpack.c.b16 %v4933, %v4925
    %v6526 = vpack.c.b16 %v4934, %v4926
    %v6527 = vpack.c.b16 %v4943, %v4935
    %v6528 = vpack.c.b16 %v4944, %v4936
    %v6529 = vpack.c.b16 %v4945, %v4937
    %v6530 = vpack.c.b16 %v4946, %v4938
    %v6531 = vpack.c.b16 %v4947, %v4939
    %v6532 = vpack.c.b16 %v4948, %v4940
    %v6533 = vpack.c.b16 %v4949, %v4941
    %v6534 = vpack.c.b16 %v4950, %v4942
    %v6535 = vpack.c.b16 %v4959, %v4951
    %v6536 = vpack.c.b16 %v4960, %v4952
    %v6537 = vpack.c.b16 %v4961, %v4953
    %v6538 = vpack.c.b16 %v4962, %v4954
    %v6539 = vpack.c.b16 %v4963, %v4955
    %v6540 = vpack.c.b16 %v4964, %v4956
    %v6541 = vpack.c.b16 %v4965, %v4957
    %v6542 = vpack.c.b16 %v4966, %v4958
    %v6543 = vpack.c.b16 %v4975, %v4967
    %v6544 = vpack.c.b16 %v4976, %v4968
    %v6545 = vpack.c.b16 %v4977, %v4969
    %v6546 = vpack.c.b16 %v4978, %v4970
    %v6547 = vpack.c.b16 %v4979, %v4971
    %v6548 = vpack.c.b16 %v4980, %v4972
    %v6549 = vpack.c.b16 %v4981, %v4973
    %v6550 = vpack.c.b16 %v4982, %v4974
    %v6551 = vpack.c.b16 %v4991, %v4983
    %v6552 = vpack.c.b16 %v4992, %v4984
    %v6553 = vpack.c.b16 %v4993, %v4985
    %v6554 = vpack.c.b16 %v4994, %v4986
    %v6555 = vpack.c.b16 %v4995, %v4987
    %v6556 = vpack.c.b16 %v4996, %v4988
    %v6557 = vpack.c.b16 %v4997, %v4989
    %v6558 = vpack.c.b16 %v4998, %v4990
    %v6559 = vpack.c.b16 %v5007, %v4999
    %v6560 = vpack.c.b16 %v5008, %v5000
    %v6561 = vpack.c.b16 %v5009, %v5001
    %v6562 = vpack.c.b16 %v5010, %v5002
    %v6563 = vpack.c.b16 %v5011, %v5003
    %v6564 = vpack.c.b16 %v5012, %v5004
    %v6565 = vpack.c.b16 %v5013, %v5005
    %v6566 = vpack.c.b16 %v5014, %v5006
    %v6567 = vpack.c.b16 %v5023, %v5015
    %v6568 = vpack.c.b16 %v5024, %v5016
    %v6569 = vpack.c.b16 %v5025, %v5017
    %v6570 = vpack.c.b16 %v5026, %v5018
    %v6571 = vpack.c.b16 %v5027, %v5019
    %v6572 = vpack.c.b16 %v5028, %v5020
    %v6573 = vpack.c.b16 %v5029, %v5021
    %v6574 = vpack.c.b16 %v5030, %v5022
    %v6575 = vpack.c.b16 %v5039, %v5031
    %v6576 = vpack.c.b16 %v5040, %v5032
    %v6577 = vpack.c.b16 %v5041, %v5033
    %v6578 = vpack.c.b16 %v5042, %v5034
    %v6579 = vpack.c.b16 %v5043, %v5035
    %v6580 = vpack.c.b16 %v5044, %v5036
    %v6581 = vpack.c.b16 %v5045, %v5037
    %v6582 = vpack.c.b16 %v5046, %v5038
    %v6583 = vpack.c.b16 %v5055, %v5047
    %v6584 = vpack.c.b16 %v5056, %v5048
    %v6585 = vpack.c.b16 %v5057, %v5049
    %v6586 = vpack.c.b16 %v5058, %v5050
    %v6587 = vpack.c.b16 %v5059, %v5051
    %v6588 = vpack.c.b16 %v5060, %v5052
    %v6589 = vpack.c.b16 %v5061, %v5053
    %v6590 = vpack.c.b16 %v5062, %v5054
    %v6591 = vpack.c.b16 %v5071, %v5063
    %v6592 = vpack.c.b16 %v5072, %v5064
    %v6593 = vpack.c.b16 %v5073, %v5065
    %v6594 = vpack.c.b16 %v5074, %v5066
    %v6595 = vpack.c.b16 %v5075, %v5067
    %v6596 = vpack.c.b16 %v5076, %v5068
    %v6597 = vpack.c.b16 %v5077, %v5069
    %v6598 = vpack.c.b16 %v5078, %v5070
    %v6599 = vpack.c.b16 %v5087, %v5079
    %v6600 = vpack.c.b16 %v5088, %v5080
    %v6601 = vpack.c.b16 %v5089, %v5081
    %v6602 = vpack.c.b16 %v5090, %v5082
    %v6603 = vpack.c.b16 %v5091, %v5083
    %v6604 = vpack.c.b16 %v5092, %v5084
    %v6605 = vpack.c.b16 %v5093, %v5085
    %v6606 = vpack.c.b16 %v5094, %v5086
    %v6607 = vpack.c.b16 %v5103, %v5095
    %v6608 = vpack.c.b16 %v5104, %v5096
    %v6609 = vpack.c.b16 %v5105, %v5097
    %v6610 = vpack.c.b16 %v5106, %v5098
    %v6611 = vpack.c.b16 %v5107, %v5099
    %v6612 = vpack.c.b16 %v5108, %v5100
    %v6613 = vpack.c.b16 %v5109, %v5101
    %v6614 = vpack.c.b16 %v5110, %v5102
    %v6615 = vpack.c.b16 %v5119, %v5111
    %v6616 = vpack.c.b16 %v5120, %v5112
    %v6617 = vpack.c.b16 %v5121, %v5113
    %v6618 = vpack.c.b16 %v5122, %v5114
    %v6619 = vpack.c.b16 %v5123, %v5115
    %v6620 = vpack.c.b16 %v5124, %v5116
    %v6621 = vpack.c.b16 %v5125, %v5117
    %v6622 = vpack.c.b16 %v5126, %v5118
    %v6623 = vpack.c.b16 %v5135, %v5127
    %v6624 = vpack.c.b16 %v5136, %v5128
    %v6625 = vpack.c.b16 %v5137, %v5129
    %v6626 = vpack.c.b16 %v5138, %v5130
    %v6627 = vpack.c.b16 %v5139, %v5131
    %v6628 = vpack.c.b16 %v5140, %v5132
    %v6629 = vpack.c.b16 %v5141, %v5133
    %v6630 = vpack.c.b16 %v5142, %v5134
    %v6631 = vpack.c.b16 %v5151, %v5143
    %v6632 = vpack.c.b16 %v5152, %v5144
    %v6633 = vpack.c.b16 %v5153, %v5145
    %v6634 = vpack.c.b16 %v5154, %v5146
    %v6635 = vpack.c.b16 %v5155, %v5147
    %v6636 = vpack.c.b16 %v5156, %v5148
    %v6637 = vpack.c.b16 %v5157, %v5149
    %v6638 = vpack.c.b16 %v5158, %v5150
    %v6639 = vpack.c.b16 %v5167, %v5159
    %v6640 = vpack.c.b16 %v5168, %v5160
    %v6641 = vpack.c.b16 %v5169, %v5161
    %v6642 = vpack.c.b16 %v5170, %v5162
    %v6643 = vpack.c.b16 %v5171, %v5163
    %v6644 = vpack.c.b16 %v5172, %v5164
    %v6645 = vpack.c.b16 %v5173, %v5165
    %v6646 = vpack.c.b16 %v5174, %v5166
    %v6647 = vpack.c.b16 %v5183, %v5175
    %v6648 = vpack.c.b16 %v5184, %v5176
    %v6649 = vpack.c.b16 %v5185, %v5177
    %v6650 = vpack.c.b16 %v5186, %v5178
    %v6651 = vpack.c.b16 %v5187, %v5179
    %v6652 = vpack.c.b16 %v5188, %v5180
    %v6653 = vpack.c.b16 %v5189, %v5181
    %v6654 = vpack.c.b16 %v5190, %v5182
    %v6655 = vpack.c.b16 %v5199, %v5191
    %v6656 = vpack.c.b16 %v5200, %v5192
    %v6657 = vpack.c.b16 %v5201, %v5193
    %v6658 = vpack.c.b16 %v5202, %v5194
    %v6659 = vpack.c.b16 %v5203, %v5195
    %v6660 = vpack.c.b16 %v5204, %v5196
    %v6661 = vpack.c.b16 %v5205, %v5197
    %v6662 = vpack.c.b16 %v5206, %v5198
    %v6663 = vpack.c.b16 %v5215, %v5207
    %v6664 = vpack.c.b16 %v5216, %v5208
    %v6665 = vpack.c.b16 %v5217, %v5209
    %v6666 = vpack.c.b16 %v5218, %v5210
    %v6667 = vpack.c.b16 %v5219, %v5211
    %v6668 = vpack.c.b16 %v5220, %v5212
    %v6669 = vpack.c.b16 %v5221, %v5213
    %v6670 = vpack.c.b16 %v5222, %v5214
    %v6671 = vpack.c.b16 %v5231, %v5223
    %v6672 = vpack.c.b16 %v5232, %v5224
    %v6673 = vpack.c.b16 %v5233, %v5225
    %v6674 = vpack.c.b16 %v5234, %v5226
    %v6675 = vpack.c.b16 %v5235, %v5227
    %v6676 = vpack.c.b16 %v5236, %v5228
    %v6677 = vpack.c.b16 %v5237, %v5229
    %v6678 = vpack.c.b16 %v5238, %v5230
    %v6679 = vpack.c.b16 %v5247, %v5239
    %v6680 = vpack.c.b16 %v5248, %v5240
    %v6681 = vpack.c.b16 %v5249, %v5241
    %v6682 = vpack.c.b16 %v5250, %v5242
    %v6683 = vpack.c.b16 %v5251, %v5243
    %v6684 = vpack.c.b16 %v5252, %v5244
    %v6685 = vpack.c.b16 %v5253, %v5245
    %v6686 = vpack.c.b16 %v5254, %v5246
    %v6687 = vpack.c.b16 %v5263, %v5255
    %v6688 = vpack.c.b16 %v5264, %v5256
    %v6689 = vpack.c.b16 %v5265, %v5257
    %v6690 = vpack.c.b16 %v5266, %v5258
    %v6691 = vpack.c.b16 %v5267, %v5259
    %v6692 = vpack.c.b16 %v5268, %v5260
    %v6693 = vpack.c.b16 %v5269, %v5261
    %v6694 = vpack.c.b16 %v5270, %v5262
    %v6695 = vpack.c.b16 %v5279, %v5271
    %v6696 = vpack.c.b16 %v5280, %v5272
    %v6697 = vpack.c.b16 %v5281, %v5273
    %v6698 = vpack.c.b16 %v5282, %v5274
    %v6699 = vpack.c.b16 %v5283, %v5275
    %v6700 = vpack.c.b16 %v5284, %v5276
    %v6701 = vpack.c.b16 %v5285, %v5277
    %v6702 = vpack.c.b16 %v5286, %v5278
    %v6703 = vpack.c.b16 %v5295, %v5287
    %v6704 = vpack.c.b16 %v5296, %v5288
    %v6705 = vpack.c.b16 %v5297, %v5289
    %v6706 = vpack.c.b16 %v5298, %v5290
    %v6707 = vpack.c.b16 %v5299, %v5291
    %v6708 = vpack.c.b16 %v5300, %v5292
    %v6709 = vpack.c.b16 %v5301, %v5293
    %v6710 = vpack.c.b16 %v5302, %v5294
    %v6711 = vpack.c.b16 %v5311, %v5303
    %v6712 = vpack.c.b16 %v5312, %v5304
    %v6713 = vpack.c.b16 %v5313, %v5305
    %v6714 = vpack.c.b16 %v5314, %v5306
    %v6715 = vpack.c.b16 %v5315, %v5307
    %v6716 = vpack.c.b16 %v5316, %v5308
    %v6717 = vpack.c.b16 %v5317, %v5309
    %v6718 = vpack.c.b16 %v5318, %v5310
    %v6719 = vpack.c.b16 %v5327, %v5319
    %v6720 = vpack.c.b16 %v5328, %v5320
    %v6721 = vpack.c.b16 %v5329, %v5321
    %v6722 = vpack.c.b16 %v5330, %v5322
    %v6723 = vpack.c.b16 %v5331, %v5323
    %v6724 = vpack.c.b16 %v5332, %v5324
    %v6725 = vpack.c.b16 %v5333, %v5325
    %v6726 = vpack.c.b16 %v5334, %v5326
    %v6727 = vpack.c.b16 %v5343, %v5335
    %v6728 = vpack.c.b16 %v5344, %v5336
    %v6729 = vpack.c.b16 %v5345, %v5337
    %v6730 = vpack.c.b16 %v5346, %v5338
    %v6731 = vpack.c.b16 %v5347, %v5339
    %v6732 = vpack.c.b16 %v5348, %v5340
    %v6733 = vpack.c.b16 %v5349, %v5341
    %v6734 = vpack.c.b16 %v5350, %v5342
    %v6735 = vpack.c.b16 %v5359, %v5351
    %v6736 = vpack.c.b16 %v5360, %v5352
    %v6737 = vpack.c.b16 %v5361, %v5353
    %v6738 = vpack.c.b16 %v5362, %v5354
    %v6739 = vpack.c.b16 %v5363, %v5355
    %v6740 = vpack.c.b16 %v5364, %v5356
    %v6741 = vpack.c.b16 %v5365, %v5357
    %v6742 = vpack.c.b16 %v5366, %v5358
    %v6743 = vpack.c.b16 %v5375, %v5367
    %v6744 = vpack.c.b16 %v5376, %v5368
    %v6745 = vpack.c.b16 %v5377, %v5369
    %v6746 = vpack.c.b16 %v5378, %v5370
    %v6747 = vpack.c.b16 %v5379, %v5371
    %v6748 = vpack.c.b16 %v5380, %v5372
    %v6749 = vpack.c.b16 %v5381, %v5373
    %v6750 = vpack.c.b16 %v5382, %v5374
    %v6751 = vpack.c.b16 %v5391, %v5383
    %v6752 = vpack.c.b16 %v5392, %v5384
    %v6753 = vpack.c.b16 %v5393, %v5385
    %v6754 = vpack.c.b16 %v5394, %v5386
    %v6755 = vpack.c.b16 %v5395, %v5387
    %v6756 = vpack.c.b16 %v5396, %v5388
    %v6757 = vpack.c.b16 %v5397, %v5389
    %v6758 = vpack.c.b16 %v5398, %v5390
    %v6759 = vpack.c.b16 %v5407, %v5399
    %v6760 = vpack.c.b16 %v5408, %v5400
    %v6761 = vpack.c.b16 %v5409, %v5401
    %v6762 = vpack.c.b16 %v5410, %v5402
    %v6763 = vpack.c.b16 %v5411, %v5403
    %v6764 = vpack.c.b16 %v5412, %v5404
    %v6765 = vpack.c.b16 %v5413, %v5405
    %v6766 = vpack.c.b16 %v5414, %v5406
    %v6767 = vpack.c.b16 %v5423, %v5415
    %v6768 = vpack.c.b16 %v5424, %v5416
    %v6769 = vpack.c.b16 %v5425, %v5417
    %v6770 = vpack.c.b16 %v5426, %v5418
    %v6771 = vpack.c.b16 %v5427, %v5419
    %v6772 = vpack.c.b16 %v5428, %v5420
    %v6773 = vpack.c.b16 %v5429, %v5421
    %v6774 = vpack.c.b16 %v5430, %v5422
    %v6775 = vpack.c.b16 %v5439, %v5431
    %v6776 = vpack.c.b16 %v5440, %v5432
    %v6777 = vpack.c.b16 %v5441, %v5433
    %v6778 = vpack.c.b16 %v5442, %v5434
    %v6779 = vpack.c.b16 %v5443, %v5435
    %v6780 = vpack.c.b16 %v5444, %v5436
    %v6781 = vpack.c.b16 %v5445, %v5437
    %v6782 = vpack.c.b16 %v5446, %v5438
    %v6783 = vpack.c.b16 %v5455, %v5447
    %v6784 = vpack.c.b16 %v5456, %v5448
    %v6785 = vpack.c.b16 %v5457, %v5449
    %v6786 = vpack.c.b16 %v5458, %v5450
    %v6787 = vpack.c.b16 %v5459, %v5451
    %v6788 = vpack.c.b16 %v5460, %v5452
    %v6789 = vpack.c.b16 %v5461, %v5453
    %v6790 = vpack.c.b16 %v5462, %v5454
    %v6791 = vpack.c.b16 %v5471, %v5463
    %v6792 = vpack.c.b16 %v5472, %v5464
    %v6793 = vpack.c.b16 %v5473, %v5465
    %v6794 = vpack.c.b16 %v5474, %v5466
    %v6795 = vpack.c.b16 %v5475, %v5467
    %v6796 = vpack.c.b16 %v5476, %v5468
    %v6797 = vpack.c.b16 %v5477, %v5469
    %v6798 = vpack.c.b16 %v5478, %v5470
    %v6799 = vpack.c.b16 %v5487, %v5479
    %v6800 = vpack.c.b16 %v5488, %v5480
    %v6801 = vpack.c.b16 %v5489, %v5481
    %v6802 = vpack.c.b16 %v5490, %v5482
    %v6803 = vpack.c.b16 %v5491, %v5483
    %v6804 = vpack.c.b16 %v5492, %v5484
    %v6805 = vpack.c.b16 %v5493, %v5485
    %v6806 = vpack.c.b16 %v5494, %v5486
    %v6807 = vpack.c.b16 %v5503, %v5495
    %v6808 = vpack.c.b16 %v5504, %v5496
    %v6809 = vpack.c.b16 %v5505, %v5497
    %v6810 = vpack.c.b16 %v5506, %v5498
    %v6811 = vpack.c.b16 %v5507, %v5499
    %v6812 = vpack.c.b16 %v5508, %v5500
    %v6813 = vpack.c.b16 %v5509, %v5501
    %v6814 = vpack.c.b16 %v5510, %v5502
    %v6815 = vpack.c.b16 %v5519, %v5511
    %v6816 = vpack.c.b16 %v5520, %v5512
    %v6817 = vpack.c.b16 %v5521, %v5513
    %v6818 = vpack.c.b16 %v5522, %v5514
    %v6819 = vpack.c.b16 %v5523, %v5515
    %v6820 = vpack.c.b16 %v5524, %v5516
    %v6821 = vpack.c.b16 %v5525, %v5517
    %v6822 = vpack.c.b16 %v5526, %v5518
    %v6823 = vpack.c.b16 %v5535, %v5527
    %v6824 = vpack.c.b16 %v5536, %v5528
    %v6825 = vpack.c.b16 %v5537, %v5529
    %v6826 = vpack.c.b16 %v5538, %v5530
    %v6827 = vpack.c.b16 %v5539, %v5531
    %v6828 = vpack.c.b16 %v5540, %v5532
    %v6829 = vpack.c.b16 %v5541, %v5533
    %v6830 = vpack.c.b16 %v5542, %v5534
    %v6831 = vpack.c.b16 %v5551, %v5543
    %v6832 = vpack.c.b16 %v5552, %v5544
    %v6833 = vpack.c.b16 %v5553, %v5545
    %v6834 = vpack.c.b16 %v5554, %v5546
    %v6835 = vpack.c.b16 %v5555, %v5547
    %v6836 = vpack.c.b16 %v5556, %v5548
    %v6837 = vpack.c.b16 %v5557, %v5549
    %v6838 = vpack.c.b16 %v5558, %v5550
    %v6839 = vpack.c.b16 %v5567, %v5559
    %v6840 = vpack.c.b16 %v5568, %v5560
    %v6841 = vpack.c.b16 %v5569, %v5561
    %v6842 = vpack.c.b16 %v5570, %v5562
    %v6843 = vpack.c.b16 %v5571, %v5563
    %v6844 = vpack.c.b16 %v5572, %v5564
    %v6845 = vpack.c.b16 %v5573, %v5565
    %v6846 = vpack.c.b16 %v5574, %v5566
    %v6847 = vpack.c.b16 %v5583, %v5575
    %v6848 = vpack.c.b16 %v5584, %v5576
    %v6849 = vpack.c.b16 %v5585, %v5577
    %v6850 = vpack.c.b16 %v5586, %v5578
    %v6851 = vpack.c.b16 %v5587, %v5579
    %v6852 = vpack.c.b16 %v5588, %v5580
    %v6853 = vpack.c.b16 %v5589, %v5581
    %v6854 = vpack.c.b16 %v5590, %v5582
    %v6855 = vpack.c.b16 %v5599, %v5591
    %v6856 = vpack.c.b16 %v5600, %v5592
    %v6857 = vpack.c.b16 %v5601, %v5593
    %v6858 = vpack.c.b16 %v5602, %v5594
    %v6859 = vpack.c.b16 %v5603, %v5595
    %v6860 = vpack.c.b16 %v5604, %v5596
    %v6861 = vpack.c.b16 %v5605, %v5597
    %v6862 = vpack.c.b16 %v5606, %v5598
    %v6863 = vpack.c.b16 %v5615, %v5607
    %v6864 = vpack.c.b16 %v5616, %v5608
    %v6865 = vpack.c.b16 %v5617, %v5609
    %v6866 = vpack.c.b16 %v5618, %v5610
    %v6867 = vpack.c.b16 %v5619, %v5611
    %v6868 = vpack.c.b16 %v5620, %v5612
    %v6869 = vpack.c.b16 %v5621, %v5613
    %v6870 = vpack.c.b16 %v5622, %v5614
    %v6871 = vpack.c.b16 %v5631, %v5623
    %v6872 = vpack.c.b16 %v5632, %v5624
    %v6873 = vpack.c.b16 %v5633, %v5625
    %v6874 = vpack.c.b16 %v5634, %v5626
    %v6875 = vpack.c.b16 %v5635, %v5627
    %v6876 = vpack.c.b16 %v5636, %v5628
    %v6877 = vpack.c.b16 %v5637, %v5629
    %v6878 = vpack.c.b16 %v5638, %v5630
    %v6879 = vpack.c.b16 %v5647, %v5639
    %v6880 = vpack.c.b16 %v5648, %v5640
    %v6881 = vpack.c.b16 %v5649, %v5641
    %v6882 = vpack.c.b16 %v5650, %v5642
    %v6883 = vpack.c.b16 %v5651, %v5643
    %v6884 = vpack.c.b16 %v5652, %v5644
    %v6885 = vpack.c.b16 %v5653, %v5645
    %v6886 = vpack.c.b16 %v5654, %v5646
    %v6887 = vpack.c.b16 %v5663, %v5655
    %v6888 = vpack.c.b16 %v5664, %v5656
    %v6889 = vpack.c.b16 %v5665, %v5657
    %v6890 = vpack.c.b16 %v5666, %v5658
    %v6891 = vpack.c.b16 %v5667, %v5659
    %v6892 = vpack.c.b16 %v5668, %v5660
    %v6893 = vpack.c.b16 %v5669, %v5661
    %v6894 = vpack.c.b16 %v5670, %v5662
    %v6895 = vpack.c.b16 %v5679, %v5671
    %v6896 = vpack.c.b16 %v5680, %v5672
    %v6897 = vpack.c.b16 %v5681, %v5673
    %v6898 = vpack.c.b16 %v5682, %v5674
    %v6899 = vpack.c.b16 %v5683, %v5675
    %v6900 = vpack.c.b16 %v5684, %v5676
    %v6901 = vpack.c.b16 %v5685, %v5677
    %v6902 = vpack.c.b16 %v5686, %v5678
    %v6903 = vpack.c.b16 %v5695, %v5687
    %v6904 = vpack.c.b16 %v5696, %v5688
    %v6905 = vpack.c.b16 %v5697, %v5689
    %v6906 = vpack.c.b16 %v5698, %v5690
    %v6907 = vpack.c.b16 %v5699, %v5691
    %v6908 = vpack.c.b16 %v5700, %v5692
    %v6909 = vpack.c.b16 %v5701, %v5693
    %v6910 = vpack.c.b16 %v5702, %v5694
    %v6911 = vpack.c.b16 %v5711, %v5703
    %v6912 = vpack.c.b16 %v5712, %v5704
    %v6913 = vpack.c.b16 %v5713, %v5705
    %v6914 = vpack.c.b16 %v5714, %v5706
    %v6915 = vpack.c.b16 %v5715, %v5707
    %v6916 = vpack.c.b16 %v5716, %v5708
    %v6917 = vpack.c.b16 %v5717, %v5709
    %v6918 = vpack.c.b16 %v5718, %v5710
    %v6919 = vpack.c.b16 %v5727, %v5719
    %v6920 = vpack.c.b16 %v5728, %v5720
    %v6921 = vpack.c.b16 %v5729, %v5721
    %v6922 = vpack.c.b16 %v5730, %v5722
    %v6923 = vpack.c.b16 %v5731, %v5723
    %v6924 = vpack.c.b16 %v5732, %v5724
    %v6925 = vpack.c.b16 %v5733, %v5725
    %v6926 = vpack.c.b16 %v5734, %v5726
    %v6927 = vpack.c.b16 %v5743, %v5735
    %v6928 = vpack.c.b16 %v5744, %v5736
    %v6929 = vpack.c.b16 %v5745, %v5737
    %v6930 = vpack.c.b16 %v5746, %v5738
    %v6931 = vpack.c.b16 %v5747, %v5739
    %v6932 = vpack.c.b16 %v5748, %v5740
    %v6933 = vpack.c.b16 %v5749, %v5741
    %v6934 = vpack.c.b16 %v5750, %v5742
    %v6935 = vpack.c.b16 %v5759, %v5751
    %v6936 = vpack.c.b16 %v5760, %v5752
    %v6937 = vpack.c.b16 %v5761, %v5753
    %v6938 = vpack.c.b16 %v5762, %v5754
    %v6939 = vpack.c.b16 %v5763, %v5755
    %v6940 = vpack.c.b16 %v5764, %v5756
    %v6941 = vpack.c.b16 %v5765, %v5757
    %v6942 = vpack.c.b16 %v5766, %v5758
    %v6943 = vpack.c.b16 %v5775, %v5767
    %v6944 = vpack.c.b16 %v5776, %v5768
    %v6945 = vpack.c.b16 %v5777, %v5769
    %v6946 = vpack.c.b16 %v5778, %v5770
    %v6947 = vpack.c.b16 %v5779, %v5771
    %v6948 = vpack.c.b16 %v5780, %v5772
    %v6949 = vpack.c.b16 %v5781, %v5773
    %v6950 = vpack.c.b16 %v5782, %v5774
    %v6951 = vpack.c.b16 %v5791, %v5783
    %v6952 = vpack.c.b16 %v5792, %v5784
    %v6953 = vpack.c.b16 %v5793, %v5785
    %v6954 = vpack.c.b16 %v5794, %v5786
    %v6955 = vpack.c.b16 %v5795, %v5787
    %v6956 = vpack.c.b16 %v5796, %v5788
    %v6957 = vpack.c.b16 %v5797, %v5789
    %v6958 = vpack.c.b16 %v5798, %v5790
    %v6959 = vpack.c.b16 %v5807, %v5799
    %v6960 = vpack.c.b16 %v5808, %v5800
    %v6961 = vpack.c.b16 %v5809, %v5801
    %v6962 = vpack.c.b16 %v5810, %v5802
    %v6963 = vpack.c.b16 %v5811, %v5803
    %v6964 = vpack.c.b16 %v5812, %v5804
    %v6965 = vpack.c.b16 %v5813, %v5805
    %v6966 = vpack.c.b16 %v5814, %v5806
    %8119 = vmatprep.subr.bf16.mxu0 %v5816
    %8120 = vmatpush1.bf16.msra.mxu0 %v5815
    %8121 = vmatprep.subr.bf16.mxu0 %v5824
    %8122 = vmatpush1.bf16.msra.mxu0 %v5823
    %8123 = vmatprep.subr.bf16.mxu0 %v5832
    %8124 = vmatpush1.bf16.msra.mxu0 %v5831
    %8125 = vmatprep.subr.bf16.mxu0 %v5840
    %8126 = vmatpush1.bf16.msra.mxu0 %v5839
    %8127 = vmatprep.subr.bf16.mxu0 %v5848
    %8128 = vmatpush1.bf16.msra.mxu0 %v5847
    %8129 = vmatprep.subr.bf16.mxu0 %v5856
    %8130 = vmatpush1.bf16.msra.mxu0 %v5855
    %8131 = vmatprep.subr.bf16.mxu0 %v5864
    %8132 = vmatpush1.bf16.msra.mxu0 %v5863
    %8133 = vmatprep.subr.bf16.mxu0 %v5872
    %8134 = vmatpush1.bf16.msra.mxu0 %v5871
    %8135 = vmatprep.subr.bf16.mxu0 %v5880
    %8136 = vmatpush1.bf16.msra.mxu0 %v5879
    %8137 = vmatprep.subr.bf16.mxu0 %v5888
    %8138 = vmatpush1.bf16.msra.mxu0 %v5887
    %8139 = vmatprep.subr.bf16.mxu0 %v5896
    %8140 = vmatpush1.bf16.msra.mxu0 %v5895
    %8141 = vmatprep.subr.bf16.mxu0 %v5904
    %8142 = vmatpush1.bf16.msra.mxu0 %v5903
    %8143 = vmatprep.subr.bf16.mxu0 %v5912
    %8144 = vmatpush1.bf16.msra.mxu0 %v5911
    %8145 = vmatprep.subr.bf16.mxu0 %v5920
    %8146 = vmatpush1.bf16.msra.mxu0 %v5919
    %8147 = vmatprep.subr.bf16.mxu0 %v5928
    %8148 = vmatpush1.bf16.msra.mxu0 %v5927
    %8149 = vmatprep.subr.bf16.mxu0 %v5936
    %8150 = vmatpush1.bf16.msra.mxu0 %v5935
    %8151 = vmatprep.mubr.bf16.mxu0 %v1148
    %8152 = vmatmul.mubr.bf16.gmra.mrb[0].mxu0 %v1147
    %v8153 = vpop.f32.mrb[0].mxu0
    %v8154 = vadd.f32 %v2342, %v8153
    %v8155 = vpop.f32.mrb[0].mxu0
    %v8156 = vadd.f32 %v2342, %v8155
    %v8157 = vpop.f32.mrb[0].mxu0
    %v8158 = vadd.f32 %v2347, %v8157
    %v8159 = vpop.f32.mrb[0].mxu0
    %v8160 = vadd.f32 %v2347, %v8159
    %8161 = vmatprep.mubr.bf16.mxu0 %v1166
    %8162 = vmatmul.mubr.bf16.gmra.mrb[0].mxu0 %v1165
    %v8163 = vpop.f32.mrb[0].mxu0
    %v8164 = vadd.f32 %v2352, %v8163
    %v8165 = vpop.f32.mrb[0].mxu0
    %v8166 = vadd.f32 %v2352, %v8165
    %v8167 = vpop.f32.mrb[0].mxu0
    %v8168 = vadd.f32 %v2357, %v8167
    %v8169 = vpop.f32.mrb[0].mxu0
    %v8170 = vadd.f32 %v2357, %v8169
    %8171 = vdwg.mxu0
    %8172 = vmatprep.subr.bf16.mxu0 %v5944
    %8173 = vmatpush1.bf16.msra.mxu0 %v5943
    %8174 = vmatprep.subr.bf16.mxu0 %v5952
    %8175 = vmatpush1.bf16.msra.mxu0 %v5951
    %8176 = vmatprep.subr.bf16.mxu0 %v5960
    %8177 = vmatpush1.bf16.msra.mxu0 %v5959
    %8178 = vmatprep.subr.bf16.mxu0 %v5968
    %8179 = vmatpush1.bf16.msra.mxu0 %v5967
    %8180 = vmatprep.subr.bf16.mxu0 %v5976
    %8181 = vmatpush1.bf16.msra.mxu0 %v5975
    %8182 = vmatprep.subr.bf16.mxu0 %v5984
    %8183 = vmatpush1.bf16.msra.mxu0 %v5983
    %8184 = vmatprep.subr.bf16.mxu0 %v5992
    %8185 = vmatpush1.bf16.msra.mxu0 %v5991
    %8186 = vmatprep.subr.bf16.mxu0 %v6000
    %8187 = vmatpush1.bf16.msra.mxu0 %v5999
    %8188 = vmatprep.subr.bf16.mxu0 %v6008
    %8189 = vmatpush1.bf16.msra.mxu0 %v6007
    %8190 = vmatprep.subr.bf16.mxu0 %v6016
    %8191 = vmatpush1.bf16.msra.mxu0 %v6015
    %8192 = vmatprep.subr.bf16.mxu0 %v6024
    %8193 = vmatpush1.bf16.msra.mxu0 %v6023
    %8194 = vmatprep.subr.bf16.mxu0 %v6032
    %8195 = vmatpush1.bf16.msra.mxu0 %v6031
    %8196 = vmatprep.subr.bf16.mxu0 %v6040
    %8197 = vmatpush1.bf16.msra.mxu0 %v6039
    %8198 = vmatprep.subr.bf16.mxu0 %v6048
    %8199 = vmatpush1.bf16.msra.mxu0 %v6047
    %8200 = vmatprep.subr.bf16.mxu0 %v6056
    %8201 = vmatpush1.bf16.msra.mxu0 %v6055
    %8202 = vmatprep.subr.bf16.mxu0 %v6064
    %8203 = vmatpush1.bf16.msra.mxu0 %v6063
    %8204 = vmatprep.mubr.bf16.mxu0 %v1150
    %8205 = vmatmul.mubr.bf16.gmra.mrb[0].mxu0 %v1149
    %v8206 = vpop.f32.mrb[0].mxu0
    %v8207 = vadd.f32 %v8154, %v8206
    %v8208 = vpop.f32.mrb[0].mxu0
    %v8209 = vadd.f32 %v8156, %v8208
    %v8210 = vpop.f32.mrb[0].mxu0
    %v8211 = vadd.f32 %v8158, %v8210
    %v8212 = vpop.f32.mrb[0].mxu0
    %v8213 = vadd.f32 %v8160, %v8212
    %8214 = vmatprep.mubr.bf16.mxu0 %v1168
    %8215 = vmatmul.mubr.bf16.gmra.mrb[0].mxu0 %v1167
    %v8216 = vpop.f32.mrb[0].mxu0
    %v8217 = vadd.f32 %v8164, %v8216
    %v8218 = vpop.f32.mrb[0].mxu0
    %v8219 = vadd.f32 %v8166, %v8218
    %v8220 = vpop.f32.mrb[0].mxu0
    %v8221 = vadd.f32 %v8168, %v8220
    %v8222 = vpop.f32.mrb[0].mxu0
    %v8223 = vadd.f32 %v8170, %v8222
    %8224 = vdwg.mxu0
    %8225 = vmatprep.subr.bf16.mxu0 %v6072
    %8226 = vmatpush1.bf16.msra.mxu0 %v6071
    %8227 = vmatprep.subr.bf16.mxu0 %v6080
    %8228 = vmatpush1.bf16.msra.mxu0 %v6079
    %8229 = vmatprep.subr.bf16.mxu0 %v6088
    %8230 = vmatpush1.bf16.msra.mxu0 %v6087
    %8231 = vmatprep.subr.bf16.mxu0 %v6096
    %8232 = vmatpush1.bf16.msra.mxu0 %v6095
    %8233 = vmatprep.subr.bf16.mxu0 %v6104
    %8234 = vmatpush1.bf16.msra.mxu0 %v6103
    %8235 = vmatprep.subr.bf16.mxu0 %v6112
    %8236 = vmatpush1.bf16.msra.mxu0 %v6111
    %8237 = vmatprep.subr.bf16.mxu0 %v6120
    %8238 = vmatpush1.bf16.msra.mxu0 %v6119
    %8239 = vmatprep.subr.bf16.mxu0 %v6128
    %8240 = vmatpush1.bf16.msra.mxu0 %v6127
    %8241 = vmatprep.subr.bf16.mxu0 %v6136
    %8242 = vmatpush1.bf16.msra.mxu0 %v6135
    %8243 = vmatprep.subr.bf16.mxu0 %v6144
    %8244 = vmatpush1.bf16.msra.mxu0 %v6143
    %8245 = vmatprep.subr.bf16.mxu0 %v6152
    %8246 = vmatpush1.bf16.msra.mxu0 %v6151
    %8247 = vmatprep.subr.bf16.mxu0 %v6160
    %8248 = vmatpush1.bf16.msra.mxu0 %v6159
    %8249 = vmatprep.subr.bf16.mxu0 %v6168
    %8250 = vmatpush1.bf16.msra.mxu0 %v6167
    %8251 = vmatprep.subr.bf16.mxu0 %v6176
    %8252 = vmatpush1.bf16.msra.mxu0 %v6175
    %8253 = vmatprep.subr.bf16.mxu0 %v6184
    %8254 = vmatpush1.bf16.msra.mxu0 %v6183
    %8255 = vmatprep.subr.bf16.mxu0 %v6192
    %8256 = vmatpush1.bf16.msra.mxu0 %v6191
    %8257 = vmatprep.mubr.bf16.mxu0 %v1152
    %8258 = vmatmul.mubr.bf16.gmra.mrb[0].mxu0 %v1151
    %v8259 = vpop.f32.mrb[0].mxu0
    %v8260 = vadd.f32 %v8207, %v8259
    %v8261 = vpop.f32.mrb[0].mxu0
    %v8262 = vadd.f32 %v8209, %v8261
    %v8263 = vpop.f32.mrb[0].mxu0
    %v8264 = vadd.f32 %v8211, %v8263
    %v8265 = vpop.f32.mrb[0].mxu0
    %v8266 = vadd.f32 %v8213, %v8265
    %8267 = vmatprep.mubr.bf16.mxu0 %v1170
    %8268 = vmatmul.mubr.bf16.gmra.mrb[0].mxu0 %v1169
    %v8269 = vpop.f32.mrb[0].mxu0
    %v8270 = vadd.f32 %v8217, %v8269
    %v8271 = vpop.f32.mrb[0].mxu0
    %v8272 = vadd.f32 %v8219, %v8271
    %v8273 = vpop.f32.mrb[0].mxu0
    %v8274 = vadd.f32 %v8221, %v8273
    %v8275 = vpop.f32.mrb[0].mxu0
    %v8276 = vadd.f32 %v8223, %v8275
    %8277 = vdwg.mxu0
    %8278 = vmatprep.subr.bf16.mxu0 %v6200
    %8279 = vmatpush1.bf16.msra.mxu0 %v6199
    %8280 = vmatprep.subr.bf16.mxu0 %v6208
    %8281 = vmatpush1.bf16.msra.mxu0 %v6207
    %8282 = vmatprep.subr.bf16.mxu0 %v6216
    %8283 = vmatpush1.bf16.msra.mxu0 %v6215
    %8284 = vmatprep.subr.bf16.mxu0 %v6224
    %8285 = vmatpush1.bf16.msra.mxu0 %v6223
    %8286 = vmatprep.subr.bf16.mxu0 %v6232
    %8287 = vmatpush1.bf16.msra.mxu0 %v6231
    %8288 = vmatprep.subr.bf16.mxu0 %v6240
    %8289 = vmatpush1.bf16.msra.mxu0 %v6239
    %8290 = vmatprep.subr.bf16.mxu0 %v6248
    %8291 = vmatpush1.bf16.msra.mxu0 %v6247
    %8292 = vmatprep.subr.bf16.mxu0 %v6256
    %8293 = vmatpush1.bf16.msra.mxu0 %v6255
    %8294 = vmatprep.subr.bf16.mxu0 %v6264
    %8295 = vmatpush1.bf16.msra.mxu0 %v6263
    %8296 = vmatprep.subr.bf16.mxu0 %v6272
    %8297 = vmatpush1.bf16.msra.mxu0 %v6271
    %8298 = vmatprep.subr.bf16.mxu0 %v6280
    %8299 = vmatpush1.bf16.msra.mxu0 %v6279
    %8300 = vmatprep.subr.bf16.mxu0 %v6288
    %8301 = vmatpush1.bf16.msra.mxu0 %v6287
    %8302 = vmatprep.subr.bf16.mxu0 %v6296
    %8303 = vmatpush1.bf16.msra.mxu0 %v6295
    %8304 = vmatprep.subr.bf16.mxu0 %v6304
    %8305 = vmatpush1.bf16.msra.mxu0 %v6303
    %8306 = vmatprep.subr.bf16.mxu0 %v6312
    %8307 = vmatpush1.bf16.msra.mxu0 %v6311
    %8308 = vmatprep.subr.bf16.mxu0 %v6320
    %8309 = vmatpush1.bf16.msra.mxu0 %v6319
    %8310 = vmatprep.mubr.bf16.mxu0 %v1154
    %8311 = vmatmul.mubr.bf16.gmra.mrb[0].mxu0 %v1153
    %v8312 = vpop.f32.mrb[0].mxu0
    %v8313 = vadd.f32 %v8260, %v8312
    %v8314 = vpop.f32.mrb[0].mxu0
    %v8315 = vadd.f32 %v8262, %v8314
    %v8316 = vpop.f32.mrb[0].mxu0
    %v8317 = vadd.f32 %v8264, %v8316
    %v8318 = vpop.f32.mrb[0].mxu0
    %v8319 = vadd.f32 %v8266, %v8318
    %8320 = vmatprep.mubr.bf16.mxu0 %v1172
    %8321 = vmatmul.mubr.bf16.gmra.mrb[0].mxu0 %v1171
    %v8322 = vpop.f32.mrb[0].mxu0
    %v8323 = vadd.f32 %v8270, %v8322
    %v8324 = vpop.f32.mrb[0].mxu0
    %v8325 = vadd.f32 %v8272, %v8324
    %v8326 = vpop.f32.mrb[0].mxu0
    %v8327 = vadd.f32 %v8274, %v8326
    %v8328 = vpop.f32.mrb[0].mxu0
    %v8329 = vadd.f32 %v8276, %v8328
    %8330 = vdwg.mxu0
    %8331 = vmatprep.subr.bf16.mxu0 %v6328
    %8332 = vmatpush1.bf16.msra.mxu0 %v6327
    %8333 = vmatprep.subr.bf16.mxu0 %v6336
    %8334 = vmatpush1.bf16.msra.mxu0 %v6335
    %8335 = vmatprep.subr.bf16.mxu0 %v6344
    %8336 = vmatpush1.bf16.msra.mxu0 %v6343
    %8337 = vmatprep.subr.bf16.mxu0 %v6352
    %8338 = vmatpush1.bf16.msra.mxu0 %v6351
    %8339 = vmatprep.subr.bf16.mxu0 %v6360
    %8340 = vmatpush1.bf16.msra.mxu0 %v6359
    %8341 = vmatprep.subr.bf16.mxu0 %v6368
    %8342 = vmatpush1.bf16.msra.mxu0 %v6367
    %8343 = vmatprep.subr.bf16.mxu0 %v6376
    %8344 = vmatpush1.bf16.msra.mxu0 %v6375
    %8345 = vmatprep.subr.bf16.mxu0 %v6384
    %8346 = vmatpush1.bf16.msra.mxu0 %v6383
    %8347 = vmatprep.subr.bf16.mxu0 %v6392
    %8348 = vmatpush1.bf16.msra.mxu0 %v6391
    %8349 = vmatprep.subr.bf16.mxu0 %v6400
    %8350 = vmatpush1.bf16.msra.mxu0 %v6399
    %8351 = vmatprep.subr.bf16.mxu0 %v6408
    %8352 = vmatpush1.bf16.msra.mxu0 %v6407
    %8353 = vmatprep.subr.bf16.mxu0 %v6416
    %8354 = vmatpush1.bf16.msra.mxu0 %v6415
    %8355 = vmatprep.subr.bf16.mxu0 %v6424
    %8356 = vmatpush1.bf16.msra.mxu0 %v6423
    %8357 = vmatprep.subr.bf16.mxu0 %v6432
    %8358 = vmatpush1.bf16.msra.mxu0 %v6431
    %8359 = vmatprep.subr.bf16.mxu0 %v6440
    %8360 = vmatpush1.bf16.msra.mxu0 %v6439
    %8361 = vmatprep.subr.bf16.mxu0 %v6448
    %8362 = vmatpush1.bf16.msra.mxu0 %v6447
    %8363 = vmatprep.mubr.bf16.mxu0 %v1156
    %8364 = vmatmul.mubr.bf16.gmra.mrb[0].mxu0 %v1155
    %v8365 = vpop.f32.mrb[0].mxu0
    %v8366 = vadd.f32 %v8313, %v8365
    %v8367 = vpop.f32.mrb[0].mxu0
    %v8368 = vadd.f32 %v8315, %v8367
    %v8369 = vpop.f32.mrb[0].mxu0
    %v8370 = vadd.f32 %v8317, %v8369
    %v8371 = vpop.f32.mrb[0].mxu0
    %v8372 = vadd.f32 %v8319, %v8371
    %8373 = vmatprep.mubr.bf16.mxu0 %v1174
    %8374 = vmatmul.mubr.bf16.gmra.mrb[0].mxu0 %v1173
    %v8375 = vpop.f32.mrb[0].mxu0
    %v8376 = vadd.f32 %v8323, %v8375
    %v8377 = vpop.f32.mrb[0].mxu0
    %v8378 = vadd.f32 %v8325, %v8377
    %v8379 = vpop.f32.mrb[0].mxu0
    %v8380 = vadd.f32 %v8327, %v8379
    %v8381 = vpop.f32.mrb[0].mxu0
    %v8382 = vadd.f32 %v8329, %v8381
    %8383 = vdwg.mxu0
    %8384 = vmatprep.subr.bf16.mxu0 %v6456
    %8385 = vmatpush1.bf16.msra.mxu0 %v6455
    %8386 = vmatprep.subr.bf16.mxu0 %v6464
    %8387 = vmatpush1.bf16.msra.mxu0 %v6463
    %8388 = vmatprep.subr.bf16.mxu0 %v6472
    %8389 = vmatpush1.bf16.msra.mxu0 %v6471
    %8390 = vmatprep.subr.bf16.mxu0 %v6480
    %8391 = vmatpush1.bf16.msra.mxu0 %v6479
    %8392 = vmatprep.subr.bf16.mxu0 %v6488
    %8393 = vmatpush1.bf16.msra.mxu0 %v6487
    %8394 = vmatprep.subr.bf16.mxu0 %v6496
    %8395 = vmatpush1.bf16.msra.mxu0 %v6495
    %8396 = vmatprep.subr.bf16.mxu0 %v6504
    %8397 = vmatpush1.bf16.msra.mxu0 %v6503
    %8398 = vmatprep.subr.bf16.mxu0 %v6512
    %8399 = vmatpush1.bf16.msra.mxu0 %v6511
    %8400 = vmatprep.subr.bf16.mxu0 %v6520
    %8401 = vmatpush1.bf16.msra.mxu0 %v6519
    %8402 = vmatprep.subr.bf16.mxu0 %v6528
    %8403 = vmatpush1.bf16.msra.mxu0 %v6527
    %8404 = vmatprep.subr.bf16.mxu0 %v6536
    %8405 = vmatpush1.bf16.msra.mxu0 %v6535
    %8406 = vmatprep.subr.bf16.mxu0 %v6544
    %8407 = vmatpush1.bf16.msra.mxu0 %v6543
    %8408 = vmatprep.subr.bf16.mxu0 %v6552
    %8409 = vmatpush1.bf16.msra.mxu0 %v6551
    %8410 = vmatprep.subr.bf16.mxu0 %v6560
    %8411 = vmatpush1.bf16.msra.mxu0 %v6559
    %8412 = vmatprep.subr.bf16.mxu0 %v6568
    %8413 = vmatpush1.bf16.msra.mxu0 %v6567
    %8414 = vmatprep.subr.bf16.mxu0 %v6576
    %8415 = vmatpush1.bf16.msra.mxu0 %v6575
    %8416 = vmatprep.mubr.bf16.mxu0 %v1158
    %8417 = vmatmul.mubr.bf16.gmra.mrb[0].mxu0 %v1157
    %v8418 = vpop.f32.mrb[0].mxu0
    %v8419 = vadd.f32 %v8366, %v8418
    %v8420 = vpop.f32.mrb[0].mxu0
    %v8421 = vadd.f32 %v8368, %v8420
    %v8422 = vpop.f32.mrb[0].mxu0
    %v8423 = vadd.f32 %v8370, %v8422
    %v8424 = vpop.f32.mrb[0].mxu0
    %v8425 = vadd.f32 %v8372, %v8424
    %8426 = vmatprep.mubr.bf16.mxu0 %v1176
    %8427 = vmatmul.mubr.bf16.gmra.mrb[0].mxu0 %v1175
    %v8428 = vpop.f32.mrb[0].mxu0
    %v8429 = vadd.f32 %v8376, %v8428
    %v8430 = vpop.f32.mrb[0].mxu0
    %v8431 = vadd.f32 %v8378, %v8430
    %v8432 = vpop.f32.mrb[0].mxu0
    %v8433 = vadd.f32 %v8380, %v8432
    %v8434 = vpop.f32.mrb[0].mxu0
    %v8435 = vadd.f32 %v8382, %v8434
    %8436 = vdwg.mxu0
    %8437 = vmatprep.subr.bf16.mxu0 %v6584
    %8438 = vmatpush1.bf16.msra.mxu0 %v6583
    %8439 = vmatprep.subr.bf16.mxu0 %v6592
    %8440 = vmatpush1.bf16.msra.mxu0 %v6591
    %8441 = vmatprep.subr.bf16.mxu0 %v6600
    %8442 = vmatpush1.bf16.msra.mxu0 %v6599
    %8443 = vmatprep.subr.bf16.mxu0 %v6608
    %8444 = vmatpush1.bf16.msra.mxu0 %v6607
    %8445 = vmatprep.subr.bf16.mxu0 %v6616
    %8446 = vmatpush1.bf16.msra.mxu0 %v6615
    %8447 = vmatprep.subr.bf16.mxu0 %v6624
    %8448 = vmatpush1.bf16.msra.mxu0 %v6623
    %8449 = vmatprep.subr.bf16.mxu0 %v6632
    %8450 = vmatpush1.bf16.msra.mxu0 %v6631
    %8451 = vmatprep.subr.bf16.mxu0 %v6640
    %8452 = vmatpush1.bf16.msra.mxu0 %v6639
    %8453 = vmatprep.subr.bf16.mxu0 %v6648
    %8454 = vmatpush1.bf16.msra.mxu0 %v6647
    %8455 = vmatprep.subr.bf16.mxu0 %v6656
    %8456 = vmatpush1.bf16.msra.mxu0 %v6655
    %8457 = vmatprep.subr.bf16.mxu0 %v6664
    %8458 = vmatpush1.bf16.msra.mxu0 %v6663
    %8459 = vmatprep.subr.bf16.mxu0 %v6672
    %8460 = vmatpush1.bf16.msra.mxu0 %v6671
    %8461 = vmatprep.subr.bf16.mxu0 %v6680
    %8462 = vmatpush1.bf16.msra.mxu0 %v6679
    %8463 = vmatprep.subr.bf16.mxu0 %v6688
    %8464 = vmatpush1.bf16.msra.mxu0 %v6687
    %8465 = vmatprep.subr.bf16.mxu0 %v6696
    %8466 = vmatpush1.bf16.msra.mxu0 %v6695
    %8467 = vmatprep.subr.bf16.mxu0 %v6704
    %8468 = vmatpush1.bf16.msra.mxu0 %v6703
    %8469 = vmatprep.mubr.bf16.mxu0 %v1160
    %8470 = vmatmul.mubr.bf16.gmra.mrb[0].mxu0 %v1159
    %v8471 = vpop.f32.mrb[0].mxu0
    %v8472 = vadd.f32 %v8419, %v8471
    %v8473 = vpop.f32.mrb[0].mxu0
    %v8474 = vadd.f32 %v8421, %v8473
    %v8475 = vpop.f32.mrb[0].mxu0
    %v8476 = vadd.f32 %v8423, %v8475
    %v8477 = vpop.f32.mrb[0].mxu0
    %v8478 = vadd.f32 %v8425, %v8477
    %8479 = vmatprep.mubr.bf16.mxu0 %v1178
    %8480 = vmatmul.mubr.bf16.gmra.mrb[0].mxu0 %v1177
    %v8481 = vpop.f32.mrb[0].mxu0
    %v8482 = vadd.f32 %v8429, %v8481
    %v8483 = vpop.f32.mrb[0].mxu0
    %v8484 = vadd.f32 %v8431, %v8483
    %v8485 = vpop.f32.mrb[0].mxu0
    %v8486 = vadd.f32 %v8433, %v8485
    %v8487 = vpop.f32.mrb[0].mxu0
    %v8488 = vadd.f32 %v8435, %v8487
    %8489 = vdwg.mxu0
    %8490 = vmatprep.subr.bf16.mxu0 %v6712
    %8491 = vmatpush1.bf16.msra.mxu0 %v6711
    %8492 = vmatprep.subr.bf16.mxu0 %v6720
    %8493 = vmatpush1.bf16.msra.mxu0 %v6719
    %8494 = vmatprep.subr.bf16.mxu0 %v6728
    %8495 = vmatpush1.bf16.msra.mxu0 %v6727
    %8496 = vmatprep.subr.bf16.mxu0 %v6736
    %8497 = vmatpush1.bf16.msra.mxu0 %v6735
    %8498 = vmatprep.subr.bf16.mxu0 %v6744
    %8499 = vmatpush1.bf16.msra.mxu0 %v6743
    %8500 = vmatprep.subr.bf16.mxu0 %v6752
    %8501 = vmatpush1.bf16.msra.mxu0 %v6751
    %8502 = vmatprep.subr.bf16.mxu0 %v6760
    %8503 = vmatpush1.bf16.msra.mxu0 %v6759
    %8504 = vmatprep.subr.bf16.mxu0 %v6768
    %8505 = vmatpush1.bf16.msra.mxu0 %v6767
    %8506 = vmatprep.subr.bf16.mxu0 %v6776
    %8507 = vmatpush1.bf16.msra.mxu0 %v6775
    %8508 = vmatprep.subr.bf16.mxu0 %v6784
    %8509 = vmatpush1.bf16.msra.mxu0 %v6783
    %8510 = vmatprep.subr.bf16.mxu0 %v6792
    %8511 = vmatpush1.bf16.msra.mxu0 %v6791
    %8512 = vmatprep.subr.bf16.mxu0 %v6800
    %8513 = vmatpush1.bf16.msra.mxu0 %v6799
    %8514 = vmatprep.subr.bf16.mxu0 %v6808
    %8515 = vmatpush1.bf16.msra.mxu0 %v6807
    %8516 = vmatprep.subr.bf16.mxu0 %v6816
    %8517 = vmatpush1.bf16.msra.mxu0 %v6815
    %8518 = vmatprep.subr.bf16.mxu0 %v6824
    %8519 = vmatpush1.bf16.msra.mxu0 %v6823
    %8520 = vmatprep.subr.bf16.mxu0 %v6832
    %8521 = vmatpush1.bf16.msra.mxu0 %v6831
    %8522 = vmatprep.mubr.bf16.mxu0 %v1162
    %8523 = vmatmul.mubr.bf16.gmra.mrb[0].mxu0 %v1161
    %v8524 = vpop.f32.mrb[0].mxu0
    %v8525 = vadd.f32 %v8472, %v8524
    %v8526 = vpop.f32.mrb[0].mxu0
    %v8527 = vadd.f32 %v8474, %v8526
    %v8528 = vpop.f32.mrb[0].mxu0
    %v8529 = vadd.f32 %v8476, %v8528
    %v8530 = vpop.f32.mrb[0].mxu0
    %v8531 = vadd.f32 %v8478, %v8530
    %8532 = vmatprep.mubr.bf16.mxu0 %v1180
    %8533 = vmatmul.mubr.bf16.gmra.mrb[0].mxu0 %v1179
    %v8534 = vpop.f32.mrb[0].mxu0
    %v8535 = vadd.f32 %v8482, %v8534
    %v8536 = vpop.f32.mrb[0].mxu0
    %v8537 = vadd.f32 %v8484, %v8536
    %v8538 = vpop.f32.mrb[0].mxu0
    %v8539 = vadd.f32 %v8486, %v8538
    %v8540 = vpop.f32.mrb[0].mxu0
    %v8541 = vadd.f32 %v8488, %v8540
    %8542 = vdwg.mxu0
    %8543 = vmatprep.subr.bf16.mxu0 %v6840
    %8544 = vmatpush1.bf16.msra.mxu0 %v6839
    %8545 = vmatprep.subr.bf16.mxu0 %v6848
    %8546 = vmatpush1.bf16.msra.mxu0 %v6847
    %8547 = vmatprep.subr.bf16.mxu0 %v6856
    %8548 = vmatpush1.bf16.msra.mxu0 %v6855
    %8549 = vmatprep.subr.bf16.mxu0 %v6864
    %8550 = vmatpush1.bf16.msra.mxu0 %v6863
    %8551 = vmatprep.subr.bf16.mxu0 %v6872
    %8552 = vmatpush1.bf16.msra.mxu0 %v6871
    %8553 = vmatprep.subr.bf16.mxu0 %v6880
    %8554 = vmatpush1.bf16.msra.mxu0 %v6879
    %8555 = vmatprep.subr.bf16.mxu0 %v6888
    %8556 = vmatpush1.bf16.msra.mxu0 %v6887
    %8557 = vmatprep.subr.bf16.mxu0 %v6896
    %8558 = vmatpush1.bf16.msra.mxu0 %v6895
    %8559 = vmatprep.subr.bf16.mxu0 %v6904
    %8560 = vmatpush1.bf16.msra.mxu0 %v6903
    %8561 = vmatprep.subr.bf16.mxu0 %v6912
    %8562 = vmatpush1.bf16.msra.mxu0 %v6911
    %8563 = vmatprep.subr.bf16.mxu0 %v6920
    %8564 = vmatpush1.bf16.msra.mxu0 %v6919
    %8565 = vmatprep.subr.bf16.mxu0 %v6928
    %8566 = vmatpush1.bf16.msra.mxu0 %v6927
    %8567 = vmatprep.subr.bf16.mxu0 %v6936
    %8568 = vmatpush1.bf16.msra.mxu0 %v6935
    %8569 = vmatprep.subr.bf16.mxu0 %v6944
    %8570 = vmatpush1.bf16.msra.mxu0 %v6943
    %8571 = vmatprep.subr.bf16.mxu0 %v6952
    %8572 = vmatpush1.bf16.msra.mxu0 %v6951
    %8573 = vmatprep.subr.bf16.mxu0 %v6960
    %8574 = vmatpush1.bf16.msra.mxu0 %v6959
    %8575 = vmatprep.mubr.bf16.mxu0 %v1164
    %8576 = vmatmul.mubr.bf16.gmra.mrb[0].mxu0 %v1163
    %v8577 = vpop.f32.mrb[0].mxu0
    %v8578 = vadd.f32 %v8525, %v8577
    %v8579 = vpop.f32.mrb[0].mxu0
    %v8580 = vadd.f32 %v8527, %v8579
    %v8581 = vpop.f32.mrb[0].mxu0
    %v8582 = vadd.f32 %v8529, %v8581
    %v8583 = vpop.f32.mrb[0].mxu0
    %v8584 = vadd.f32 %v8531, %v8583
    %8585 = vmatprep.mubr.bf16.mxu0 %v1182
    %8586 = vmatmul.mubr.bf16.gmra.mrb[0].mxu0 %v1181
    %v8587 = vpop.f32.mrb[0].mxu0
    %v8588 = vadd.f32 %v8535, %v8587
    %v8589 = vpop.f32.mrb[0].mxu0
    %v8590 = vadd.f32 %v8537, %v8589
    %v8591 = vpop.f32.mrb[0].mxu0
    %v8592 = vadd.f32 %v8539, %v8591
    %v8593 = vpop.f32.mrb[0].mxu0
    %v8594 = vadd.f32 %v8541, %v8593
    %8595 = vdwg.mxu0
    %8596 = vmatprep.subr.bf16.mxu0 %v5818
    %8597 = vmatpush1.bf16.msra.mxu0 %v5817
    %8598 = vmatprep.subr.bf16.mxu0 %v5826
    %8599 = vmatpush1.bf16.msra.mxu0 %v5825
    %8600 = vmatprep.subr.bf16.mxu0 %v5834
    %8601 = vmatpush1.bf16.msra.mxu0 %v5833
    %8602 = vmatprep.subr.bf16.mxu0 %v5842
    %8603 = vmatpush1.bf16.msra.mxu0 %v5841
    %8604 = vmatprep.subr.bf16.mxu0 %v5850
    %8605 = vmatpush1.bf16.msra.mxu0 %v5849
    %8606 = vmatprep.subr.bf16.mxu0 %v5858
    %8607 = vmatpush1.bf16.msra.mxu0 %v5857
    %8608 = vmatprep.subr.bf16.mxu0 %v5866
    %8609 = vmatpush1.bf16.msra.mxu0 %v5865
    %8610 = vmatprep.subr.bf16.mxu0 %v5874
    %8611 = vmatpush1.bf16.msra.mxu0 %v5873
    %8612 = vmatprep.subr.bf16.mxu0 %v5882
    %8613 = vmatpush1.bf16.msra.mxu0 %v5881
    %8614 = vmatprep.subr.bf16.mxu0 %v5890
    %8615 = vmatpush1.bf16.msra.mxu0 %v5889
    %8616 = vmatprep.subr.bf16.mxu0 %v5898
    %8617 = vmatpush1.bf16.msra.mxu0 %v5897
    %8618 = vmatprep.subr.bf16.mxu0 %v5906
    %8619 = vmatpush1.bf16.msra.mxu0 %v5905
    %8620 = vmatprep.subr.bf16.mxu0 %v5914
    %8621 = vmatpush1.bf16.msra.mxu0 %v5913
    %8622 = vmatprep.subr.bf16.mxu0 %v5922
    %8623 = vmatpush1.bf16.msra.mxu0 %v5921
    %8624 = vmatprep.subr.bf16.mxu0 %v5930
    %8625 = vmatpush1.bf16.msra.mxu0 %v5929
    %8626 = vmatprep.subr.bf16.mxu0 %v5938
    %8627 = vmatpush1.bf16.msra.mxu0 %v5937
    %8628 = vmatprep.mubr.bf16.mxu0 %v1148
    %8629 = vmatmul.mubr.bf16.gmra.mrb[0].mxu0 %v1147
    %v8630 = vpop.f32.mrb[0].mxu0
    %v8631 = vadd.f32 %v2342, %v8630
    %v8632 = vpop.f32.mrb[0].mxu0
    %v8633 = vadd.f32 %v2342, %v8632
    %v8634 = vpop.f32.mrb[0].mxu0
    %v8635 = vadd.f32 %v2347, %v8634
    %v8636 = vpop.f32.mrb[0].mxu0
    %v8637 = vadd.f32 %v2347, %v8636
    %8638 = vmatprep.mubr.bf16.mxu0 %v1166
    %8639 = vmatmul.mubr.bf16.gmra.mrb[0].mxu0 %v1165
    %v8640 = vpop.f32.mrb[0].mxu0
    %v8641 = vadd.f32 %v2352, %v8640
    %v8642 = vpop.f32.mrb[0].mxu0
    %v8643 = vadd.f32 %v2352, %v8642
    %v8644 = vpop.f32.mrb[0].mxu0
    %v8645 = vadd.f32 %v2357, %v8644
    %v8646 = vpop.f32.mrb[0].mxu0
    %v8647 = vadd.f32 %v2357, %v8646
    %8648 = vdwg.mxu0
    %8649 = vmatprep.subr.bf16.mxu0 %v5946
    %8650 = vmatpush1.bf16.msra.mxu0 %v5945
    %8651 = vmatprep.subr.bf16.mxu0 %v5954
    %8652 = vmatpush1.bf16.msra.mxu0 %v5953
    %8653 = vmatprep.subr.bf16.mxu0 %v5962
    %8654 = vmatpush1.bf16.msra.mxu0 %v5961
    %8655 = vmatprep.subr.bf16.mxu0 %v5970
    %8656 = vmatpush1.bf16.msra.mxu0 %v5969
    %8657 = vmatprep.subr.bf16.mxu0 %v5978
    %8658 = vmatpush1.bf16.msra.mxu0 %v5977
    %8659 = vmatprep.subr.bf16.mxu0 %v5986
    %8660 = vmatpush1.bf16.msra.mxu0 %v5985
    %8661 = vmatprep.subr.bf16.mxu0 %v5994
    %8662 = vmatpush1.bf16.msra.mxu0 %v5993
    %8663 = vmatprep.subr.bf16.mxu0 %v6002
    %8664 = vmatpush1.bf16.msra.mxu0 %v6001
    %8665 = vmatprep.subr.bf16.mxu0 %v6010
    %8666 = vmatpush1.bf16.msra.mxu0 %v6009
    %8667 = vmatprep.subr.bf16.mxu0 %v6018
    %8668 = vmatpush1.bf16.msra.mxu0 %v6017
    %8669 = vmatprep.subr.bf16.mxu0 %v6026
    %8670 = vmatpush1.bf16.msra.mxu0 %v6025
    %8671 = vmatprep.subr.bf16.mxu0 %v6034
    %8672 = vmatpush1.bf16.msra.mxu0 %v6033
    %8673 = vmatprep.subr.bf16.mxu0 %v6042
    %8674 = vmatpush1.bf16.msra.mxu0 %v6041
    %8675 = vmatprep.subr.bf16.mxu0 %v6050
    %8676 = vmatpush1.bf16.msra.mxu0 %v6049
    %8677 = vmatprep.subr.bf16.mxu0 %v6058
    %8678 = vmatpush1.bf16.msra.mxu0 %v6057
    %8679 = vmatprep.subr.bf16.mxu0 %v6066
    %8680 = vmatpush1.bf16.msra.mxu0 %v6065
    %8681 = vmatprep.mubr.bf16.mxu0 %v1150
    %8682 = vmatmul.mubr.bf16.gmra.mrb[0].mxu0 %v1149
    %v8683 = vpop.f32.mrb[0].mxu0
    %v8684 = vadd.f32 %v8631, %v8683
    %v8685 = vpop.f32.mrb[0].mxu0
    %v8686 = vadd.f32 %v8633, %v8685
    %v8687 = vpop.f32.mrb[0].mxu0
    %v8688 = vadd.f32 %v8635, %v8687
    %v8689 = vpop.f32.mrb[0].mxu0
    %v8690 = vadd.f32 %v8637, %v8689
    %8691 = vmatprep.mubr.bf16.mxu0 %v1168
    %8692 = vmatmul.mubr.bf16.gmra.mrb[0].mxu0 %v1167
    %v8693 = vpop.f32.mrb[0].mxu0
    %v8694 = vadd.f32 %v8641, %v8693
    %v8695 = vpop.f32.mrb[0].mxu0
    %v8696 = vadd.f32 %v8643, %v8695
    %v8697 = vpop.f32.mrb[0].mxu0
    %v8698 = vadd.f32 %v8645, %v8697
    %v8699 = vpop.f32.mrb[0].mxu0
    %v8700 = vadd.f32 %v8647, %v8699
    %8701 = vdwg.mxu0
    %8702 = vmatprep.subr.bf16.mxu0 %v6074
    %8703 = vmatpush1.bf16.msra.mxu0 %v6073
    %8704 = vmatprep.subr.bf16.mxu0 %v6082
    %8705 = vmatpush1.bf16.msra.mxu0 %v6081
    %8706 = vmatprep.subr.bf16.mxu0 %v6090
    %8707 = vmatpush1.bf16.msra.mxu0 %v6089
    %8708 = vmatprep.subr.bf16.mxu0 %v6098
    %8709 = vmatpush1.bf16.msra.mxu0 %v6097
    %8710 = vmatprep.subr.bf16.mxu0 %v6106
    %8711 = vmatpush1.bf16.msra.mxu0 %v6105
    %8712 = vmatprep.subr.bf16.mxu0 %v6114
    %8713 = vmatpush1.bf16.msra.mxu0 %v6113
    %8714 = vmatprep.subr.bf16.mxu0 %v6122
    %8715 = vmatpush1.bf16.msra.mxu0 %v6121
    %8716 = vmatprep.subr.bf16.mxu0 %v6130
    %8717 = vmatpush1.bf16.msra.mxu0 %v6129
    %8718 = vmatprep.subr.bf16.mxu0 %v6138
    %8719 = vmatpush1.bf16.msra.mxu0 %v6137
    %8720 = vmatprep.subr.bf16.mxu0 %v6146
    %8721 = vmatpush1.bf16.msra.mxu0 %v6145
    %8722 = vmatprep.subr.bf16.mxu0 %v6154
    %8723 = vmatpush1.bf16.msra.mxu0 %v6153
    %8724 = vmatprep.subr.bf16.mxu0 %v6162
    %8725 = vmatpush1.bf16.msra.mxu0 %v6161
    %8726 = vmatprep.subr.bf16.mxu0 %v6170
    %8727 = vmatpush1.bf16.msra.mxu0 %v6169
    %8728 = vmatprep.subr.bf16.mxu0 %v6178
    %8729 = vmatpush1.bf16.msra.mxu0 %v6177
    %8730 = vmatprep.subr.bf16.mxu0 %v6186
    %8731 = vmatpush1.bf16.msra.mxu0 %v6185
    %8732 = vmatprep.subr.bf16.mxu0 %v6194
    %8733 = vmatpush1.bf16.msra.mxu0 %v6193
    %8734 = vmatprep.mubr.bf16.mxu0 %v1152
    %8735 = vmatmul.mubr.bf16.gmra.mrb[0].mxu0 %v1151
    %v8736 = vpop.f32.mrb[0].mxu0
    %v8737 = vadd.f32 %v8684, %v8736
    %v8738 = vpop.f32.mrb[0].mxu0
    %v8739 = vadd.f32 %v8686, %v8738
    %v8740 = vpop.f32.mrb[0].mxu0
    %v8741 = vadd.f32 %v8688, %v8740
    %v8742 = vpop.f32.mrb[0].mxu0
    %v8743 = vadd.f32 %v8690, %v8742
    %8744 = vmatprep.mubr.bf16.mxu0 %v1170
    %8745 = vmatmul.mubr.bf16.gmra.mrb[0].mxu0 %v1169
    %v8746 = vpop.f32.mrb[0].mxu0
    %v8747 = vadd.f32 %v8694, %v8746
    %v8748 = vpop.f32.mrb[0].mxu0
    %v8749 = vadd.f32 %v8696, %v8748
    %v8750 = vpop.f32.mrb[0].mxu0
    %v8751 = vadd.f32 %v8698, %v8750
    %v8752 = vpop.f32.mrb[0].mxu0
    %v8753 = vadd.f32 %v8700, %v8752
    %8754 = vdwg.mxu0
    %8755 = vmatprep.subr.bf16.mxu0 %v6202
    %8756 = vmatpush1.bf16.msra.mxu0 %v6201
    %8757 = vmatprep.subr.bf16.mxu0 %v6210
    %8758 = vmatpush1.bf16.msra.mxu0 %v6209
    %8759 = vmatprep.subr.bf16.mxu0 %v6218
    %8760 = vmatpush1.bf16.msra.mxu0 %v6217
    %8761 = vmatprep.subr.bf16.mxu0 %v6226
    %8762 = vmatpush1.bf16.msra.mxu0 %v6225
    %8763 = vmatprep.subr.bf16.mxu0 %v6234
    %8764 = vmatpush1.bf16.msra.mxu0 %v6233
    %8765 = vmatprep.subr.bf16.mxu0 %v6242
    %8766 = vmatpush1.bf16.msra.mxu0 %v6241
    %8767 = vmatprep.subr.bf16.mxu0 %v6250
    %8768 = vmatpush1.bf16.msra.mxu0 %v6249
    %8769 = vmatprep.subr.bf16.mxu0 %v6258
    %8770 = vmatpush1.bf16.msra.mxu0 %v6257
    %8771 = vmatprep.subr.bf16.mxu0 %v6266
    %8772 = vmatpush1.bf16.msra.mxu0 %v6265
    %8773 = vmatprep.subr.bf16.mxu0 %v6274
    %8774 = vmatpush1.bf16.msra.mxu0 %v6273
    %8775 = vmatprep.subr.bf16.mxu0 %v6282
    %8776 = vmatpush1.bf16.msra.mxu0 %v6281
    %8777 = vmatprep.subr.bf16.mxu0 %v6290
    %8778 = vmatpush1.bf16.msra.mxu0 %v6289
    %8779 = vmatprep.subr.bf16.mxu0 %v6298
    %8780 = vmatpush1.bf16.msra.mxu0 %v6297
    %8781 = vmatprep.subr.bf16.mxu0 %v6306
    %8782 = vmatpush1.bf16.msra.mxu0 %v6305
    %8783 = vmatprep.subr.bf16.mxu0 %v6314
    %8784 = vmatpush1.bf16.msra.mxu0 %v6313
    %8785 = vmatprep.subr.bf16.mxu0 %v6322
    %8786 = vmatpush1.bf16.msra.mxu0 %v6321
    %8787 = vmatprep.mubr.bf16.mxu0 %v1154
    %8788 = vmatmul.mubr.bf16.gmra.mrb[0].mxu0 %v1153
    %v8789 = vpop.f32.mrb[0].mxu0
    %v8790 = vadd.f32 %v8737, %v8789
    %v8791 = vpop.f32.mrb[0].mxu0
    %v8792 = vadd.f32 %v8739, %v8791
    %v8793 = vpop.f32.mrb[0].mxu0
    %v8794 = vadd.f32 %v8741, %v8793
    %v8795 = vpop.f32.mrb[0].mxu0
    %v8796 = vadd.f32 %v8743, %v8795
    %8797 = vmatprep.mubr.bf16.mxu0 %v1172
    %8798 = vmatmul.mubr.bf16.gmra.mrb[0].mxu0 %v1171
    %v8799 = vpop.f32.mrb[0].mxu0
    %v8800 = vadd.f32 %v8747, %v8799
    %v8801 = vpop.f32.mrb[0].mxu0
    %v8802 = vadd.f32 %v8749, %v8801
    %v8803 = vpop.f32.mrb[0].mxu0
    %v8804 = vadd.f32 %v8751, %v8803
    %v8805 = vpop.f32.mrb[0].mxu0
    %v8806 = vadd.f32 %v8753, %v8805
    %8807 = vdwg.mxu0
    %8808 = vmatprep.subr.bf16.mxu0 %v6330
    %8809 = vmatpush1.bf16.msra.mxu0 %v6329
    %8810 = vmatprep.subr.bf16.mxu0 %v6338
    %8811 = vmatpush1.bf16.msra.mxu0 %v6337
    %8812 = vmatprep.subr.bf16.mxu0 %v6346
    %8813 = vmatpush1.bf16.msra.mxu0 %v6345
    %8814 = vmatprep.subr.bf16.mxu0 %v6354
    %8815 = vmatpush1.bf16.msra.mxu0 %v6353
    %8816 = vmatprep.subr.bf16.mxu0 %v6362
    %8817 = vmatpush1.bf16.msra.mxu0 %v6361
    %8818 = vmatprep.subr.bf16.mxu0 %v6370
    %8819 = vmatpush1.bf16.msra.mxu0 %v6369
    %8820 = vmatprep.subr.bf16.mxu0 %v6378
    %8821 = vmatpush1.bf16.msra.mxu0 %v6377
    %8822 = vmatprep.subr.bf16.mxu0 %v6386
    %8823 = vmatpush1.bf16.msra.mxu0 %v6385
    %8824 = vmatprep.subr.bf16.mxu0 %v6394
    %8825 = vmatpush1.bf16.msra.mxu0 %v6393
    %8826 = vmatprep.subr.bf16.mxu0 %v6402
    %8827 = vmatpush1.bf16.msra.mxu0 %v6401
    %8828 = vmatprep.subr.bf16.mxu0 %v6410
    %8829 = vmatpush1.bf16.msra.mxu0 %v6409
    %8830 = vmatprep.subr.bf16.mxu0 %v6418
    %8831 = vmatpush1.bf16.msra.mxu0 %v6417
    %8832 = vmatprep.subr.bf16.mxu0 %v6426
    %8833 = vmatpush1.bf16.msra.mxu0 %v6425
    %8834 = vmatprep.subr.bf16.mxu0 %v6434
    %8835 = vmatpush1.bf16.msra.mxu0 %v6433
    %8836 = vmatprep.subr.bf16.mxu0 %v6442
    %8837 = vmatpush1.bf16.msra.mxu0 %v6441
    %8838 = vmatprep.subr.bf16.mxu0 %v6450
    %8839 = vmatpush1.bf16.msra.mxu0 %v6449
    %8840 = vmatprep.mubr.bf16.mxu0 %v1156
    %8841 = vmatmul.mubr.bf16.gmra.mrb[0].mxu0 %v1155
    %v8842 = vpop.f32.mrb[0].mxu0
    %v8843 = vadd.f32 %v8790, %v8842
    %v8844 = vpop.f32.mrb[0].mxu0
    %v8845 = vadd.f32 %v8792, %v8844
    %v8846 = vpop.f32.mrb[0].mxu0
    %v8847 = vadd.f32 %v8794, %v8846
    %v8848 = vpop.f32.mrb[0].mxu0
    %v8849 = vadd.f32 %v8796, %v8848
    %8850 = vmatprep.mubr.bf16.mxu0 %v1174
    %8851 = vmatmul.mubr.bf16.gmra.mrb[0].mxu0 %v1173
    %v8852 = vpop.f32.mrb[0].mxu0
    %v8853 = vadd.f32 %v8800, %v8852
    %v8854 = vpop.f32.mrb[0].mxu0
    %v8855 = vadd.f32 %v8802, %v8854
    %v8856 = vpop.f32.mrb[0].mxu0
    %v8857 = vadd.f32 %v8804, %v8856
    %v8858 = vpop.f32.mrb[0].mxu0
    %v8859 = vadd.f32 %v8806, %v8858
    %8860 = vdwg.mxu0
    %8861 = vmatprep.subr.bf16.mxu0 %v6458
    %8862 = vmatpush1.bf16.msra.mxu0 %v6457
    %8863 = vmatprep.subr.bf16.mxu0 %v6466
    %8864 = vmatpush1.bf16.msra.mxu0 %v6465
    %8865 = vmatprep.subr.bf16.mxu0 %v6474
    %8866 = vmatpush1.bf16.msra.mxu0 %v6473
    %8867 = vmatprep.subr.bf16.mxu0 %v6482
    %8868 = vmatpush1.bf16.msra.mxu0 %v6481
    %8869 = vmatprep.subr.bf16.mxu0 %v6490
    %8870 = vmatpush1.bf16.msra.mxu0 %v6489
    %8871 = vmatprep.subr.bf16.mxu0 %v6498
    %8872 = vmatpush1.bf16.msra.mxu0 %v6497
    %8873 = vmatprep.subr.bf16.mxu0 %v6506
    %8874 = vmatpush1.bf16.msra.mxu0 %v6505
    %8875 = vmatprep.subr.bf16.mxu0 %v6514
    %8876 = vmatpush1.bf16.msra.mxu0 %v6513
    %8877 = vmatprep.subr.bf16.mxu0 %v6522
    %8878 = vmatpush1.bf16.msra.mxu0 %v6521
    %8879 = vmatprep.subr.bf16.mxu0 %v6530
    %8880 = vmatpush1.bf16.msra.mxu0 %v6529
    %8881 = vmatprep.subr.bf16.mxu0 %v6538
    %8882 = vmatpush1.bf16.msra.mxu0 %v6537
    %8883 = vmatprep.subr.bf16.mxu0 %v6546
    %8884 = vmatpush1.bf16.msra.mxu0 %v6545
    %8885 = vmatprep.subr.bf16.mxu0 %v6554
    %8886 = vmatpush1.bf16.msra.mxu0 %v6553
    %8887 = vmatprep.subr.bf16.mxu0 %v6562
    %8888 = vmatpush1.bf16.msra.mxu0 %v6561
    %8889 = vmatprep.subr.bf16.mxu0 %v6570
    %8890 = vmatpush1.bf16.msra.mxu0 %v6569
    %8891 = vmatprep.subr.bf16.mxu0 %v6578
    %8892 = vmatpush1.bf16.msra.mxu0 %v6577
    %8893 = vmatprep.mubr.bf16.mxu0 %v1158
    %8894 = vmatmul.mubr.bf16.gmra.mrb[0].mxu0 %v1157
    %v8895 = vpop.f32.mrb[0].mxu0
    %v8896 = vadd.f32 %v8843, %v8895
    %v8897 = vpop.f32.mrb[0].mxu0
    %v8898 = vadd.f32 %v8845, %v8897
    %v8899 = vpop.f32.mrb[0].mxu0
    %v8900 = vadd.f32 %v8847, %v8899
    %v8901 = vpop.f32.mrb[0].mxu0
    %v8902 = vadd.f32 %v8849, %v8901
    %8903 = vmatprep.mubr.bf16.mxu0 %v1176
    %8904 = vmatmul.mubr.bf16.gmra.mrb[0].mxu0 %v1175
    %v8905 = vpop.f32.mrb[0].mxu0
    %v8906 = vadd.f32 %v8853, %v8905
    %v8907 = vpop.f32.mrb[0].mxu0
    %v8908 = vadd.f32 %v8855, %v8907
    %v8909 = vpop.f32.mrb[0].mxu0
    %v8910 = vadd.f32 %v8857, %v8909
    %v8911 = vpop.f32.mrb[0].mxu0
    %v8912 = vadd.f32 %v8859, %v8911
    %8913 = vdwg.mxu0
    %8914 = vmatprep.subr.bf16.mxu0 %v6586
    %8915 = vmatpush1.bf16.msra.mxu0 %v6585
    %8916 = vmatprep.subr.bf16.mxu0 %v6594
    %8917 = vmatpush1.bf16.msra.mxu0 %v6593
    %8918 = vmatprep.subr.bf16.mxu0 %v6602
    %8919 = vmatpush1.bf16.msra.mxu0 %v6601
    %8920 = vmatprep.subr.bf16.mxu0 %v6610
    %8921 = vmatpush1.bf16.msra.mxu0 %v6609
    %8922 = vmatprep.subr.bf16.mxu0 %v6618
    %8923 = vmatpush1.bf16.msra.mxu0 %v6617
    %8924 = vmatprep.subr.bf16.mxu0 %v6626
    %8925 = vmatpush1.bf16.msra.mxu0 %v6625
    %8926 = vmatprep.subr.bf16.mxu0 %v6634
    %8927 = vmatpush1.bf16.msra.mxu0 %v6633
    %8928 = vmatprep.subr.bf16.mxu0 %v6642
    %8929 = vmatpush1.bf16.msra.mxu0 %v6641
    %8930 = vmatprep.subr.bf16.mxu0 %v6650
    %8931 = vmatpush1.bf16.msra.mxu0 %v6649
    %8932 = vmatprep.subr.bf16.mxu0 %v6658
    %8933 = vmatpush1.bf16.msra.mxu0 %v6657
    %8934 = vmatprep.subr.bf16.mxu0 %v6666
    %8935 = vmatpush1.bf16.msra.mxu0 %v6665
    %8936 = vmatprep.subr.bf16.mxu0 %v6674
    %8937 = vmatpush1.bf16.msra.mxu0 %v6673
    %8938 = vmatprep.subr.bf16.mxu0 %v6682
    %8939 = vmatpush1.bf16.msra.mxu0 %v6681
    %8940 = vmatprep.subr.bf16.mxu0 %v6690
    %8941 = vmatpush1.bf16.msra.mxu0 %v6689
    %8942 = vmatprep.subr.bf16.mxu0 %v6698
    %8943 = vmatpush1.bf16.msra.mxu0 %v6697
    %8944 = vmatprep.subr.bf16.mxu0 %v6706
    %8945 = vmatpush1.bf16.msra.mxu0 %v6705
    %8946 = vmatprep.mubr.bf16.mxu0 %v1160
    %8947 = vmatmul.mubr.bf16.gmra.mrb[0].mxu0 %v1159
    %v8948 = vpop.f32.mrb[0].mxu0
    %v8949 = vadd.f32 %v8896, %v8948
    %v8950 = vpop.f32.mrb[0].mxu0
    %v8951 = vadd.f32 %v8898, %v8950
    %v8952 = vpop.f32.mrb[0].mxu0
    %v8953 = vadd.f32 %v8900, %v8952
    %v8954 = vpop.f32.mrb[0].mxu0
    %v8955 = vadd.f32 %v8902, %v8954
    %8956 = vmatprep.mubr.bf16.mxu0 %v1178
    %8957 = vmatmul.mubr.bf16.gmra.mrb[0].mxu0 %v1177
    %v8958 = vpop.f32.mrb[0].mxu0
    %v8959 = vadd.f32 %v8906, %v8958
    %v8960 = vpop.f32.mrb[0].mxu0
    %v8961 = vadd.f32 %v8908, %v8960
    %v8962 = vpop.f32.mrb[0].mxu0
    %v8963 = vadd.f32 %v8910, %v8962
    %v8964 = vpop.f32.mrb[0].mxu0
    %v8965 = vadd.f32 %v8912, %v8964
    %8966 = vdwg.mxu0
    %8967 = vmatprep.subr.bf16.mxu0 %v6714
    %8968 = vmatpush1.bf16.msra.mxu0 %v6713
    %8969 = vmatprep.subr.bf16.mxu0 %v6722
    %8970 = vmatpush1.bf16.msra.mxu0 %v6721
    %8971 = vmatprep.subr.bf16.mxu0 %v6730
    %8972 = vmatpush1.bf16.msra.mxu0 %v6729
    %8973 = vmatprep.subr.bf16.mxu0 %v6738
    %8974 = vmatpush1.bf16.msra.mxu0 %v6737
    %8975 = vmatprep.subr.bf16.mxu0 %v6746
    %8976 = vmatpush1.bf16.msra.mxu0 %v6745
    %8977 = vmatprep.subr.bf16.mxu0 %v6754
    %8978 = vmatpush1.bf16.msra.mxu0 %v6753
    %8979 = vmatprep.subr.bf16.mxu0 %v6762
    %8980 = vmatpush1.bf16.msra.mxu0 %v6761
    %8981 = vmatprep.subr.bf16.mxu0 %v6770
    %8982 = vmatpush1.bf16.msra.mxu0 %v6769
    %8983 = vmatprep.subr.bf16.mxu0 %v6778
    %8984 = vmatpush1.bf16.msra.mxu0 %v6777
    %8985 = vmatprep.subr.bf16.mxu0 %v6786
    %8986 = vmatpush1.bf16.msra.mxu0 %v6785
    %8987 = vmatprep.subr.bf16.mxu0 %v6794
    %8988 = vmatpush1.bf16.msra.mxu0 %v6793
    %8989 = vmatprep.subr.bf16.mxu0 %v6802
    %8990 = vmatpush1.bf16.msra.mxu0 %v6801
    %8991 = vmatprep.subr.bf16.mxu0 %v6810
    %8992 = vmatpush1.bf16.msra.mxu0 %v6809
    %8993 = vmatprep.subr.bf16.mxu0 %v6818
    %8994 = vmatpush1.bf16.msra.mxu0 %v6817
    %8995 = vmatprep.subr.bf16.mxu0 %v6826
    %8996 = vmatpush1.bf16.msra.mxu0 %v6825
    %8997 = vmatprep.subr.bf16.mxu0 %v6834
    %8998 = vmatpush1.bf16.msra.mxu0 %v6833
    %8999 = vmatprep.mubr.bf16.mxu0 %v1162
    %9000 = vmatmul.mubr.bf16.gmra.mrb[0].mxu0 %v1161
    %v9001 = vpop.f32.mrb[0].mxu0
    %v9002 = vadd.f32 %v8949, %v9001
    %v9003 = vpop.f32.mrb[0].mxu0
    %v9004 = vadd.f32 %v8951, %v9003
    %v9005 = vpop.f32.mrb[0].mxu0
    %v9006 = vadd.f32 %v8953, %v9005
    %v9007 = vpop.f32.mrb[0].mxu0
    %v9008 = vadd.f32 %v8955, %v9007
    %9009 = vmatprep.mubr.bf16.mxu0 %v1180
    %9010 = vmatmul.mubr.bf16.gmra.mrb[0].mxu0 %v1179
    %v9011 = vpop.f32.mrb[0].mxu0
    %v9012 = vadd.f32 %v8959, %v9011
    %v9013 = vpop.f32.mrb[0].mxu0
    %v9014 = vadd.f32 %v8961, %v9013
    %v9015 = vpop.f32.mrb[0].mxu0
    %v9016 = vadd.f32 %v8963, %v9015
    %v9017 = vpop.f32.mrb[0].mxu0
    %v9018 = vadd.f32 %v8965, %v9017
    %9019 = vdwg.mxu0
    %9020 = vmatprep.subr.bf16.mxu0 %v6842
    %9021 = vmatpush1.bf16.msra.mxu0 %v6841
    %9022 = vmatprep.subr.bf16.mxu0 %v6850
    %9023 = vmatpush1.bf16.msra.mxu0 %v6849
    %9024 = vmatprep.subr.bf16.mxu0 %v6858
    %9025 = vmatpush1.bf16.msra.mxu0 %v6857
    %9026 = vmatprep.subr.bf16.mxu0 %v6866
    %9027 = vmatpush1.bf16.msra.mxu0 %v6865
    %9028 = vmatprep.subr.bf16.mxu0 %v6874
    %9029 = vmatpush1.bf16.msra.mxu0 %v6873
    %9030 = vmatprep.subr.bf16.mxu0 %v6882
    %9031 = vmatpush1.bf16.msra.mxu0 %v6881
    %9032 = vmatprep.subr.bf16.mxu0 %v6890
    %9033 = vmatpush1.bf16.msra.mxu0 %v6889
    %9034 = vmatprep.subr.bf16.mxu0 %v6898
    %9035 = vmatpush1.bf16.msra.mxu0 %v6897
    %9036 = vmatprep.subr.bf16.mxu0 %v6906
    %9037 = vmatpush1.bf16.msra.mxu0 %v6905
    %9038 = vmatprep.subr.bf16.mxu0 %v6914
    %9039 = vmatpush1.bf16.msra.mxu0 %v6913
    %9040 = vmatprep.subr.bf16.mxu0 %v6922
    %9041 = vmatpush1.bf16.msra.mxu0 %v6921
    %9042 = vmatprep.subr.bf16.mxu0 %v6930
    %9043 = vmatpush1.bf16.msra.mxu0 %v6929
    %9044 = vmatprep.subr.bf16.mxu0 %v6938
    %9045 = vmatpush1.bf16.msra.mxu0 %v6937
    %9046 = vmatprep.subr.bf16.mxu0 %v6946
    %9047 = vmatpush1.bf16.msra.mxu0 %v6945
    %9048 = vmatprep.subr.bf16.mxu0 %v6954
    %9049 = vmatpush1.bf16.msra.mxu0 %v6953
    %9050 = vmatprep.subr.bf16.mxu0 %v6962
    %9051 = vmatpush1.bf16.msra.mxu0 %v6961
    %9052 = vmatprep.mubr.bf16.mxu0 %v1164
    %9053 = vmatmul.mubr.bf16.gmra.mrb[0].mxu0 %v1163
    %v9054 = vpop.f32.mrb[0].mxu0
    %v9055 = vadd.f32 %v9002, %v9054
    %v9056 = vpop.f32.mrb[0].mxu0
    %v9057 = vadd.f32 %v9004, %v9056
    %v9058 = vpop.f32.mrb[0].mxu0
    %v9059 = vadd.f32 %v9006, %v9058
    %v9060 = vpop.f32.mrb[0].mxu0
    %v9061 = vadd.f32 %v9008, %v9060
    %9062 = vmatprep.mubr.bf16.mxu0 %v1182
    %9063 = vmatmul.mubr.bf16.gmra.mrb[0].mxu0 %v1181
    %v9064 = vpop.f32.mrb[0].mxu0
    %v9065 = vadd.f32 %v9012, %v9064
    %v9066 = vpop.f32.mrb[0].mxu0
    %v9067 = vadd.f32 %v9014, %v9066
    %v9068 = vpop.f32.mrb[0].mxu0
    %v9069 = vadd.f32 %v9016, %v9068
    %v9070 = vpop.f32.mrb[0].mxu0
    %v9071 = vadd.f32 %v9018, %v9070
    %9072 = vdwg.mxu0
    %9073 = vmatprep.subr.bf16.mxu0 %v5820
    %9074 = vmatpush1.bf16.msra.mxu0 %v5819
    %9075 = vmatprep.subr.bf16.mxu0 %v5828
    %9076 = vmatpush1.bf16.msra.mxu0 %v5827
    %9077 = vmatprep.subr.bf16.mxu0 %v5836
    %9078 = vmatpush1.bf16.msra.mxu0 %v5835
    %9079 = vmatprep.subr.bf16.mxu0 %v5844
    %9080 = vmatpush1.bf16.msra.mxu0 %v5843
    %9081 = vmatprep.subr.bf16.mxu0 %v5852
    %9082 = vmatpush1.bf16.msra.mxu0 %v5851
    %9083 = vmatprep.subr.bf16.mxu0 %v5860
    %9084 = vmatpush1.bf16.msra.mxu0 %v5859
    %9085 = vmatprep.subr.bf16.mxu0 %v5868
    %9086 = vmatpush1.bf16.msra.mxu0 %v5867
    %9087 = vmatprep.subr.bf16.mxu0 %v5876
    %9088 = vmatpush1.bf16.msra.mxu0 %v5875
    %9089 = vmatprep.subr.bf16.mxu0 %v5884
    %9090 = vmatpush1.bf16.msra.mxu0 %v5883
    %9091 = vmatprep.subr.bf16.mxu0 %v5892
    %9092 = vmatpush1.bf16.msra.mxu0 %v5891
    %9093 = vmatprep.subr.bf16.mxu0 %v5900
    %9094 = vmatpush1.bf16.msra.mxu0 %v5899
    %9095 = vmatprep.subr.bf16.mxu0 %v5908
    %9096 = vmatpush1.bf16.msra.mxu0 %v5907
    %9097 = vmatprep.subr.bf16.mxu0 %v5916
    %9098 = vmatpush1.bf16.msra.mxu0 %v5915
    %9099 = vmatprep.subr.bf16.mxu0 %v5924
    %9100 = vmatpush1.bf16.msra.mxu0 %v5923
    %9101 = vmatprep.subr.bf16.mxu0 %v5932
    %9102 = vmatpush1.bf16.msra.mxu0 %v5931
    %9103 = vmatprep.subr.bf16.mxu0 %v5940
    %9104 = vmatpush1.bf16.msra.mxu0 %v5939
    %9105 = vmatprep.mubr.bf16.mxu0 %v1148
    %9106 = vmatmul.mubr.bf16.gmra.mrb[0].mxu0 %v1147
    %v9107 = vpop.f32.mrb[0].mxu0
    %v9108 = vadd.f32 %v2342, %v9107
    %v9109 = vpop.f32.mrb[0].mxu0
    %v9110 = vadd.f32 %v2342, %v9109
    %v9111 = vpop.f32.mrb[0].mxu0
    %v9112 = vadd.f32 %v2347, %v9111
    %v9113 = vpop.f32.mrb[0].mxu0
    %v9114 = vadd.f32 %v2347, %v9113
    %9115 = vmatprep.mubr.bf16.mxu0 %v1166
    %9116 = vmatmul.mubr.bf16.gmra.mrb[0].mxu0 %v1165
    %v9117 = vpop.f32.mrb[0].mxu0
    %v9118 = vadd.f32 %v2352, %v9117
    %v9119 = vpop.f32.mrb[0].mxu0
    %v9120 = vadd.f32 %v2352, %v9119
    %v9121 = vpop.f32.mrb[0].mxu0
    %v9122 = vadd.f32 %v2357, %v9121
    %v9123 = vpop.f32.mrb[0].mxu0
    %v9124 = vadd.f32 %v2357, %v9123
    %9125 = vdwg.mxu0
    %9126 = vmatprep.subr.bf16.mxu0 %v5948
    %9127 = vmatpush1.bf16.msra.mxu0 %v5947
    %9128 = vmatprep.subr.bf16.mxu0 %v5956
    %9129 = vmatpush1.bf16.msra.mxu0 %v5955
    %9130 = vmatprep.subr.bf16.mxu0 %v5964
    %9131 = vmatpush1.bf16.msra.mxu0 %v5963
    %9132 = vmatprep.subr.bf16.mxu0 %v5972
    %9133 = vmatpush1.bf16.msra.mxu0 %v5971
    %9134 = vmatprep.subr.bf16.mxu0 %v5980
    %9135 = vmatpush1.bf16.msra.mxu0 %v5979
    %9136 = vmatprep.subr.bf16.mxu0 %v5988
    %9137 = vmatpush1.bf16.msra.mxu0 %v5987
    %9138 = vmatprep.subr.bf16.mxu0 %v5996
    %9139 = vmatpush1.bf16.msra.mxu0 %v5995
    %9140 = vmatprep.subr.bf16.mxu0 %v6004
    %9141 = vmatpush1.bf16.msra.mxu0 %v6003
    %9142 = vmatprep.subr.bf16.mxu0 %v6012
    %9143 = vmatpush1.bf16.msra.mxu0 %v6011
    %9144 = vmatprep.subr.bf16.mxu0 %v6020
    %9145 = vmatpush1.bf16.msra.mxu0 %v6019
    %9146 = vmatprep.subr.bf16.mxu0 %v6028
    %9147 = vmatpush1.bf16.msra.mxu0 %v6027
    %9148 = vmatprep.subr.bf16.mxu0 %v6036
    %9149 = vmatpush1.bf16.msra.mxu0 %v6035
    %9150 = vmatprep.subr.bf16.mxu0 %v6044
    %9151 = vmatpush1.bf16.msra.mxu0 %v6043
    %9152 = vmatprep.subr.bf16.mxu0 %v6052
    %9153 = vmatpush1.bf16.msra.mxu0 %v6051
    %9154 = vmatprep.subr.bf16.mxu0 %v6060
    %9155 = vmatpush1.bf16.msra.mxu0 %v6059
    %9156 = vmatprep.subr.bf16.mxu0 %v6068
    %9157 = vmatpush1.bf16.msra.mxu0 %v6067
    %9158 = vmatprep.mubr.bf16.mxu0 %v1150
    %9159 = vmatmul.mubr.bf16.gmra.mrb[0].mxu0 %v1149
    %v9160 = vpop.f32.mrb[0].mxu0
    %v9161 = vadd.f32 %v9108, %v9160
    %v9162 = vpop.f32.mrb[0].mxu0
    %v9163 = vadd.f32 %v9110, %v9162
    %v9164 = vpop.f32.mrb[0].mxu0
    %v9165 = vadd.f32 %v9112, %v9164
    %v9166 = vpop.f32.mrb[0].mxu0
    %v9167 = vadd.f32 %v9114, %v9166
    %9168 = vmatprep.mubr.bf16.mxu0 %v1168
    %9169 = vmatmul.mubr.bf16.gmra.mrb[0].mxu0 %v1167
    %v9170 = vpop.f32.mrb[0].mxu0
    %v9171 = vadd.f32 %v9118, %v9170
    %v9172 = vpop.f32.mrb[0].mxu0
    %v9173 = vadd.f32 %v9120, %v9172
    %v9174 = vpop.f32.mrb[0].mxu0
    %v9175 = vadd.f32 %v9122, %v9174
    %v9176 = vpop.f32.mrb[0].mxu0
    %v9177 = vadd.f32 %v9124, %v9176
    %9178 = vdwg.mxu0
    %9179 = vmatprep.subr.bf16.mxu0 %v6076
    %9180 = vmatpush1.bf16.msra.mxu0 %v6075
    %9181 = vmatprep.subr.bf16.mxu0 %v6084
    %9182 = vmatpush1.bf16.msra.mxu0 %v6083
    %9183 = vmatprep.subr.bf16.mxu0 %v6092
    %9184 = vmatpush1.bf16.msra.mxu0 %v6091
    %9185 = vmatprep.subr.bf16.mxu0 %v6100
    %9186 = vmatpush1.bf16.msra.mxu0 %v6099
    %9187 = vmatprep.subr.bf16.mxu0 %v6108
    %9188 = vmatpush1.bf16.msra.mxu0 %v6107
    %9189 = vmatprep.subr.bf16.mxu0 %v6116
    %9190 = vmatpush1.bf16.msra.mxu0 %v6115
    %9191 = vmatprep.subr.bf16.mxu0 %v6124
    %9192 = vmatpush1.bf16.msra.mxu0 %v6123
    %9193 = vmatprep.subr.bf16.mxu0 %v6132
    %9194 = vmatpush1.bf16.msra.mxu0 %v6131
    %9195 = vmatprep.subr.bf16.mxu0 %v6140
    %9196 = vmatpush1.bf16.msra.mxu0 %v6139
    %9197 = vmatprep.subr.bf16.mxu0 %v6148
    %9198 = vmatpush1.bf16.msra.mxu0 %v6147
    %9199 = vmatprep.subr.bf16.mxu0 %v6156
    %9200 = vmatpush1.bf16.msra.mxu0 %v6155
    %9201 = vmatprep.subr.bf16.mxu0 %v6164
    %9202 = vmatpush1.bf16.msra.mxu0 %v6163
    %9203 = vmatprep.subr.bf16.mxu0 %v6172
    %9204 = vmatpush1.bf16.msra.mxu0 %v6171
    %9205 = vmatprep.subr.bf16.mxu0 %v6180
    %9206 = vmatpush1.bf16.msra.mxu0 %v6179
    %9207 = vmatprep.subr.bf16.mxu0 %v6188
    %9208 = vmatpush1.bf16.msra.mxu0 %v6187
    %9209 = vmatprep.subr.bf16.mxu0 %v6196
    %9210 = vmatpush1.bf16.msra.mxu0 %v6195
    %9211 = vmatprep.mubr.bf16.mxu0 %v1152
    %9212 = vmatmul.mubr.bf16.gmra.mrb[0].mxu0 %v1151
    %v9213 = vpop.f32.mrb[0].mxu0
    %v9214 = vadd.f32 %v9161, %v9213
    %v9215 = vpop.f32.mrb[0].mxu0
    %v9216 = vadd.f32 %v9163, %v9215
    %v9217 = vpop.f32.mrb[0].mxu0
    %v9218 = vadd.f32 %v9165, %v9217
    %v9219 = vpop.f32.mrb[0].mxu0
    %v9220 = vadd.f32 %v9167, %v9219
    %9221 = vmatprep.mubr.bf16.mxu0 %v1170
    %9222 = vmatmul.mubr.bf16.gmra.mrb[0].mxu0 %v1169
    %v9223 = vpop.f32.mrb[0].mxu0
    %v9224 = vadd.f32 %v9171, %v9223
    %v9225 = vpop.f32.mrb[0].mxu0
    %v9226 = vadd.f32 %v9173, %v9225
    %v9227 = vpop.f32.mrb[0].mxu0
    %v9228 = vadd.f32 %v9175, %v9227
    %v9229 = vpop.f32.mrb[0].mxu0
    %v9230 = vadd.f32 %v9177, %v9229
    %9231 = vdwg.mxu0
    %9232 = vmatprep.subr.bf16.mxu0 %v6204
    %9233 = vmatpush1.bf16.msra.mxu0 %v6203
    %9234 = vmatprep.subr.bf16.mxu0 %v6212
    %9235 = vmatpush1.bf16.msra.mxu0 %v6211
    %9236 = vmatprep.subr.bf16.mxu0 %v6220
    %9237 = vmatpush1.bf16.msra.mxu0 %v6219
    %9238 = vmatprep.subr.bf16.mxu0 %v6228
    %9239 = vmatpush1.bf16.msra.mxu0 %v6227
    %9240 = vmatprep.subr.bf16.mxu0 %v6236
    %9241 = vmatpush1.bf16.msra.mxu0 %v6235
    %9242 = vmatprep.subr.bf16.mxu0 %v6244
    %9243 = vmatpush1.bf16.msra.mxu0 %v6243
    %9244 = vmatprep.subr.bf16.mxu0 %v6252
    %9245 = vmatpush1.bf16.msra.mxu0 %v6251
    %9246 = vmatprep.subr.bf16.mxu0 %v6260
    %9247 = vmatpush1.bf16.msra.mxu0 %v6259
    %9248 = vmatprep.subr.bf16.mxu0 %v6268
    %9249 = vmatpush1.bf16.msra.mxu0 %v6267
    %9250 = vmatprep.subr.bf16.mxu0 %v6276
    %9251 = vmatpush1.bf16.msra.mxu0 %v6275
    %9252 = vmatprep.subr.bf16.mxu0 %v6284
    %9253 = vmatpush1.bf16.msra.mxu0 %v6283
    %9254 = vmatprep.subr.bf16.mxu0 %v6292
    %9255 = vmatpush1.bf16.msra.mxu0 %v6291
    %9256 = vmatprep.subr.bf16.mxu0 %v6300
    %9257 = vmatpush1.bf16.msra.mxu0 %v6299
    %9258 = vmatprep.subr.bf16.mxu0 %v6308
    %9259 = vmatpush1.bf16.msra.mxu0 %v6307
    %9260 = vmatprep.subr.bf16.mxu0 %v6316
    %9261 = vmatpush1.bf16.msra.mxu0 %v6315
    %9262 = vmatprep.subr.bf16.mxu0 %v6324
    %9263 = vmatpush1.bf16.msra.mxu0 %v6323
    %9264 = vmatprep.mubr.bf16.mxu0 %v1154
    %9265 = vmatmul.mubr.bf16.gmra.mrb[0].mxu0 %v1153
    %v9266 = vpop.f32.mrb[0].mxu0
    %v9267 = vadd.f32 %v9214, %v9266
    %v9268 = vpop.f32.mrb[0].mxu0
    %v9269 = vadd.f32 %v9216, %v9268
    %v9270 = vpop.f32.mrb[0].mxu0
    %v9271 = vadd.f32 %v9218, %v9270
    %v9272 = vpop.f32.mrb[0].mxu0
    %v9273 = vadd.f32 %v9220, %v9272
    %9274 = vmatprep.mubr.bf16.mxu0 %v1172
    %9275 = vmatmul.mubr.bf16.gmra.mrb[0].mxu0 %v1171
    %v9276 = vpop.f32.mrb[0].mxu0
    %v9277 = vadd.f32 %v9224, %v9276
    %v9278 = vpop.f32.mrb[0].mxu0
    %v9279 = vadd.f32 %v9226, %v9278
    %v9280 = vpop.f32.mrb[0].mxu0
    %v9281 = vadd.f32 %v9228, %v9280
    %v9282 = vpop.f32.mrb[0].mxu0
    %v9283 = vadd.f32 %v9230, %v9282
    %9284 = vdwg.mxu0
    %9285 = vmatprep.subr.bf16.mxu0 %v6332
    %9286 = vmatpush1.bf16.msra.mxu0 %v6331
    %9287 = vmatprep.subr.bf16.mxu0 %v6340
    %9288 = vmatpush1.bf16.msra.mxu0 %v6339
    %9289 = vmatprep.subr.bf16.mxu0 %v6348
    %9290 = vmatpush1.bf16.msra.mxu0 %v6347
    %9291 = vmatprep.subr.bf16.mxu0 %v6356
    %9292 = vmatpush1.bf16.msra.mxu0 %v6355
    %9293 = vmatprep.subr.bf16.mxu0 %v6364
    %9294 = vmatpush1.bf16.msra.mxu0 %v6363
    %9295 = vmatprep.subr.bf16.mxu0 %v6372
    %9296 = vmatpush1.bf16.msra.mxu0 %v6371
    %9297 = vmatprep.subr.bf16.mxu0 %v6380
    %9298 = vmatpush1.bf16.msra.mxu0 %v6379
    %9299 = vmatprep.subr.bf16.mxu0 %v6388
    %9300 = vmatpush1.bf16.msra.mxu0 %v6387
    %9301 = vmatprep.subr.bf16.mxu0 %v6396
    %9302 = vmatpush1.bf16.msra.mxu0 %v6395
    %9303 = vmatprep.subr.bf16.mxu0 %v6404
    %9304 = vmatpush1.bf16.msra.mxu0 %v6403
    %9305 = vmatprep.subr.bf16.mxu0 %v6412
    %9306 = vmatpush1.bf16.msra.mxu0 %v6411
    %9307 = vmatprep.subr.bf16.mxu0 %v6420
    %9308 = vmatpush1.bf16.msra.mxu0 %v6419
    %9309 = vmatprep.subr.bf16.mxu0 %v6428
    %9310 = vmatpush1.bf16.msra.mxu0 %v6427
    %9311 = vmatprep.subr.bf16.mxu0 %v6436
    %9312 = vmatpush1.bf16.msra.mxu0 %v6435
    %9313 = vmatprep.subr.bf16.mxu0 %v6444
    %9314 = vmatpush1.bf16.msra.mxu0 %v6443
    %9315 = vmatprep.subr.bf16.mxu0 %v6452
    %9316 = vmatpush1.bf16.msra.mxu0 %v6451
    %9317 = vmatprep.mubr.bf16.mxu0 %v1156
    %9318 = vmatmul.mubr.bf16.gmra.mrb[0].mxu0 %v1155
    %v9319 = vpop.f32.mrb[0].mxu0
    %v9320 = vadd.f32 %v9267, %v9319
    %v9321 = vpop.f32.mrb[0].mxu0
    %v9322 = vadd.f32 %v9269, %v9321
    %v9323 = vpop.f32.mrb[0].mxu0
    %v9324 = vadd.f32 %v9271, %v9323
    %v9325 = vpop.f32.mrb[0].mxu0
    %v9326 = vadd.f32 %v9273, %v9325
    %9327 = vmatprep.mubr.bf16.mxu0 %v1174
    %9328 = vmatmul.mubr.bf16.gmra.mrb[0].mxu0 %v1173
    %v9329 = vpop.f32.mrb[0].mxu0
    %v9330 = vadd.f32 %v9277, %v9329
    %v9331 = vpop.f32.mrb[0].mxu0
    %v9332 = vadd.f32 %v9279, %v9331
    %v9333 = vpop.f32.mrb[0].mxu0
    %v9334 = vadd.f32 %v9281, %v9333
    %v9335 = vpop.f32.mrb[0].mxu0
    %v9336 = vadd.f32 %v9283, %v9335
    %9337 = vdwg.mxu0
    %9338 = vmatprep.subr.bf16.mxu0 %v6460
    %9339 = vmatpush1.bf16.msra.mxu0 %v6459
    %9340 = vmatprep.subr.bf16.mxu0 %v6468
    %9341 = vmatpush1.bf16.msra.mxu0 %v6467
    %9342 = vmatprep.subr.bf16.mxu0 %v6476
    %9343 = vmatpush1.bf16.msra.mxu0 %v6475
    %9344 = vmatprep.subr.bf16.mxu0 %v6484
    %9345 = vmatpush1.bf16.msra.mxu0 %v6483
    %9346 = vmatprep.subr.bf16.mxu0 %v6492
    %9347 = vmatpush1.bf16.msra.mxu0 %v6491
    %9348 = vmatprep.subr.bf16.mxu0 %v6500
    %9349 = vmatpush1.bf16.msra.mxu0 %v6499
    %9350 = vmatprep.subr.bf16.mxu0 %v6508
    %9351 = vmatpush1.bf16.msra.mxu0 %v6507
    %9352 = vmatprep.subr.bf16.mxu0 %v6516
    %9353 = vmatpush1.bf16.msra.mxu0 %v6515
    %9354 = vmatprep.subr.bf16.mxu0 %v6524
    %9355 = vmatpush1.bf16.msra.mxu0 %v6523
    %9356 = vmatprep.subr.bf16.mxu0 %v6532
    %9357 = vmatpush1.bf16.msra.mxu0 %v6531
    %9358 = vmatprep.subr.bf16.mxu0 %v6540
    %9359 = vmatpush1.bf16.msra.mxu0 %v6539
    %9360 = vmatprep.subr.bf16.mxu0 %v6548
    %9361 = vmatpush1.bf16.msra.mxu0 %v6547
    %9362 = vmatprep.subr.bf16.mxu0 %v6556
    %9363 = vmatpush1.bf16.msra.mxu0 %v6555
    %9364 = vmatprep.subr.bf16.mxu0 %v6564
    %9365 = vmatpush1.bf16.msra.mxu0 %v6563
    %9366 = vmatprep.subr.bf16.mxu0 %v6572
    %9367 = vmatpush1.bf16.msra.mxu0 %v6571
    %9368 = vmatprep.subr.bf16.mxu0 %v6580
    %9369 = vmatpush1.bf16.msra.mxu0 %v6579
    %9370 = vmatprep.mubr.bf16.mxu0 %v1158
    %9371 = vmatmul.mubr.bf16.gmra.mrb[0].mxu0 %v1157
    %v9372 = vpop.f32.mrb[0].mxu0
    %v9373 = vadd.f32 %v9320, %v9372
    %v9374 = vpop.f32.mrb[0].mxu0
    %v9375 = vadd.f32 %v9322, %v9374
    %v9376 = vpop.f32.mrb[0].mxu0
    %v9377 = vadd.f32 %v9324, %v9376
    %v9378 = vpop.f32.mrb[0].mxu0
    %v9379 = vadd.f32 %v9326, %v9378
    %9380 = vmatprep.mubr.bf16.mxu0 %v1176
    %9381 = vmatmul.mubr.bf16.gmra.mrb[0].mxu0 %v1175
    %v9382 = vpop.f32.mrb[0].mxu0
    %v9383 = vadd.f32 %v9330, %v9382
    %v9384 = vpop.f32.mrb[0].mxu0
    %v9385 = vadd.f32 %v9332, %v9384
    %v9386 = vpop.f32.mrb[0].mxu0
    %v9387 = vadd.f32 %v9334, %v9386
    %v9388 = vpop.f32.mrb[0].mxu0
    %v9389 = vadd.f32 %v9336, %v9388
    %9390 = vdwg.mxu0
    %9391 = vmatprep.subr.bf16.mxu0 %v6588
    %9392 = vmatpush1.bf16.msra.mxu0 %v6587
    %9393 = vmatprep.subr.bf16.mxu0 %v6596
    %9394 = vmatpush1.bf16.msra.mxu0 %v6595
    %9395 = vmatprep.subr.bf16.mxu0 %v6604
    %9396 = vmatpush1.bf16.msra.mxu0 %v6603
    %9397 = vmatprep.subr.bf16.mxu0 %v6612
    %9398 = vmatpush1.bf16.msra.mxu0 %v6611
    %9399 = vmatprep.subr.bf16.mxu0 %v6620
    %9400 = vmatpush1.bf16.msra.mxu0 %v6619
    %9401 = vmatprep.subr.bf16.mxu0 %v6628
    %9402 = vmatpush1.bf16.msra.mxu0 %v6627
    %9403 = vmatprep.subr.bf16.mxu0 %v6636
    %9404 = vmatpush1.bf16.msra.mxu0 %v6635
    %9405 = vmatprep.subr.bf16.mxu0 %v6644
    %9406 = vmatpush1.bf16.msra.mxu0 %v6643
    %9407 = vmatprep.subr.bf16.mxu0 %v6652
    %9408 = vmatpush1.bf16.msra.mxu0 %v6651
    %9409 = vmatprep.subr.bf16.mxu0 %v6660
    %9410 = vmatpush1.bf16.msra.mxu0 %v6659
    %9411 = vmatprep.subr.bf16.mxu0 %v6668
    %9412 = vmatpush1.bf16.msra.mxu0 %v6667
    %9413 = vmatprep.subr.bf16.mxu0 %v6676
    %9414 = vmatpush1.bf16.msra.mxu0 %v6675
    %9415 = vmatprep.subr.bf16.mxu0 %v6684
    %9416 = vmatpush1.bf16.msra.mxu0 %v6683
    %9417 = vmatprep.subr.bf16.mxu0 %v6692
    %9418 = vmatpush1.bf16.msra.mxu0 %v6691
    %9419 = vmatprep.subr.bf16.mxu0 %v6700
    %9420 = vmatpush1.bf16.msra.mxu0 %v6699
    %9421 = vmatprep.subr.bf16.mxu0 %v6708
    %9422 = vmatpush1.bf16.msra.mxu0 %v6707
    %9423 = vmatprep.mubr.bf16.mxu0 %v1160
    %9424 = vmatmul.mubr.bf16.gmra.mrb[0].mxu0 %v1159
    %v9425 = vpop.f32.mrb[0].mxu0
    %v9426 = vadd.f32 %v9373, %v9425
    %v9427 = vpop.f32.mrb[0].mxu0
    %v9428 = vadd.f32 %v9375, %v9427
    %v9429 = vpop.f32.mrb[0].mxu0
    %v9430 = vadd.f32 %v9377, %v9429
    %v9431 = vpop.f32.mrb[0].mxu0
    %v9432 = vadd.f32 %v9379, %v9431
    %9433 = vmatprep.mubr.bf16.mxu0 %v1178
    %9434 = vmatmul.mubr.bf16.gmra.mrb[0].mxu0 %v1177
    %v9435 = vpop.f32.mrb[0].mxu0
    %v9436 = vadd.f32 %v9383, %v9435
    %v9437 = vpop.f32.mrb[0].mxu0
    %v9438 = vadd.f32 %v9385, %v9437
    %v9439 = vpop.f32.mrb[0].mxu0
    %v9440 = vadd.f32 %v9387, %v9439
    %v9441 = vpop.f32.mrb[0].mxu0
    %v9442 = vadd.f32 %v9389, %v9441
    %9443 = vdwg.mxu0
    %9444 = vmatprep.subr.bf16.mxu0 %v6716
    %9445 = vmatpush1.bf16.msra.mxu0 %v6715
    %9446 = vmatprep.subr.bf16.mxu0 %v6724
    %9447 = vmatpush1.bf16.msra.mxu0 %v6723
    %9448 = vmatprep.subr.bf16.mxu0 %v6732
    %9449 = vmatpush1.bf16.msra.mxu0 %v6731
    %9450 = vmatprep.subr.bf16.mxu0 %v6740
    %9451 = vmatpush1.bf16.msra.mxu0 %v6739
    %9452 = vmatprep.subr.bf16.mxu0 %v6748
    %9453 = vmatpush1.bf16.msra.mxu0 %v6747
    %9454 = vmatprep.subr.bf16.mxu0 %v6756
    %9455 = vmatpush1.bf16.msra.mxu0 %v6755
    %9456 = vmatprep.subr.bf16.mxu0 %v6764
    %9457 = vmatpush1.bf16.msra.mxu0 %v6763
    %9458 = vmatprep.subr.bf16.mxu0 %v6772
    %9459 = vmatpush1.bf16.msra.mxu0 %v6771
    %9460 = vmatprep.subr.bf16.mxu0 %v6780
    %9461 = vmatpush1.bf16.msra.mxu0 %v6779
    %9462 = vmatprep.subr.bf16.mxu0 %v6788
    %9463 = vmatpush1.bf16.msra.mxu0 %v6787
    %9464 = vmatprep.subr.bf16.mxu0 %v6796
    %9465 = vmatpush1.bf16.msra.mxu0 %v6795
    %9466 = vmatprep.subr.bf16.mxu0 %v6804
    %9467 = vmatpush1.bf16.msra.mxu0 %v6803
    %9468 = vmatprep.subr.bf16.mxu0 %v6812
    %9469 = vmatpush1.bf16.msra.mxu0 %v6811
    %9470 = vmatprep.subr.bf16.mxu0 %v6820
    %9471 = vmatpush1.bf16.msra.mxu0 %v6819
    %9472 = vmatprep.subr.bf16.mxu0 %v6828
    %9473 = vmatpush1.bf16.msra.mxu0 %v6827
    %9474 = vmatprep.subr.bf16.mxu0 %v6836
    %9475 = vmatpush1.bf16.msra.mxu0 %v6835
    %9476 = vmatprep.mubr.bf16.mxu0 %v1162
    %9477 = vmatmul.mubr.bf16.gmra.mrb[0].mxu0 %v1161
    %v9478 = vpop.f32.mrb[0].mxu0
    %v9479 = vadd.f32 %v9426, %v9478
    %v9480 = vpop.f32.mrb[0].mxu0
    %v9481 = vadd.f32 %v9428, %v9480
    %v9482 = vpop.f32.mrb[0].mxu0
    %v9483 = vadd.f32 %v9430, %v9482
    %v9484 = vpop.f32.mrb[0].mxu0
    %v9485 = vadd.f32 %v9432, %v9484
    %9486 = vmatprep.mubr.bf16.mxu0 %v1180
    %9487 = vmatmul.mubr.bf16.gmra.mrb[0].mxu0 %v1179
    %v9488 = vpop.f32.mrb[0].mxu0
    %v9489 = vadd.f32 %v9436, %v9488
    %v9490 = vpop.f32.mrb[0].mxu0
    %v9491 = vadd.f32 %v9438, %v9490
    %v9492 = vpop.f32.mrb[0].mxu0
    %v9493 = vadd.f32 %v9440, %v9492
    %v9494 = vpop.f32.mrb[0].mxu0
    %v9495 = vadd.f32 %v9442, %v9494
    %9496 = vdwg.mxu0
    %9497 = vmatprep.subr.bf16.mxu0 %v6844
    %9498 = vmatpush1.bf16.msra.mxu0 %v6843
    %9499 = vmatprep.subr.bf16.mxu0 %v6852
    %9500 = vmatpush1.bf16.msra.mxu0 %v6851
    %9501 = vmatprep.subr.bf16.mxu0 %v6860
    %9502 = vmatpush1.bf16.msra.mxu0 %v6859
    %9503 = vmatprep.subr.bf16.mxu0 %v6868
    %9504 = vmatpush1.bf16.msra.mxu0 %v6867
    %9505 = vmatprep.subr.bf16.mxu0 %v6876
    %9506 = vmatpush1.bf16.msra.mxu0 %v6875
    %9507 = vmatprep.subr.bf16.mxu0 %v6884
    %9508 = vmatpush1.bf16.msra.mxu0 %v6883
    %9509 = vmatprep.subr.bf16.mxu0 %v6892
    %9510 = vmatpush1.bf16.msra.mxu0 %v6891
    %9511 = vmatprep.subr.bf16.mxu0 %v6900
    %9512 = vmatpush1.bf16.msra.mxu0 %v6899
    %9513 = vmatprep.subr.bf16.mxu0 %v6908
    %9514 = vmatpush1.bf16.msra.mxu0 %v6907
    %9515 = vmatprep.subr.bf16.mxu0 %v6916
    %9516 = vmatpush1.bf16.msra.mxu0 %v6915
    %9517 = vmatprep.subr.bf16.mxu0 %v6924
    %9518 = vmatpush1.bf16.msra.mxu0 %v6923
    %9519 = vmatprep.subr.bf16.mxu0 %v6932
    %9520 = vmatpush1.bf16.msra.mxu0 %v6931
    %9521 = vmatprep.subr.bf16.mxu0 %v6940
    %9522 = vmatpush1.bf16.msra.mxu0 %v6939
    %9523 = vmatprep.subr.bf16.mxu0 %v6948
    %9524 = vmatpush1.bf16.msra.mxu0 %v6947
    %9525 = vmatprep.subr.bf16.mxu0 %v6956
    %9526 = vmatpush1.bf16.msra.mxu0 %v6955
    %9527 = vmatprep.subr.bf16.mxu0 %v6964
    %9528 = vmatpush1.bf16.msra.mxu0 %v6963
    %9529 = vmatprep.mubr.bf16.mxu0 %v1164
    %9530 = vmatmul.mubr.bf16.gmra.mrb[0].mxu0 %v1163
    %v9531 = vpop.f32.mrb[0].mxu0
    %v9532 = vadd.f32 %v9479, %v9531
    %v9533 = vpop.f32.mrb[0].mxu0
    %v9534 = vadd.f32 %v9481, %v9533
    %v9535 = vpop.f32.mrb[0].mxu0
    %v9536 = vadd.f32 %v9483, %v9535
    %v9537 = vpop.f32.mrb[0].mxu0
    %v9538 = vadd.f32 %v9485, %v9537
    %9539 = vmatprep.mubr.bf16.mxu0 %v1182
    %9540 = vmatmul.mubr.bf16.gmra.mrb[0].mxu0 %v1181
    %v9541 = vpop.f32.mrb[0].mxu0
    %v9542 = vadd.f32 %v9489, %v9541
    %v9543 = vpop.f32.mrb[0].mxu0
    %v9544 = vadd.f32 %v9491, %v9543
    %v9545 = vpop.f32.mrb[0].mxu0
    %v9546 = vadd.f32 %v9493, %v9545
    %v9547 = vpop.f32.mrb[0].mxu0
    %v9548 = vadd.f32 %v9495, %v9547
    %9549 = vdwg.mxu0
    %9550 = vmatprep.subr.bf16.mxu0 %v5822
    %9551 = vmatpush1.bf16.msra.mxu0 %v5821
    %9552 = vmatprep.subr.bf16.mxu0 %v5830
    %9553 = vmatpush1.bf16.msra.mxu0 %v5829
    %9554 = vmatprep.subr.bf16.mxu0 %v5838
    %9555 = vmatpush1.bf16.msra.mxu0 %v5837
    %9556 = vmatprep.subr.bf16.mxu0 %v5846
    %9557 = vmatpush1.bf16.msra.mxu0 %v5845
    %9558 = vmatprep.subr.bf16.mxu0 %v5854
    %9559 = vmatpush1.bf16.msra.mxu0 %v5853
    %9560 = vmatprep.subr.bf16.mxu0 %v5862
    %9561 = vmatpush1.bf16.msra.mxu0 %v5861
    %9562 = vmatprep.subr.bf16.mxu0 %v5870
    %9563 = vmatpush1.bf16.msra.mxu0 %v5869
    %9564 = vmatprep.subr.bf16.mxu0 %v5878
    %9565 = vmatpush1.bf16.msra.mxu0 %v5877
    %9566 = vmatprep.subr.bf16.mxu0 %v5886
    %9567 = vmatpush1.bf16.msra.mxu0 %v5885
    %9568 = vmatprep.subr.bf16.mxu0 %v5894
    %9569 = vmatpush1.bf16.msra.mxu0 %v5893
    %9570 = vmatprep.subr.bf16.mxu0 %v5902
    %9571 = vmatpush1.bf16.msra.mxu0 %v5901
    %9572 = vmatprep.subr.bf16.mxu0 %v5910
    %9573 = vmatpush1.bf16.msra.mxu0 %v5909
    %9574 = vmatprep.subr.bf16.mxu0 %v5918
    %9575 = vmatpush1.bf16.msra.mxu0 %v5917
    %9576 = vmatprep.subr.bf16.mxu0 %v5926
    %9577 = vmatpush1.bf16.msra.mxu0 %v5925
    %9578 = vmatprep.subr.bf16.mxu0 %v5934
    %9579 = vmatpush1.bf16.msra.mxu0 %v5933
    %9580 = vmatprep.subr.bf16.mxu0 %v5942
    %9581 = vmatpush1.bf16.msra.mxu0 %v5941
    %9582 = vmatprep.mubr.bf16.mxu0 %v1148
    %9583 = vmatmul.mubr.bf16.gmra.mrb[0].mxu0 %v1147
    %v9584 = vpop.f32.mrb[0].mxu0
    %v9585 = vadd.f32 %v2342, %v9584
    %v9586 = vpop.f32.mrb[0].mxu0
    %v9587 = vadd.f32 %v2342, %v9586
    %v9588 = vpop.f32.mrb[0].mxu0
    %v9589 = vadd.f32 %v2347, %v9588
    %v9590 = vpop.f32.mrb[0].mxu0
    %v9591 = vadd.f32 %v2347, %v9590
    %9592 = vmatprep.mubr.bf16.mxu0 %v1166
    %9593 = vmatmul.mubr.bf16.gmra.mrb[0].mxu0 %v1165
    %v9594 = vpop.f32.mrb[0].mxu0
    %v9595 = vadd.f32 %v2352, %v9594
    %v9596 = vpop.f32.mrb[0].mxu0
    %v9597 = vadd.f32 %v2352, %v9596
    %v9598 = vpop.f32.mrb[0].mxu0
    %v9599 = vadd.f32 %v2357, %v9598
    %v9600 = vpop.f32.mrb[0].mxu0
    %v9601 = vadd.f32 %v2357, %v9600
    %9602 = vdwg.mxu0
    %9603 = vmatprep.subr.bf16.mxu0 %v5950
    %9604 = vmatpush1.bf16.msra.mxu0 %v5949
    %9605 = vmatprep.subr.bf16.mxu0 %v5958
    %9606 = vmatpush1.bf16.msra.mxu0 %v5957
    %9607 = vmatprep.subr.bf16.mxu0 %v5966
    %9608 = vmatpush1.bf16.msra.mxu0 %v5965
    %9609 = vmatprep.subr.bf16.mxu0 %v5974
    %9610 = vmatpush1.bf16.msra.mxu0 %v5973
    %9611 = vmatprep.subr.bf16.mxu0 %v5982
    %9612 = vmatpush1.bf16.msra.mxu0 %v5981
    %9613 = vmatprep.subr.bf16.mxu0 %v5990
    %9614 = vmatpush1.bf16.msra.mxu0 %v5989
    %9615 = vmatprep.subr.bf16.mxu0 %v5998
    %9616 = vmatpush1.bf16.msra.mxu0 %v5997
    %9617 = vmatprep.subr.bf16.mxu0 %v6006
    %9618 = vmatpush1.bf16.msra.mxu0 %v6005
    %9619 = vmatprep.subr.bf16.mxu0 %v6014
    %9620 = vmatpush1.bf16.msra.mxu0 %v6013
    %9621 = vmatprep.subr.bf16.mxu0 %v6022
    %9622 = vmatpush1.bf16.msra.mxu0 %v6021
    %9623 = vmatprep.subr.bf16.mxu0 %v6030
    %9624 = vmatpush1.bf16.msra.mxu0 %v6029
    %9625 = vmatprep.subr.bf16.mxu0 %v6038
    %9626 = vmatpush1.bf16.msra.mxu0 %v6037
    %9627 = vmatprep.subr.bf16.mxu0 %v6046
    %9628 = vmatpush1.bf16.msra.mxu0 %v6045
    %9629 = vmatprep.subr.bf16.mxu0 %v6054
    %9630 = vmatpush1.bf16.msra.mxu0 %v6053
    %9631 = vmatprep.subr.bf16.mxu0 %v6062
    %9632 = vmatpush1.bf16.msra.mxu0 %v6061
    %9633 = vmatprep.subr.bf16.mxu0 %v6070
    %9634 = vmatpush1.bf16.msra.mxu0 %v6069
    %9635 = vmatprep.mubr.bf16.mxu0 %v1150
    %9636 = vmatmul.mubr.bf16.gmra.mrb[0].mxu0 %v1149
    %v9637 = vpop.f32.mrb[0].mxu0
    %v9638 = vadd.f32 %v9585, %v9637
    %v9639 = vpop.f32.mrb[0].mxu0
    %v9640 = vadd.f32 %v9587, %v9639
    %v9641 = vpop.f32.mrb[0].mxu0
    %v9642 = vadd.f32 %v9589, %v9641
    %v9643 = vpop.f32.mrb[0].mxu0
    %v9644 = vadd.f32 %v9591, %v9643
    %9645 = vmatprep.mubr.bf16.mxu0 %v1168
    %9646 = vmatmul.mubr.bf16.gmra.mrb[0].mxu0 %v1167
    %v9647 = vpop.f32.mrb[0].mxu0
    %v9648 = vadd.f32 %v9595, %v9647
    %v9649 = vpop.f32.mrb[0].mxu0
    %v9650 = vadd.f32 %v9597, %v9649
    %v9651 = vpop.f32.mrb[0].mxu0
    %v9652 = vadd.f32 %v9599, %v9651
    %v9653 = vpop.f32.mrb[0].mxu0
    %v9654 = vadd.f32 %v9601, %v9653
    %9655 = vdwg.mxu0
    %9656 = vmatprep.subr.bf16.mxu0 %v6078
    %9657 = vmatpush1.bf16.msra.mxu0 %v6077
    %9658 = vmatprep.subr.bf16.mxu0 %v6086
    %9659 = vmatpush1.bf16.msra.mxu0 %v6085
    %9660 = vmatprep.subr.bf16.mxu0 %v6094
    %9661 = vmatpush1.bf16.msra.mxu0 %v6093
    %9662 = vmatprep.subr.bf16.mxu0 %v6102
    %9663 = vmatpush1.bf16.msra.mxu0 %v6101
    %9664 = vmatprep.subr.bf16.mxu0 %v6110
    %9665 = vmatpush1.bf16.msra.mxu0 %v6109
    %9666 = vmatprep.subr.bf16.mxu0 %v6118
    %9667 = vmatpush1.bf16.msra.mxu0 %v6117
    %9668 = vmatprep.subr.bf16.mxu0 %v6126
    %9669 = vmatpush1.bf16.msra.mxu0 %v6125
    %9670 = vmatprep.subr.bf16.mxu0 %v6134
    %9671 = vmatpush1.bf16.msra.mxu0 %v6133
    %9672 = vmatprep.subr.bf16.mxu0 %v6142
    %9673 = vmatpush1.bf16.msra.mxu0 %v6141
    %9674 = vmatprep.subr.bf16.mxu0 %v6150
    %9675 = vmatpush1.bf16.msra.mxu0 %v6149
    %9676 = vmatprep.subr.bf16.mxu0 %v6158
    %9677 = vmatpush1.bf16.msra.mxu0 %v6157
    %9678 = vmatprep.subr.bf16.mxu0 %v6166
    %9679 = vmatpush1.bf16.msra.mxu0 %v6165
    %9680 = vmatprep.subr.bf16.mxu0 %v6174
    %9681 = vmatpush1.bf16.msra.mxu0 %v6173
    %9682 = vmatprep.subr.bf16.mxu0 %v6182
    %9683 = vmatpush1.bf16.msra.mxu0 %v6181
    %9684 = vmatprep.subr.bf16.mxu0 %v6190
    %9685 = vmatpush1.bf16.msra.mxu0 %v6189
    %9686 = vmatprep.subr.bf16.mxu0 %v6198
    %9687 = vmatpush1.bf16.msra.mxu0 %v6197
    %9688 = vmatprep.mubr.bf16.mxu0 %v1152
    %9689 = vmatmul.mubr.bf16.gmra.mrb[0].mxu0 %v1151
    %v9690 = vpop.f32.mrb[0].mxu0
    %v9691 = vadd.f32 %v9638, %v9690
    %v9692 = vpop.f32.mrb[0].mxu0
    %v9693 = vadd.f32 %v9640, %v9692
    %v9694 = vpop.f32.mrb[0].mxu0
    %v9695 = vadd.f32 %v9642, %v9694
    %v9696 = vpop.f32.mrb[0].mxu0
    %v9697 = vadd.f32 %v9644, %v9696
    %9698 = vmatprep.mubr.bf16.mxu0 %v1170
    %9699 = vmatmul.mubr.bf16.gmra.mrb[0].mxu0 %v1169
    %v9700 = vpop.f32.mrb[0].mxu0
    %v9701 = vadd.f32 %v9648, %v9700
    %v9702 = vpop.f32.mrb[0].mxu0
    %v9703 = vadd.f32 %v9650, %v9702
    %v9704 = vpop.f32.mrb[0].mxu0
    %v9705 = vadd.f32 %v9652, %v9704
    %v9706 = vpop.f32.mrb[0].mxu0
    %v9707 = vadd.f32 %v9654, %v9706
    %9708 = vdwg.mxu0
    %9709 = vmatprep.subr.bf16.mxu0 %v6206
    %9710 = vmatpush1.bf16.msra.mxu0 %v6205
    %9711 = vmatprep.subr.bf16.mxu0 %v6214
    %9712 = vmatpush1.bf16.msra.mxu0 %v6213
    %9713 = vmatprep.subr.bf16.mxu0 %v6222
    %9714 = vmatpush1.bf16.msra.mxu0 %v6221
    %9715 = vmatprep.subr.bf16.mxu0 %v6230
    %9716 = vmatpush1.bf16.msra.mxu0 %v6229
    %9717 = vmatprep.subr.bf16.mxu0 %v6238
    %9718 = vmatpush1.bf16.msra.mxu0 %v6237
    %9719 = vmatprep.subr.bf16.mxu0 %v6246
    %9720 = vmatpush1.bf16.msra.mxu0 %v6245
    %9721 = vmatprep.subr.bf16.mxu0 %v6254
    %9722 = vmatpush1.bf16.msra.mxu0 %v6253
    %9723 = vmatprep.subr.bf16.mxu0 %v6262
    %9724 = vmatpush1.bf16.msra.mxu0 %v6261
    %9725 = vmatprep.subr.bf16.mxu0 %v6270
    %9726 = vmatpush1.bf16.msra.mxu0 %v6269
    %9727 = vmatprep.subr.bf16.mxu0 %v6278
    %9728 = vmatpush1.bf16.msra.mxu0 %v6277
    %9729 = vmatprep.subr.bf16.mxu0 %v6286
    %9730 = vmatpush1.bf16.msra.mxu0 %v6285
    %9731 = vmatprep.subr.bf16.mxu0 %v6294
    %9732 = vmatpush1.bf16.msra.mxu0 %v6293
    %9733 = vmatprep.subr.bf16.mxu0 %v6302
    %9734 = vmatpush1.bf16.msra.mxu0 %v6301
    %9735 = vmatprep.subr.bf16.mxu0 %v6310
    %9736 = vmatpush1.bf16.msra.mxu0 %v6309
    %9737 = vmatprep.subr.bf16.mxu0 %v6318
    %9738 = vmatpush1.bf16.msra.mxu0 %v6317
    %9739 = vmatprep.subr.bf16.mxu0 %v6326
    %9740 = vmatpush1.bf16.msra.mxu0 %v6325
    %9741 = vmatprep.mubr.bf16.mxu0 %v1154
    %9742 = vmatmul.mubr.bf16.gmra.mrb[0].mxu0 %v1153
    %v9743 = vpop.f32.mrb[0].mxu0
    %v9744 = vadd.f32 %v9691, %v9743
    %v9745 = vpop.f32.mrb[0].mxu0
    %v9746 = vadd.f32 %v9693, %v9745
    %v9747 = vpop.f32.mrb[0].mxu0
    %v9748 = vadd.f32 %v9695, %v9747
    %v9749 = vpop.f32.mrb[0].mxu0
    %v9750 = vadd.f32 %v9697, %v9749
    %9751 = vmatprep.mubr.bf16.mxu0 %v1172
    %9752 = vmatmul.mubr.bf16.gmra.mrb[0].mxu0 %v1171
    %v9753 = vpop.f32.mrb[0].mxu0
    %v9754 = vadd.f32 %v9701, %v9753
    %v9755 = vpop.f32.mrb[0].mxu0
    %v9756 = vadd.f32 %v9703, %v9755
    %v9757 = vpop.f32.mrb[0].mxu0
    %v9758 = vadd.f32 %v9705, %v9757
    %v9759 = vpop.f32.mrb[0].mxu0
    %v9760 = vadd.f32 %v9707, %v9759
    %9761 = vdwg.mxu0
    %9762 = vmatprep.subr.bf16.mxu0 %v6334
    %9763 = vmatpush1.bf16.msra.mxu0 %v6333
    %9764 = vmatprep.subr.bf16.mxu0 %v6342
    %9765 = vmatpush1.bf16.msra.mxu0 %v6341
    %9766 = vmatprep.subr.bf16.mxu0 %v6350
    %9767 = vmatpush1.bf16.msra.mxu0 %v6349
    %9768 = vmatprep.subr.bf16.mxu0 %v6358
    %9769 = vmatpush1.bf16.msra.mxu0 %v6357
    %9770 = vmatprep.subr.bf16.mxu0 %v6366
    %9771 = vmatpush1.bf16.msra.mxu0 %v6365
    %9772 = vmatprep.subr.bf16.mxu0 %v6374
    %9773 = vmatpush1.bf16.msra.mxu0 %v6373
    %9774 = vmatprep.subr.bf16.mxu0 %v6382
    %9775 = vmatpush1.bf16.msra.mxu0 %v6381
    %9776 = vmatprep.subr.bf16.mxu0 %v6390
    %9777 = vmatpush1.bf16.msra.mxu0 %v6389
    %9778 = vmatprep.subr.bf16.mxu0 %v6398
    %9779 = vmatpush1.bf16.msra.mxu0 %v6397
    %9780 = vmatprep.subr.bf16.mxu0 %v6406
    %9781 = vmatpush1.bf16.msra.mxu0 %v6405
    %9782 = vmatprep.subr.bf16.mxu0 %v6414
    %9783 = vmatpush1.bf16.msra.mxu0 %v6413
    %9784 = vmatprep.subr.bf16.mxu0 %v6422
    %9785 = vmatpush1.bf16.msra.mxu0 %v6421
    %9786 = vmatprep.subr.bf16.mxu0 %v6430
    %9787 = vmatpush1.bf16.msra.mxu0 %v6429
    %9788 = vmatprep.subr.bf16.mxu0 %v6438
    %9789 = vmatpush1.bf16.msra.mxu0 %v6437
    %9790 = vmatprep.subr.bf16.mxu0 %v6446
    %9791 = vmatpush1.bf16.msra.mxu0 %v6445
    %9792 = vmatprep.subr.bf16.mxu0 %v6454
    %9793 = vmatpush1.bf16.msra.mxu0 %v6453
    %9794 = vmatprep.mubr.bf16.mxu0 %v1156
    %9795 = vmatmul.mubr.bf16.gmra.mrb[0].mxu0 %v1155
    %v9796 = vpop.f32.mrb[0].mxu0
    %v9797 = vadd.f32 %v9744, %v9796
    %v9798 = vpop.f32.mrb[0].mxu0
    %v9799 = vadd.f32 %v9746, %v9798
    %v9800 = vpop.f32.mrb[0].mxu0
    %v9801 = vadd.f32 %v9748, %v9800
    %v9802 = vpop.f32.mrb[0].mxu0
    %v9803 = vadd.f32 %v9750, %v9802
    %9804 = vmatprep.mubr.bf16.mxu0 %v1174
    %9805 = vmatmul.mubr.bf16.gmra.mrb[0].mxu0 %v1173
    %v9806 = vpop.f32.mrb[0].mxu0
    %v9807 = vadd.f32 %v9754, %v9806
    %v9808 = vpop.f32.mrb[0].mxu0
    %v9809 = vadd.f32 %v9756, %v9808
    %v9810 = vpop.f32.mrb[0].mxu0
    %v9811 = vadd.f32 %v9758, %v9810
    %v9812 = vpop.f32.mrb[0].mxu0
    %v9813 = vadd.f32 %v9760, %v9812
    %9814 = vdwg.mxu0
    %9815 = vmatprep.subr.bf16.mxu0 %v6462
    %9816 = vmatpush1.bf16.msra.mxu0 %v6461
    %9817 = vmatprep.subr.bf16.mxu0 %v6470
    %9818 = vmatpush1.bf16.msra.mxu0 %v6469
    %9819 = vmatprep.subr.bf16.mxu0 %v6478
    %9820 = vmatpush1.bf16.msra.mxu0 %v6477
    %9821 = vmatprep.subr.bf16.mxu0 %v6486
    %9822 = vmatpush1.bf16.msra.mxu0 %v6485
    %9823 = vmatprep.subr.bf16.mxu0 %v6494
    %9824 = vmatpush1.bf16.msra.mxu0 %v6493
    %9825 = vmatprep.subr.bf16.mxu0 %v6502
    %9826 = vmatpush1.bf16.msra.mxu0 %v6501
    %9827 = vmatprep.subr.bf16.mxu0 %v6510
    %9828 = vmatpush1.bf16.msra.mxu0 %v6509
    %9829 = vmatprep.subr.bf16.mxu0 %v6518
    %9830 = vmatpush1.bf16.msra.mxu0 %v6517
    %9831 = vmatprep.subr.bf16.mxu0 %v6526
    %9832 = vmatpush1.bf16.msra.mxu0 %v6525
    %9833 = vmatprep.subr.bf16.mxu0 %v6534
    %9834 = vmatpush1.bf16.msra.mxu0 %v6533
    %9835 = vmatprep.subr.bf16.mxu0 %v6542
    %9836 = vmatpush1.bf16.msra.mxu0 %v6541
    %9837 = vmatprep.subr.bf16.mxu0 %v6550
    %9838 = vmatpush1.bf16.msra.mxu0 %v6549
    %9839 = vmatprep.subr.bf16.mxu0 %v6558
    %9840 = vmatpush1.bf16.msra.mxu0 %v6557
    %9841 = vmatprep.subr.bf16.mxu0 %v6566
    %9842 = vmatpush1.bf16.msra.mxu0 %v6565
    %9843 = vmatprep.subr.bf16.mxu0 %v6574
    %9844 = vmatpush1.bf16.msra.mxu0 %v6573
    %9845 = vmatprep.subr.bf16.mxu0 %v6582
    %9846 = vmatpush1.bf16.msra.mxu0 %v6581
    %9847 = vmatprep.mubr.bf16.mxu0 %v1158
    %9848 = vmatmul.mubr.bf16.gmra.mrb[0].mxu0 %v1157
    %v9849 = vpop.f32.mrb[0].mxu0
    %v9850 = vadd.f32 %v9797, %v9849
    %v9851 = vpop.f32.mrb[0].mxu0
    %v9852 = vadd.f32 %v9799, %v9851
    %v9853 = vpop.f32.mrb[0].mxu0
    %v9854 = vadd.f32 %v9801, %v9853
    %v9855 = vpop.f32.mrb[0].mxu0
    %v9856 = vadd.f32 %v9803, %v9855
    %9857 = vmatprep.mubr.bf16.mxu0 %v1176
    %9858 = vmatmul.mubr.bf16.gmra.mrb[0].mxu0 %v1175
    %v9859 = vpop.f32.mrb[0].mxu0
    %v9860 = vadd.f32 %v9807, %v9859
    %v9861 = vpop.f32.mrb[0].mxu0
    %v9862 = vadd.f32 %v9809, %v9861
    %v9863 = vpop.f32.mrb[0].mxu0
    %v9864 = vadd.f32 %v9811, %v9863
    %v9865 = vpop.f32.mrb[0].mxu0
    %v9866 = vadd.f32 %v9813, %v9865
    %9867 = vdwg.mxu0
    %9868 = vmatprep.subr.bf16.mxu0 %v6590
    %9869 = vmatpush1.bf16.msra.mxu0 %v6589
    %9870 = vmatprep.subr.bf16.mxu0 %v6598
    %9871 = vmatpush1.bf16.msra.mxu0 %v6597
    %9872 = vmatprep.subr.bf16.mxu0 %v6606
    %9873 = vmatpush1.bf16.msra.mxu0 %v6605
    %9874 = vmatprep.subr.bf16.mxu0 %v6614
    %9875 = vmatpush1.bf16.msra.mxu0 %v6613
    %9876 = vmatprep.subr.bf16.mxu0 %v6622
    %9877 = vmatpush1.bf16.msra.mxu0 %v6621
    %9878 = vmatprep.subr.bf16.mxu0 %v6630
    %9879 = vmatpush1.bf16.msra.mxu0 %v6629
    %9880 = vmatprep.subr.bf16.mxu0 %v6638
    %9881 = vmatpush1.bf16.msra.mxu0 %v6637
    %9882 = vmatprep.subr.bf16.mxu0 %v6646
    %9883 = vmatpush1.bf16.msra.mxu0 %v6645
    %9884 = vmatprep.subr.bf16.mxu0 %v6654
    %9885 = vmatpush1.bf16.msra.mxu0 %v6653
    %9886 = vmatprep.subr.bf16.mxu0 %v6662
    %9887 = vmatpush1.bf16.msra.mxu0 %v6661
    %9888 = vmatprep.subr.bf16.mxu0 %v6670
    %9889 = vmatpush1.bf16.msra.mxu0 %v6669
    %9890 = vmatprep.subr.bf16.mxu0 %v6678
    %9891 = vmatpush1.bf16.msra.mxu0 %v6677
    %9892 = vmatprep.subr.bf16.mxu0 %v6686
    %9893 = vmatpush1.bf16.msra.mxu0 %v6685
    %9894 = vmatprep.subr.bf16.mxu0 %v6694
    %9895 = vmatpush1.bf16.msra.mxu0 %v6693
    %9896 = vmatprep.subr.bf16.mxu0 %v6702
    %9897 = vmatpush1.bf16.msra.mxu0 %v6701
    %9898 = vmatprep.subr.bf16.mxu0 %v6710
    %9899 = vmatpush1.bf16.msra.mxu0 %v6709
    %9900 = vmatprep.mubr.bf16.mxu0 %v1160
    %9901 = vmatmul.mubr.bf16.gmra.mrb[0].mxu0 %v1159
    %v9902 = vpop.f32.mrb[0].mxu0
    %v9903 = vadd.f32 %v9850, %v9902
    %v9904 = vpop.f32.mrb[0].mxu0
    %v9905 = vadd.f32 %v9852, %v9904
    %v9906 = vpop.f32.mrb[0].mxu0
    %v9907 = vadd.f32 %v9854, %v9906
    %v9908 = vpop.f32.mrb[0].mxu0
    %v9909 = vadd.f32 %v9856, %v9908
    %9910 = vmatprep.mubr.bf16.mxu0 %v1178
    %9911 = vmatmul.mubr.bf16.gmra.mrb[0].mxu0 %v1177
    %v9912 = vpop.f32.mrb[0].mxu0
    %v9913 = vadd.f32 %v9860, %v9912
    %v9914 = vpop.f32.mrb[0].mxu0
    %v9915 = vadd.f32 %v9862, %v9914
    %v9916 = vpop.f32.mrb[0].mxu0
    %v9917 = vadd.f32 %v9864, %v9916
    %v9918 = vpop.f32.mrb[0].mxu0
    %v9919 = vadd.f32 %v9866, %v9918
    %9920 = vdwg.mxu0
    %9921 = vmatprep.subr.bf16.mxu0 %v6718
    %9922 = vmatpush1.bf16.msra.mxu0 %v6717
    %9923 = vmatprep.subr.bf16.mxu0 %v6726
    %9924 = vmatpush1.bf16.msra.mxu0 %v6725
    %9925 = vmatprep.subr.bf16.mxu0 %v6734
    %9926 = vmatpush1.bf16.msra.mxu0 %v6733
    %9927 = vmatprep.subr.bf16.mxu0 %v6742
    %9928 = vmatpush1.bf16.msra.mxu0 %v6741
    %9929 = vmatprep.subr.bf16.mxu0 %v6750
    %9930 = vmatpush1.bf16.msra.mxu0 %v6749
    %9931 = vmatprep.subr.bf16.mxu0 %v6758
    %9932 = vmatpush1.bf16.msra.mxu0 %v6757
    %9933 = vmatprep.subr.bf16.mxu0 %v6766
    %9934 = vmatpush1.bf16.msra.mxu0 %v6765
    %9935 = vmatprep.subr.bf16.mxu0 %v6774
    %9936 = vmatpush1.bf16.msra.mxu0 %v6773
    %9937 = vmatprep.subr.bf16.mxu0 %v6782
    %9938 = vmatpush1.bf16.msra.mxu0 %v6781
    %9939 = vmatprep.subr.bf16.mxu0 %v6790
    %9940 = vmatpush1.bf16.msra.mxu0 %v6789
    %9941 = vmatprep.subr.bf16.mxu0 %v6798
    %9942 = vmatpush1.bf16.msra.mxu0 %v6797
    %9943 = vmatprep.subr.bf16.mxu0 %v6806
    %9944 = vmatpush1.bf16.msra.mxu0 %v6805
    %9945 = vmatprep.subr.bf16.mxu0 %v6814
    %9946 = vmatpush1.bf16.msra.mxu0 %v6813
    %9947 = vmatprep.subr.bf16.mxu0 %v6822
    %9948 = vmatpush1.bf16.msra.mxu0 %v6821
    %9949 = vmatprep.subr.bf16.mxu0 %v6830
    %9950 = vmatpush1.bf16.msra.mxu0 %v6829
    %9951 = vmatprep.subr.bf16.mxu0 %v6838
    %9952 = vmatpush1.bf16.msra.mxu0 %v6837
    %9953 = vmatprep.mubr.bf16.mxu0 %v1162
    %9954 = vmatmul.mubr.bf16.gmra.mrb[0].mxu0 %v1161
    %v9955 = vpop.f32.mrb[0].mxu0
    %v9956 = vadd.f32 %v9903, %v9955
    %v9957 = vpop.f32.mrb[0].mxu0
    %v9958 = vadd.f32 %v9905, %v9957
    %v9959 = vpop.f32.mrb[0].mxu0
    %v9960 = vadd.f32 %v9907, %v9959
    %v9961 = vpop.f32.mrb[0].mxu0
    %v9962 = vadd.f32 %v9909, %v9961
    %9963 = vmatprep.mubr.bf16.mxu0 %v1180
    %9964 = vmatmul.mubr.bf16.gmra.mrb[0].mxu0 %v1179
    %v9965 = vpop.f32.mrb[0].mxu0
    %v9966 = vadd.f32 %v9913, %v9965
    %v9967 = vpop.f32.mrb[0].mxu0
    %v9968 = vadd.f32 %v9915, %v9967
    %v9969 = vpop.f32.mrb[0].mxu0
    %v9970 = vadd.f32 %v9917, %v9969
    %v9971 = vpop.f32.mrb[0].mxu0
    %v9972 = vadd.f32 %v9919, %v9971
    %9973 = vdwg.mxu0
    %9974 = vmatprep.subr.bf16.mxu0 %v6846
    %9975 = vmatpush1.bf16.msra.mxu0 %v6845
    %9976 = vmatprep.subr.bf16.mxu0 %v6854
    %9977 = vmatpush1.bf16.msra.mxu0 %v6853
    %9978 = vmatprep.subr.bf16.mxu0 %v6862
    %9979 = vmatpush1.bf16.msra.mxu0 %v6861
    %9980 = vmatprep.subr.bf16.mxu0 %v6870
    %9981 = vmatpush1.bf16.msra.mxu0 %v6869
    %9982 = vmatprep.subr.bf16.mxu0 %v6878
    %9983 = vmatpush1.bf16.msra.mxu0 %v6877
    %9984 = vmatprep.subr.bf16.mxu0 %v6886
    %9985 = vmatpush1.bf16.msra.mxu0 %v6885
    %9986 = vmatprep.subr.bf16.mxu0 %v6894
    %9987 = vmatpush1.bf16.msra.mxu0 %v6893
    %9988 = vmatprep.subr.bf16.mxu0 %v6902
    %9989 = vmatpush1.bf16.msra.mxu0 %v6901
    %9990 = vmatprep.subr.bf16.mxu0 %v6910
    %9991 = vmatpush1.bf16.msra.mxu0 %v6909
    %9992 = vmatprep.subr.bf16.mxu0 %v6918
    %9993 = vmatpush1.bf16.msra.mxu0 %v6917
    %9994 = vmatprep.subr.bf16.mxu0 %v6926
    %9995 = vmatpush1.bf16.msra.mxu0 %v6925
    %9996 = vmatprep.subr.bf16.mxu0 %v6934
    %9997 = vmatpush1.bf16.msra.mxu0 %v6933
    %9998 = vmatprep.subr.bf16.mxu0 %v6942
    %9999 = vmatpush1.bf16.msra.mxu0 %v6941
    %10000 = vmatprep.subr.bf16.mxu0 %v6950
    %10001 = vmatpush1.bf16.msra.mxu0 %v6949
    %10002 = vmatprep.subr.bf16.mxu0 %v6958
    %10003 = vmatpush1.bf16.msra.mxu0 %v6957
    %10004 = vmatprep.subr.bf16.mxu0 %v6966
    %10005 = vmatpush1.bf16.msra.mxu0 %v6965
    %10006 = vmatprep.mubr.bf16.mxu0 %v1164
    %10007 = vmatmul.mubr.bf16.gmra.mrb[0].mxu0 %v1163
    %v10008 = vpop.f32.mrb[0].mxu0
    %v10009 = vadd.f32 %v9956, %v10008
    %v10010 = vpop.f32.mrb[0].mxu0
    %v10011 = vadd.f32 %v9958, %v10010
    %v10012 = vpop.f32.mrb[0].mxu0
    %v10013 = vadd.f32 %v9960, %v10012
    %v10014 = vpop.f32.mrb[0].mxu0
    %v10015 = vadd.f32 %v9962, %v10014
    %10016 = vmatprep.mubr.bf16.mxu0 %v1182
    %10017 = vmatmul.mubr.bf16.gmra.mrb[0].mxu0 %v1181
    %v10018 = vpop.f32.mrb[0].mxu0
    %v10019 = vadd.f32 %v9966, %v10018
    %v10020 = vpop.f32.mrb[0].mxu0
    %v10021 = vadd.f32 %v9968, %v10020
    %v10022 = vpop.f32.mrb[0].mxu0
    %v10023 = vadd.f32 %v9970, %v10022
    %v10024 = vpop.f32.mrb[0].mxu0
    %v10025 = vadd.f32 %v9972, %v10024
    %10026 = vdwg.mxu0
    %v10027 = vmax.f32 %v8578, 0.0
    %v10028 = vmax.f32 %v8580, 0.0
    %v10029 = vmax.f32 %v9055, 0.0
    %v10030 = vmax.f32 %v9057, 0.0
    %v10031 = vmax.f32 %v9532, 0.0
    %v10032 = vmax.f32 %v9534, 0.0
    %v10033 = vmax.f32 %v10009, 0.0
    %v10034 = vmax.f32 %v10011, 0.0
    %v10035 = vmax.f32 %v8582, 0.0
    %v10036 = vmax.f32 %v8584, 0.0
    %v10037 = vmax.f32 %v9059, 0.0
    %v10038 = vmax.f32 %v9061, 0.0
    %v10039 = vmax.f32 %v9536, 0.0
    %v10040 = vmax.f32 %v9538, 0.0
    %v10041 = vmax.f32 %v10013, 0.0
    %v10042 = vmax.f32 %v10015, 0.0
    %v10043 = vmax.f32 %v8588, 0.0
    %v10044 = vmax.f32 %v8590, 0.0
    %v10045 = vmax.f32 %v9065, 0.0
    %v10046 = vmax.f32 %v9067, 0.0
    %v10047 = vmax.f32 %v9542, 0.0
    %v10048 = vmax.f32 %v9544, 0.0
    %v10049 = vmax.f32 %v10019, 0.0
    %v10050 = vmax.f32 %v10021, 0.0
    %v10051 = vmax.f32 %v8592, 0.0
    %v10052 = vmax.f32 %v8594, 0.0
    %v10053 = vmax.f32 %v9069, 0.0
    %v10054 = vmax.f32 %v9071, 0.0
    %v10055 = vmax.f32 %v9546, 0.0
    %v10056 = vmax.f32 %v9548, 0.0
    %v10057 = vmax.f32 %v10023, 0.0
    %v10058 = vmax.f32 %v10025, 0.0
    %v10059 = vld [vmem:[%s4] sm:$0xff]
    %v10060 = vld [vmem:[%s4 + $0x8] sm:$0xff]
    %v10061 = vld [vmem:[%s4 + $0x10] sm:$0xff]
    %v10062 = vld [vmem:[%s4 + $0x18] sm:$0xff]
    %v10063 = vmin.f32 %v8578, 0.0
    %v10064 = vmin.f32 %v8580, 0.0
    %v10065 = vmin.f32 %v9055, 0.0
    %v10066 = vmin.f32 %v9057, 0.0
    %v10067 = vmin.f32 %v9532, 0.0
    %v10068 = vmin.f32 %v9534, 0.0
    %v10069 = vmin.f32 %v10009, 0.0
    %v10070 = vmin.f32 %v10011, 0.0
    %v10071 = vmin.f32 %v8582, 0.0
    %v10072 = vmin.f32 %v8584, 0.0
    %v10073 = vmin.f32 %v9059, 0.0
    %v10074 = vmin.f32 %v9061, 0.0
    %v10075 = vmin.f32 %v9536, 0.0
    %v10076 = vmin.f32 %v9538, 0.0
    %v10077 = vmin.f32 %v10013, 0.0
    %v10078 = vmin.f32 %v10015, 0.0
    %v10079 = vmin.f32 %v8588, 0.0
    %v10080 = vmin.f32 %v8590, 0.0
    %v10081 = vmin.f32 %v9065, 0.0
    %v10082 = vmin.f32 %v9067, 0.0
    %v10083 = vmin.f32 %v9542, 0.0
    %v10084 = vmin.f32 %v9544, 0.0
    %v10085 = vmin.f32 %v10019, 0.0
    %v10086 = vmin.f32 %v10021, 0.0
    %v10087 = vmin.f32 %v8592, 0.0
    %v10088 = vmin.f32 %v8594, 0.0
    %v10089 = vmin.f32 %v9069, 0.0
    %v10090 = vmin.f32 %v9071, 0.0
    %v10091 = vmin.f32 %v9546, 0.0
    %v10092 = vmin.f32 %v9548, 0.0
    %v10093 = vmin.f32 %v10023, 0.0
    %v10094 = vmin.f32 %v10025, 0.0
    %10096 = vset.pattern.permute.xlu0 0
    %10097 = vperm.xlu0 %10096, %v10059
    %v10098 = vpop.permute.xlu0 %10097
    %10101 = vset.pattern.permute.xlu0 0
    %10102 = vperm.xlu0 %10101, %v10060
    %v10103 = vpop.permute.xlu0 %10102
    %10106 = vset.pattern.permute.xlu0 0
    %10107 = vperm.xlu0 %10106, %v10061
    %v10108 = vpop.permute.xlu0 %10107
    %10111 = vset.pattern.permute.xlu0 0
    %10112 = vperm.xlu0 %10111, %v10062
    %v10113 = vpop.permute.xlu0 %10112
    %v10115 = vmul.f32 %v10098, %v10063
    %v10116 = vmul.f32 %v10098, %v10064
    %v10117 = vmul.f32 %v10098, %v10065
    %v10118 = vmul.f32 %v10098, %v10066
    %v10119 = vmul.f32 %v10098, %v10067
    %v10120 = vmul.f32 %v10098, %v10068
    %v10121 = vmul.f32 %v10098, %v10069
    %v10122 = vmul.f32 %v10098, %v10070
    %v10123 = vmul.f32 %v10103, %v10071
    %v10124 = vmul.f32 %v10103, %v10072
    %v10125 = vmul.f32 %v10103, %v10073
    %v10126 = vmul.f32 %v10103, %v10074
    %v10127 = vmul.f32 %v10103, %v10075
    %v10128 = vmul.f32 %v10103, %v10076
    %v10129 = vmul.f32 %v10103, %v10077
    %v10130 = vmul.f32 %v10103, %v10078
    %v10131 = vmul.f32 %v10108, %v10079
    %v10132 = vmul.f32 %v10108, %v10080
    %v10133 = vmul.f32 %v10108, %v10081
    %v10134 = vmul.f32 %v10108, %v10082
    %v10135 = vmul.f32 %v10108, %v10083
    %v10136 = vmul.f32 %v10108, %v10084
    %v10137 = vmul.f32 %v10108, %v10085
    %v10138 = vmul.f32 %v10108, %v10086
    %v10139 = vmul.f32 %v10113, %v10087
    %v10140 = vmul.f32 %v10113, %v10088
    %v10141 = vmul.f32 %v10113, %v10089
    %v10142 = vmul.f32 %v10113, %v10090
    %v10143 = vmul.f32 %v10113, %v10091
    %v10144 = vmul.f32 %v10113, %v10092
    %v10145 = vmul.f32 %v10113, %v10093
    %v10146 = vmul.f32 %v10113, %v10094
    %v10147 = vadd.f32 %v10027, %v10115
    %v10148 = vadd.f32 %v10028, %v10116
    %v10149 = vadd.f32 %v10029, %v10117
    %v10150 = vadd.f32 %v10030, %v10118
    %v10151 = vadd.f32 %v10031, %v10119
    %v10152 = vadd.f32 %v10032, %v10120
    %v10153 = vadd.f32 %v10033, %v10121
    %v10154 = vadd.f32 %v10034, %v10122
    %v10155 = vadd.f32 %v10035, %v10123
    %v10156 = vadd.f32 %v10036, %v10124
    %v10157 = vadd.f32 %v10037, %v10125
    %v10158 = vadd.f32 %v10038, %v10126
    %v10159 = vadd.f32 %v10039, %v10127
    %v10160 = vadd.f32 %v10040, %v10128
    %v10161 = vadd.f32 %v10041, %v10129
    %v10162 = vadd.f32 %v10042, %v10130
    %v10163 = vadd.f32 %v10043, %v10131
    %v10164 = vadd.f32 %v10044, %v10132
    %v10165 = vadd.f32 %v10045, %v10133
    %v10166 = vadd.f32 %v10046, %v10134
    %v10167 = vadd.f32 %v10047, %v10135
    %v10168 = vadd.f32 %v10048, %v10136
    %v10169 = vadd.f32 %v10049, %v10137
    %v10170 = vadd.f32 %v10050, %v10138
    %v10171 = vadd.f32 %v10051, %v10139
    %v10172 = vadd.f32 %v10052, %v10140
    %v10173 = vadd.f32 %v10053, %v10141
    %v10174 = vadd.f32 %v10054, %v10142
    %v10175 = vadd.f32 %v10055, %v10143
    %v10176 = vadd.f32 %v10056, %v10144
    %v10177 = vadd.f32 %v10057, %v10145
    %v10178 = vadd.f32 %v10058, %v10146
    %10179 = vst [vmem:[#allocation9] sm:$0xff] %v10147
    %10180 = vst [vmem:[#allocation9 + $0x8] sm:$0xff] %v10148
    %10181 = vst [vmem:[#allocation9 + $0x10] sm:$0xff] %v10149
    %10182 = vst [vmem:[#allocation9 + $0x18] sm:$0xff] %v10150
    %10183 = vst [vmem:[#allocation9 + $0x20] sm:$0xff] %v10151
    %10184 = vst [vmem:[#allocation9 + $0x28] sm:$0xff] %v10152
    %10185 = vst [vmem:[#allocation9 + $0x30] sm:$0xff] %v10153
    %10186 = vst [vmem:[#allocation9 + $0x38] sm:$0xff] %v10154
    %10187 = vst [vmem:[#allocation9 + $0x40] sm:$0xff] %v10155
    %10188 = vst [vmem:[#allocation9 + $0x48] sm:$0xff] %v10156
    %10189 = vst [vmem:[#allocation9 + $0x50] sm:$0xff] %v10157
    %10190 = vst [vmem:[#allocation9 + $0x58] sm:$0xff] %v10158
    %10191 = vst [vmem:[#allocation9 + $0x60] sm:$0xff] %v10159
    %10192 = vst [vmem:[#allocation9 + $0x68] sm:$0xff] %v10160
    %10193 = vst [vmem:[#allocation9 + $0x70] sm:$0xff] %v10161
    %10194 = vst [vmem:[#allocation9 + $0x78] sm:$0xff] %v10162
    %10195 = vst [vmem:[#allocation9 + $0x80] sm:$0xff] %v10163
    %10196 = vst [vmem:[#allocation9 + $0x88] sm:$0xff] %v10164
    %10197 = vst [vmem:[#allocation9 + $0x90] sm:$0xff] %v10165
    %10198 = vst [vmem:[#allocation9 + $0x98] sm:$0xff] %v10166
    %10199 = vst [vmem:[#allocation9 + $0xa0] sm:$0xff] %v10167
    %10200 = vst [vmem:[#allocation9 + $0xa8] sm:$0xff] %v10168
    %10201 = vst [vmem:[#allocation9 + $0xb0] sm:$0xff] %v10169
    %10202 = vst [vmem:[#allocation9 + $0xb8] sm:$0xff] %v10170
    %10203 = vst [vmem:[#allocation9 + $0xc0] sm:$0xff] %v10171
    %10204 = vst [vmem:[#allocation9 + $0xc8] sm:$0xff] %v10172
    %10205 = vst [vmem:[#allocation9 + $0xd0] sm:$0xff] %v10173
    %10206 = vst [vmem:[#allocation9 + $0xd8] sm:$0xff] %v10174
    %10207 = vst [vmem:[#allocation9 + $0xe0] sm:$0xff] %v10175
    %10208 = vst [vmem:[#allocation9 + $0xe8] sm:$0xff] %v10176
    %10209 = vst [vmem:[#allocation9 + $0xf0] sm:$0xff] %v10177
    %10210 = vst [vmem:[#allocation9 + $0xf8] sm:$0xff] %v10178
    // Predicated region
    $region34: #{tpu_custom_call.1} parent=1 // pred_check
      _
    $region35: #{tpu_custom_call.1} parent=1 // pred_check_branch
      %10212 = sbr.rel (0) target = $region37
    $region36: #{tpu_custom_call.1} parent=1 // pred_region
      %s10214 = ssub.s32 4096, 4096
      %10215 = vsyncadd [#allocation5], %s10214
      %s10216 = sshll.u32 [#allocation9], 4
      %s10217 = int_to_ptr.vmem [resolvable:$true] %s10216
      %10222 = dma.vmem_to_hbm [thread:$0]  %s10217, 4096, %s5, [#allocation5], 1024, 1024, 64
    $region37: #{tpu_custom_call.1} parent=1 // pred_fallthru
      _
    // Predicated region
    $region38: #{tpu_custom_call.1} parent=1 // pred_check
      _
    $region39: #{tpu_custom_call.1} parent=1 // pred_check_branch
      %10224 = sbr.rel (0) target = $region41
    $region40: #{tpu_custom_call.1} parent=1 // pred_region
      %10225 = dma.done [#allocation5], 4096
    $region41: #{tpu_custom_call.1} parent=1 // pred_fallthru
      _
    %10226 = vsyncpa [#allocation4], 1
    %10227 = vsyncpa [#allocation7], 1
    %10228 = vsyncpa [#allocation5], 1

</llo_original>
